<compile_context>
chip_gen: v7x
topology: tpu7x:2x2x1
jax: 0.10.0
libtpu: 0.0.40
codegen_flags: <defaults>
</compile_context>

<pallas_src>
import numpy as np
import jax
import jax.numpy as jnp
from jax.experimental import pallas as pl
from jax.experimental.pallas import tpu as pltpu

H_IN, W_IN = 62, 62          # input spatial size implied by fc1.in_features = 32*14*14
C1, C2 = 6, 32
H1 = W1 = 60                 # after conv1 (3x3 valid)
HP1 = WP1 = 30               # after pool1 (2x2 stride 2)
H2 = W2 = 28                 # after conv2
HP2 = WP2 = 14               # after pool2
R1 = C1 * HP1                # 180 rows: (channel, pooled-row) after conv1 + row-pool
R2 = C2 * HP2                # 448 rows after conv2 + row-pool
FLAT = C2 * HP2 * WP2        # 6272
FC1_OUT = 32
B_TILE = 4                   # images stacked along the lane axis per grid step


# ------------------------------- Pallas kernel ------------------------------
def _fused_kernel(xs_ref, m1_ref, b1_ref, sw1_ref, m2_ref, b2_ref, sw2_ref,
                  wc_ref, seg_ref, zoff_ref, o_ref):
    """conv1+relu+pool -> conv2+relu+pool -> (output∘fc1)+sigmoid for B images."""
    B = seg_ref.shape[1]
    f32 = jnp.float32
    xs = xs_ref[0]                                           # (3, 62, B*60)

    # ---- conv1 (1->6, 3x3 valid) + 2x2 row max-pool ------------------------
    # m1[2*dj] produces conv rows i = 2r (even), m1[2*dj+1] rows i = 2r+1 (odd)
    acc_e = (jnp.dot(m1_ref[0], xs[0], preferred_element_type=f32)
             + jnp.dot(m1_ref[2], xs[1], preferred_element_type=f32)
             + jnp.dot(m1_ref[4], xs[2], preferred_element_type=f32))
    acc_o = (jnp.dot(m1_ref[1], xs[0], preferred_element_type=f32)
             + jnp.dot(m1_ref[3], xs[1], preferred_element_type=f32)
             + jnp.dot(m1_ref[5], xs[2], preferred_element_type=f32))
    # relu(x + b) is monotone, so max-then-bias-then-relu == pool of relu(conv+b)
    a1 = jnp.maximum(jnp.maximum(acc_e, acc_o) + b1_ref[...], 0.0)   # (180, B*60)

    # ---- pool1 columns: adjacent max + block-diagonal 0/1 stride-2 select --
    cm1 = jnp.maximum(a1[:, :-1], a1[:, 1:])                         # (180, B*60-1)
    p1 = jnp.dot(cm1, sw1_ref[...], preferred_element_type=f32)      # (180, B*30)

    # ---- conv2 (6->32, 3x3 valid) + 2x2 row max-pool ------------------------
    # per kernel-column shift, gather per-image 28-wide lane windows
    shs = [jnp.concatenate(
               [p1[:, b * WP1 + dj: b * WP1 + dj + W2] for b in range(B)], axis=1)
           for dj in range(3)]                                       # 3 x (180, B*28)
    acc2e = (jnp.dot(m2_ref[0], shs[0], preferred_element_type=f32)
             + jnp.dot(m2_ref[2], shs[1], preferred_element_type=f32)
             + jnp.dot(m2_ref[4], shs[2], preferred_element_type=f32))
    acc2o = (jnp.dot(m2_ref[1], shs[0], preferred_element_type=f32)
             + jnp.dot(m2_ref[3], shs[1], preferred_element_type=f32)
             + jnp.dot(m2_ref[5], shs[2], preferred_element_type=f32))
    a2 = jnp.maximum(jnp.maximum(acc2e, acc2o) + b2_ref[...], 0.0)   # (448, B*28)

    # ---- pool2 columns -------------------------------------------------------
    cm2 = jnp.maximum(a2[:, :-1], a2[:, 1:])                         # (448, B*28-1)
    p2 = jnp.dot(cm2, sw2_ref[...], preferred_element_type=f32)      # (448, B*14)

    # ---- fused head: output∘fc1 composed into one linear map + sigmoid -----
    t = jnp.dot(p2 * wc_ref[...], seg_ref[...], preferred_element_type=f32)  # (448, B)
    z = jnp.sum(t, axis=0, keepdims=True) + zoff_ref[...]                    # (1, B)
    o_ref[0] = 1.0 / (1.0 + jnp.exp(-z))


# -------------------- one-time host-side operand preparation ----------------
def build_operands(params, b_tile=B_TILE):
    """Rearrange weights into structured matmul operands (built once, cached)."""
    B = b_tile
    w1 = np.asarray(params["w1"], np.float32); b1 = np.asarray(params["b1"], np.float32)
    w2 = np.asarray(params["w2"], np.float32); b2 = np.asarray(params["b2"], np.float32)
    fc1_w = np.asarray(params["fc1_w"], np.float32)
    fc1_b = np.asarray(params["fc1_b"], np.float32)
    out_w = np.asarray(params["out_w"], np.float32)
    out_b = np.asarray(params["out_b"], np.float32)

    # conv1 Toeplitz weights, split into even/odd output-row halves:
    #   m1[2*dj + h, c*30 + r, (2r + h) + di] = w1[c, 0, di, dj]
    m1 = np.zeros((6, R1, H_IN), np.float32)
    r = np.arange(HP1)
    for dj in range(3):
        for h in range(2):
            for c in range(C1):
                for di in range(3):
                    m1[2 * dj + h, c * HP1 + r, 2 * r + h + di] = w1[c, 0, di, dj]

    # conv2 Toeplitz weights over the row-pooled conv1 layout (rows c*30 + q):
    #   m2[2*dj + h, o*14 + r2, c*30 + (2*r2 + h) + di] = w2[o, c, di, dj]
    m2 = np.zeros((6, R2, R1), np.float32)
    r2 = np.arange(HP2)
    for dj in range(3):
        for h in range(2):
            for o in range(C2):
                for c in range(C1):
                    for di in range(3):
                        m2[2 * dj + h, o * HP2 + r2,
                           c * HP1 + 2 * r2 + h + di] = w2[o, c, di, dj]

    # per-row bias columns (row-pooled layouts)
    b1col = np.repeat(b1, HP1).reshape(R1, 1).astype(np.float32)
    b2col = np.repeat(b2, HP2).reshape(R2, 1).astype(np.float32)

    # block-diagonal 0/1 column-pool selectors and per-image segment summer
    sw1 = np.zeros((B * W1 - 1, B * WP1), np.float32)
    sw2 = np.zeros((B * W2 - 1, B * WP2), np.float32)
    seg = np.zeros((B * WP2, B), np.float32)
    for b in range(B):
        sw1[b * W1 + 2 * np.arange(WP1), b * WP1 + np.arange(WP1)] = 1.0
        sw2[b * W2 + 2 * np.arange(WP2), b * WP2 + np.arange(WP2)] = 1.0
        seg[b * WP2 + np.arange(WP2), b] = 1.0

    # fc1 and output are back-to-back linear layers -> compose them host-side
    wcomb = (out_w @ fc1_w).reshape(C2, HP2, WP2)            # NCHW flatten order
    wc = np.tile(wcomb.reshape(R2, WP2), (1, B))             # (448, B*14)
    zoff = (out_w @ fc1_b + out_b).reshape(1, 1).astype(np.float32)

    return dict(m1=jnp.asarray(m1), b1=jnp.asarray(b1col), sw1=jnp.asarray(sw1),
                m2=jnp.asarray(m2), b2=jnp.asarray(b2col), sw2=jnp.asarray(sw2),
                wc=jnp.asarray(wc), segsel=jnp.asarray(seg), zoff=jnp.asarray(zoff))


# --------------------------------- wrapper ----------------------------------
def _full(shape):
    return pl.BlockSpec(shape, lambda i, _n=len(shape): (0,) * _n)


def image_classification_forward(x_nchw, ops):
    """NCHW (N,1,62,62) -> (N,1) sigmoid probabilities.  jit-able."""
    n = x_nchw.shape[0]
    assert x_nchw.shape[1:] == (1, H_IN, W_IN)
    B = ops["segsel"].shape[1]
    g = -(-n // B)                                   # grid steps of B images each

    x2d = x_nchw[:, 0].astype(jnp.float32)           # (N, 62, 62)
    if g * B != n:                                   # pad batch to a multiple of B
        pad = g * B - n
        x2d = jnp.concatenate(
            [x2d, jnp.zeros((pad, H_IN, W_IN), jnp.float32)], axis=0)

    # layout plumbing: pre-slice the 3 conv1 column shifts and stack B images
    # along lanes:  xs[gi, dj, i, b*60 + j] = x[gi*B + b, i, j + dj]
    xsh = jnp.stack([x2d[:, :, d:d + W1] for d in range(3)], axis=1)  # (g*B,3,62,60)
    xs = (xsh.reshape(g, B, 3, H_IN, W1)
              .transpose(0, 2, 3, 1, 4)
              .reshape(g, 3, H_IN, B * W1))

    out = pl.pallas_call(
        _fused_kernel,
        out_shape=jax.ShapeDtypeStruct((g, 1, B), jnp.float32),
        grid=(g,),
        in_specs=[
            pl.BlockSpec((1, 3, H_IN, B * W1), lambda i: (i, 0, 0, 0)),
            _full((6, R1, H_IN)),
            _full((R1, 1)),
            _full((B * W1 - 1, B * WP1)),
            _full((6, R2, R1)),
            _full((R2, 1)),
            _full((B * W2 - 1, B * WP2)),
            _full((R2, B * WP2)),
            _full((B * WP2, B)),
            _full((1, 1)),
        ],
        out_specs=pl.BlockSpec((1, 1, B), lambda i: (i, 0, 0)),
        compiler_params=pltpu.CompilerParams(
            dimension_semantics=("parallel",),
            vmem_limit_bytes=32 * 1024 * 1024),
    )(xs, ops["m1"], ops["b1"], ops["sw1"], ops["m2"], ops["b2"], ops["sw2"],
      ops["wc"], ops["segsel"], ops["zoff"])

    return out.reshape(g * B, 1)[:n]


# ------------------------------- parameters ---------------------------------
def init_params(key):
    ks = jax.random.split(key, 8)
    return dict(
        w1=0.2 * jax.random.normal(ks[0], (C1, 1, 3, 3), jnp.float32),
        b1=0.1 * jax.random.normal(ks[1], (C1,), jnp.float32),
        w2=0.05 * jax.random.normal(ks[2], (C2, C1, 3, 3), jnp.float32),
        b2=0.1 * jax.random.normal(ks[3], (C2,), jnp.float32),
        fc1_w=0.02 * jax.random.normal(ks[4], (FC1_OUT, FLAT), jnp.float32),
        fc1_b=0.1 * jax.random.normal(ks[5], (FC1_OUT,), jnp.float32),
        out_w=0.1 * jax.random.normal(ks[6], (1, FC1_OUT), jnp.float32),
        out_b=0.1 * jax.random.normal(ks[7], (1,), jnp.float32),
    )


# ----------------------------- pure-JAX reference ---------------------------
def reference_forward(x, p):
    dn = ("NCHW", "OIHW", "NCHW")
    y = jax.lax.conv_general_dilated(x, p["w1"], (1, 1), "VALID", dimension_numbers=dn)
    y = jnp.maximum(y + p["b1"].reshape(1, C1, 1, 1), 0.0)
    y = jax.lax.reduce_window(y, -jnp.inf, jax.lax.max, (1, 1, 2, 2), (1, 1, 2, 2), "VALID")
    y = jax.lax.conv_general_dilated(y, p["w2"], (1, 1), "VALID", dimension_numbers=dn)
    y = jnp.maximum(y + p["b2"].reshape(1, C2, 1, 1), 0.0)
    y = jax.lax.reduce_window(y, -jnp.inf, jax.lax.max, (1, 1, 2, 2), (1, 1, 2, 2), "VALID")
    y = y.reshape(x.shape[0], -1)
    y = y @ p["fc1_w"].T + p["fc1_b"]
    y = y @ p["out_w"].T + p["out_b"]
    return 1.0 / (1.0 + jnp.exp(-y))


if __name__ == "__main__":
    key = jax.random.PRNGKey(0)
    k_param, k_x = jax.random.split(key)
    params = init_params(k_param)

    # hoisted: structured operands built once and cached as device arrays
    ops = build_operands(params, b_tile=B_TILE)

    x = jax.random.normal(k_x, (2, 1, H_IN, W_IN), jnp.float32)   # NCHW batch=2

    fwd = jax.jit(image_classification_forward)
    out = jax.block_until_ready(fwd(x, ops))
    assert out.shape == (2, 1) and out.dtype == jnp.float32

    ref = jax.block_until_ready(reference_forward(x, params))
    np.testing.assert_allclose(np.asarray(out), np.asarray(ref), atol=2e-3, rtol=2e-3)
    print("KERNEL_OK")
</pallas_src>

<mosaic_0001>
module attributes {stable_mosaic.version = 11 : i64} {
  func.func @_fused_kernel(%arg0: i32, %arg1: memref<1x3x62x240xf32, #tpu.memory_space<vmem>>, %arg2: memref<6x180x62xf32, #tpu.memory_space<vmem>>, %arg3: memref<180x1xf32, #tpu.memory_space<vmem>>, %arg4: memref<239x120xf32, #tpu.memory_space<vmem>>, %arg5: memref<6x448x180xf32, #tpu.memory_space<vmem>>, %arg6: memref<448x1xf32, #tpu.memory_space<vmem>>, %arg7: memref<111x56xf32, #tpu.memory_space<vmem>>, %arg8: memref<448x56xf32, #tpu.memory_space<vmem>>, %arg9: memref<56x4xf32, #tpu.memory_space<vmem>>, %arg10: memref<1x1xf32, #tpu.memory_space<vmem>>, %arg11: memref<1x1x4xf32, #tpu.memory_space<vmem>>) attributes {dimension_semantics = [#tpu.dimension_semantics<parallel>], iteration_bounds = array<i64: 1>, scalar_prefetch = 0 : i64, scratch_operands = 0 : i64, tpu.core_type = #tpu.core_type<tc>, window_params = [{transform_indices = @transform_0, window_bounds = array<i64: 1, 3, 62, 240>}, {pipeline_mode = #tpu.pipeline_mode<synchronous>, transform_indices = @transform_1, window_bounds = array<i64: 6, 180, 62>}, {pipeline_mode = #tpu.pipeline_mode<synchronous>, transform_indices = @transform_2, window_bounds = array<i64: 180, 1>}, {pipeline_mode = #tpu.pipeline_mode<synchronous>, transform_indices = @transform_3, window_bounds = array<i64: 239, 120>}, {pipeline_mode = #tpu.pipeline_mode<synchronous>, transform_indices = @transform_4, window_bounds = array<i64: 6, 448, 180>}, {pipeline_mode = #tpu.pipeline_mode<synchronous>, transform_indices = @transform_5, window_bounds = array<i64: 448, 1>}, {pipeline_mode = #tpu.pipeline_mode<synchronous>, transform_indices = @transform_6, window_bounds = array<i64: 111, 56>}, {pipeline_mode = #tpu.pipeline_mode<synchronous>, transform_indices = @transform_7, window_bounds = array<i64: 448, 56>}, {pipeline_mode = #tpu.pipeline_mode<synchronous>, transform_indices = @transform_8, window_bounds = array<i64: 56, 4>}, {pipeline_mode = #tpu.pipeline_mode<synchronous>, transform_indices = @transform_9, window_bounds = array<i64: 1, 1>}, {transform_indices = @transform_10, window_bounds = array<i64: 1, 1, 4>}]} {
    %c0 = arith.constant 0 : index
    %c0_0 = arith.constant 0 : index
    %c0_1 = arith.constant 0 : index
    %c0_2 = arith.constant 0 : index
    %0 = vector.load %arg1[%c0, %c0_0, %c0_1, %c0_2] : memref<1x3x62x240xf32, #tpu.memory_space<vmem>>, vector<1x3x62x240xf32>
    %1 = vector.shape_cast %0 : vector<1x3x62x240xf32> to vector<3x62x240xf32>
    %c0_3 = arith.constant 0 : index
    %c0_4 = arith.constant 0 : index
    %c0_5 = arith.constant 0 : index
    %2 = vector.load %arg2[%c0_3, %c0_4, %c0_5] : memref<6x180x62xf32, #tpu.memory_space<vmem>>, vector<1x180x62xf32>
    %3 = vector.shape_cast %2 : vector<1x180x62xf32> to vector<180x62xf32>
    %4 = vector.extract_strided_slice %1 {offsets = [0, 0, 0], sizes = [1, 62, 240], strides = [1, 1, 1]} : vector<3x62x240xf32> to vector<1x62x240xf32>
    %5 = vector.shape_cast %4 : vector<1x62x240xf32> to vector<62x240xf32>
    %cst = arith.constant dense<0.000000e+00> : vector<180x240xf32>
    %6 = tpu.matmul %3, %5, %cst {dimension_numbers = #tpu.dot_dimension_numbers<[1], [0], [0], [1], [0, 0, 1, 1], [], []>} : vector<180x62xf32>, vector<62x240xf32>, vector<180x240xf32> -> vector<180x240xf32>
    %c2 = arith.constant 2 : index
    %c0_6 = arith.constant 0 : index
    %c0_7 = arith.constant 0 : index
    %7 = vector.load %arg2[%c2, %c0_6, %c0_7] : memref<6x180x62xf32, #tpu.memory_space<vmem>>, vector<1x180x62xf32>
    %8 = vector.shape_cast %7 : vector<1x180x62xf32> to vector<180x62xf32>
    %9 = vector.extract_strided_slice %1 {offsets = [1, 0, 0], sizes = [1, 62, 240], strides = [1, 1, 1]} : vector<3x62x240xf32> to vector<1x62x240xf32>
    %10 = vector.shape_cast %9 : vector<1x62x240xf32> to vector<62x240xf32>
    %cst_8 = arith.constant dense<0.000000e+00> : vector<180x240xf32>
    %11 = tpu.matmul %8, %10, %cst_8 {dimension_numbers = #tpu.dot_dimension_numbers<[1], [0], [0], [1], [0, 0, 1, 1], [], []>} : vector<180x62xf32>, vector<62x240xf32>, vector<180x240xf32> -> vector<180x240xf32>
    %12 = arith.addf %6, %11 : vector<180x240xf32>
    %c4 = arith.constant 4 : index
    %c0_9 = arith.constant 0 : index
    %c0_10 = arith.constant 0 : index
    %13 = vector.load %arg2[%c4, %c0_9, %c0_10] : memref<6x180x62xf32, #tpu.memory_space<vmem>>, vector<1x180x62xf32>
    %14 = vector.shape_cast %13 : vector<1x180x62xf32> to vector<180x62xf32>
    %15 = vector.extract_strided_slice %1 {offsets = [2, 0, 0], sizes = [1, 62, 240], strides = [1, 1, 1]} : vector<3x62x240xf32> to vector<1x62x240xf32>
    %16 = vector.shape_cast %15 : vector<1x62x240xf32> to vector<62x240xf32>
    %cst_11 = arith.constant dense<0.000000e+00> : vector<180x240xf32>
    %17 = tpu.matmul %14, %16, %cst_11 {dimension_numbers = #tpu.dot_dimension_numbers<[1], [0], [0], [1], [0, 0, 1, 1], [], []>} : vector<180x62xf32>, vector<62x240xf32>, vector<180x240xf32> -> vector<180x240xf32>
    %18 = arith.addf %12, %17 : vector<180x240xf32>
    %c1 = arith.constant 1 : index
    %c0_12 = arith.constant 0 : index
    %c0_13 = arith.constant 0 : index
    %19 = vector.load %arg2[%c1, %c0_12, %c0_13] : memref<6x180x62xf32, #tpu.memory_space<vmem>>, vector<1x180x62xf32>
    %20 = vector.shape_cast %19 : vector<1x180x62xf32> to vector<180x62xf32>
    %21 = vector.extract_strided_slice %1 {offsets = [0, 0, 0], sizes = [1, 62, 240], strides = [1, 1, 1]} : vector<3x62x240xf32> to vector<1x62x240xf32>
    %22 = vector.shape_cast %21 : vector<1x62x240xf32> to vector<62x240xf32>
    %cst_14 = arith.constant dense<0.000000e+00> : vector<180x240xf32>
    %23 = tpu.matmul %20, %22, %cst_14 {dimension_numbers = #tpu.dot_dimension_numbers<[1], [0], [0], [1], [0, 0, 1, 1], [], []>} : vector<180x62xf32>, vector<62x240xf32>, vector<180x240xf32> -> vector<180x240xf32>
    %c3 = arith.constant 3 : index
    %c0_15 = arith.constant 0 : index
    %c0_16 = arith.constant 0 : index
    %24 = vector.load %arg2[%c3, %c0_15, %c0_16] : memref<6x180x62xf32, #tpu.memory_space<vmem>>, vector<1x180x62xf32>
    %25 = vector.shape_cast %24 : vector<1x180x62xf32> to vector<180x62xf32>
    %26 = vector.extract_strided_slice %1 {offsets = [1, 0, 0], sizes = [1, 62, 240], strides = [1, 1, 1]} : vector<3x62x240xf32> to vector<1x62x240xf32>
    %27 = vector.shape_cast %26 : vector<1x62x240xf32> to vector<62x240xf32>
    %cst_17 = arith.constant dense<0.000000e+00> : vector<180x240xf32>
    %28 = tpu.matmul %25, %27, %cst_17 {dimension_numbers = #tpu.dot_dimension_numbers<[1], [0], [0], [1], [0, 0, 1, 1], [], []>} : vector<180x62xf32>, vector<62x240xf32>, vector<180x240xf32> -> vector<180x240xf32>
    %29 = arith.addf %23, %28 : vector<180x240xf32>
    %c5 = arith.constant 5 : index
    %c0_18 = arith.constant 0 : index
    %c0_19 = arith.constant 0 : index
    %30 = vector.load %arg2[%c5, %c0_18, %c0_19] : memref<6x180x62xf32, #tpu.memory_space<vmem>>, vector<1x180x62xf32>
    %31 = vector.shape_cast %30 : vector<1x180x62xf32> to vector<180x62xf32>
    %32 = vector.extract_strided_slice %1 {offsets = [2, 0, 0], sizes = [1, 62, 240], strides = [1, 1, 1]} : vector<3x62x240xf32> to vector<1x62x240xf32>
    %33 = vector.shape_cast %32 : vector<1x62x240xf32> to vector<62x240xf32>
    %cst_20 = arith.constant dense<0.000000e+00> : vector<180x240xf32>
    %34 = tpu.matmul %31, %33, %cst_20 {dimension_numbers = #tpu.dot_dimension_numbers<[1], [0], [0], [1], [0, 0, 1, 1], [], []>} : vector<180x62xf32>, vector<62x240xf32>, vector<180x240xf32> -> vector<180x240xf32>
    %35 = arith.addf %29, %34 : vector<180x240xf32>
    %36 = arith.maximumf %18, %35 : vector<180x240xf32>
    %c0_21 = arith.constant 0 : index
    %c0_22 = arith.constant 0 : index
    %37 = vector.load %arg3[%c0_21, %c0_22] : memref<180x1xf32, #tpu.memory_space<vmem>>, vector<180x1xf32>
    %38 = vector.broadcast %37 : vector<180x1xf32> to vector<180x240xf32>
    %39 = arith.addf %36, %38 : vector<180x240xf32>
    %cst_23 = arith.constant 0.000000e+00 : f32
    %40 = vector.broadcast %cst_23 : f32 to vector<180x240xf32>
    %41 = arith.maximumf %39, %40 : vector<180x240xf32>
    %42 = vector.extract_strided_slice %41 {offsets = [0, 0], sizes = [180, 239], strides = [1, 1]} : vector<180x240xf32> to vector<180x239xf32>
    %43 = vector.extract_strided_slice %41 {offsets = [0, 1], sizes = [180, 239], strides = [1, 1]} : vector<180x240xf32> to vector<180x239xf32>
    %44 = arith.maximumf %42, %43 : vector<180x239xf32>
    %c0_24 = arith.constant 0 : index
    %c0_25 = arith.constant 0 : index
    %45 = vector.load %arg4[%c0_24, %c0_25] : memref<239x120xf32, #tpu.memory_space<vmem>>, vector<239x120xf32>
    %cst_26 = arith.constant dense<0.000000e+00> : vector<180x120xf32>
    %46 = tpu.matmul %44, %45, %cst_26 {dimension_numbers = #tpu.dot_dimension_numbers<[1], [0], [0], [1], [0, 0, 1, 1], [], []>} : vector<180x239xf32>, vector<239x120xf32>, vector<180x120xf32> -> vector<180x120xf32>
    %47 = vector.extract_strided_slice %46 {offsets = [0, 0], sizes = [180, 28], strides = [1, 1]} : vector<180x120xf32> to vector<180x28xf32>
    %48 = vector.extract_strided_slice %46 {offsets = [0, 30], sizes = [180, 28], strides = [1, 1]} : vector<180x120xf32> to vector<180x28xf32>
    %49 = vector.extract_strided_slice %46 {offsets = [0, 60], sizes = [180, 28], strides = [1, 1]} : vector<180x120xf32> to vector<180x28xf32>
    %50 = vector.extract_strided_slice %46 {offsets = [0, 90], sizes = [180, 28], strides = [1, 1]} : vector<180x120xf32> to vector<180x28xf32>
    %51 = tpu.concatenate %47, %48, %49, %50 in 1 : vector<180x28xf32>, vector<180x28xf32>, vector<180x28xf32>, vector<180x28xf32> -> vector<180x112xf32>
    %52 = vector.extract_strided_slice %46 {offsets = [0, 1], sizes = [180, 28], strides = [1, 1]} : vector<180x120xf32> to vector<180x28xf32>
    %53 = vector.extract_strided_slice %46 {offsets = [0, 31], sizes = [180, 28], strides = [1, 1]} : vector<180x120xf32> to vector<180x28xf32>
    %54 = vector.extract_strided_slice %46 {offsets = [0, 61], sizes = [180, 28], strides = [1, 1]} : vector<180x120xf32> to vector<180x28xf32>
    %55 = vector.extract_strided_slice %46 {offsets = [0, 91], sizes = [180, 28], strides = [1, 1]} : vector<180x120xf32> to vector<180x28xf32>
    %56 = tpu.concatenate %52, %53, %54, %55 in 1 : vector<180x28xf32>, vector<180x28xf32>, vector<180x28xf32>, vector<180x28xf32> -> vector<180x112xf32>
    %57 = vector.extract_strided_slice %46 {offsets = [0, 2], sizes = [180, 28], strides = [1, 1]} : vector<180x120xf32> to vector<180x28xf32>
    %58 = vector.extract_strided_slice %46 {offsets = [0, 32], sizes = [180, 28], strides = [1, 1]} : vector<180x120xf32> to vector<180x28xf32>
    %59 = vector.extract_strided_slice %46 {offsets = [0, 62], sizes = [180, 28], strides = [1, 1]} : vector<180x120xf32> to vector<180x28xf32>
    %60 = vector.extract_strided_slice %46 {offsets = [0, 92], sizes = [180, 28], strides = [1, 1]} : vector<180x120xf32> to vector<180x28xf32>
    %61 = tpu.concatenate %57, %58, %59, %60 in 1 : vector<180x28xf32>, vector<180x28xf32>, vector<180x28xf32>, vector<180x28xf32> -> vector<180x112xf32>
    %c0_27 = arith.constant 0 : index
    %c0_28 = arith.constant 0 : index
    %c0_29 = arith.constant 0 : index
    %62 = vector.load %arg5[%c0_27, %c0_28, %c0_29] : memref<6x448x180xf32, #tpu.memory_space<vmem>>, vector<1x448x180xf32>
    %63 = vector.shape_cast %62 : vector<1x448x180xf32> to vector<448x180xf32>
    %cst_30 = arith.constant dense<0.000000e+00> : vector<448x112xf32>
    %64 = tpu.matmul %63, %51, %cst_30 {dimension_numbers = #tpu.dot_dimension_numbers<[1], [0], [0], [1], [0, 0, 1, 1], [], []>} : vector<448x180xf32>, vector<180x112xf32>, vector<448x112xf32> -> vector<448x112xf32>
    %c2_31 = arith.constant 2 : index
    %c0_32 = arith.constant 0 : index
    %c0_33 = arith.constant 0 : index
    %65 = vector.load %arg5[%c2_31, %c0_32, %c0_33] : memref<6x448x180xf32, #tpu.memory_space<vmem>>, vector<1x448x180xf32>
    %66 = vector.shape_cast %65 : vector<1x448x180xf32> to vector<448x180xf32>
    %cst_34 = arith.constant dense<0.000000e+00> : vector<448x112xf32>
    %67 = tpu.matmul %66, %56, %cst_34 {dimension_numbers = #tpu.dot_dimension_numbers<[1], [0], [0], [1], [0, 0, 1, 1], [], []>} : vector<448x180xf32>, vector<180x112xf32>, vector<448x112xf32> -> vector<448x112xf32>
    %68 = arith.addf %64, %67 : vector<448x112xf32>
    %c4_35 = arith.constant 4 : index
    %c0_36 = arith.constant 0 : index
    %c0_37 = arith.constant 0 : index
    %69 = vector.load %arg5[%c4_35, %c0_36, %c0_37] : memref<6x448x180xf32, #tpu.memory_space<vmem>>, vector<1x448x180xf32>
    %70 = vector.shape_cast %69 : vector<1x448x180xf32> to vector<448x180xf32>
    %cst_38 = arith.constant dense<0.000000e+00> : vector<448x112xf32>
    %71 = tpu.matmul %70, %61, %cst_38 {dimension_numbers = #tpu.dot_dimension_numbers<[1], [0], [0], [1], [0, 0, 1, 1], [], []>} : vector<448x180xf32>, vector<180x112xf32>, vector<448x112xf32> -> vector<448x112xf32>
    %72 = arith.addf %68, %71 : vector<448x112xf32>
    %c1_39 = arith.constant 1 : index
    %c0_40 = arith.constant 0 : index
    %c0_41 = arith.constant 0 : index
    %73 = vector.load %arg5[%c1_39, %c0_40, %c0_41] : memref<6x448x180xf32, #tpu.memory_space<vmem>>, vector<1x448x180xf32>
    %74 = vector.shape_cast %73 : vector<1x448x180xf32> to vector<448x180xf32>
    %cst_42 = arith.constant dense<0.000000e+00> : vector<448x112xf32>
    %75 = tpu.matmul %74, %51, %cst_42 {dimension_numbers = #tpu.dot_dimension_numbers<[1], [0], [0], [1], [0, 0, 1, 1], [], []>} : vector<448x180xf32>, vector<180x112xf32>, vector<448x112xf32> -> vector<448x112xf32>
    %c3_43 = arith.constant 3 : index
    %c0_44 = arith.constant 0 : index
    %c0_45 = arith.constant 0 : index
    %76 = vector.load %arg5[%c3_43, %c0_44, %c0_45] : memref<6x448x180xf32, #tpu.memory_space<vmem>>, vector<1x448x180xf32>
    %77 = vector.shape_cast %76 : vector<1x448x180xf32> to vector<448x180xf32>
    %cst_46 = arith.constant dense<0.000000e+00> : vector<448x112xf32>
    %78 = tpu.matmul %77, %56, %cst_46 {dimension_numbers = #tpu.dot_dimension_numbers<[1], [0], [0], [1], [0, 0, 1, 1], [], []>} : vector<448x180xf32>, vector<180x112xf32>, vector<448x112xf32> -> vector<448x112xf32>
    %79 = arith.addf %75, %78 : vector<448x112xf32>
    %c5_47 = arith.constant 5 : index
    %c0_48 = arith.constant 0 : index
    %c0_49 = arith.constant 0 : index
    %80 = vector.load %arg5[%c5_47, %c0_48, %c0_49] : memref<6x448x180xf32, #tpu.memory_space<vmem>>, vector<1x448x180xf32>
    %81 = vector.shape_cast %80 : vector<1x448x180xf32> to vector<448x180xf32>
    %cst_50 = arith.constant dense<0.000000e+00> : vector<448x112xf32>
    %82 = tpu.matmul %81, %61, %cst_50 {dimension_numbers = #tpu.dot_dimension_numbers<[1], [0], [0], [1], [0, 0, 1, 1], [], []>} : vector<448x180xf32>, vector<180x112xf32>, vector<448x112xf32> -> vector<448x112xf32>
    %83 = arith.addf %79, %82 : vector<448x112xf32>
    %84 = arith.maximumf %72, %83 : vector<448x112xf32>
    %c0_51 = arith.constant 0 : index
    %c0_52 = arith.constant 0 : index
    %85 = vector.load %arg6[%c0_51, %c0_52] : memref<448x1xf32, #tpu.memory_space<vmem>>, vector<448x1xf32>
    %86 = vector.broadcast %85 : vector<448x1xf32> to vector<448x112xf32>
    %87 = arith.addf %84, %86 : vector<448x112xf32>
    %cst_53 = arith.constant 0.000000e+00 : f32
    %88 = vector.broadcast %cst_53 : f32 to vector<448x112xf32>
    %89 = arith.maximumf %87, %88 : vector<448x112xf32>
    %90 = vector.extract_strided_slice %89 {offsets = [0, 0], sizes = [448, 111], strides = [1, 1]} : vector<448x112xf32> to vector<448x111xf32>
    %91 = vector.extract_strided_slice %89 {offsets = [0, 1], sizes = [448, 111], strides = [1, 1]} : vector<448x112xf32> to vector<448x111xf32>
    %92 = arith.maximumf %90, %91 : vector<448x111xf32>
    %c0_54 = arith.constant 0 : index
    %c0_55 = arith.constant 0 : index
    %93 = vector.load %arg7[%c0_54, %c0_55] : memref<111x56xf32, #tpu.memory_space<vmem>>, vector<111x56xf32>
    %cst_56 = arith.constant dense<0.000000e+00> : vector<448x56xf32>
    %94 = tpu.matmul %92, %93, %cst_56 {dimension_numbers = #tpu.dot_dimension_numbers<[1], [0], [0], [1], [0, 0, 1, 1], [], []>} : vector<448x111xf32>, vector<111x56xf32>, vector<448x56xf32> -> vector<448x56xf32>
    %c0_57 = arith.constant 0 : index
    %c0_58 = arith.constant 0 : index
    %95 = vector.load %arg8[%c0_57, %c0_58] : memref<448x56xf32, #tpu.memory_space<vmem>>, vector<448x56xf32>
    %96 = arith.mulf %94, %95 : vector<448x56xf32>
    %c0_59 = arith.constant 0 : index
    %c0_60 = arith.constant 0 : index
    %97 = vector.load %arg9[%c0_59, %c0_60] : memref<56x4xf32, #tpu.memory_space<vmem>>, vector<56x4xf32>
    %cst_61 = arith.constant dense<0.000000e+00> : vector<448x4xf32>
    %98 = tpu.matmul %96, %97, %cst_61 {dimension_numbers = #tpu.dot_dimension_numbers<[1], [0], [0], [1], [0, 0, 1, 1], [], []>} : vector<448x56xf32>, vector<56x4xf32>, vector<448x4xf32> -> vector<448x4xf32>
    %cst_62 = arith.constant dense<0.000000e+00> : vector<4xf32>
    %99 = vector.multi_reduction <add>, %98, %cst_62 [0] : vector<448x4xf32> to vector<4xf32>
    %100 = vector.shape_cast %99 : vector<4xf32> to vector<1x4xf32>
    %c0_63 = arith.constant 0 : index
    %c0_64 = arith.constant 0 : index
    %101 = vector.load %arg10[%c0_63, %c0_64] : memref<1x1xf32, #tpu.memory_space<vmem>>, vector<1x1xf32>
    %102 = vector.broadcast %101 : vector<1x1xf32> to vector<1x4xf32>
    %103 = arith.addf %100, %102 : vector<1x4xf32>
    %cst_65 = arith.constant 0.000000e+00 : f32
    %104 = vector.broadcast %cst_65 : f32 to vector<1x4xf32>
    %105 = arith.subf %104, %103 : vector<1x4xf32>
    %106 = math.exp %105 : vector<1x4xf32>
    %cst_66 = arith.constant 1.000000e+00 : f32
    %107 = vector.broadcast %cst_66 : f32 to vector<1x4xf32>
    %108 = arith.addf %107, %106 : vector<1x4xf32>
    %cst_67 = arith.constant 1.000000e+00 : f32
    %109 = vector.broadcast %cst_67 : f32 to vector<1x4xf32>
    %110 = arith.divf %109, %108 : vector<1x4xf32>
    %c0_68 = arith.constant 0 : index
    %c0_69 = arith.constant 0 : index
    %c0_70 = arith.constant 0 : index
    %111 = vector.load %arg11[%c0_68, %c0_69, %c0_70] : memref<1x1x4xf32, #tpu.memory_space<vmem>>, vector<1x1x4xf32>
    %112 = vector.shape_cast %111 : vector<1x1x4xf32> to vector<1x4xf32>
    %113 = vector.shape_cast %110 : vector<1x4xf32> to vector<1x1x4xf32>
    tpu.vector_store %arg11[%c0_68, %c0_69, %c0_70], %113 {strides = array<i32>} : memref<1x1x4xf32, #tpu.memory_space<vmem>>, vector<1x1x4xf32>,
    return
  }
  func.func @transform_0(%arg0: i32) -> (i32, i32, i32, i32) {
    %c0_i32 = arith.constant 0 : i32
    %c0_i32_0 = arith.constant 0 : i32
    %c0_i32_1 = arith.constant 0 : i32
    %c0_i32_2 = arith.constant 0 : i32
    return %arg0, %c0_i32, %c0_i32_0, %c0_i32_1 : i32, i32, i32, i32
  }
  func.func @transform_1(%arg0: i32) -> (i32, i32, i32) {
    %c0_i32 = arith.constant 0 : i32
    %c0_i32_0 = arith.constant 0 : i32
    %c0_i32_1 = arith.constant 0 : i32
    %c0_i32_2 = arith.constant 0 : i32
    return %c0_i32, %c0_i32_0, %c0_i32_1 : i32, i32, i32
  }
  func.func @transform_2(%arg0: i32) -> (i32, i32) {
    %c0_i32 = arith.constant 0 : i32
    %c0_i32_0 = arith.constant 0 : i32
    %c0_i32_1 = arith.constant 0 : i32
    return %c0_i32, %c0_i32_0 : i32, i32
  }
  func.func @transform_3(%arg0: i32) -> (i32, i32) {
    %c0_i32 = arith.constant 0 : i32
    %c0_i32_0 = arith.constant 0 : i32
    %c0_i32_1 = arith.constant 0 : i32
    return %c0_i32, %c0_i32_0 : i32, i32
  }
  func.func @transform_4(%arg0: i32) -> (i32, i32, i32) {
    %c0_i32 = arith.constant 0 : i32
    %c0_i32_0 = arith.constant 0 : i32
    %c0_i32_1 = arith.constant 0 : i32
    %c0_i32_2 = arith.constant 0 : i32
    return %c0_i32, %c0_i32_0, %c0_i32_1 : i32, i32, i32
  }
  func.func @transform_5(%arg0: i32) -> (i32, i32) {
    %c0_i32 = arith.constant 0 : i32
    %c0_i32_0 = arith.constant 0 : i32
    %c0_i32_1 = arith.constant 0 : i32
    return %c0_i32, %c0_i32_0 : i32, i32
  }
  func.func @transform_6(%arg0: i32) -> (i32, i32) {
    %c0_i32 = arith.constant 0 : i32
    %c0_i32_0 = arith.constant 0 : i32
    %c0_i32_1 = arith.constant 0 : i32
    return %c0_i32, %c0_i32_0 : i32, i32
  }
  func.func @transform_7(%arg0: i32) -> (i32, i32) {
    %c0_i32 = arith.constant 0 : i32
    %c0_i32_0 = arith.constant 0 : i32
    %c0_i32_1 = arith.constant 0 : i32
    return %c0_i32, %c0_i32_0 : i32, i32
  }
  func.func @transform_8(%arg0: i32) -> (i32, i32) {
    %c0_i32 = arith.constant 0 : i32
    %c0_i32_0 = arith.constant 0 : i32
    %c0_i32_1 = arith.constant 0 : i32
    return %c0_i32, %c0_i32_0 : i32, i32
  }
  func.func @transform_9(%arg0: i32) -> (i32, i32) {
    %c0_i32 = arith.constant 0 : i32
    %c0_i32_0 = arith.constant 0 : i32
    %c0_i32_1 = arith.constant 0 : i32
    return %c0_i32, %c0_i32_0 : i32, i32
  }
  func.func @transform_10(%arg0: i32) -> (i32, i32, i32) {
    %c0_i32 = arith.constant 0 : i32
    %c0_i32_0 = arith.constant 0 : i32
    %c0_i32_1 = arith.constant 0 : i32
    return %arg0, %c0_i32, %c0_i32_0 : i32, i32, i32
  }
}

</mosaic_0001>

<llo_original>
// kernel: image_classification_forward.1
$region0: #{image_classification_forward.1}
  #allocation0 [shape = 'u32[]', space=smem, size = 0x4, offset = 0x4, fixed_abs, tag = 'smem constant byte address 0x4 - core index']
  #allocation1 [shape = 'u32[144,128]{1,0:T(1,128)}', space=vmem, size = 0x12000, scoped, tag = 'internal scratch']
  #allocation2 [shape = 'f32[1,1]{1,0:T(1,128)S(1)}', space=vmem, size = 0x200, scoped, tag = 'scoped memory for image_classification_forward.1']
  %s0 = inlined_call_operand.vmem [shape: f32[1,3,62,240], index: 0, kind: input, shape index: {}]
  %s1 = inlined_call_operand.vmem [shape: f32[6,180,62], index: 1, kind: input, shape index: {}]
  %s2 = inlined_call_operand.vmem [shape: f32[180,1], index: 2, kind: input, shape index: {}]
  %s3 = inlined_call_operand.vmem [shape: f32[239,120], index: 3, kind: input, shape index: {}]
  %s4 = inlined_call_operand.vmem [shape: f32[6,448,180], index: 4, kind: input, shape index: {}]
  %s5 = inlined_call_operand.vmem [shape: f32[448,1], index: 5, kind: input, shape index: {}]
  %s6 = inlined_call_operand.vmem [shape: f32[111,56], index: 6, kind: input, shape index: {}]
  %s7 = inlined_call_operand.vmem [shape: f32[448,56], index: 7, kind: input, shape index: {}]
  %s8 = inlined_call_operand.vmem [shape: f32[56,4], index: 8, kind: input, shape index: {}]
  %s9 = inlined_call_operand.<no memory space> [shape: f32[1,1], index: 9, kind: input, shape index: {}]
  %s10 = inlined_call_operand.vmem [shape: f32[1,1,4], index: 10, kind: output, shape index: {}]
  %s11 = sld [smem:[#allocation0]]
  $region50: #{image_classification_forward.1} parent=0
    _
  %s13 = ssub.s32 1, %s11
  %s14 = scalar_select 0, %s13, %s11
  %v15 = vstv %s9
  %16 = vst [vmem:[#allocation2] sm:$0x1] %v15
  // Predicated region
  $region2: #{image_classification_forward.1} parent=0 // pred_check
    _
  $region3: #{image_classification_forward.1} parent=0 // pred_check_branch
    %18 = sbr.rel (0) target = $region5
  $region4: #{image_classification_forward.1} parent=0 // pred_region
    _
  $region5: #{image_classification_forward.1} parent=0 // pred_fallthru
    _
  // Predicated region
  $region6: #{image_classification_forward.1} parent=0 // pred_check
    _
  $region7: #{image_classification_forward.1} parent=0 // pred_check_branch
    %20 = sbr.rel (0) target = $region9
  $region8: #{image_classification_forward.1} parent=0 // pred_region
    _
  $region9: #{image_classification_forward.1} parent=0 // pred_fallthru
    _
  // Predicated region
  $region10: #{image_classification_forward.1} parent=0 // pred_check
    _
  $region11: #{image_classification_forward.1} parent=0 // pred_check_branch
    %22 = sbr.rel (0) target = $region13
  $region12: #{image_classification_forward.1} parent=0 // pred_region
    _
  $region13: #{image_classification_forward.1} parent=0 // pred_fallthru
    _
  // Predicated region
  $region14: #{image_classification_forward.1} parent=0 // pred_check
    _
  $region15: #{image_classification_forward.1} parent=0 // pred_check_branch
    %24 = sbr.rel (0) target = $region17
  $region16: #{image_classification_forward.1} parent=0 // pred_region
    _
  $region17: #{image_classification_forward.1} parent=0 // pred_fallthru
    _
  // Predicated region
  $region18: #{image_classification_forward.1} parent=0 // pred_check
    _
  $region19: #{image_classification_forward.1} parent=0 // pred_check_branch
    %26 = sbr.rel (0) target = $region21
  $region20: #{image_classification_forward.1} parent=0 // pred_region
    _
  $region21: #{image_classification_forward.1} parent=0 // pred_fallthru
    _
  // Predicated region
  $region22: #{image_classification_forward.1} parent=0 // pred_check
    _
  $region23: #{image_classification_forward.1} parent=0 // pred_check_branch
    %28 = sbr.rel (0) target = $region25
  $region24: #{image_classification_forward.1} parent=0 // pred_region
    _
  $region25: #{image_classification_forward.1} parent=0 // pred_fallthru
    _
  // Predicated region
  $region26: #{image_classification_forward.1} parent=0 // pred_check
    _
  $region27: #{image_classification_forward.1} parent=0 // pred_check_branch
    %30 = sbr.rel (0) target = $region29
  $region28: #{image_classification_forward.1} parent=0 // pred_region
    _
  $region29: #{image_classification_forward.1} parent=0 // pred_fallthru
    _
  // Predicated region
  $region30: #{image_classification_forward.1} parent=0 // pred_check
    _
  $region31: #{image_classification_forward.1} parent=0 // pred_check_branch
    %32 = sbr.rel (0) target = $region33
  $region32: #{image_classification_forward.1} parent=0 // pred_region
    _
  $region33: #{image_classification_forward.1} parent=0 // pred_fallthru
    _
  // Predicated region
  $region34: #{image_classification_forward.1} parent=0 // pred_check
    _
  $region35: #{image_classification_forward.1} parent=0 // pred_check_branch
    %34 = sbr.rel (0) target = $region37
  $region36: #{image_classification_forward.1} parent=0 // pred_region
    _
  $region37: #{image_classification_forward.1} parent=0 // pred_fallthru
    _
  // Predicated region
  $region38: #{image_classification_forward.1} parent=0 // pred_check
    _
  $region39: #{image_classification_forward.1} parent=0 // pred_check_branch
    %36 = sbr.rel (0) target = $region41
  $region40: #{image_classification_forward.1} parent=0 // pred_region
    _
  $region41: #{image_classification_forward.1} parent=0 // pred_fallthru
    _
  %v37 = vld [vmem:[%s0] sm:$0xff]
  %v38 = vld [vmem:[%s0 + $0x8] sm:$0xff]
  %v39 = vld [vmem:[%s0 + $0x10] sm:$0xff]
  %v40 = vld [vmem:[%s0 + $0x18] sm:$0xff]
  %v41 = vld [vmem:[%s0 + $0x20] sm:$0xff]
  %v42 = vld [vmem:[%s0 + $0x28] sm:$0xff]
  %v43 = vld [vmem:[%s0 + $0x30] sm:$0xff]
  %v44 = vld [vmem:[%s0 + $0x38] sm:$0xff]
  %v45 = vld [vmem:[%s0 + $0x40] sm:$0xff]
  %v46 = vld [vmem:[%s0 + $0x48] sm:$0xff]
  %v47 = vld [vmem:[%s0 + $0x50] sm:$0xff]
  %v48 = vld [vmem:[%s0 + $0x58] sm:$0xff]
  %v49 = vld [vmem:[%s0 + $0x60] sm:$0xff]
  %v50 = vld [vmem:[%s0 + $0x68] sm:$0xff]
  %v51 = vld [vmem:[%s0 + $0x70] sm:$0x3f]
  %v52 = vld [vmem:[%s0 + $0x78] sm:$0x3f]
  %v53 = vld [vmem:[%s0 + $0x80] sm:$0xff]
  %v54 = vld [vmem:[%s0 + $0x88] sm:$0xff]
  %v55 = vld [vmem:[%s0 + $0x90] sm:$0xff]
  %v56 = vld [vmem:[%s0 + $0x98] sm:$0xff]
  %v57 = vld [vmem:[%s0 + $0xa0] sm:$0xff]
  %v58 = vld [vmem:[%s0 + $0xa8] sm:$0xff]
  %v59 = vld [vmem:[%s0 + $0xb0] sm:$0xff]
  %v60 = vld [vmem:[%s0 + $0xb8] sm:$0xff]
  %v61 = vld [vmem:[%s0 + $0xc0] sm:$0xff]
  %v62 = vld [vmem:[%s0 + $0xc8] sm:$0xff]
  %v63 = vld [vmem:[%s0 + $0xd0] sm:$0xff]
  %v64 = vld [vmem:[%s0 + $0xd8] sm:$0xff]
  %v65 = vld [vmem:[%s0 + $0xe0] sm:$0xff]
  %v66 = vld [vmem:[%s0 + $0xe8] sm:$0xff]
  %v67 = vld [vmem:[%s0 + $0xf0] sm:$0x3f]
  %v68 = vld [vmem:[%s0 + $0xf8] sm:$0x3f]
  %v69 = vld [vmem:[%s0 + $0x100] sm:$0xff]
  %v70 = vld [vmem:[%s0 + $0x108] sm:$0xff]
  %v71 = vld [vmem:[%s0 + $0x110] sm:$0xff]
  %v72 = vld [vmem:[%s0 + $0x118] sm:$0xff]
  %v73 = vld [vmem:[%s0 + $0x120] sm:$0xff]
  %v74 = vld [vmem:[%s0 + $0x128] sm:$0xff]
  %v75 = vld [vmem:[%s0 + $0x130] sm:$0xff]
  %v76 = vld [vmem:[%s0 + $0x138] sm:$0xff]
  %v77 = vld [vmem:[%s0 + $0x140] sm:$0xff]
  %v78 = vld [vmem:[%s0 + $0x148] sm:$0xff]
  %v79 = vld [vmem:[%s0 + $0x150] sm:$0xff]
  %v80 = vld [vmem:[%s0 + $0x158] sm:$0xff]
  %v81 = vld [vmem:[%s0 + $0x160] sm:$0xff]
  %v82 = vld [vmem:[%s0 + $0x168] sm:$0xff]
  %v83 = vld [vmem:[%s0 + $0x170] sm:$0x3f]
  %v84 = vld [vmem:[%s0 + $0x178] sm:$0x3f]
  %v85 = vld [vmem:[%s1] sm:$0xff]
  %v86 = vld [vmem:[%s1 + $0x8] sm:$0xff]
  %v87 = vld [vmem:[%s1 + $0x10] sm:$0xff]
  %v88 = vld [vmem:[%s1 + $0x18] sm:$0xff]
  %v89 = vld [vmem:[%s1 + $0x20] sm:$0xff]
  %v90 = vld [vmem:[%s1 + $0x28] sm:$0xff]
  %v91 = vld [vmem:[%s1 + $0x30] sm:$0xff]
  %v92 = vld [vmem:[%s1 + $0x38] sm:$0xff]
  %v93 = vld [vmem:[%s1 + $0x40] sm:$0xff]
  %v94 = vld [vmem:[%s1 + $0x48] sm:$0xff]
  %v95 = vld [vmem:[%s1 + $0x50] sm:$0xff]
  %v96 = vld [vmem:[%s1 + $0x58] sm:$0xff]
  %v97 = vld [vmem:[%s1 + $0x60] sm:$0xff]
  %v98 = vld [vmem:[%s1 + $0x68] sm:$0xff]
  %v99 = vld [vmem:[%s1 + $0x70] sm:$0xff]
  %v100 = vld [vmem:[%s1 + $0x78] sm:$0xff]
  %v101 = vld [vmem:[%s1 + $0x80] sm:$0xff]
  %v102 = vld [vmem:[%s1 + $0x88] sm:$0xff]
  %v103 = vld [vmem:[%s1 + $0x90] sm:$0xff]
  %v104 = vld [vmem:[%s1 + $0x98] sm:$0xff]
  %v105 = vld [vmem:[%s1 + $0xa0] sm:$0xff]
  %v106 = vld [vmem:[%s1 + $0xa8] sm:$0xff]
  %v107 = vld [vmem:[%s1 + $0xb0] sm:$0xf]
  %s108 = scalar_lea.vmem %s1, 368
  %v109 = vld [vmem:[%s108] sm:$0xff]
  %v110 = vld [vmem:[%s108 + $0x8] sm:$0xff]
  %v111 = vld [vmem:[%s108 + $0x10] sm:$0xff]
  %v112 = vld [vmem:[%s108 + $0x18] sm:$0xff]
  %v113 = vld [vmem:[%s108 + $0x20] sm:$0xff]
  %v114 = vld [vmem:[%s108 + $0x28] sm:$0xff]
  %v115 = vld [vmem:[%s108 + $0x30] sm:$0xff]
  %v116 = vld [vmem:[%s108 + $0x38] sm:$0xff]
  %v117 = vld [vmem:[%s108 + $0x40] sm:$0xff]
  %v118 = vld [vmem:[%s108 + $0x48] sm:$0xff]
  %v119 = vld [vmem:[%s108 + $0x50] sm:$0xff]
  %v120 = vld [vmem:[%s108 + $0x58] sm:$0xff]
  %v121 = vld [vmem:[%s108 + $0x60] sm:$0xff]
  %v122 = vld [vmem:[%s108 + $0x68] sm:$0xff]
  %v123 = vld [vmem:[%s108 + $0x70] sm:$0xff]
  %v124 = vld [vmem:[%s108 + $0x78] sm:$0xff]
  %v125 = vld [vmem:[%s108 + $0x80] sm:$0xff]
  %v126 = vld [vmem:[%s108 + $0x88] sm:$0xff]
  %v127 = vld [vmem:[%s108 + $0x90] sm:$0xff]
  %v128 = vld [vmem:[%s108 + $0x98] sm:$0xff]
  %v129 = vld [vmem:[%s108 + $0xa0] sm:$0xff]
  %v130 = vld [vmem:[%s108 + $0xa8] sm:$0xff]
  %v131 = vld [vmem:[%s108 + $0xb0] sm:$0xf]
  %vm132 = vcmask 506880
  %v134 = vsel %vm132, %v109, 0
  %v137 = vsel %vm132, %v110, 0
  %v140 = vsel %vm132, %v111, 0
  %v143 = vsel %vm132, %v112, 0
  %v146 = vsel %vm132, %v113, 0
  %v149 = vsel %vm132, %v114, 0
  %v152 = vsel %vm132, %v115, 0
  %v155 = vsel %vm132, %v116, 0
  %v158 = vsel %vm132, %v117, 0
  %v161 = vsel %vm132, %v118, 0
  %v164 = vsel %vm132, %v119, 0
  %v167 = vsel %vm132, %v120, 0
  %v170 = vsel %vm132, %v121, 0
  %v173 = vsel %vm132, %v122, 0
  %v176 = vsel %vm132, %v123, 0
  %v179 = vsel %vm132, %v124, 0
  %v182 = vsel %vm132, %v125, 0
  %v185 = vsel %vm132, %v126, 0
  %v188 = vsel %vm132, %v127, 0
  %v191 = vsel %vm132, %v128, 0
  %v194 = vsel %vm132, %v129, 0
  %v197 = vsel %vm132, %v130, 0
  %v200 = vsel %vm132, %v131, 0
  %vm202 = vcmask 1045504
  %v204 = vsel %vm202, %v67, 0
  %v207 = vsel %vm202, %v68, 0
  %209 = vmatprep.subr.mxu0 %v54
  %210 = vmatpush1.msra.mxu0 %v53
  %211 = vmatprep.subr.mxu0 %v56
  %212 = vmatpush1.msra.mxu0 %v55
  %213 = vmatprep.subr.mxu0 %v58
  %214 = vmatpush1.msra.mxu0 %v57
  %215 = vmatprep.subr.mxu0 %v60
  %216 = vmatpush1.msra.mxu0 %v59
  %217 = vmatprep.subr.mxu0 %v62
  %218 = vmatpush1.msra.mxu0 %v61
  %219 = vmatprep.subr.mxu0 %v64
  %220 = vmatpush1.msra.mxu0 %v63
  %221 = vmatprep.subr.mxu0 %v66
  %222 = vmatpush1.msra.mxu0 %v65
  %223 = vmatprep.subr.mxu0 %v207
  %224 = vmatpush1.msra.mxu0 %v204
  %225 = vmatprep.subr.mxu0 0.0
  %226 = vmatpush1.msra.mxu0 0.0
  %227 = vmatprep.subr.mxu0 0.0
  %228 = vmatpush1.msra.mxu0 0.0
  %229 = vmatprep.subr.mxu0 0.0
  %230 = vmatpush1.msra.mxu0 0.0
  %231 = vmatprep.subr.mxu0 0.0
  %232 = vmatpush1.msra.mxu0 0.0
  %233 = vmatprep.subr.mxu0 0.0
  %234 = vmatpush1.msra.mxu0 0.0
  %235 = vmatprep.subr.mxu0 0.0
  %236 = vmatpush1.msra.mxu0 0.0
  %237 = vmatprep.subr.mxu0 0.0
  %238 = vmatpush1.msra.mxu0 0.0
  %239 = vmatprep.subr.mxu0 0.0
  %240 = vmatpush1.msra.mxu0 0.0
  %241 = vmatprep.subr.mxu0 0.0
  %242 = vmatpush1.msra.mxu0 0.0
  %243 = vmatprep.subr.mxu0 0.0
  %244 = vmatpush1.msra.mxu0 0.0
  %245 = vmatprep.subr.mxu0 0.0
  %246 = vmatpush1.msra.mxu0 0.0
  %247 = vmatprep.subr.mxu0 0.0
  %248 = vmatpush1.msra.mxu0 0.0
  %249 = vmatprep.subr.mxu0 0.0
  %250 = vmatpush1.msra.mxu0 0.0
  %251 = vmatprep.subr.mxu0 0.0
  %252 = vmatpush1.msra.mxu0 0.0
  %253 = vmatprep.subr.mxu0 0.0
  %254 = vmatpush1.msra.mxu0 0.0
  %255 = vmatprep.subr.mxu0 0.0
  %256 = vmatpush1.msra.mxu0 0.0
  %257 = vmatprep.subr.mxu0 0.0
  %258 = vmatpush1.msra.mxu0 0.0
  %259 = vmatprep.subr.mxu0 0.0
  %260 = vmatpush1.msra.mxu0 0.0
  %261 = vmatprep.subr.mxu0 0.0
  %262 = vmatpush1.msra.mxu0 0.0
  %263 = vmatprep.subr.mxu0 0.0
  %264 = vmatpush1.msra.mxu0 0.0
  %265 = vmatprep.subr.mxu0 0.0
  %266 = vmatpush1.msra.mxu0 0.0
  %267 = vmatprep.subr.mxu0 0.0
  %268 = vmatpush1.msra.mxu0 0.0
  %269 = vmatprep.subr.mxu0 0.0
  %270 = vmatpush1.msra.mxu0 0.0
  %271 = vmatprep.subr.mxu0 0.0
  %272 = vmatpush1.msra.mxu0 0.0
  %273 = vmatprep.mubr.f32.mxu0 0.0
  %274 = vmatmul.mubr.f32.gmra.mrb[0].mxu0 %v134
  %v275 = vpop.f32.mrb[0].mxu0
  %v276 = vadd.f32 0.0, %v275
  %v277 = vpop.f32.mrb[0].mxu0
  %v278 = vadd.f32 0.0, %v277
  %279 = vmatprep.mubr.f32.mxu0 0.0
  %280 = vmatmul.mubr.f32.gmra.mrb[0].mxu0 %v137
  %v281 = vpop.f32.mrb[0].mxu0
  %v282 = vadd.f32 0.0, %v281
  %v283 = vpop.f32.mrb[0].mxu0
  %v284 = vadd.f32 0.0, %v283
  %285 = vmatprep.mubr.f32.mxu0 0.0
  %286 = vmatmul.mubr.f32.gmra.mrb[0].mxu0 %v140
  %v287 = vpop.f32.mrb[0].mxu0
  %v288 = vadd.f32 0.0, %v287
  %v289 = vpop.f32.mrb[0].mxu0
  %v290 = vadd.f32 0.0, %v289
  %291 = vmatprep.mubr.f32.mxu0 0.0
  %292 = vmatmul.mubr.f32.gmra.mrb[0].mxu0 %v143
  %v293 = vpop.f32.mrb[0].mxu0
  %v294 = vadd.f32 0.0, %v293
  %v295 = vpop.f32.mrb[0].mxu0
  %v296 = vadd.f32 0.0, %v295
  %297 = vmatprep.mubr.f32.mxu0 0.0
  %298 = vmatmul.mubr.f32.gmra.mrb[0].mxu0 %v146
  %v299 = vpop.f32.mrb[0].mxu0
  %v300 = vadd.f32 0.0, %v299
  %v301 = vpop.f32.mrb[0].mxu0
  %v302 = vadd.f32 0.0, %v301
  %303 = vmatprep.mubr.f32.mxu0 0.0
  %304 = vmatmul.mubr.f32.gmra.mrb[0].mxu0 %v149
  %v305 = vpop.f32.mrb[0].mxu0
  %v306 = vadd.f32 0.0, %v305
  %v307 = vpop.f32.mrb[0].mxu0
  %v308 = vadd.f32 0.0, %v307
  %309 = vmatprep.mubr.f32.mxu0 0.0
  %310 = vmatmul.mubr.f32.gmra.mrb[0].mxu0 %v152
  %v311 = vpop.f32.mrb[0].mxu0
  %v312 = vadd.f32 0.0, %v311
  %v313 = vpop.f32.mrb[0].mxu0
  %v314 = vadd.f32 0.0, %v313
  %315 = vmatprep.mubr.f32.mxu0 0.0
  %316 = vmatmul.mubr.f32.gmra.mrb[0].mxu0 %v155
  %v317 = vpop.f32.mrb[0].mxu0
  %v318 = vadd.f32 0.0, %v317
  %v319 = vpop.f32.mrb[0].mxu0
  %v320 = vadd.f32 0.0, %v319
  %321 = vmatprep.mubr.f32.mxu0 0.0
  %322 = vmatmul.mubr.f32.gmra.mrb[0].mxu0 %v158
  %v323 = vpop.f32.mrb[0].mxu0
  %v324 = vadd.f32 0.0, %v323
  %v325 = vpop.f32.mrb[0].mxu0
  %v326 = vadd.f32 0.0, %v325
  %327 = vmatprep.mubr.f32.mxu0 0.0
  %328 = vmatmul.mubr.f32.gmra.mrb[0].mxu0 %v161
  %v329 = vpop.f32.mrb[0].mxu0
  %v330 = vadd.f32 0.0, %v329
  %v331 = vpop.f32.mrb[0].mxu0
  %v332 = vadd.f32 0.0, %v331
  %333 = vmatprep.mubr.f32.mxu0 0.0
  %334 = vmatmul.mubr.f32.gmra.mrb[0].mxu0 %v164
  %v335 = vpop.f32.mrb[0].mxu0
  %v336 = vadd.f32 0.0, %v335
  %v337 = vpop.f32.mrb[0].mxu0
  %v338 = vadd.f32 0.0, %v337
  %339 = vmatprep.mubr.f32.mxu0 0.0
  %340 = vmatmul.mubr.f32.gmra.mrb[0].mxu0 %v167
  %v341 = vpop.f32.mrb[0].mxu0
  %v342 = vadd.f32 0.0, %v341
  %v343 = vpop.f32.mrb[0].mxu0
  %v344 = vadd.f32 0.0, %v343
  %345 = vmatprep.mubr.f32.mxu0 0.0
  %346 = vmatmul.mubr.f32.gmra.mrb[0].mxu0 %v170
  %v347 = vpop.f32.mrb[0].mxu0
  %v348 = vadd.f32 0.0, %v347
  %v349 = vpop.f32.mrb[0].mxu0
  %v350 = vadd.f32 0.0, %v349
  %351 = vmatprep.mubr.f32.mxu0 0.0
  %352 = vmatmul.mubr.f32.gmra.mrb[0].mxu0 %v173
  %v353 = vpop.f32.mrb[0].mxu0
  %v354 = vadd.f32 0.0, %v353
  %v355 = vpop.f32.mrb[0].mxu0
  %v356 = vadd.f32 0.0, %v355
  %357 = vmatprep.mubr.f32.mxu0 0.0
  %358 = vmatmul.mubr.f32.gmra.mrb[0].mxu0 %v176
  %v359 = vpop.f32.mrb[0].mxu0
  %v360 = vadd.f32 0.0, %v359
  %v361 = vpop.f32.mrb[0].mxu0
  %v362 = vadd.f32 0.0, %v361
  %363 = vmatprep.mubr.f32.mxu0 0.0
  %364 = vmatmul.mubr.f32.gmra.mrb[0].mxu0 %v179
  %v365 = vpop.f32.mrb[0].mxu0
  %v366 = vadd.f32 0.0, %v365
  %v367 = vpop.f32.mrb[0].mxu0
  %v368 = vadd.f32 0.0, %v367
  %369 = vmatprep.mubr.f32.mxu0 0.0
  %370 = vmatmul.mubr.f32.gmra.mrb[0].mxu0 %v182
  %v371 = vpop.f32.mrb[0].mxu0
  %v372 = vadd.f32 0.0, %v371
  %v373 = vpop.f32.mrb[0].mxu0
  %v374 = vadd.f32 0.0, %v373
  %375 = vmatprep.mubr.f32.mxu0 0.0
  %376 = vmatmul.mubr.f32.gmra.mrb[0].mxu0 %v185
  %v377 = vpop.f32.mrb[0].mxu0
  %v378 = vadd.f32 0.0, %v377
  %v379 = vpop.f32.mrb[0].mxu0
  %v380 = vadd.f32 0.0, %v379
  %381 = vmatprep.mubr.f32.mxu0 0.0
  %382 = vmatmul.mubr.f32.gmra.mrb[0].mxu0 %v188
  %v383 = vpop.f32.mrb[0].mxu0
  %v384 = vadd.f32 0.0, %v383
  %v385 = vpop.f32.mrb[0].mxu0
  %v386 = vadd.f32 0.0, %v385
  %387 = vmatprep.mubr.f32.mxu0 0.0
  %388 = vmatmul.mubr.f32.gmra.mrb[0].mxu0 %v191
  %v389 = vpop.f32.mrb[0].mxu0
  %v390 = vadd.f32 0.0, %v389
  %v391 = vpop.f32.mrb[0].mxu0
  %v392 = vadd.f32 0.0, %v391
  %393 = vmatprep.mubr.f32.mxu0 0.0
  %394 = vmatmul.mubr.f32.gmra.mrb[0].mxu0 %v194
  %v395 = vpop.f32.mrb[0].mxu0
  %v396 = vadd.f32 0.0, %v395
  %v397 = vpop.f32.mrb[0].mxu0
  %v398 = vadd.f32 0.0, %v397
  %399 = vmatprep.mubr.f32.mxu0 0.0
  %400 = vmatmul.mubr.f32.gmra.mrb[0].mxu0 %v197
  %v401 = vpop.f32.mrb[0].mxu0
  %v402 = vadd.f32 0.0, %v401
  %v403 = vpop.f32.mrb[0].mxu0
  %v404 = vadd.f32 0.0, %v403
  %405 = vmatprep.mubr.f32.mxu0 0.0
  %406 = vmatmul.mubr.f32.gmra.mrb[0].mxu0 %v200
  %v407 = vpop.f32.mrb[0].mxu0
  %v408 = vadd.f32 0.0, %v407
  %v409 = vpop.f32.mrb[0].mxu0
  %v410 = vadd.f32 0.0, %v409
  %411 = vdwg.mxu0
  %v413 = vsel %vm132, %v85, 0
  %v416 = vsel %vm132, %v86, 0
  %v419 = vsel %vm132, %v87, 0
  %v422 = vsel %vm132, %v88, 0
  %v425 = vsel %vm132, %v89, 0
  %v428 = vsel %vm132, %v90, 0
  %v431 = vsel %vm132, %v91, 0
  %v434 = vsel %vm132, %v92, 0
  %v437 = vsel %vm132, %v93, 0
  %v440 = vsel %vm132, %v94, 0
  %v443 = vsel %vm132, %v95, 0
  %v446 = vsel %vm132, %v96, 0
  %v449 = vsel %vm132, %v97, 0
  %v452 = vsel %vm132, %v98, 0
  %v455 = vsel %vm132, %v99, 0
  %v458 = vsel %vm132, %v100, 0
  %v461 = vsel %vm132, %v101, 0
  %v464 = vsel %vm132, %v102, 0
  %v467 = vsel %vm132, %v103, 0
  %v470 = vsel %vm132, %v104, 0
  %v473 = vsel %vm132, %v105, 0
  %v476 = vsel %vm132, %v106, 0
  %v479 = vsel %vm132, %v107, 0
  %v482 = vsel %vm202, %v51, 0
  %v485 = vsel %vm202, %v52, 0
  %487 = vmatprep.subr.mxu0 %v38
  %488 = vmatpush1.msra.mxu0 %v37
  %489 = vmatprep.subr.mxu0 %v40
  %490 = vmatpush1.msra.mxu0 %v39
  %491 = vmatprep.subr.mxu0 %v42
  %492 = vmatpush1.msra.mxu0 %v41
  %493 = vmatprep.subr.mxu0 %v44
  %494 = vmatpush1.msra.mxu0 %v43
  %495 = vmatprep.subr.mxu0 %v46
  %496 = vmatpush1.msra.mxu0 %v45
  %497 = vmatprep.subr.mxu0 %v48
  %498 = vmatpush1.msra.mxu0 %v47
  %499 = vmatprep.subr.mxu0 %v50
  %500 = vmatpush1.msra.mxu0 %v49
  %501 = vmatprep.subr.mxu0 %v485
  %502 = vmatpush1.msra.mxu0 %v482
  %503 = vmatprep.subr.mxu0 0.0
  %504 = vmatpush1.msra.mxu0 0.0
  %505 = vmatprep.subr.mxu0 0.0
  %506 = vmatpush1.msra.mxu0 0.0
  %507 = vmatprep.subr.mxu0 0.0
  %508 = vmatpush1.msra.mxu0 0.0
  %509 = vmatprep.subr.mxu0 0.0
  %510 = vmatpush1.msra.mxu0 0.0
  %511 = vmatprep.subr.mxu0 0.0
  %512 = vmatpush1.msra.mxu0 0.0
  %513 = vmatprep.subr.mxu0 0.0
  %514 = vmatpush1.msra.mxu0 0.0
  %515 = vmatprep.subr.mxu0 0.0
  %516 = vmatpush1.msra.mxu0 0.0
  %517 = vmatprep.subr.mxu0 0.0
  %518 = vmatpush1.msra.mxu0 0.0
  %519 = vmatprep.subr.mxu0 0.0
  %520 = vmatpush1.msra.mxu0 0.0
  %521 = vmatprep.subr.mxu0 0.0
  %522 = vmatpush1.msra.mxu0 0.0
  %523 = vmatprep.subr.mxu0 0.0
  %524 = vmatpush1.msra.mxu0 0.0
  %525 = vmatprep.subr.mxu0 0.0
  %526 = vmatpush1.msra.mxu0 0.0
  %527 = vmatprep.subr.mxu0 0.0
  %528 = vmatpush1.msra.mxu0 0.0
  %529 = vmatprep.subr.mxu0 0.0
  %530 = vmatpush1.msra.mxu0 0.0
  %531 = vmatprep.subr.mxu0 0.0
  %532 = vmatpush1.msra.mxu0 0.0
  %533 = vmatprep.subr.mxu0 0.0
  %534 = vmatpush1.msra.mxu0 0.0
  %535 = vmatprep.subr.mxu0 0.0
  %536 = vmatpush1.msra.mxu0 0.0
  %537 = vmatprep.subr.mxu0 0.0
  %538 = vmatpush1.msra.mxu0 0.0
  %539 = vmatprep.subr.mxu0 0.0
  %540 = vmatpush1.msra.mxu0 0.0
  %541 = vmatprep.subr.mxu0 0.0
  %542 = vmatpush1.msra.mxu0 0.0
  %543 = vmatprep.subr.mxu0 0.0
  %544 = vmatpush1.msra.mxu0 0.0
  %545 = vmatprep.subr.mxu0 0.0
  %546 = vmatpush1.msra.mxu0 0.0
  %547 = vmatprep.subr.mxu0 0.0
  %548 = vmatpush1.msra.mxu0 0.0
  %549 = vmatprep.subr.mxu0 0.0
  %550 = vmatpush1.msra.mxu0 0.0
  %551 = vmatprep.mubr.f32.mxu0 0.0
  %552 = vmatmul.mubr.f32.gmra.mrb[0].mxu0 %v413
  %v553 = vpop.f32.mrb[0].mxu0
  %v554 = vadd.f32 %v276, %v553
  %v555 = vpop.f32.mrb[0].mxu0
  %v556 = vadd.f32 %v278, %v555
  %557 = vmatprep.mubr.f32.mxu0 0.0
  %558 = vmatmul.mubr.f32.gmra.mrb[0].mxu0 %v416
  %v559 = vpop.f32.mrb[0].mxu0
  %v560 = vadd.f32 %v282, %v559
  %v561 = vpop.f32.mrb[0].mxu0
  %v562 = vadd.f32 %v284, %v561
  %563 = vmatprep.mubr.f32.mxu0 0.0
  %564 = vmatmul.mubr.f32.gmra.mrb[0].mxu0 %v419
  %v565 = vpop.f32.mrb[0].mxu0
  %v566 = vadd.f32 %v288, %v565
  %v567 = vpop.f32.mrb[0].mxu0
  %v568 = vadd.f32 %v290, %v567
  %569 = vmatprep.mubr.f32.mxu0 0.0
  %570 = vmatmul.mubr.f32.gmra.mrb[0].mxu0 %v422
  %v571 = vpop.f32.mrb[0].mxu0
  %v572 = vadd.f32 %v294, %v571
  %v573 = vpop.f32.mrb[0].mxu0
  %v574 = vadd.f32 %v296, %v573
  %575 = vmatprep.mubr.f32.mxu0 0.0
  %576 = vmatmul.mubr.f32.gmra.mrb[0].mxu0 %v425
  %v577 = vpop.f32.mrb[0].mxu0
  %v578 = vadd.f32 %v300, %v577
  %v579 = vpop.f32.mrb[0].mxu0
  %v580 = vadd.f32 %v302, %v579
  %581 = vmatprep.mubr.f32.mxu0 0.0
  %582 = vmatmul.mubr.f32.gmra.mrb[0].mxu0 %v428
  %v583 = vpop.f32.mrb[0].mxu0
  %v584 = vadd.f32 %v306, %v583
  %v585 = vpop.f32.mrb[0].mxu0
  %v586 = vadd.f32 %v308, %v585
  %587 = vmatprep.mubr.f32.mxu0 0.0
  %588 = vmatmul.mubr.f32.gmra.mrb[0].mxu0 %v431
  %v589 = vpop.f32.mrb[0].mxu0
  %v590 = vadd.f32 %v312, %v589
  %v591 = vpop.f32.mrb[0].mxu0
  %v592 = vadd.f32 %v314, %v591
  %593 = vmatprep.mubr.f32.mxu0 0.0
  %594 = vmatmul.mubr.f32.gmra.mrb[0].mxu0 %v434
  %v595 = vpop.f32.mrb[0].mxu0
  %v596 = vadd.f32 %v318, %v595
  %v597 = vpop.f32.mrb[0].mxu0
  %v598 = vadd.f32 %v320, %v597
  %599 = vmatprep.mubr.f32.mxu0 0.0
  %600 = vmatmul.mubr.f32.gmra.mrb[0].mxu0 %v437
  %v601 = vpop.f32.mrb[0].mxu0
  %v602 = vadd.f32 %v324, %v601
  %v603 = vpop.f32.mrb[0].mxu0
  %v604 = vadd.f32 %v326, %v603
  %605 = vmatprep.mubr.f32.mxu0 0.0
  %606 = vmatmul.mubr.f32.gmra.mrb[0].mxu0 %v440
  %v607 = vpop.f32.mrb[0].mxu0
  %v608 = vadd.f32 %v330, %v607
  %v609 = vpop.f32.mrb[0].mxu0
  %v610 = vadd.f32 %v332, %v609
  %611 = vmatprep.mubr.f32.mxu0 0.0
  %612 = vmatmul.mubr.f32.gmra.mrb[0].mxu0 %v443
  %v613 = vpop.f32.mrb[0].mxu0
  %v614 = vadd.f32 %v336, %v613
  %v615 = vpop.f32.mrb[0].mxu0
  %v616 = vadd.f32 %v338, %v615
  %617 = vmatprep.mubr.f32.mxu0 0.0
  %618 = vmatmul.mubr.f32.gmra.mrb[0].mxu0 %v446
  %v619 = vpop.f32.mrb[0].mxu0
  %v620 = vadd.f32 %v342, %v619
  %v621 = vpop.f32.mrb[0].mxu0
  %v622 = vadd.f32 %v344, %v621
  %623 = vmatprep.mubr.f32.mxu0 0.0
  %624 = vmatmul.mubr.f32.gmra.mrb[0].mxu0 %v449
  %v625 = vpop.f32.mrb[0].mxu0
  %v626 = vadd.f32 %v348, %v625
  %v627 = vpop.f32.mrb[0].mxu0
  %v628 = vadd.f32 %v350, %v627
  %629 = vmatprep.mubr.f32.mxu0 0.0
  %630 = vmatmul.mubr.f32.gmra.mrb[0].mxu0 %v452
  %v631 = vpop.f32.mrb[0].mxu0
  %v632 = vadd.f32 %v354, %v631
  %v633 = vpop.f32.mrb[0].mxu0
  %v634 = vadd.f32 %v356, %v633
  %635 = vmatprep.mubr.f32.mxu0 0.0
  %636 = vmatmul.mubr.f32.gmra.mrb[0].mxu0 %v455
  %v637 = vpop.f32.mrb[0].mxu0
  %v638 = vadd.f32 %v360, %v637
  %v639 = vpop.f32.mrb[0].mxu0
  %v640 = vadd.f32 %v362, %v639
  %641 = vmatprep.mubr.f32.mxu0 0.0
  %642 = vmatmul.mubr.f32.gmra.mrb[0].mxu0 %v458
  %v643 = vpop.f32.mrb[0].mxu0
  %v644 = vadd.f32 %v366, %v643
  %v645 = vpop.f32.mrb[0].mxu0
  %v646 = vadd.f32 %v368, %v645
  %647 = vmatprep.mubr.f32.mxu0 0.0
  %648 = vmatmul.mubr.f32.gmra.mrb[0].mxu0 %v461
  %v649 = vpop.f32.mrb[0].mxu0
  %v650 = vadd.f32 %v372, %v649
  %v651 = vpop.f32.mrb[0].mxu0
  %v652 = vadd.f32 %v374, %v651
  %653 = vmatprep.mubr.f32.mxu0 0.0
  %654 = vmatmul.mubr.f32.gmra.mrb[0].mxu0 %v464
  %v655 = vpop.f32.mrb[0].mxu0
  %v656 = vadd.f32 %v378, %v655
  %v657 = vpop.f32.mrb[0].mxu0
  %v658 = vadd.f32 %v380, %v657
  %659 = vmatprep.mubr.f32.mxu0 0.0
  %660 = vmatmul.mubr.f32.gmra.mrb[0].mxu0 %v467
  %v661 = vpop.f32.mrb[0].mxu0
  %v662 = vadd.f32 %v384, %v661
  %v663 = vpop.f32.mrb[0].mxu0
  %v664 = vadd.f32 %v386, %v663
  %665 = vmatprep.mubr.f32.mxu0 0.0
  %666 = vmatmul.mubr.f32.gmra.mrb[0].mxu0 %v470
  %v667 = vpop.f32.mrb[0].mxu0
  %v668 = vadd.f32 %v390, %v667
  %v669 = vpop.f32.mrb[0].mxu0
  %v670 = vadd.f32 %v392, %v669
  %671 = vmatprep.mubr.f32.mxu0 0.0
  %672 = vmatmul.mubr.f32.gmra.mrb[0].mxu0 %v473
  %v673 = vpop.f32.mrb[0].mxu0
  %v674 = vadd.f32 %v396, %v673
  %v675 = vpop.f32.mrb[0].mxu0
  %v676 = vadd.f32 %v398, %v675
  %677 = vmatprep.mubr.f32.mxu0 0.0
  %678 = vmatmul.mubr.f32.gmra.mrb[0].mxu0 %v476
  %v679 = vpop.f32.mrb[0].mxu0
  %v680 = vadd.f32 %v402, %v679
  %v681 = vpop.f32.mrb[0].mxu0
  %v682 = vadd.f32 %v404, %v681
  %683 = vmatprep.mubr.f32.mxu0 0.0
  %684 = vmatmul.mubr.f32.gmra.mrb[0].mxu0 %v479
  %v685 = vpop.f32.mrb[0].mxu0
  %v686 = vadd.f32 %v408, %v685
  %v687 = vpop.f32.mrb[0].mxu0
  %v688 = vadd.f32 %v410, %v687
  %689 = vdwg.mxu0
  %s690 = scalar_lea.vmem %s1, 736
  %v691 = vld [vmem:[%s690] sm:$0xff]
  %v692 = vld [vmem:[%s690 + $0x8] sm:$0xff]
  %v693 = vld [vmem:[%s690 + $0x10] sm:$0xff]
  %v694 = vld [vmem:[%s690 + $0x18] sm:$0xff]
  %v695 = vld [vmem:[%s690 + $0x20] sm:$0xff]
  %v696 = vld [vmem:[%s690 + $0x28] sm:$0xff]
  %v697 = vld [vmem:[%s690 + $0x30] sm:$0xff]
  %v698 = vld [vmem:[%s690 + $0x38] sm:$0xff]
  %v699 = vld [vmem:[%s690 + $0x40] sm:$0xff]
  %v700 = vld [vmem:[%s690 + $0x48] sm:$0xff]
  %v701 = vld [vmem:[%s690 + $0x50] sm:$0xff]
  %v702 = vld [vmem:[%s690 + $0x58] sm:$0xff]
  %v703 = vld [vmem:[%s690 + $0x60] sm:$0xff]
  %v704 = vld [vmem:[%s690 + $0x68] sm:$0xff]
  %v705 = vld [vmem:[%s690 + $0x70] sm:$0xff]
  %v706 = vld [vmem:[%s690 + $0x78] sm:$0xff]
  %v707 = vld [vmem:[%s690 + $0x80] sm:$0xff]
  %v708 = vld [vmem:[%s690 + $0x88] sm:$0xff]
  %v709 = vld [vmem:[%s690 + $0x90] sm:$0xff]
  %v710 = vld [vmem:[%s690 + $0x98] sm:$0xff]
  %v711 = vld [vmem:[%s690 + $0xa0] sm:$0xff]
  %v712 = vld [vmem:[%s690 + $0xa8] sm:$0xff]
  %v713 = vld [vmem:[%s690 + $0xb0] sm:$0xf]
  %v715 = vsel %vm132, %v691, 0
  %v718 = vsel %vm132, %v692, 0
  %v721 = vsel %vm132, %v693, 0
  %v724 = vsel %vm132, %v694, 0
  %v727 = vsel %vm132, %v695, 0
  %v730 = vsel %vm132, %v696, 0
  %v733 = vsel %vm132, %v697, 0
  %v736 = vsel %vm132, %v698, 0
  %v739 = vsel %vm132, %v699, 0
  %v742 = vsel %vm132, %v700, 0
  %v745 = vsel %vm132, %v701, 0
  %v748 = vsel %vm132, %v702, 0
  %v751 = vsel %vm132, %v703, 0
  %v754 = vsel %vm132, %v704, 0
  %v757 = vsel %vm132, %v705, 0
  %v760 = vsel %vm132, %v706, 0
  %v763 = vsel %vm132, %v707, 0
  %v766 = vsel %vm132, %v708, 0
  %v769 = vsel %vm132, %v709, 0
  %v772 = vsel %vm132, %v710, 0
  %v775 = vsel %vm132, %v711, 0
  %v778 = vsel %vm132, %v712, 0
  %v781 = vsel %vm132, %v713, 0
  %v784 = vsel %vm202, %v83, 0
  %v787 = vsel %vm202, %v84, 0
  %789 = vmatprep.subr.mxu0 %v70
  %790 = vmatpush1.msra.mxu0 %v69
  %791 = vmatprep.subr.mxu0 %v72
  %792 = vmatpush1.msra.mxu0 %v71
  %793 = vmatprep.subr.mxu0 %v74
  %794 = vmatpush1.msra.mxu0 %v73
  %795 = vmatprep.subr.mxu0 %v76
  %796 = vmatpush1.msra.mxu0 %v75
  %797 = vmatprep.subr.mxu0 %v78
  %798 = vmatpush1.msra.mxu0 %v77
  %799 = vmatprep.subr.mxu0 %v80
  %800 = vmatpush1.msra.mxu0 %v79
  %801 = vmatprep.subr.mxu0 %v82
  %802 = vmatpush1.msra.mxu0 %v81
  %803 = vmatprep.subr.mxu0 %v787
  %804 = vmatpush1.msra.mxu0 %v784
  %805 = vmatprep.subr.mxu0 0.0
  %806 = vmatpush1.msra.mxu0 0.0
  %807 = vmatprep.subr.mxu0 0.0
  %808 = vmatpush1.msra.mxu0 0.0
  %809 = vmatprep.subr.mxu0 0.0
  %810 = vmatpush1.msra.mxu0 0.0
  %811 = vmatprep.subr.mxu0 0.0
  %812 = vmatpush1.msra.mxu0 0.0
  %813 = vmatprep.subr.mxu0 0.0
  %814 = vmatpush1.msra.mxu0 0.0
  %815 = vmatprep.subr.mxu0 0.0
  %816 = vmatpush1.msra.mxu0 0.0
  %817 = vmatprep.subr.mxu0 0.0
  %818 = vmatpush1.msra.mxu0 0.0
  %819 = vmatprep.subr.mxu0 0.0
  %820 = vmatpush1.msra.mxu0 0.0
  %821 = vmatprep.subr.mxu0 0.0
  %822 = vmatpush1.msra.mxu0 0.0
  %823 = vmatprep.subr.mxu0 0.0
  %824 = vmatpush1.msra.mxu0 0.0
  %825 = vmatprep.subr.mxu0 0.0
  %826 = vmatpush1.msra.mxu0 0.0
  %827 = vmatprep.subr.mxu0 0.0
  %828 = vmatpush1.msra.mxu0 0.0
  %829 = vmatprep.subr.mxu0 0.0
  %830 = vmatpush1.msra.mxu0 0.0
  %831 = vmatprep.subr.mxu0 0.0
  %832 = vmatpush1.msra.mxu0 0.0
  %833 = vmatprep.subr.mxu0 0.0
  %834 = vmatpush1.msra.mxu0 0.0
  %835 = vmatprep.subr.mxu0 0.0
  %836 = vmatpush1.msra.mxu0 0.0
  %837 = vmatprep.subr.mxu0 0.0
  %838 = vmatpush1.msra.mxu0 0.0
  %839 = vmatprep.subr.mxu0 0.0
  %840 = vmatpush1.msra.mxu0 0.0
  %841 = vmatprep.subr.mxu0 0.0
  %842 = vmatpush1.msra.mxu0 0.0
  %843 = vmatprep.subr.mxu0 0.0
  %844 = vmatpush1.msra.mxu0 0.0
  %845 = vmatprep.subr.mxu0 0.0
  %846 = vmatpush1.msra.mxu0 0.0
  %847 = vmatprep.subr.mxu0 0.0
  %848 = vmatpush1.msra.mxu0 0.0
  %849 = vmatprep.subr.mxu0 0.0
  %850 = vmatpush1.msra.mxu0 0.0
  %851 = vmatprep.subr.mxu0 0.0
  %852 = vmatpush1.msra.mxu0 0.0
  %853 = vmatprep.mubr.f32.mxu0 0.0
  %854 = vmatmul.mubr.f32.gmra.mrb[0].mxu0 %v715
  %v855 = vpop.f32.mrb[0].mxu0
  %v856 = vadd.f32 0.0, %v855
  %v857 = vpop.f32.mrb[0].mxu0
  %v858 = vadd.f32 0.0, %v857
  %859 = vmatprep.mubr.f32.mxu0 0.0
  %860 = vmatmul.mubr.f32.gmra.mrb[0].mxu0 %v718
  %v861 = vpop.f32.mrb[0].mxu0
  %v862 = vadd.f32 0.0, %v861
  %v863 = vpop.f32.mrb[0].mxu0
  %v864 = vadd.f32 0.0, %v863
  %865 = vmatprep.mubr.f32.mxu0 0.0
  %866 = vmatmul.mubr.f32.gmra.mrb[0].mxu0 %v721
  %v867 = vpop.f32.mrb[0].mxu0
  %v868 = vadd.f32 0.0, %v867
  %v869 = vpop.f32.mrb[0].mxu0
  %v870 = vadd.f32 0.0, %v869
  %871 = vmatprep.mubr.f32.mxu0 0.0
  %872 = vmatmul.mubr.f32.gmra.mrb[0].mxu0 %v724
  %v873 = vpop.f32.mrb[0].mxu0
  %v874 = vadd.f32 0.0, %v873
  %v875 = vpop.f32.mrb[0].mxu0
  %v876 = vadd.f32 0.0, %v875
  %877 = vmatprep.mubr.f32.mxu0 0.0
  %878 = vmatmul.mubr.f32.gmra.mrb[0].mxu0 %v727
  %v879 = vpop.f32.mrb[0].mxu0
  %v880 = vadd.f32 0.0, %v879
  %v881 = vpop.f32.mrb[0].mxu0
  %v882 = vadd.f32 0.0, %v881
  %883 = vmatprep.mubr.f32.mxu0 0.0
  %884 = vmatmul.mubr.f32.gmra.mrb[0].mxu0 %v730
  %v885 = vpop.f32.mrb[0].mxu0
  %v886 = vadd.f32 0.0, %v885
  %v887 = vpop.f32.mrb[0].mxu0
  %v888 = vadd.f32 0.0, %v887
  %889 = vmatprep.mubr.f32.mxu0 0.0
  %890 = vmatmul.mubr.f32.gmra.mrb[0].mxu0 %v733
  %v891 = vpop.f32.mrb[0].mxu0
  %v892 = vadd.f32 0.0, %v891
  %v893 = vpop.f32.mrb[0].mxu0
  %v894 = vadd.f32 0.0, %v893
  %895 = vmatprep.mubr.f32.mxu0 0.0
  %896 = vmatmul.mubr.f32.gmra.mrb[0].mxu0 %v736
  %v897 = vpop.f32.mrb[0].mxu0
  %v898 = vadd.f32 0.0, %v897
  %v899 = vpop.f32.mrb[0].mxu0
  %v900 = vadd.f32 0.0, %v899
  %901 = vmatprep.mubr.f32.mxu0 0.0
  %902 = vmatmul.mubr.f32.gmra.mrb[0].mxu0 %v739
  %v903 = vpop.f32.mrb[0].mxu0
  %v904 = vadd.f32 0.0, %v903
  %v905 = vpop.f32.mrb[0].mxu0
  %v906 = vadd.f32 0.0, %v905
  %907 = vmatprep.mubr.f32.mxu0 0.0
  %908 = vmatmul.mubr.f32.gmra.mrb[0].mxu0 %v742
  %v909 = vpop.f32.mrb[0].mxu0
  %v910 = vadd.f32 0.0, %v909
  %v911 = vpop.f32.mrb[0].mxu0
  %v912 = vadd.f32 0.0, %v911
  %913 = vmatprep.mubr.f32.mxu0 0.0
  %914 = vmatmul.mubr.f32.gmra.mrb[0].mxu0 %v745
  %v915 = vpop.f32.mrb[0].mxu0
  %v916 = vadd.f32 0.0, %v915
  %v917 = vpop.f32.mrb[0].mxu0
  %v918 = vadd.f32 0.0, %v917
  %919 = vmatprep.mubr.f32.mxu0 0.0
  %920 = vmatmul.mubr.f32.gmra.mrb[0].mxu0 %v748
  %v921 = vpop.f32.mrb[0].mxu0
  %v922 = vadd.f32 0.0, %v921
  %v923 = vpop.f32.mrb[0].mxu0
  %v924 = vadd.f32 0.0, %v923
  %925 = vmatprep.mubr.f32.mxu0 0.0
  %926 = vmatmul.mubr.f32.gmra.mrb[0].mxu0 %v751
  %v927 = vpop.f32.mrb[0].mxu0
  %v928 = vadd.f32 0.0, %v927
  %v929 = vpop.f32.mrb[0].mxu0
  %v930 = vadd.f32 0.0, %v929
  %931 = vmatprep.mubr.f32.mxu0 0.0
  %932 = vmatmul.mubr.f32.gmra.mrb[0].mxu0 %v754
  %v933 = vpop.f32.mrb[0].mxu0
  %v934 = vadd.f32 0.0, %v933
  %v935 = vpop.f32.mrb[0].mxu0
  %v936 = vadd.f32 0.0, %v935
  %937 = vmatprep.mubr.f32.mxu0 0.0
  %938 = vmatmul.mubr.f32.gmra.mrb[0].mxu0 %v757
  %v939 = vpop.f32.mrb[0].mxu0
  %v940 = vadd.f32 0.0, %v939
  %v941 = vpop.f32.mrb[0].mxu0
  %v942 = vadd.f32 0.0, %v941
  %943 = vmatprep.mubr.f32.mxu0 0.0
  %944 = vmatmul.mubr.f32.gmra.mrb[0].mxu0 %v760
  %v945 = vpop.f32.mrb[0].mxu0
  %v946 = vadd.f32 0.0, %v945
  %v947 = vpop.f32.mrb[0].mxu0
  %v948 = vadd.f32 0.0, %v947
  %949 = vmatprep.mubr.f32.mxu0 0.0
  %950 = vmatmul.mubr.f32.gmra.mrb[0].mxu0 %v763
  %v951 = vpop.f32.mrb[0].mxu0
  %v952 = vadd.f32 0.0, %v951
  %v953 = vpop.f32.mrb[0].mxu0
  %v954 = vadd.f32 0.0, %v953
  %955 = vmatprep.mubr.f32.mxu0 0.0
  %956 = vmatmul.mubr.f32.gmra.mrb[0].mxu0 %v766
  %v957 = vpop.f32.mrb[0].mxu0
  %v958 = vadd.f32 0.0, %v957
  %v959 = vpop.f32.mrb[0].mxu0
  %v960 = vadd.f32 0.0, %v959
  %961 = vmatprep.mubr.f32.mxu0 0.0
  %962 = vmatmul.mubr.f32.gmra.mrb[0].mxu0 %v769
  %v963 = vpop.f32.mrb[0].mxu0
  %v964 = vadd.f32 0.0, %v963
  %v965 = vpop.f32.mrb[0].mxu0
  %v966 = vadd.f32 0.0, %v965
  %967 = vmatprep.mubr.f32.mxu0 0.0
  %968 = vmatmul.mubr.f32.gmra.mrb[0].mxu0 %v772
  %v969 = vpop.f32.mrb[0].mxu0
  %v970 = vadd.f32 0.0, %v969
  %v971 = vpop.f32.mrb[0].mxu0
  %v972 = vadd.f32 0.0, %v971
  %973 = vmatprep.mubr.f32.mxu0 0.0
  %974 = vmatmul.mubr.f32.gmra.mrb[0].mxu0 %v775
  %v975 = vpop.f32.mrb[0].mxu0
  %v976 = vadd.f32 0.0, %v975
  %v977 = vpop.f32.mrb[0].mxu0
  %v978 = vadd.f32 0.0, %v977
  %979 = vmatprep.mubr.f32.mxu0 0.0
  %980 = vmatmul.mubr.f32.gmra.mrb[0].mxu0 %v778
  %v981 = vpop.f32.mrb[0].mxu0
  %v982 = vadd.f32 0.0, %v981
  %v983 = vpop.f32.mrb[0].mxu0
  %v984 = vadd.f32 0.0, %v983
  %985 = vmatprep.mubr.f32.mxu0 0.0
  %986 = vmatmul.mubr.f32.gmra.mrb[0].mxu0 %v781
  %v987 = vpop.f32.mrb[0].mxu0
  %v988 = vadd.f32 0.0, %v987
  %v989 = vpop.f32.mrb[0].mxu0
  %v990 = vadd.f32 0.0, %v989
  %991 = vdwg.mxu0
  %v992 = vadd.f32 %v554, %v856
  %v993 = vadd.f32 %v556, %v858
  %v994 = vadd.f32 %v560, %v862
  %v995 = vadd.f32 %v562, %v864
  %v996 = vadd.f32 %v566, %v868
  %v997 = vadd.f32 %v568, %v870
  %v998 = vadd.f32 %v572, %v874
  %v999 = vadd.f32 %v574, %v876
  %v1000 = vadd.f32 %v578, %v880
  %v1001 = vadd.f32 %v580, %v882
  %v1002 = vadd.f32 %v584, %v886
  %v1003 = vadd.f32 %v586, %v888
  %v1004 = vadd.f32 %v590, %v892
  %v1005 = vadd.f32 %v592, %v894
  %v1006 = vadd.f32 %v596, %v898
  %v1007 = vadd.f32 %v598, %v900
  %v1008 = vadd.f32 %v602, %v904
  %v1009 = vadd.f32 %v604, %v906
  %v1010 = vadd.f32 %v608, %v910
  %v1011 = vadd.f32 %v610, %v912
  %v1012 = vadd.f32 %v614, %v916
  %v1013 = vadd.f32 %v616, %v918
  %v1014 = vadd.f32 %v620, %v922
  %v1015 = vadd.f32 %v622, %v924
  %v1016 = vadd.f32 %v626, %v928
  %v1017 = vadd.f32 %v628, %v930
  %v1018 = vadd.f32 %v632, %v934
  %v1019 = vadd.f32 %v634, %v936
  %v1020 = vadd.f32 %v638, %v940
  %v1021 = vadd.f32 %v640, %v942
  %v1022 = vadd.f32 %v644, %v946
  %v1023 = vadd.f32 %v646, %v948
  %v1024 = vadd.f32 %v650, %v952
  %v1025 = vadd.f32 %v652, %v954
  %v1026 = vadd.f32 %v656, %v958
  %v1027 = vadd.f32 %v658, %v960
  %v1028 = vadd.f32 %v662, %v964
  %v1029 = vadd.f32 %v664, %v966
  %v1030 = vadd.f32 %v668, %v970
  %v1031 = vadd.f32 %v670, %v972
  %v1032 = vadd.f32 %v674, %v976
  %v1033 = vadd.f32 %v676, %v978
  %v1034 = vadd.f32 %v680, %v982
  %v1035 = vadd.f32 %v682, %v984
  %v1036 = vadd.f32 %v686, %v988
  %v1037 = vadd.f32 %v688, %v990
  %s1038 = scalar_lea.vmem %s1, 184
  %v1039 = vld [vmem:[%s1038] sm:$0xff]
  %v1040 = vld [vmem:[%s1038 + $0x8] sm:$0xff]
  %v1041 = vld [vmem:[%s1038 + $0x10] sm:$0xff]
  %v1042 = vld [vmem:[%s1038 + $0x18] sm:$0xff]
  %v1043 = vld [vmem:[%s1038 + $0x20] sm:$0xff]
  %v1044 = vld [vmem:[%s1038 + $0x28] sm:$0xff]
  %v1045 = vld [vmem:[%s1038 + $0x30] sm:$0xff]
  %v1046 = vld [vmem:[%s1038 + $0x38] sm:$0xff]
  %v1047 = vld [vmem:[%s1038 + $0x40] sm:$0xff]
  %v1048 = vld [vmem:[%s1038 + $0x48] sm:$0xff]
  %v1049 = vld [vmem:[%s1038 + $0x50] sm:$0xff]
  %v1050 = vld [vmem:[%s1038 + $0x58] sm:$0xff]
  %v1051 = vld [vmem:[%s1038 + $0x60] sm:$0xff]
  %v1052 = vld [vmem:[%s1038 + $0x68] sm:$0xff]
  %v1053 = vld [vmem:[%s1038 + $0x70] sm:$0xff]
  %v1054 = vld [vmem:[%s1038 + $0x78] sm:$0xff]
  %v1055 = vld [vmem:[%s1038 + $0x80] sm:$0xff]
  %v1056 = vld [vmem:[%s1038 + $0x88] sm:$0xff]
  %v1057 = vld [vmem:[%s1038 + $0x90] sm:$0xff]
  %v1058 = vld [vmem:[%s1038 + $0x98] sm:$0xff]
  %v1059 = vld [vmem:[%s1038 + $0xa0] sm:$0xff]
  %v1060 = vld [vmem:[%s1038 + $0xa8] sm:$0xff]
  %v1061 = vld [vmem:[%s1038 + $0xb0] sm:$0xf]
  %s1062 = scalar_lea.vmem %s1, 552
  %v1063 = vld [vmem:[%s1062] sm:$0xff]
  %v1064 = vld [vmem:[%s1062 + $0x8] sm:$0xff]
  %v1065 = vld [vmem:[%s1062 + $0x10] sm:$0xff]
  %v1066 = vld [vmem:[%s1062 + $0x18] sm:$0xff]
  %v1067 = vld [vmem:[%s1062 + $0x20] sm:$0xff]
  %v1068 = vld [vmem:[%s1062 + $0x28] sm:$0xff]
  %v1069 = vld [vmem:[%s1062 + $0x30] sm:$0xff]
  %v1070 = vld [vmem:[%s1062 + $0x38] sm:$0xff]
  %v1071 = vld [vmem:[%s1062 + $0x40] sm:$0xff]
  %v1072 = vld [vmem:[%s1062 + $0x48] sm:$0xff]
  %v1073 = vld [vmem:[%s1062 + $0x50] sm:$0xff]
  %v1074 = vld [vmem:[%s1062 + $0x58] sm:$0xff]
  %v1075 = vld [vmem:[%s1062 + $0x60] sm:$0xff]
  %v1076 = vld [vmem:[%s1062 + $0x68] sm:$0xff]
  %v1077 = vld [vmem:[%s1062 + $0x70] sm:$0xff]
  %v1078 = vld [vmem:[%s1062 + $0x78] sm:$0xff]
  %v1079 = vld [vmem:[%s1062 + $0x80] sm:$0xff]
  %v1080 = vld [vmem:[%s1062 + $0x88] sm:$0xff]
  %v1081 = vld [vmem:[%s1062 + $0x90] sm:$0xff]
  %v1082 = vld [vmem:[%s1062 + $0x98] sm:$0xff]
  %v1083 = vld [vmem:[%s1062 + $0xa0] sm:$0xff]
  %v1084 = vld [vmem:[%s1062 + $0xa8] sm:$0xff]
  %v1085 = vld [vmem:[%s1062 + $0xb0] sm:$0xf]
  %v1087 = vsel %vm132, %v1063, 0
  %v1090 = vsel %vm132, %v1064, 0
  %v1093 = vsel %vm132, %v1065, 0
  %v1096 = vsel %vm132, %v1066, 0
  %v1099 = vsel %vm132, %v1067, 0
  %v1102 = vsel %vm132, %v1068, 0
  %v1105 = vsel %vm132, %v1069, 0
  %v1108 = vsel %vm132, %v1070, 0
  %v1111 = vsel %vm132, %v1071, 0
  %v1114 = vsel %vm132, %v1072, 0
  %v1117 = vsel %vm132, %v1073, 0
  %v1120 = vsel %vm132, %v1074, 0
  %v1123 = vsel %vm132, %v1075, 0
  %v1126 = vsel %vm132, %v1076, 0
  %v1129 = vsel %vm132, %v1077, 0
  %v1132 = vsel %vm132, %v1078, 0
  %v1135 = vsel %vm132, %v1079, 0
  %v1138 = vsel %vm132, %v1080, 0
  %v1141 = vsel %vm132, %v1081, 0
  %v1144 = vsel %vm132, %v1082, 0
  %v1147 = vsel %vm132, %v1083, 0
  %v1150 = vsel %vm132, %v1084, 0
  %v1153 = vsel %vm132, %v1085, 0
  %1155 = vmatprep.subr.mxu0 %v54
  %1156 = vmatpush1.msra.mxu0 %v53
  %1157 = vmatprep.subr.mxu0 %v56
  %1158 = vmatpush1.msra.mxu0 %v55
  %1159 = vmatprep.subr.mxu0 %v58
  %1160 = vmatpush1.msra.mxu0 %v57
  %1161 = vmatprep.subr.mxu0 %v60
  %1162 = vmatpush1.msra.mxu0 %v59
  %1163 = vmatprep.subr.mxu0 %v62
  %1164 = vmatpush1.msra.mxu0 %v61
  %1165 = vmatprep.subr.mxu0 %v64
  %1166 = vmatpush1.msra.mxu0 %v63
  %1167 = vmatprep.subr.mxu0 %v66
  %1168 = vmatpush1.msra.mxu0 %v65
  %1169 = vmatprep.subr.mxu0 %v207
  %1170 = vmatpush1.msra.mxu0 %v204
  %1171 = vmatprep.subr.mxu0 0.0
  %1172 = vmatpush1.msra.mxu0 0.0
  %1173 = vmatprep.subr.mxu0 0.0
  %1174 = vmatpush1.msra.mxu0 0.0
  %1175 = vmatprep.subr.mxu0 0.0
  %1176 = vmatpush1.msra.mxu0 0.0
  %1177 = vmatprep.subr.mxu0 0.0
  %1178 = vmatpush1.msra.mxu0 0.0
  %1179 = vmatprep.subr.mxu0 0.0
  %1180 = vmatpush1.msra.mxu0 0.0
  %1181 = vmatprep.subr.mxu0 0.0
  %1182 = vmatpush1.msra.mxu0 0.0
  %1183 = vmatprep.subr.mxu0 0.0
  %1184 = vmatpush1.msra.mxu0 0.0
  %1185 = vmatprep.subr.mxu0 0.0
  %1186 = vmatpush1.msra.mxu0 0.0
  %1187 = vmatprep.subr.mxu0 0.0
  %1188 = vmatpush1.msra.mxu0 0.0
  %1189 = vmatprep.subr.mxu0 0.0
  %1190 = vmatpush1.msra.mxu0 0.0
  %1191 = vmatprep.subr.mxu0 0.0
  %1192 = vmatpush1.msra.mxu0 0.0
  %1193 = vmatprep.subr.mxu0 0.0
  %1194 = vmatpush1.msra.mxu0 0.0
  %1195 = vmatprep.subr.mxu0 0.0
  %1196 = vmatpush1.msra.mxu0 0.0
  %1197 = vmatprep.subr.mxu0 0.0
  %1198 = vmatpush1.msra.mxu0 0.0
  %1199 = vmatprep.subr.mxu0 0.0
  %1200 = vmatpush1.msra.mxu0 0.0
  %1201 = vmatprep.subr.mxu0 0.0
  %1202 = vmatpush1.msra.mxu0 0.0
  %1203 = vmatprep.subr.mxu0 0.0
  %1204 = vmatpush1.msra.mxu0 0.0
  %1205 = vmatprep.subr.mxu0 0.0
  %1206 = vmatpush1.msra.mxu0 0.0
  %1207 = vmatprep.subr.mxu0 0.0
  %1208 = vmatpush1.msra.mxu0 0.0
  %1209 = vmatprep.subr.mxu0 0.0
  %1210 = vmatpush1.msra.mxu0 0.0
  %1211 = vmatprep.subr.mxu0 0.0
  %1212 = vmatpush1.msra.mxu0 0.0
  %1213 = vmatprep.subr.mxu0 0.0
  %1214 = vmatpush1.msra.mxu0 0.0
  %1215 = vmatprep.subr.mxu0 0.0
  %1216 = vmatpush1.msra.mxu0 0.0
  %1217 = vmatprep.subr.mxu0 0.0
  %1218 = vmatpush1.msra.mxu0 0.0
  %1219 = vmatprep.mubr.f32.mxu0 0.0
  %1220 = vmatmul.mubr.f32.gmra.mrb[0].mxu0 %v1087
  %v1221 = vpop.f32.mrb[0].mxu0
  %v1222 = vadd.f32 0.0, %v1221
  %v1223 = vpop.f32.mrb[0].mxu0
  %v1224 = vadd.f32 0.0, %v1223
  %1225 = vmatprep.mubr.f32.mxu0 0.0
  %1226 = vmatmul.mubr.f32.gmra.mrb[0].mxu0 %v1090
  %v1227 = vpop.f32.mrb[0].mxu0
  %v1228 = vadd.f32 0.0, %v1227
  %v1229 = vpop.f32.mrb[0].mxu0
  %v1230 = vadd.f32 0.0, %v1229
  %1231 = vmatprep.mubr.f32.mxu0 0.0
  %1232 = vmatmul.mubr.f32.gmra.mrb[0].mxu0 %v1093
  %v1233 = vpop.f32.mrb[0].mxu0
  %v1234 = vadd.f32 0.0, %v1233
  %v1235 = vpop.f32.mrb[0].mxu0
  %v1236 = vadd.f32 0.0, %v1235
  %1237 = vmatprep.mubr.f32.mxu0 0.0
  %1238 = vmatmul.mubr.f32.gmra.mrb[0].mxu0 %v1096
  %v1239 = vpop.f32.mrb[0].mxu0
  %v1240 = vadd.f32 0.0, %v1239
  %v1241 = vpop.f32.mrb[0].mxu0
  %v1242 = vadd.f32 0.0, %v1241
  %1243 = vmatprep.mubr.f32.mxu0 0.0
  %1244 = vmatmul.mubr.f32.gmra.mrb[0].mxu0 %v1099
  %v1245 = vpop.f32.mrb[0].mxu0
  %v1246 = vadd.f32 0.0, %v1245
  %v1247 = vpop.f32.mrb[0].mxu0
  %v1248 = vadd.f32 0.0, %v1247
  %1249 = vmatprep.mubr.f32.mxu0 0.0
  %1250 = vmatmul.mubr.f32.gmra.mrb[0].mxu0 %v1102
  %v1251 = vpop.f32.mrb[0].mxu0
  %v1252 = vadd.f32 0.0, %v1251
  %v1253 = vpop.f32.mrb[0].mxu0
  %v1254 = vadd.f32 0.0, %v1253
  %1255 = vmatprep.mubr.f32.mxu0 0.0
  %1256 = vmatmul.mubr.f32.gmra.mrb[0].mxu0 %v1105
  %v1257 = vpop.f32.mrb[0].mxu0
  %v1258 = vadd.f32 0.0, %v1257
  %v1259 = vpop.f32.mrb[0].mxu0
  %v1260 = vadd.f32 0.0, %v1259
  %1261 = vmatprep.mubr.f32.mxu0 0.0
  %1262 = vmatmul.mubr.f32.gmra.mrb[0].mxu0 %v1108
  %v1263 = vpop.f32.mrb[0].mxu0
  %v1264 = vadd.f32 0.0, %v1263
  %v1265 = vpop.f32.mrb[0].mxu0
  %v1266 = vadd.f32 0.0, %v1265
  %1267 = vmatprep.mubr.f32.mxu0 0.0
  %1268 = vmatmul.mubr.f32.gmra.mrb[0].mxu0 %v1111
  %v1269 = vpop.f32.mrb[0].mxu0
  %v1270 = vadd.f32 0.0, %v1269
  %v1271 = vpop.f32.mrb[0].mxu0
  %v1272 = vadd.f32 0.0, %v1271
  %1273 = vmatprep.mubr.f32.mxu0 0.0
  %1274 = vmatmul.mubr.f32.gmra.mrb[0].mxu0 %v1114
  %v1275 = vpop.f32.mrb[0].mxu0
  %v1276 = vadd.f32 0.0, %v1275
  %v1277 = vpop.f32.mrb[0].mxu0
  %v1278 = vadd.f32 0.0, %v1277
  %1279 = vmatprep.mubr.f32.mxu0 0.0
  %1280 = vmatmul.mubr.f32.gmra.mrb[0].mxu0 %v1117
  %v1281 = vpop.f32.mrb[0].mxu0
  %v1282 = vadd.f32 0.0, %v1281
  %v1283 = vpop.f32.mrb[0].mxu0
  %v1284 = vadd.f32 0.0, %v1283
  %1285 = vmatprep.mubr.f32.mxu0 0.0
  %1286 = vmatmul.mubr.f32.gmra.mrb[0].mxu0 %v1120
  %v1287 = vpop.f32.mrb[0].mxu0
  %v1288 = vadd.f32 0.0, %v1287
  %v1289 = vpop.f32.mrb[0].mxu0
  %v1290 = vadd.f32 0.0, %v1289
  %1291 = vmatprep.mubr.f32.mxu0 0.0
  %1292 = vmatmul.mubr.f32.gmra.mrb[0].mxu0 %v1123
  %v1293 = vpop.f32.mrb[0].mxu0
  %v1294 = vadd.f32 0.0, %v1293
  %v1295 = vpop.f32.mrb[0].mxu0
  %v1296 = vadd.f32 0.0, %v1295
  %1297 = vmatprep.mubr.f32.mxu0 0.0
  %1298 = vmatmul.mubr.f32.gmra.mrb[0].mxu0 %v1126
  %v1299 = vpop.f32.mrb[0].mxu0
  %v1300 = vadd.f32 0.0, %v1299
  %v1301 = vpop.f32.mrb[0].mxu0
  %v1302 = vadd.f32 0.0, %v1301
  %1303 = vmatprep.mubr.f32.mxu0 0.0
  %1304 = vmatmul.mubr.f32.gmra.mrb[0].mxu0 %v1129
  %v1305 = vpop.f32.mrb[0].mxu0
  %v1306 = vadd.f32 0.0, %v1305
  %v1307 = vpop.f32.mrb[0].mxu0
  %v1308 = vadd.f32 0.0, %v1307
  %1309 = vmatprep.mubr.f32.mxu0 0.0
  %1310 = vmatmul.mubr.f32.gmra.mrb[0].mxu0 %v1132
  %v1311 = vpop.f32.mrb[0].mxu0
  %v1312 = vadd.f32 0.0, %v1311
  %v1313 = vpop.f32.mrb[0].mxu0
  %v1314 = vadd.f32 0.0, %v1313
  %1315 = vmatprep.mubr.f32.mxu0 0.0
  %1316 = vmatmul.mubr.f32.gmra.mrb[0].mxu0 %v1135
  %v1317 = vpop.f32.mrb[0].mxu0
  %v1318 = vadd.f32 0.0, %v1317
  %v1319 = vpop.f32.mrb[0].mxu0
  %v1320 = vadd.f32 0.0, %v1319
  %1321 = vmatprep.mubr.f32.mxu0 0.0
  %1322 = vmatmul.mubr.f32.gmra.mrb[0].mxu0 %v1138
  %v1323 = vpop.f32.mrb[0].mxu0
  %v1324 = vadd.f32 0.0, %v1323
  %v1325 = vpop.f32.mrb[0].mxu0
  %v1326 = vadd.f32 0.0, %v1325
  %1327 = vmatprep.mubr.f32.mxu0 0.0
  %1328 = vmatmul.mubr.f32.gmra.mrb[0].mxu0 %v1141
  %v1329 = vpop.f32.mrb[0].mxu0
  %v1330 = vadd.f32 0.0, %v1329
  %v1331 = vpop.f32.mrb[0].mxu0
  %v1332 = vadd.f32 0.0, %v1331
  %1333 = vmatprep.mubr.f32.mxu0 0.0
  %1334 = vmatmul.mubr.f32.gmra.mrb[0].mxu0 %v1144
  %v1335 = vpop.f32.mrb[0].mxu0
  %v1336 = vadd.f32 0.0, %v1335
  %v1337 = vpop.f32.mrb[0].mxu0
  %v1338 = vadd.f32 0.0, %v1337
  %1339 = vmatprep.mubr.f32.mxu0 0.0
  %1340 = vmatmul.mubr.f32.gmra.mrb[0].mxu0 %v1147
  %v1341 = vpop.f32.mrb[0].mxu0
  %v1342 = vadd.f32 0.0, %v1341
  %v1343 = vpop.f32.mrb[0].mxu0
  %v1344 = vadd.f32 0.0, %v1343
  %1345 = vmatprep.mubr.f32.mxu0 0.0
  %1346 = vmatmul.mubr.f32.gmra.mrb[0].mxu0 %v1150
  %v1347 = vpop.f32.mrb[0].mxu0
  %v1348 = vadd.f32 0.0, %v1347
  %v1349 = vpop.f32.mrb[0].mxu0
  %v1350 = vadd.f32 0.0, %v1349
  %1351 = vmatprep.mubr.f32.mxu0 0.0
  %1352 = vmatmul.mubr.f32.gmra.mrb[0].mxu0 %v1153
  %v1353 = vpop.f32.mrb[0].mxu0
  %v1354 = vadd.f32 0.0, %v1353
  %v1355 = vpop.f32.mrb[0].mxu0
  %v1356 = vadd.f32 0.0, %v1355
  %1357 = vdwg.mxu0
  %v1359 = vsel %vm132, %v1039, 0
  %v1362 = vsel %vm132, %v1040, 0
  %v1365 = vsel %vm132, %v1041, 0
  %v1368 = vsel %vm132, %v1042, 0
  %v1371 = vsel %vm132, %v1043, 0
  %v1374 = vsel %vm132, %v1044, 0
  %v1377 = vsel %vm132, %v1045, 0
  %v1380 = vsel %vm132, %v1046, 0
  %v1383 = vsel %vm132, %v1047, 0
  %v1386 = vsel %vm132, %v1048, 0
  %v1389 = vsel %vm132, %v1049, 0
  %v1392 = vsel %vm132, %v1050, 0
  %v1395 = vsel %vm132, %v1051, 0
  %v1398 = vsel %vm132, %v1052, 0
  %v1401 = vsel %vm132, %v1053, 0
  %v1404 = vsel %vm132, %v1054, 0
  %v1407 = vsel %vm132, %v1055, 0
  %v1410 = vsel %vm132, %v1056, 0
  %v1413 = vsel %vm132, %v1057, 0
  %v1416 = vsel %vm132, %v1058, 0
  %v1419 = vsel %vm132, %v1059, 0
  %v1422 = vsel %vm132, %v1060, 0
  %v1425 = vsel %vm132, %v1061, 0
  %1427 = vmatprep.subr.mxu0 %v38
  %1428 = vmatpush1.msra.mxu0 %v37
  %1429 = vmatprep.subr.mxu0 %v40
  %1430 = vmatpush1.msra.mxu0 %v39
  %1431 = vmatprep.subr.mxu0 %v42
  %1432 = vmatpush1.msra.mxu0 %v41
  %1433 = vmatprep.subr.mxu0 %v44
  %1434 = vmatpush1.msra.mxu0 %v43
  %1435 = vmatprep.subr.mxu0 %v46
  %1436 = vmatpush1.msra.mxu0 %v45
  %1437 = vmatprep.subr.mxu0 %v48
  %1438 = vmatpush1.msra.mxu0 %v47
  %1439 = vmatprep.subr.mxu0 %v50
  %1440 = vmatpush1.msra.mxu0 %v49
  %1441 = vmatprep.subr.mxu0 %v485
  %1442 = vmatpush1.msra.mxu0 %v482
  %1443 = vmatprep.subr.mxu0 0.0
  %1444 = vmatpush1.msra.mxu0 0.0
  %1445 = vmatprep.subr.mxu0 0.0
  %1446 = vmatpush1.msra.mxu0 0.0
  %1447 = vmatprep.subr.mxu0 0.0
  %1448 = vmatpush1.msra.mxu0 0.0
  %1449 = vmatprep.subr.mxu0 0.0
  %1450 = vmatpush1.msra.mxu0 0.0
  %1451 = vmatprep.subr.mxu0 0.0
  %1452 = vmatpush1.msra.mxu0 0.0
  %1453 = vmatprep.subr.mxu0 0.0
  %1454 = vmatpush1.msra.mxu0 0.0
  %1455 = vmatprep.subr.mxu0 0.0
  %1456 = vmatpush1.msra.mxu0 0.0
  %1457 = vmatprep.subr.mxu0 0.0
  %1458 = vmatpush1.msra.mxu0 0.0
  %1459 = vmatprep.subr.mxu0 0.0
  %1460 = vmatpush1.msra.mxu0 0.0
  %1461 = vmatprep.subr.mxu0 0.0
  %1462 = vmatpush1.msra.mxu0 0.0
  %1463 = vmatprep.subr.mxu0 0.0
  %1464 = vmatpush1.msra.mxu0 0.0
  %1465 = vmatprep.subr.mxu0 0.0
  %1466 = vmatpush1.msra.mxu0 0.0
  %1467 = vmatprep.subr.mxu0 0.0
  %1468 = vmatpush1.msra.mxu0 0.0
  %1469 = vmatprep.subr.mxu0 0.0
  %1470 = vmatpush1.msra.mxu0 0.0
  %1471 = vmatprep.subr.mxu0 0.0
  %1472 = vmatpush1.msra.mxu0 0.0
  %1473 = vmatprep.subr.mxu0 0.0
  %1474 = vmatpush1.msra.mxu0 0.0
  %1475 = vmatprep.subr.mxu0 0.0
  %1476 = vmatpush1.msra.mxu0 0.0
  %1477 = vmatprep.subr.mxu0 0.0
  %1478 = vmatpush1.msra.mxu0 0.0
  %1479 = vmatprep.subr.mxu0 0.0
  %1480 = vmatpush1.msra.mxu0 0.0
  %1481 = vmatprep.subr.mxu0 0.0
  %1482 = vmatpush1.msra.mxu0 0.0
  %1483 = vmatprep.subr.mxu0 0.0
  %1484 = vmatpush1.msra.mxu0 0.0
  %1485 = vmatprep.subr.mxu0 0.0
  %1486 = vmatpush1.msra.mxu0 0.0
  %1487 = vmatprep.subr.mxu0 0.0
  %1488 = vmatpush1.msra.mxu0 0.0
  %1489 = vmatprep.subr.mxu0 0.0
  %1490 = vmatpush1.msra.mxu0 0.0
  %1491 = vmatprep.mubr.f32.mxu0 0.0
  %1492 = vmatmul.mubr.f32.gmra.mrb[0].mxu0 %v1359
  %v1493 = vpop.f32.mrb[0].mxu0
  %v1494 = vadd.f32 %v1222, %v1493
  %v1495 = vpop.f32.mrb[0].mxu0
  %v1496 = vadd.f32 %v1224, %v1495
  %1497 = vmatprep.mubr.f32.mxu0 0.0
  %1498 = vmatmul.mubr.f32.gmra.mrb[0].mxu0 %v1362
  %v1499 = vpop.f32.mrb[0].mxu0
  %v1500 = vadd.f32 %v1228, %v1499
  %v1501 = vpop.f32.mrb[0].mxu0
  %v1502 = vadd.f32 %v1230, %v1501
  %1503 = vmatprep.mubr.f32.mxu0 0.0
  %1504 = vmatmul.mubr.f32.gmra.mrb[0].mxu0 %v1365
  %v1505 = vpop.f32.mrb[0].mxu0
  %v1506 = vadd.f32 %v1234, %v1505
  %v1507 = vpop.f32.mrb[0].mxu0
  %v1508 = vadd.f32 %v1236, %v1507
  %1509 = vmatprep.mubr.f32.mxu0 0.0
  %1510 = vmatmul.mubr.f32.gmra.mrb[0].mxu0 %v1368
  %v1511 = vpop.f32.mrb[0].mxu0
  %v1512 = vadd.f32 %v1240, %v1511
  %v1513 = vpop.f32.mrb[0].mxu0
  %v1514 = vadd.f32 %v1242, %v1513
  %1515 = vmatprep.mubr.f32.mxu0 0.0
  %1516 = vmatmul.mubr.f32.gmra.mrb[0].mxu0 %v1371
  %v1517 = vpop.f32.mrb[0].mxu0
  %v1518 = vadd.f32 %v1246, %v1517
  %v1519 = vpop.f32.mrb[0].mxu0
  %v1520 = vadd.f32 %v1248, %v1519
  %1521 = vmatprep.mubr.f32.mxu0 0.0
  %1522 = vmatmul.mubr.f32.gmra.mrb[0].mxu0 %v1374
  %v1523 = vpop.f32.mrb[0].mxu0
  %v1524 = vadd.f32 %v1252, %v1523
  %v1525 = vpop.f32.mrb[0].mxu0
  %v1526 = vadd.f32 %v1254, %v1525
  %1527 = vmatprep.mubr.f32.mxu0 0.0
  %1528 = vmatmul.mubr.f32.gmra.mrb[0].mxu0 %v1377
  %v1529 = vpop.f32.mrb[0].mxu0
  %v1530 = vadd.f32 %v1258, %v1529
  %v1531 = vpop.f32.mrb[0].mxu0
  %v1532 = vadd.f32 %v1260, %v1531
  %1533 = vmatprep.mubr.f32.mxu0 0.0
  %1534 = vmatmul.mubr.f32.gmra.mrb[0].mxu0 %v1380
  %v1535 = vpop.f32.mrb[0].mxu0
  %v1536 = vadd.f32 %v1264, %v1535
  %v1537 = vpop.f32.mrb[0].mxu0
  %v1538 = vadd.f32 %v1266, %v1537
  %1539 = vmatprep.mubr.f32.mxu0 0.0
  %1540 = vmatmul.mubr.f32.gmra.mrb[0].mxu0 %v1383
  %v1541 = vpop.f32.mrb[0].mxu0
  %v1542 = vadd.f32 %v1270, %v1541
  %v1543 = vpop.f32.mrb[0].mxu0
  %v1544 = vadd.f32 %v1272, %v1543
  %1545 = vmatprep.mubr.f32.mxu0 0.0
  %1546 = vmatmul.mubr.f32.gmra.mrb[0].mxu0 %v1386
  %v1547 = vpop.f32.mrb[0].mxu0
  %v1548 = vadd.f32 %v1276, %v1547
  %v1549 = vpop.f32.mrb[0].mxu0
  %v1550 = vadd.f32 %v1278, %v1549
  %1551 = vmatprep.mubr.f32.mxu0 0.0
  %1552 = vmatmul.mubr.f32.gmra.mrb[0].mxu0 %v1389
  %v1553 = vpop.f32.mrb[0].mxu0
  %v1554 = vadd.f32 %v1282, %v1553
  %v1555 = vpop.f32.mrb[0].mxu0
  %v1556 = vadd.f32 %v1284, %v1555
  %1557 = vmatprep.mubr.f32.mxu0 0.0
  %1558 = vmatmul.mubr.f32.gmra.mrb[0].mxu0 %v1392
  %v1559 = vpop.f32.mrb[0].mxu0
  %v1560 = vadd.f32 %v1288, %v1559
  %v1561 = vpop.f32.mrb[0].mxu0
  %v1562 = vadd.f32 %v1290, %v1561
  %1563 = vmatprep.mubr.f32.mxu0 0.0
  %1564 = vmatmul.mubr.f32.gmra.mrb[0].mxu0 %v1395
  %v1565 = vpop.f32.mrb[0].mxu0
  %v1566 = vadd.f32 %v1294, %v1565
  %v1567 = vpop.f32.mrb[0].mxu0
  %v1568 = vadd.f32 %v1296, %v1567
  %1569 = vmatprep.mubr.f32.mxu0 0.0
  %1570 = vmatmul.mubr.f32.gmra.mrb[0].mxu0 %v1398
  %v1571 = vpop.f32.mrb[0].mxu0
  %v1572 = vadd.f32 %v1300, %v1571
  %v1573 = vpop.f32.mrb[0].mxu0
  %v1574 = vadd.f32 %v1302, %v1573
  %1575 = vmatprep.mubr.f32.mxu0 0.0
  %1576 = vmatmul.mubr.f32.gmra.mrb[0].mxu0 %v1401
  %v1577 = vpop.f32.mrb[0].mxu0
  %v1578 = vadd.f32 %v1306, %v1577
  %v1579 = vpop.f32.mrb[0].mxu0
  %v1580 = vadd.f32 %v1308, %v1579
  %1581 = vmatprep.mubr.f32.mxu0 0.0
  %1582 = vmatmul.mubr.f32.gmra.mrb[0].mxu0 %v1404
  %v1583 = vpop.f32.mrb[0].mxu0
  %v1584 = vadd.f32 %v1312, %v1583
  %v1585 = vpop.f32.mrb[0].mxu0
  %v1586 = vadd.f32 %v1314, %v1585
  %1587 = vmatprep.mubr.f32.mxu0 0.0
  %1588 = vmatmul.mubr.f32.gmra.mrb[0].mxu0 %v1407
  %v1589 = vpop.f32.mrb[0].mxu0
  %v1590 = vadd.f32 %v1318, %v1589
  %v1591 = vpop.f32.mrb[0].mxu0
  %v1592 = vadd.f32 %v1320, %v1591
  %1593 = vmatprep.mubr.f32.mxu0 0.0
  %1594 = vmatmul.mubr.f32.gmra.mrb[0].mxu0 %v1410
  %v1595 = vpop.f32.mrb[0].mxu0
  %v1596 = vadd.f32 %v1324, %v1595
  %v1597 = vpop.f32.mrb[0].mxu0
  %v1598 = vadd.f32 %v1326, %v1597
  %1599 = vmatprep.mubr.f32.mxu0 0.0
  %1600 = vmatmul.mubr.f32.gmra.mrb[0].mxu0 %v1413
  %v1601 = vpop.f32.mrb[0].mxu0
  %v1602 = vadd.f32 %v1330, %v1601
  %v1603 = vpop.f32.mrb[0].mxu0
  %v1604 = vadd.f32 %v1332, %v1603
  %1605 = vmatprep.mubr.f32.mxu0 0.0
  %1606 = vmatmul.mubr.f32.gmra.mrb[0].mxu0 %v1416
  %v1607 = vpop.f32.mrb[0].mxu0
  %v1608 = vadd.f32 %v1336, %v1607
  %v1609 = vpop.f32.mrb[0].mxu0
  %v1610 = vadd.f32 %v1338, %v1609
  %1611 = vmatprep.mubr.f32.mxu0 0.0
  %1612 = vmatmul.mubr.f32.gmra.mrb[0].mxu0 %v1419
  %v1613 = vpop.f32.mrb[0].mxu0
  %v1614 = vadd.f32 %v1342, %v1613
  %v1615 = vpop.f32.mrb[0].mxu0
  %v1616 = vadd.f32 %v1344, %v1615
  %1617 = vmatprep.mubr.f32.mxu0 0.0
  %1618 = vmatmul.mubr.f32.gmra.mrb[0].mxu0 %v1422
  %v1619 = vpop.f32.mrb[0].mxu0
  %v1620 = vadd.f32 %v1348, %v1619
  %v1621 = vpop.f32.mrb[0].mxu0
  %v1622 = vadd.f32 %v1350, %v1621
  %1623 = vmatprep.mubr.f32.mxu0 0.0
  %1624 = vmatmul.mubr.f32.gmra.mrb[0].mxu0 %v1425
  %v1625 = vpop.f32.mrb[0].mxu0
  %v1626 = vadd.f32 %v1354, %v1625
  %v1627 = vpop.f32.mrb[0].mxu0
  %v1628 = vadd.f32 %v1356, %v1627
  %1629 = vdwg.mxu0
  %s1630 = scalar_lea.vmem %s1, 920
  %v1631 = vld [vmem:[%s1630] sm:$0xff]
  %v1632 = vld [vmem:[%s1630 + $0x8] sm:$0xff]
  %v1633 = vld [vmem:[%s1630 + $0x10] sm:$0xff]
  %v1634 = vld [vmem:[%s1630 + $0x18] sm:$0xff]
  %v1635 = vld [vmem:[%s1630 + $0x20] sm:$0xff]
  %v1636 = vld [vmem:[%s1630 + $0x28] sm:$0xff]
  %v1637 = vld [vmem:[%s1630 + $0x30] sm:$0xff]
  %v1638 = vld [vmem:[%s1630 + $0x38] sm:$0xff]
  %v1639 = vld [vmem:[%s1630 + $0x40] sm:$0xff]
  %v1640 = vld [vmem:[%s1630 + $0x48] sm:$0xff]
  %v1641 = vld [vmem:[%s1630 + $0x50] sm:$0xff]
  %v1642 = vld [vmem:[%s1630 + $0x58] sm:$0xff]
  %v1643 = vld [vmem:[%s1630 + $0x60] sm:$0xff]
  %v1644 = vld [vmem:[%s1630 + $0x68] sm:$0xff]
  %v1645 = vld [vmem:[%s1630 + $0x70] sm:$0xff]
  %v1646 = vld [vmem:[%s1630 + $0x78] sm:$0xff]
  %v1647 = vld [vmem:[%s1630 + $0x80] sm:$0xff]
  %v1648 = vld [vmem:[%s1630 + $0x88] sm:$0xff]
  %v1649 = vld [vmem:[%s1630 + $0x90] sm:$0xff]
  %v1650 = vld [vmem:[%s1630 + $0x98] sm:$0xff]
  %v1651 = vld [vmem:[%s1630 + $0xa0] sm:$0xff]
  %v1652 = vld [vmem:[%s1630 + $0xa8] sm:$0xff]
  %v1653 = vld [vmem:[%s1630 + $0xb0] sm:$0xf]
  %v1655 = vsel %vm132, %v1631, 0
  %v1658 = vsel %vm132, %v1632, 0
  %v1661 = vsel %vm132, %v1633, 0
  %v1664 = vsel %vm132, %v1634, 0
  %v1667 = vsel %vm132, %v1635, 0
  %v1670 = vsel %vm132, %v1636, 0
  %v1673 = vsel %vm132, %v1637, 0
  %v1676 = vsel %vm132, %v1638, 0
  %v1679 = vsel %vm132, %v1639, 0
  %v1682 = vsel %vm132, %v1640, 0
  %v1685 = vsel %vm132, %v1641, 0
  %v1688 = vsel %vm132, %v1642, 0
  %v1691 = vsel %vm132, %v1643, 0
  %v1694 = vsel %vm132, %v1644, 0
  %v1697 = vsel %vm132, %v1645, 0
  %v1700 = vsel %vm132, %v1646, 0
  %v1703 = vsel %vm132, %v1647, 0
  %v1706 = vsel %vm132, %v1648, 0
  %v1709 = vsel %vm132, %v1649, 0
  %v1712 = vsel %vm132, %v1650, 0
  %v1715 = vsel %vm132, %v1651, 0
  %v1718 = vsel %vm132, %v1652, 0
  %v1721 = vsel %vm132, %v1653, 0
  %1723 = vmatprep.subr.mxu0 %v70
  %1724 = vmatpush1.msra.mxu0 %v69
  %1725 = vmatprep.subr.mxu0 %v72
  %1726 = vmatpush1.msra.mxu0 %v71
  %1727 = vmatprep.subr.mxu0 %v74
  %1728 = vmatpush1.msra.mxu0 %v73
  %1729 = vmatprep.subr.mxu0 %v76
  %1730 = vmatpush1.msra.mxu0 %v75
  %1731 = vmatprep.subr.mxu0 %v78
  %1732 = vmatpush1.msra.mxu0 %v77
  %1733 = vmatprep.subr.mxu0 %v80
  %1734 = vmatpush1.msra.mxu0 %v79
  %1735 = vmatprep.subr.mxu0 %v82
  %1736 = vmatpush1.msra.mxu0 %v81
  %1737 = vmatprep.subr.mxu0 %v787
  %1738 = vmatpush1.msra.mxu0 %v784
  %1739 = vmatprep.subr.mxu0 0.0
  %1740 = vmatpush1.msra.mxu0 0.0
  %1741 = vmatprep.subr.mxu0 0.0
  %1742 = vmatpush1.msra.mxu0 0.0
  %1743 = vmatprep.subr.mxu0 0.0
  %1744 = vmatpush1.msra.mxu0 0.0
  %1745 = vmatprep.subr.mxu0 0.0
  %1746 = vmatpush1.msra.mxu0 0.0
  %1747 = vmatprep.subr.mxu0 0.0
  %1748 = vmatpush1.msra.mxu0 0.0
  %1749 = vmatprep.subr.mxu0 0.0
  %1750 = vmatpush1.msra.mxu0 0.0
  %1751 = vmatprep.subr.mxu0 0.0
  %1752 = vmatpush1.msra.mxu0 0.0
  %1753 = vmatprep.subr.mxu0 0.0
  %1754 = vmatpush1.msra.mxu0 0.0
  %1755 = vmatprep.subr.mxu0 0.0
  %1756 = vmatpush1.msra.mxu0 0.0
  %1757 = vmatprep.subr.mxu0 0.0
  %1758 = vmatpush1.msra.mxu0 0.0
  %1759 = vmatprep.subr.mxu0 0.0
  %1760 = vmatpush1.msra.mxu0 0.0
  %1761 = vmatprep.subr.mxu0 0.0
  %1762 = vmatpush1.msra.mxu0 0.0
  %1763 = vmatprep.subr.mxu0 0.0
  %1764 = vmatpush1.msra.mxu0 0.0
  %1765 = vmatprep.subr.mxu0 0.0
  %1766 = vmatpush1.msra.mxu0 0.0
  %1767 = vmatprep.subr.mxu0 0.0
  %1768 = vmatpush1.msra.mxu0 0.0
  %1769 = vmatprep.subr.mxu0 0.0
  %1770 = vmatpush1.msra.mxu0 0.0
  %1771 = vmatprep.subr.mxu0 0.0
  %1772 = vmatpush1.msra.mxu0 0.0
  %1773 = vmatprep.subr.mxu0 0.0
  %1774 = vmatpush1.msra.mxu0 0.0
  %1775 = vmatprep.subr.mxu0 0.0
  %1776 = vmatpush1.msra.mxu0 0.0
  %1777 = vmatprep.subr.mxu0 0.0
  %1778 = vmatpush1.msra.mxu0 0.0
  %1779 = vmatprep.subr.mxu0 0.0
  %1780 = vmatpush1.msra.mxu0 0.0
  %1781 = vmatprep.subr.mxu0 0.0
  %1782 = vmatpush1.msra.mxu0 0.0
  %1783 = vmatprep.subr.mxu0 0.0
  %1784 = vmatpush1.msra.mxu0 0.0
  %1785 = vmatprep.subr.mxu0 0.0
  %1786 = vmatpush1.msra.mxu0 0.0
  %1787 = vmatprep.mubr.f32.mxu0 0.0
  %1788 = vmatmul.mubr.f32.gmra.mrb[0].mxu0 %v1655
  %v1789 = vpop.f32.mrb[0].mxu0
  %v1790 = vadd.f32 0.0, %v1789
  %v1791 = vpop.f32.mrb[0].mxu0
  %v1792 = vadd.f32 0.0, %v1791
  %1793 = vmatprep.mubr.f32.mxu0 0.0
  %1794 = vmatmul.mubr.f32.gmra.mrb[0].mxu0 %v1658
  %v1795 = vpop.f32.mrb[0].mxu0
  %v1796 = vadd.f32 0.0, %v1795
  %v1797 = vpop.f32.mrb[0].mxu0
  %v1798 = vadd.f32 0.0, %v1797
  %1799 = vmatprep.mubr.f32.mxu0 0.0
  %1800 = vmatmul.mubr.f32.gmra.mrb[0].mxu0 %v1661
  %v1801 = vpop.f32.mrb[0].mxu0
  %v1802 = vadd.f32 0.0, %v1801
  %v1803 = vpop.f32.mrb[0].mxu0
  %v1804 = vadd.f32 0.0, %v1803
  %1805 = vmatprep.mubr.f32.mxu0 0.0
  %1806 = vmatmul.mubr.f32.gmra.mrb[0].mxu0 %v1664
  %v1807 = vpop.f32.mrb[0].mxu0
  %v1808 = vadd.f32 0.0, %v1807
  %v1809 = vpop.f32.mrb[0].mxu0
  %v1810 = vadd.f32 0.0, %v1809
  %1811 = vmatprep.mubr.f32.mxu0 0.0
  %1812 = vmatmul.mubr.f32.gmra.mrb[0].mxu0 %v1667
  %v1813 = vpop.f32.mrb[0].mxu0
  %v1814 = vadd.f32 0.0, %v1813
  %v1815 = vpop.f32.mrb[0].mxu0
  %v1816 = vadd.f32 0.0, %v1815
  %1817 = vmatprep.mubr.f32.mxu0 0.0
  %1818 = vmatmul.mubr.f32.gmra.mrb[0].mxu0 %v1670
  %v1819 = vpop.f32.mrb[0].mxu0
  %v1820 = vadd.f32 0.0, %v1819
  %v1821 = vpop.f32.mrb[0].mxu0
  %v1822 = vadd.f32 0.0, %v1821
  %1823 = vmatprep.mubr.f32.mxu0 0.0
  %1824 = vmatmul.mubr.f32.gmra.mrb[0].mxu0 %v1673
  %v1825 = vpop.f32.mrb[0].mxu0
  %v1826 = vadd.f32 0.0, %v1825
  %v1827 = vpop.f32.mrb[0].mxu0
  %v1828 = vadd.f32 0.0, %v1827
  %1829 = vmatprep.mubr.f32.mxu0 0.0
  %1830 = vmatmul.mubr.f32.gmra.mrb[0].mxu0 %v1676
  %v1831 = vpop.f32.mrb[0].mxu0
  %v1832 = vadd.f32 0.0, %v1831
  %v1833 = vpop.f32.mrb[0].mxu0
  %v1834 = vadd.f32 0.0, %v1833
  %1835 = vmatprep.mubr.f32.mxu0 0.0
  %1836 = vmatmul.mubr.f32.gmra.mrb[0].mxu0 %v1679
  %v1837 = vpop.f32.mrb[0].mxu0
  %v1838 = vadd.f32 0.0, %v1837
  %v1839 = vpop.f32.mrb[0].mxu0
  %v1840 = vadd.f32 0.0, %v1839
  %1841 = vmatprep.mubr.f32.mxu0 0.0
  %1842 = vmatmul.mubr.f32.gmra.mrb[0].mxu0 %v1682
  %v1843 = vpop.f32.mrb[0].mxu0
  %v1844 = vadd.f32 0.0, %v1843
  %v1845 = vpop.f32.mrb[0].mxu0
  %v1846 = vadd.f32 0.0, %v1845
  %1847 = vmatprep.mubr.f32.mxu0 0.0
  %1848 = vmatmul.mubr.f32.gmra.mrb[0].mxu0 %v1685
  %v1849 = vpop.f32.mrb[0].mxu0
  %v1850 = vadd.f32 0.0, %v1849
  %v1851 = vpop.f32.mrb[0].mxu0
  %v1852 = vadd.f32 0.0, %v1851
  %1853 = vmatprep.mubr.f32.mxu0 0.0
  %1854 = vmatmul.mubr.f32.gmra.mrb[0].mxu0 %v1688
  %v1855 = vpop.f32.mrb[0].mxu0
  %v1856 = vadd.f32 0.0, %v1855
  %v1857 = vpop.f32.mrb[0].mxu0
  %v1858 = vadd.f32 0.0, %v1857
  %1859 = vmatprep.mubr.f32.mxu0 0.0
  %1860 = vmatmul.mubr.f32.gmra.mrb[0].mxu0 %v1691
  %v1861 = vpop.f32.mrb[0].mxu0
  %v1862 = vadd.f32 0.0, %v1861
  %v1863 = vpop.f32.mrb[0].mxu0
  %v1864 = vadd.f32 0.0, %v1863
  %1865 = vmatprep.mubr.f32.mxu0 0.0
  %1866 = vmatmul.mubr.f32.gmra.mrb[0].mxu0 %v1694
  %v1867 = vpop.f32.mrb[0].mxu0
  %v1868 = vadd.f32 0.0, %v1867
  %v1869 = vpop.f32.mrb[0].mxu0
  %v1870 = vadd.f32 0.0, %v1869
  %1871 = vmatprep.mubr.f32.mxu0 0.0
  %1872 = vmatmul.mubr.f32.gmra.mrb[0].mxu0 %v1697
  %v1873 = vpop.f32.mrb[0].mxu0
  %v1874 = vadd.f32 0.0, %v1873
  %v1875 = vpop.f32.mrb[0].mxu0
  %v1876 = vadd.f32 0.0, %v1875
  %1877 = vmatprep.mubr.f32.mxu0 0.0
  %1878 = vmatmul.mubr.f32.gmra.mrb[0].mxu0 %v1700
  %v1879 = vpop.f32.mrb[0].mxu0
  %v1880 = vadd.f32 0.0, %v1879
  %v1881 = vpop.f32.mrb[0].mxu0
  %v1882 = vadd.f32 0.0, %v1881
  %1883 = vmatprep.mubr.f32.mxu0 0.0
  %1884 = vmatmul.mubr.f32.gmra.mrb[0].mxu0 %v1703
  %v1885 = vpop.f32.mrb[0].mxu0
  %v1886 = vadd.f32 0.0, %v1885
  %v1887 = vpop.f32.mrb[0].mxu0
  %v1888 = vadd.f32 0.0, %v1887
  %1889 = vmatprep.mubr.f32.mxu0 0.0
  %1890 = vmatmul.mubr.f32.gmra.mrb[0].mxu0 %v1706
  %v1891 = vpop.f32.mrb[0].mxu0
  %v1892 = vadd.f32 0.0, %v1891
  %v1893 = vpop.f32.mrb[0].mxu0
  %v1894 = vadd.f32 0.0, %v1893
  %1895 = vmatprep.mubr.f32.mxu0 0.0
  %1896 = vmatmul.mubr.f32.gmra.mrb[0].mxu0 %v1709
  %v1897 = vpop.f32.mrb[0].mxu0
  %v1898 = vadd.f32 0.0, %v1897
  %v1899 = vpop.f32.mrb[0].mxu0
  %v1900 = vadd.f32 0.0, %v1899
  %1901 = vmatprep.mubr.f32.mxu0 0.0
  %1902 = vmatmul.mubr.f32.gmra.mrb[0].mxu0 %v1712
  %v1903 = vpop.f32.mrb[0].mxu0
  %v1904 = vadd.f32 0.0, %v1903
  %v1905 = vpop.f32.mrb[0].mxu0
  %v1906 = vadd.f32 0.0, %v1905
  %1907 = vmatprep.mubr.f32.mxu0 0.0
  %1908 = vmatmul.mubr.f32.gmra.mrb[0].mxu0 %v1715
  %v1909 = vpop.f32.mrb[0].mxu0
  %v1910 = vadd.f32 0.0, %v1909
  %v1911 = vpop.f32.mrb[0].mxu0
  %v1912 = vadd.f32 0.0, %v1911
  %1913 = vmatprep.mubr.f32.mxu0 0.0
  %1914 = vmatmul.mubr.f32.gmra.mrb[0].mxu0 %v1718
  %v1915 = vpop.f32.mrb[0].mxu0
  %v1916 = vadd.f32 0.0, %v1915
  %v1917 = vpop.f32.mrb[0].mxu0
  %v1918 = vadd.f32 0.0, %v1917
  %1919 = vmatprep.mubr.f32.mxu0 0.0
  %1920 = vmatmul.mubr.f32.gmra.mrb[0].mxu0 %v1721
  %v1921 = vpop.f32.mrb[0].mxu0
  %v1922 = vadd.f32 0.0, %v1921
  %v1923 = vpop.f32.mrb[0].mxu0
  %v1924 = vadd.f32 0.0, %v1923
  %1925 = vdwg.mxu0
  %v1926 = vadd.f32 %v1494, %v1790
  %v1927 = vadd.f32 %v1496, %v1792
  %v1928 = vadd.f32 %v1500, %v1796
  %v1929 = vadd.f32 %v1502, %v1798
  %v1930 = vadd.f32 %v1506, %v1802
  %v1931 = vadd.f32 %v1508, %v1804
  %v1932 = vadd.f32 %v1512, %v1808
  %v1933 = vadd.f32 %v1514, %v1810
  %v1934 = vadd.f32 %v1518, %v1814
  %v1935 = vadd.f32 %v1520, %v1816
  %v1936 = vadd.f32 %v1524, %v1820
  %v1937 = vadd.f32 %v1526, %v1822
  %v1938 = vadd.f32 %v1530, %v1826
  %v1939 = vadd.f32 %v1532, %v1828
  %v1940 = vadd.f32 %v1536, %v1832
  %v1941 = vadd.f32 %v1538, %v1834
  %v1942 = vadd.f32 %v1542, %v1838
  %v1943 = vadd.f32 %v1544, %v1840
  %v1944 = vadd.f32 %v1548, %v1844
  %v1945 = vadd.f32 %v1550, %v1846
  %v1946 = vadd.f32 %v1554, %v1850
  %v1947 = vadd.f32 %v1556, %v1852
  %v1948 = vadd.f32 %v1560, %v1856
  %v1949 = vadd.f32 %v1562, %v1858
  %v1950 = vadd.f32 %v1566, %v1862
  %v1951 = vadd.f32 %v1568, %v1864
  %v1952 = vadd.f32 %v1572, %v1868
  %v1953 = vadd.f32 %v1574, %v1870
  %v1954 = vadd.f32 %v1578, %v1874
  %v1955 = vadd.f32 %v1580, %v1876
  %v1956 = vadd.f32 %v1584, %v1880
  %v1957 = vadd.f32 %v1586, %v1882
  %v1958 = vadd.f32 %v1590, %v1886
  %v1959 = vadd.f32 %v1592, %v1888
  %v1960 = vadd.f32 %v1596, %v1892
  %v1961 = vadd.f32 %v1598, %v1894
  %v1962 = vadd.f32 %v1602, %v1898
  %v1963 = vadd.f32 %v1604, %v1900
  %v1964 = vadd.f32 %v1608, %v1904
  %v1965 = vadd.f32 %v1610, %v1906
  %v1966 = vadd.f32 %v1614, %v1910
  %v1967 = vadd.f32 %v1616, %v1912
  %v1968 = vadd.f32 %v1620, %v1916
  %v1969 = vadd.f32 %v1622, %v1918
  %v1970 = vadd.f32 %v1626, %v1922
  %v1971 = vadd.f32 %v1628, %v1924
  %v1972 = vmax.f32 %v992, %v1926
  %v1973 = vmax.f32 %v993, %v1927
  %v1974 = vmax.f32 %v994, %v1928
  %v1975 = vmax.f32 %v995, %v1929
  %v1976 = vmax.f32 %v996, %v1930
  %v1977 = vmax.f32 %v997, %v1931
  %v1978 = vmax.f32 %v998, %v1932
  %v1979 = vmax.f32 %v999, %v1933
  %v1980 = vmax.f32 %v1000, %v1934
  %v1981 = vmax.f32 %v1001, %v1935
  %v1982 = vmax.f32 %v1002, %v1936
  %v1983 = vmax.f32 %v1003, %v1937
  %v1984 = vmax.f32 %v1004, %v1938
  %v1985 = vmax.f32 %v1005, %v1939
  %v1986 = vmax.f32 %v1006, %v1940
  %v1987 = vmax.f32 %v1007, %v1941
  %v1988 = vmax.f32 %v1008, %v1942
  %v1989 = vmax.f32 %v1009, %v1943
  %v1990 = vmax.f32 %v1010, %v1944
  %v1991 = vmax.f32 %v1011, %v1945
  %v1992 = vmax.f32 %v1012, %v1946
  %v1993 = vmax.f32 %v1013, %v1947
  %v1994 = vmax.f32 %v1014, %v1948
  %v1995 = vmax.f32 %v1015, %v1949
  %v1996 = vmax.f32 %v1016, %v1950
  %v1997 = vmax.f32 %v1017, %v1951
  %v1998 = vmax.f32 %v1018, %v1952
  %v1999 = vmax.f32 %v1019, %v1953
  %v2000 = vmax.f32 %v1020, %v1954
  %v2001 = vmax.f32 %v1021, %v1955
  %v2002 = vmax.f32 %v1022, %v1956
  %v2003 = vmax.f32 %v1023, %v1957
  %v2004 = vmax.f32 %v1024, %v1958
  %v2005 = vmax.f32 %v1025, %v1959
  %v2006 = vmax.f32 %v1026, %v1960
  %v2007 = vmax.f32 %v1027, %v1961
  %v2008 = vmax.f32 %v1028, %v1962
  %v2009 = vmax.f32 %v1029, %v1963
  %v2010 = vmax.f32 %v1030, %v1964
  %v2011 = vmax.f32 %v1031, %v1965
  %v2012 = vmax.f32 %v1032, %v1966
  %v2013 = vmax.f32 %v1033, %v1967
  %v2014 = vmax.f32 %v1034, %v1968
  %v2015 = vmax.f32 %v1035, %v1969
  %v2016 = vmax.f32 %v1036, %v1970
  %v2017 = vmax.f32 %v1037, %v1971
  %v2018 = vld [vmem:[%s2] sm:$0xff]
  %v2019 = vld [vmem:[%s2 + $0x8] sm:$0xff]
  %v2020 = vld [vmem:[%s2 + $0x10] sm:$0xff]
  %v2021 = vld [vmem:[%s2 + $0x18] sm:$0xff]
  %v2022 = vld [vmem:[%s2 + $0x20] sm:$0xff]
  %v2023 = vld [vmem:[%s2 + $0x28] sm:$0xff]
  %v2024 = vld [vmem:[%s2 + $0x30] sm:$0xff]
  %v2025 = vld [vmem:[%s2 + $0x38] sm:$0xff]
  %v2026 = vld [vmem:[%s2 + $0x40] sm:$0xff]
  %v2027 = vld [vmem:[%s2 + $0x48] sm:$0xff]
  %v2028 = vld [vmem:[%s2 + $0x50] sm:$0xff]
  %v2029 = vld [vmem:[%s2 + $0x58] sm:$0xff]
  %v2030 = vld [vmem:[%s2 + $0x60] sm:$0xff]
  %v2031 = vld [vmem:[%s2 + $0x68] sm:$0xff]
  %v2032 = vld [vmem:[%s2 + $0x70] sm:$0xff]
  %v2033 = vld [vmem:[%s2 + $0x78] sm:$0xff]
  %v2034 = vld [vmem:[%s2 + $0x80] sm:$0xff]
  %v2035 = vld [vmem:[%s2 + $0x88] sm:$0xff]
  %v2036 = vld [vmem:[%s2 + $0x90] sm:$0xff]
  %v2037 = vld [vmem:[%s2 + $0x98] sm:$0xff]
  %v2038 = vld [vmem:[%s2 + $0xa0] sm:$0xff]
  %v2039 = vld [vmem:[%s2 + $0xa8] sm:$0xff]
  %v2040 = vld [vmem:[%s2 + $0xb0] sm:$0xf]
  %2042 = vset.pattern.permute.xlu0 0
  %2043 = vperm.xlu0 %2042, %v2018
  %v2044 = vpop.permute.xlu0 %2043
  %2047 = vset.pattern.permute.xlu0 0
  %2048 = vperm.xlu0 %2047, %v2019
  %v2049 = vpop.permute.xlu0 %2048
  %2052 = vset.pattern.permute.xlu0 0
  %2053 = vperm.xlu0 %2052, %v2020
  %v2054 = vpop.permute.xlu0 %2053
  %2057 = vset.pattern.permute.xlu0 0
  %2058 = vperm.xlu0 %2057, %v2021
  %v2059 = vpop.permute.xlu0 %2058
  %2062 = vset.pattern.permute.xlu0 0
  %2063 = vperm.xlu0 %2062, %v2022
  %v2064 = vpop.permute.xlu0 %2063
  %2067 = vset.pattern.permute.xlu0 0
  %2068 = vperm.xlu0 %2067, %v2023
  %v2069 = vpop.permute.xlu0 %2068
  %2072 = vset.pattern.permute.xlu0 0
  %2073 = vperm.xlu0 %2072, %v2024
  %v2074 = vpop.permute.xlu0 %2073
  %2077 = vset.pattern.permute.xlu0 0
  %2078 = vperm.xlu0 %2077, %v2025
  %v2079 = vpop.permute.xlu0 %2078
  %2082 = vset.pattern.permute.xlu0 0
  %2083 = vperm.xlu0 %2082, %v2026
  %v2084 = vpop.permute.xlu0 %2083
  %2087 = vset.pattern.permute.xlu0 0
  %2088 = vperm.xlu0 %2087, %v2027
  %v2089 = vpop.permute.xlu0 %2088
  %2092 = vset.pattern.permute.xlu0 0
  %2093 = vperm.xlu0 %2092, %v2028
  %v2094 = vpop.permute.xlu0 %2093
  %2097 = vset.pattern.permute.xlu0 0
  %2098 = vperm.xlu0 %2097, %v2029
  %v2099 = vpop.permute.xlu0 %2098
  %2102 = vset.pattern.permute.xlu0 0
  %2103 = vperm.xlu0 %2102, %v2030
  %v2104 = vpop.permute.xlu0 %2103
  %2107 = vset.pattern.permute.xlu0 0
  %2108 = vperm.xlu0 %2107, %v2031
  %v2109 = vpop.permute.xlu0 %2108
  %2112 = vset.pattern.permute.xlu0 0
  %2113 = vperm.xlu0 %2112, %v2032
  %v2114 = vpop.permute.xlu0 %2113
  %2117 = vset.pattern.permute.xlu0 0
  %2118 = vperm.xlu0 %2117, %v2033
  %v2119 = vpop.permute.xlu0 %2118
  %2122 = vset.pattern.permute.xlu0 0
  %2123 = vperm.xlu0 %2122, %v2034
  %v2124 = vpop.permute.xlu0 %2123
  %2127 = vset.pattern.permute.xlu0 0
  %2128 = vperm.xlu0 %2127, %v2035
  %v2129 = vpop.permute.xlu0 %2128
  %2132 = vset.pattern.permute.xlu0 0
  %2133 = vperm.xlu0 %2132, %v2036
  %v2134 = vpop.permute.xlu0 %2133
  %2137 = vset.pattern.permute.xlu0 0
  %2138 = vperm.xlu0 %2137, %v2037
  %v2139 = vpop.permute.xlu0 %2138
  %2142 = vset.pattern.permute.xlu0 0
  %2143 = vperm.xlu0 %2142, %v2038
  %v2144 = vpop.permute.xlu0 %2143
  %2147 = vset.pattern.permute.xlu0 0
  %2148 = vperm.xlu0 %2147, %v2039
  %v2149 = vpop.permute.xlu0 %2148
  %2152 = vset.pattern.permute.xlu0 0
  %2153 = vperm.xlu0 %2152, %v2040
  %v2154 = vpop.permute.xlu0 %2153
  %v2156 = vadd.f32 %v1972, %v2044
  %v2157 = vadd.f32 %v1973, %v2044
  %v2158 = vadd.f32 %v1974, %v2049
  %v2159 = vadd.f32 %v1975, %v2049
  %v2160 = vadd.f32 %v1976, %v2054
  %v2161 = vadd.f32 %v1977, %v2054
  %v2162 = vadd.f32 %v1978, %v2059
  %v2163 = vadd.f32 %v1979, %v2059
  %v2164 = vadd.f32 %v1980, %v2064
  %v2165 = vadd.f32 %v1981, %v2064
  %v2166 = vadd.f32 %v1982, %v2069
  %v2167 = vadd.f32 %v1983, %v2069
  %v2168 = vadd.f32 %v1984, %v2074
  %v2169 = vadd.f32 %v1985, %v2074
  %v2170 = vadd.f32 %v1986, %v2079
  %v2171 = vadd.f32 %v1987, %v2079
  %v2172 = vadd.f32 %v1988, %v2084
  %v2173 = vadd.f32 %v1989, %v2084
  %v2174 = vadd.f32 %v1990, %v2089
  %v2175 = vadd.f32 %v1991, %v2089
  %v2176 = vadd.f32 %v1992, %v2094
  %v2177 = vadd.f32 %v1993, %v2094
  %v2178 = vadd.f32 %v1994, %v2099
  %v2179 = vadd.f32 %v1995, %v2099
  %v2180 = vadd.f32 %v1996, %v2104
  %v2181 = vadd.f32 %v1997, %v2104
  %v2182 = vadd.f32 %v1998, %v2109
  %v2183 = vadd.f32 %v1999, %v2109
  %v2184 = vadd.f32 %v2000, %v2114
  %v2185 = vadd.f32 %v2001, %v2114
  %v2186 = vadd.f32 %v2002, %v2119
  %v2187 = vadd.f32 %v2003, %v2119
  %v2188 = vadd.f32 %v2004, %v2124
  %v2189 = vadd.f32 %v2005, %v2124
  %v2190 = vadd.f32 %v2006, %v2129
  %v2191 = vadd.f32 %v2007, %v2129
  %v2192 = vadd.f32 %v2008, %v2134
  %v2193 = vadd.f32 %v2009, %v2134
  %v2194 = vadd.f32 %v2010, %v2139
  %v2195 = vadd.f32 %v2011, %v2139
  %v2196 = vadd.f32 %v2012, %v2144
  %v2197 = vadd.f32 %v2013, %v2144
  %v2198 = vadd.f32 %v2014, %v2149
  %v2199 = vadd.f32 %v2015, %v2149
  %v2200 = vadd.f32 %v2016, %v2154
  %v2201 = vadd.f32 %v2017, %v2154
  %v2202 = vmax.f32 %v2156, 0.0
  %v2203 = vmax.f32 %v2157, 0.0
  %v2204 = vmax.f32 %v2158, 0.0
  %v2205 = vmax.f32 %v2159, 0.0
  %v2206 = vmax.f32 %v2160, 0.0
  %v2207 = vmax.f32 %v2161, 0.0
  %v2208 = vmax.f32 %v2162, 0.0
  %v2209 = vmax.f32 %v2163, 0.0
  %v2210 = vmax.f32 %v2164, 0.0
  %v2211 = vmax.f32 %v2165, 0.0
  %v2212 = vmax.f32 %v2166, 0.0
  %v2213 = vmax.f32 %v2167, 0.0
  %v2214 = vmax.f32 %v2168, 0.0
  %v2215 = vmax.f32 %v2169, 0.0
  %v2216 = vmax.f32 %v2170, 0.0
  %v2217 = vmax.f32 %v2171, 0.0
  %v2218 = vmax.f32 %v2172, 0.0
  %v2219 = vmax.f32 %v2173, 0.0
  %v2220 = vmax.f32 %v2174, 0.0
  %v2221 = vmax.f32 %v2175, 0.0
  %v2222 = vmax.f32 %v2176, 0.0
  %v2223 = vmax.f32 %v2177, 0.0
  %v2224 = vmax.f32 %v2178, 0.0
  %v2225 = vmax.f32 %v2179, 0.0
  %v2226 = vmax.f32 %v2180, 0.0
  %v2227 = vmax.f32 %v2181, 0.0
  %v2228 = vmax.f32 %v2182, 0.0
  %v2229 = vmax.f32 %v2183, 0.0
  %v2230 = vmax.f32 %v2184, 0.0
  %v2231 = vmax.f32 %v2185, 0.0
  %v2232 = vmax.f32 %v2186, 0.0
  %v2233 = vmax.f32 %v2187, 0.0
  %v2234 = vmax.f32 %v2188, 0.0
  %v2235 = vmax.f32 %v2189, 0.0
  %v2236 = vmax.f32 %v2190, 0.0
  %v2237 = vmax.f32 %v2191, 0.0
  %v2238 = vmax.f32 %v2192, 0.0
  %v2239 = vmax.f32 %v2193, 0.0
  %v2240 = vmax.f32 %v2194, 0.0
  %v2241 = vmax.f32 %v2195, 0.0
  %v2242 = vmax.f32 %v2196, 0.0
  %v2243 = vmax.f32 %v2197, 0.0
  %v2244 = vmax.f32 %v2198, 0.0
  %v2245 = vmax.f32 %v2199, 0.0
  %v2246 = vmax.f32 %v2200, 0.0
  %v2247 = vmax.f32 %v2201, 0.0
  %2294 = vrot.lane.b32.xlu0 %v2202, 127
  %v2295 = vpop.permute.xlu0 %2294
  %2296 = vrot.lane.b32.xlu0 %v2203, 127
  %v2297 = vpop.permute.xlu0 %2296
  %2298 = vrot.lane.b32.xlu0 %v2204, 127
  %v2299 = vpop.permute.xlu0 %2298
  %2300 = vrot.lane.b32.xlu0 %v2205, 127
  %v2301 = vpop.permute.xlu0 %2300
  %2302 = vrot.lane.b32.xlu0 %v2206, 127
  %v2303 = vpop.permute.xlu0 %2302
  %2304 = vrot.lane.b32.xlu0 %v2207, 127
  %v2305 = vpop.permute.xlu0 %2304
  %2306 = vrot.lane.b32.xlu0 %v2208, 127
  %v2307 = vpop.permute.xlu0 %2306
  %2308 = vrot.lane.b32.xlu0 %v2209, 127
  %v2309 = vpop.permute.xlu0 %2308
  %2310 = vrot.lane.b32.xlu0 %v2210, 127
  %v2311 = vpop.permute.xlu0 %2310
  %2312 = vrot.lane.b32.xlu0 %v2211, 127
  %v2313 = vpop.permute.xlu0 %2312
  %2314 = vrot.lane.b32.xlu0 %v2212, 127
  %v2315 = vpop.permute.xlu0 %2314
  %2316 = vrot.lane.b32.xlu0 %v2213, 127
  %v2317 = vpop.permute.xlu0 %2316
  %2318 = vrot.lane.b32.xlu0 %v2214, 127
  %v2319 = vpop.permute.xlu0 %2318
  %2320 = vrot.lane.b32.xlu0 %v2215, 127
  %v2321 = vpop.permute.xlu0 %2320
  %2322 = vrot.lane.b32.xlu0 %v2216, 127
  %v2323 = vpop.permute.xlu0 %2322
  %2324 = vrot.lane.b32.xlu0 %v2217, 127
  %v2325 = vpop.permute.xlu0 %2324
  %2326 = vrot.lane.b32.xlu0 %v2218, 127
  %v2327 = vpop.permute.xlu0 %2326
  %2328 = vrot.lane.b32.xlu0 %v2219, 127
  %v2329 = vpop.permute.xlu0 %2328
  %2330 = vrot.lane.b32.xlu0 %v2220, 127
  %v2331 = vpop.permute.xlu0 %2330
  %2332 = vrot.lane.b32.xlu0 %v2221, 127
  %v2333 = vpop.permute.xlu0 %2332
  %2334 = vrot.lane.b32.xlu0 %v2222, 127
  %v2335 = vpop.permute.xlu0 %2334
  %2336 = vrot.lane.b32.xlu0 %v2223, 127
  %v2337 = vpop.permute.xlu0 %2336
  %2338 = vrot.lane.b32.xlu0 %v2224, 127
  %v2339 = vpop.permute.xlu0 %2338
  %2340 = vrot.lane.b32.xlu0 %v2225, 127
  %v2341 = vpop.permute.xlu0 %2340
  %2342 = vrot.lane.b32.xlu0 %v2226, 127
  %v2343 = vpop.permute.xlu0 %2342
  %2344 = vrot.lane.b32.xlu0 %v2227, 127
  %v2345 = vpop.permute.xlu0 %2344
  %2346 = vrot.lane.b32.xlu0 %v2228, 127
  %v2347 = vpop.permute.xlu0 %2346
  %2348 = vrot.lane.b32.xlu0 %v2229, 127
  %v2349 = vpop.permute.xlu0 %2348
  %2350 = vrot.lane.b32.xlu0 %v2230, 127
  %v2351 = vpop.permute.xlu0 %2350
  %2352 = vrot.lane.b32.xlu0 %v2231, 127
  %v2353 = vpop.permute.xlu0 %2352
  %2354 = vrot.lane.b32.xlu0 %v2232, 127
  %v2355 = vpop.permute.xlu0 %2354
  %2356 = vrot.lane.b32.xlu0 %v2233, 127
  %v2357 = vpop.permute.xlu0 %2356
  %2358 = vrot.lane.b32.xlu0 %v2234, 127
  %v2359 = vpop.permute.xlu0 %2358
  %2360 = vrot.lane.b32.xlu0 %v2235, 127
  %v2361 = vpop.permute.xlu0 %2360
  %2362 = vrot.lane.b32.xlu0 %v2236, 127
  %v2363 = vpop.permute.xlu0 %2362
  %2364 = vrot.lane.b32.xlu0 %v2237, 127
  %v2365 = vpop.permute.xlu0 %2364
  %2366 = vrot.lane.b32.xlu0 %v2238, 127
  %v2367 = vpop.permute.xlu0 %2366
  %2368 = vrot.lane.b32.xlu0 %v2239, 127
  %v2369 = vpop.permute.xlu0 %2368
  %2370 = vrot.lane.b32.xlu0 %v2240, 127
  %v2371 = vpop.permute.xlu0 %2370
  %2372 = vrot.lane.b32.xlu0 %v2241, 127
  %v2373 = vpop.permute.xlu0 %2372
  %2374 = vrot.lane.b32.xlu0 %v2242, 127
  %v2375 = vpop.permute.xlu0 %2374
  %2376 = vrot.lane.b32.xlu0 %v2243, 127
  %v2377 = vpop.permute.xlu0 %2376
  %2378 = vrot.lane.b32.xlu0 %v2244, 127
  %v2379 = vpop.permute.xlu0 %2378
  %2380 = vrot.lane.b32.xlu0 %v2245, 127
  %v2381 = vpop.permute.xlu0 %2380
  %2382 = vrot.lane.b32.xlu0 %v2246, 127
  %v2383 = vpop.permute.xlu0 %2382
  %2384 = vrot.lane.b32.xlu0 %v2247, 127
  %v2385 = vpop.permute.xlu0 %2384
  %vm2386 = vcmask 1039360
  %v2387 = vsel %vm2386, %v2295, %v2297
  %v2388 = vsel %vm2386, %v2299, %v2301
  %v2389 = vsel %vm2386, %v2303, %v2305
  %v2390 = vsel %vm2386, %v2307, %v2309
  %v2391 = vsel %vm2386, %v2311, %v2313
  %v2392 = vsel %vm2386, %v2315, %v2317
  %v2393 = vsel %vm2386, %v2319, %v2321
  %v2394 = vsel %vm2386, %v2323, %v2325
  %v2395 = vsel %vm2386, %v2327, %v2329
  %v2396 = vsel %vm2386, %v2331, %v2333
  %v2397 = vsel %vm2386, %v2335, %v2337
  %v2398 = vsel %vm2386, %v2339, %v2341
  %v2399 = vsel %vm2386, %v2343, %v2345
  %v2400 = vsel %vm2386, %v2347, %v2349
  %v2401 = vsel %vm2386, %v2351, %v2353
  %v2402 = vsel %vm2386, %v2355, %v2357
  %v2403 = vsel %vm2386, %v2359, %v2361
  %v2404 = vsel %vm2386, %v2363, %v2365
  %v2405 = vsel %vm2386, %v2367, %v2369
  %v2406 = vsel %vm2386, %v2371, %v2373
  %v2407 = vsel %vm2386, %v2375, %v2377
  %v2408 = vsel %vm2386, %v2379, %v2381
  %v2409 = vsel %vm2386, %v2383, %v2385
  %v2456 = vmax.f32 %v2202, %v2387
  %v2457 = vmax.f32 %v2203, %v2297
  %v2458 = vmax.f32 %v2204, %v2388
  %v2459 = vmax.f32 %v2205, %v2301
  %v2460 = vmax.f32 %v2206, %v2389
  %v2461 = vmax.f32 %v2207, %v2305
  %v2462 = vmax.f32 %v2208, %v2390
  %v2463 = vmax.f32 %v2209, %v2309
  %v2464 = vmax.f32 %v2210, %v2391
  %v2465 = vmax.f32 %v2211, %v2313
  %v2466 = vmax.f32 %v2212, %v2392
  %v2467 = vmax.f32 %v2213, %v2317
  %v2468 = vmax.f32 %v2214, %v2393
  %v2469 = vmax.f32 %v2215, %v2321
  %v2470 = vmax.f32 %v2216, %v2394
  %v2471 = vmax.f32 %v2217, %v2325
  %v2472 = vmax.f32 %v2218, %v2395
  %v2473 = vmax.f32 %v2219, %v2329
  %v2474 = vmax.f32 %v2220, %v2396
  %v2475 = vmax.f32 %v2221, %v2333
  %v2476 = vmax.f32 %v2222, %v2397
  %v2477 = vmax.f32 %v2223, %v2337
  %v2478 = vmax.f32 %v2224, %v2398
  %v2479 = vmax.f32 %v2225, %v2341
  %v2480 = vmax.f32 %v2226, %v2399
  %v2481 = vmax.f32 %v2227, %v2345
  %v2482 = vmax.f32 %v2228, %v2400
  %v2483 = vmax.f32 %v2229, %v2349
  %v2484 = vmax.f32 %v2230, %v2401
  %v2485 = vmax.f32 %v2231, %v2353
  %v2486 = vmax.f32 %v2232, %v2402
  %v2487 = vmax.f32 %v2233, %v2357
  %v2488 = vmax.f32 %v2234, %v2403
  %v2489 = vmax.f32 %v2235, %v2361
  %v2490 = vmax.f32 %v2236, %v2404
  %v2491 = vmax.f32 %v2237, %v2365
  %v2492 = vmax.f32 %v2238, %v2405
  %v2493 = vmax.f32 %v2239, %v2369
  %v2494 = vmax.f32 %v2240, %v2406
  %v2495 = vmax.f32 %v2241, %v2373
  %v2496 = vmax.f32 %v2242, %v2407
  %v2497 = vmax.f32 %v2243, %v2377
  %v2498 = vmax.f32 %v2244, %v2408
  %v2499 = vmax.f32 %v2245, %v2381
  %v2500 = vmax.f32 %v2246, %v2409
  %v2501 = vmax.f32 %v2247, %v2385
  %v2502 = vld [vmem:[%s3] sm:$0xff]
  %v2503 = vld [vmem:[%s3 + $0x8] sm:$0xff]
  %v2504 = vld [vmem:[%s3 + $0x10] sm:$0xff]
  %v2505 = vld [vmem:[%s3 + $0x18] sm:$0xff]
  %v2506 = vld [vmem:[%s3 + $0x20] sm:$0xff]
  %v2507 = vld [vmem:[%s3 + $0x28] sm:$0xff]
  %v2508 = vld [vmem:[%s3 + $0x30] sm:$0xff]
  %v2509 = vld [vmem:[%s3 + $0x38] sm:$0xff]
  %v2510 = vld [vmem:[%s3 + $0x40] sm:$0xff]
  %v2511 = vld [vmem:[%s3 + $0x48] sm:$0xff]
  %v2512 = vld [vmem:[%s3 + $0x50] sm:$0xff]
  %v2513 = vld [vmem:[%s3 + $0x58] sm:$0xff]
  %v2514 = vld [vmem:[%s3 + $0x60] sm:$0xff]
  %v2515 = vld [vmem:[%s3 + $0x68] sm:$0xff]
  %v2516 = vld [vmem:[%s3 + $0x70] sm:$0xff]
  %v2517 = vld [vmem:[%s3 + $0x78] sm:$0xff]
  %v2518 = vld [vmem:[%s3 + $0x80] sm:$0xff]
  %v2519 = vld [vmem:[%s3 + $0x88] sm:$0xff]
  %v2520 = vld [vmem:[%s3 + $0x90] sm:$0xff]
  %v2521 = vld [vmem:[%s3 + $0x98] sm:$0xff]
  %v2522 = vld [vmem:[%s3 + $0xa0] sm:$0xff]
  %v2523 = vld [vmem:[%s3 + $0xa8] sm:$0xff]
  %v2524 = vld [vmem:[%s3 + $0xb0] sm:$0xff]
  %v2525 = vld [vmem:[%s3 + $0xb8] sm:$0xff]
  %v2526 = vld [vmem:[%s3 + $0xc0] sm:$0xff]
  %v2527 = vld [vmem:[%s3 + $0xc8] sm:$0xff]
  %v2528 = vld [vmem:[%s3 + $0xd0] sm:$0xff]
  %v2529 = vld [vmem:[%s3 + $0xd8] sm:$0xff]
  %v2530 = vld [vmem:[%s3 + $0xe0] sm:$0xff]
  %v2531 = vld [vmem:[%s3 + $0xe8] sm:$0x7f]
  %vm2532 = vcmask 908288
  %v2534 = vsel %vm2532, %v2457, 0
  %v2537 = vsel %vm2532, %v2459, 0
  %v2540 = vsel %vm2532, %v2461, 0
  %v2543 = vsel %vm2532, %v2463, 0
  %v2546 = vsel %vm2532, %v2465, 0
  %v2549 = vsel %vm2532, %v2467, 0
  %v2552 = vsel %vm2532, %v2469, 0
  %v2555 = vsel %vm2532, %v2471, 0
  %v2558 = vsel %vm2532, %v2473, 0
  %v2561 = vsel %vm2532, %v2475, 0
  %v2564 = vsel %vm2532, %v2477, 0
  %v2567 = vsel %vm2532, %v2479, 0
  %v2570 = vsel %vm2532, %v2481, 0
  %v2573 = vsel %vm2532, %v2483, 0
  %v2576 = vsel %vm2532, %v2485, 0
  %v2579 = vsel %vm2532, %v2487, 0
  %v2582 = vsel %vm2532, %v2489, 0
  %v2585 = vsel %vm2532, %v2491, 0
  %v2588 = vsel %vm2532, %v2493, 0
  %v2591 = vsel %vm2532, %v2495, 0
  %v2594 = vsel %vm2532, %v2497, 0
  %v2597 = vsel %vm2532, %v2499, 0
  %v2600 = vsel %vm2532, %v2501, 0
  %vm2602 = vcmask 1046528
  %v2604 = vsel %vm2602, %v2531, 0
  %2606 = vmatprep.subr.mxu0 0.0
  %2607 = vmatpush1.msra.mxu0 %v2502
  %2608 = vmatprep.subr.mxu0 0.0
  %2609 = vmatpush1.msra.mxu0 %v2503
  %2610 = vmatprep.subr.mxu0 0.0
  %2611 = vmatpush1.msra.mxu0 %v2504
  %2612 = vmatprep.subr.mxu0 0.0
  %2613 = vmatpush1.msra.mxu0 %v2505
  %2614 = vmatprep.subr.mxu0 0.0
  %2615 = vmatpush1.msra.mxu0 %v2506
  %2616 = vmatprep.subr.mxu0 0.0
  %2617 = vmatpush1.msra.mxu0 %v2507
  %2618 = vmatprep.subr.mxu0 0.0
  %2619 = vmatpush1.msra.mxu0 %v2508
  %2620 = vmatprep.subr.mxu0 0.0
  %2621 = vmatpush1.msra.mxu0 %v2509
  %2622 = vmatprep.subr.mxu0 0.0
  %2623 = vmatpush1.msra.mxu0 %v2510
  %2624 = vmatprep.subr.mxu0 0.0
  %2625 = vmatpush1.msra.mxu0 %v2511
  %2626 = vmatprep.subr.mxu0 0.0
  %2627 = vmatpush1.msra.mxu0 %v2512
  %2628 = vmatprep.subr.mxu0 0.0
  %2629 = vmatpush1.msra.mxu0 %v2513
  %2630 = vmatprep.subr.mxu0 0.0
  %2631 = vmatpush1.msra.mxu0 %v2514
  %2632 = vmatprep.subr.mxu0 0.0
  %2633 = vmatpush1.msra.mxu0 %v2515
  %2634 = vmatprep.subr.mxu0 0.0
  %2635 = vmatpush1.msra.mxu0 %v2516
  %2636 = vmatprep.subr.mxu0 0.0
  %2637 = vmatpush1.msra.mxu0 %v2517
  %2638 = vmatprep.subr.mxu0 0.0
  %2639 = vmatpush1.msra.mxu0 %v2518
  %2640 = vmatprep.subr.mxu0 0.0
  %2641 = vmatpush1.msra.mxu0 %v2519
  %2642 = vmatprep.subr.mxu0 0.0
  %2643 = vmatpush1.msra.mxu0 %v2520
  %2644 = vmatprep.subr.mxu0 0.0
  %2645 = vmatpush1.msra.mxu0 %v2521
  %2646 = vmatprep.subr.mxu0 0.0
  %2647 = vmatpush1.msra.mxu0 %v2522
  %2648 = vmatprep.subr.mxu0 0.0
  %2649 = vmatpush1.msra.mxu0 %v2523
  %2650 = vmatprep.subr.mxu0 0.0
  %2651 = vmatpush1.msra.mxu0 %v2524
  %2652 = vmatprep.subr.mxu0 0.0
  %2653 = vmatpush1.msra.mxu0 %v2525
  %2654 = vmatprep.subr.mxu0 0.0
  %2655 = vmatpush1.msra.mxu0 %v2526
  %2656 = vmatprep.subr.mxu0 0.0
  %2657 = vmatpush1.msra.mxu0 %v2527
  %2658 = vmatprep.subr.mxu0 0.0
  %2659 = vmatpush1.msra.mxu0 %v2528
  %2660 = vmatprep.subr.mxu0 0.0
  %2661 = vmatpush1.msra.mxu0 %v2529
  %2662 = vmatprep.subr.mxu0 0.0
  %2663 = vmatpush1.msra.mxu0 %v2530
  %2664 = vmatprep.subr.mxu0 0.0
  %2665 = vmatpush1.msra.mxu0 %v2604
  %2666 = vmatprep.subr.mxu0 0.0
  %2667 = vmatpush1.msra.mxu0 0.0
  %2668 = vmatprep.subr.mxu0 0.0
  %2669 = vmatpush1.msra.mxu0 0.0
  %2670 = vmatprep.mubr.f32.mxu0 %v2534
  %2671 = vmatmul.mubr.f32.gmra.mrb[0].mxu0 %v2456
  %v2672 = vpop.f32.mrb[0].mxu0
  %v2673 = vadd.f32 0.0, %v2672
  %v2674 = vpop.f32.mrb[0].mxu0
  %2675 = vmatprep.mubr.f32.mxu0 %v2537
  %2676 = vmatmul.mubr.f32.gmra.mrb[0].mxu0 %v2458
  %v2677 = vpop.f32.mrb[0].mxu0
  %v2678 = vadd.f32 0.0, %v2677
  %v2679 = vpop.f32.mrb[0].mxu0
  %2680 = vmatprep.mubr.f32.mxu0 %v2540
  %2681 = vmatmul.mubr.f32.gmra.mrb[0].mxu0 %v2460
  %v2682 = vpop.f32.mrb[0].mxu0
  %v2683 = vadd.f32 0.0, %v2682
  %v2684 = vpop.f32.mrb[0].mxu0
  %2685 = vmatprep.mubr.f32.mxu0 %v2543
  %2686 = vmatmul.mubr.f32.gmra.mrb[0].mxu0 %v2462
  %v2687 = vpop.f32.mrb[0].mxu0
  %v2688 = vadd.f32 0.0, %v2687
  %v2689 = vpop.f32.mrb[0].mxu0
  %2690 = vmatprep.mubr.f32.mxu0 %v2546
  %2691 = vmatmul.mubr.f32.gmra.mrb[0].mxu0 %v2464
  %v2692 = vpop.f32.mrb[0].mxu0
  %v2693 = vadd.f32 0.0, %v2692
  %v2694 = vpop.f32.mrb[0].mxu0
  %2695 = vmatprep.mubr.f32.mxu0 %v2549
  %2696 = vmatmul.mubr.f32.gmra.mrb[0].mxu0 %v2466
  %v2697 = vpop.f32.mrb[0].mxu0
  %v2698 = vadd.f32 0.0, %v2697
  %v2699 = vpop.f32.mrb[0].mxu0
  %2700 = vmatprep.mubr.f32.mxu0 %v2552
  %2701 = vmatmul.mubr.f32.gmra.mrb[0].mxu0 %v2468
  %v2702 = vpop.f32.mrb[0].mxu0
  %v2703 = vadd.f32 0.0, %v2702
  %v2704 = vpop.f32.mrb[0].mxu0
  %2705 = vmatprep.mubr.f32.mxu0 %v2555
  %2706 = vmatmul.mubr.f32.gmra.mrb[0].mxu0 %v2470
  %v2707 = vpop.f32.mrb[0].mxu0
  %v2708 = vadd.f32 0.0, %v2707
  %v2709 = vpop.f32.mrb[0].mxu0
  %2710 = vmatprep.mubr.f32.mxu0 %v2558
  %2711 = vmatmul.mubr.f32.gmra.mrb[0].mxu0 %v2472
  %v2712 = vpop.f32.mrb[0].mxu0
  %v2713 = vadd.f32 0.0, %v2712
  %v2714 = vpop.f32.mrb[0].mxu0
  %2715 = vmatprep.mubr.f32.mxu0 %v2561
  %2716 = vmatmul.mubr.f32.gmra.mrb[0].mxu0 %v2474
  %v2717 = vpop.f32.mrb[0].mxu0
  %v2718 = vadd.f32 0.0, %v2717
  %v2719 = vpop.f32.mrb[0].mxu0
  %2720 = vmatprep.mubr.f32.mxu0 %v2564
  %2721 = vmatmul.mubr.f32.gmra.mrb[0].mxu0 %v2476
  %v2722 = vpop.f32.mrb[0].mxu0
  %v2723 = vadd.f32 0.0, %v2722
  %v2724 = vpop.f32.mrb[0].mxu0
  %2725 = vmatprep.mubr.f32.mxu0 %v2567
  %2726 = vmatmul.mubr.f32.gmra.mrb[0].mxu0 %v2478
  %v2727 = vpop.f32.mrb[0].mxu0
  %v2728 = vadd.f32 0.0, %v2727
  %v2729 = vpop.f32.mrb[0].mxu0
  %2730 = vmatprep.mubr.f32.mxu0 %v2570
  %2731 = vmatmul.mubr.f32.gmra.mrb[0].mxu0 %v2480
  %v2732 = vpop.f32.mrb[0].mxu0
  %v2733 = vadd.f32 0.0, %v2732
  %v2734 = vpop.f32.mrb[0].mxu0
  %2735 = vmatprep.mubr.f32.mxu0 %v2573
  %2736 = vmatmul.mubr.f32.gmra.mrb[0].mxu0 %v2482
  %v2737 = vpop.f32.mrb[0].mxu0
  %v2738 = vadd.f32 0.0, %v2737
  %v2739 = vpop.f32.mrb[0].mxu0
  %2740 = vmatprep.mubr.f32.mxu0 %v2576
  %2741 = vmatmul.mubr.f32.gmra.mrb[0].mxu0 %v2484
  %v2742 = vpop.f32.mrb[0].mxu0
  %v2743 = vadd.f32 0.0, %v2742
  %v2744 = vpop.f32.mrb[0].mxu0
  %2745 = vmatprep.mubr.f32.mxu0 %v2579
  %2746 = vmatmul.mubr.f32.gmra.mrb[0].mxu0 %v2486
  %v2747 = vpop.f32.mrb[0].mxu0
  %v2748 = vadd.f32 0.0, %v2747
  %v2749 = vpop.f32.mrb[0].mxu0
  %2750 = vmatprep.mubr.f32.mxu0 %v2582
  %2751 = vmatmul.mubr.f32.gmra.mrb[0].mxu0 %v2488
  %v2752 = vpop.f32.mrb[0].mxu0
  %v2753 = vadd.f32 0.0, %v2752
  %v2754 = vpop.f32.mrb[0].mxu0
  %2755 = vmatprep.mubr.f32.mxu0 %v2585
  %2756 = vmatmul.mubr.f32.gmra.mrb[0].mxu0 %v2490
  %v2757 = vpop.f32.mrb[0].mxu0
  %v2758 = vadd.f32 0.0, %v2757
  %v2759 = vpop.f32.mrb[0].mxu0
  %2760 = vmatprep.mubr.f32.mxu0 %v2588
  %2761 = vmatmul.mubr.f32.gmra.mrb[0].mxu0 %v2492
  %v2762 = vpop.f32.mrb[0].mxu0
  %v2763 = vadd.f32 0.0, %v2762
  %v2764 = vpop.f32.mrb[0].mxu0
  %2765 = vmatprep.mubr.f32.mxu0 %v2591
  %2766 = vmatmul.mubr.f32.gmra.mrb[0].mxu0 %v2494
  %v2767 = vpop.f32.mrb[0].mxu0
  %v2768 = vadd.f32 0.0, %v2767
  %v2769 = vpop.f32.mrb[0].mxu0
  %2770 = vmatprep.mubr.f32.mxu0 %v2594
  %2771 = vmatmul.mubr.f32.gmra.mrb[0].mxu0 %v2496
  %v2772 = vpop.f32.mrb[0].mxu0
  %v2773 = vadd.f32 0.0, %v2772
  %v2774 = vpop.f32.mrb[0].mxu0
  %2775 = vmatprep.mubr.f32.mxu0 %v2597
  %2776 = vmatmul.mubr.f32.gmra.mrb[0].mxu0 %v2498
  %v2777 = vpop.f32.mrb[0].mxu0
  %v2778 = vadd.f32 0.0, %v2777
  %v2779 = vpop.f32.mrb[0].mxu0
  %2780 = vmatprep.mubr.f32.mxu0 %v2600
  %2781 = vmatmul.mubr.f32.gmra.mrb[0].mxu0 %v2500
  %v2782 = vpop.f32.mrb[0].mxu0
  %v2783 = vadd.f32 0.0, %v2782
  %v2784 = vpop.f32.mrb[0].mxu0
  %2785 = vdwg.mxu0
  %2809 = vrot.lane.b32.xlu0 %v2673, 126
  %v2810 = vpop.permute.xlu0 %2809
  %2811 = vrot.lane.b32.xlu0 %v2678, 126
  %v2812 = vpop.permute.xlu0 %2811
  %2813 = vrot.lane.b32.xlu0 %v2683, 126
  %v2814 = vpop.permute.xlu0 %2813
  %2815 = vrot.lane.b32.xlu0 %v2688, 126
  %v2816 = vpop.permute.xlu0 %2815
  %2817 = vrot.lane.b32.xlu0 %v2693, 126
  %v2818 = vpop.permute.xlu0 %2817
  %2819 = vrot.lane.b32.xlu0 %v2698, 126
  %v2820 = vpop.permute.xlu0 %2819
  %2821 = vrot.lane.b32.xlu0 %v2703, 126
  %v2822 = vpop.permute.xlu0 %2821
  %2823 = vrot.lane.b32.xlu0 %v2708, 126
  %v2824 = vpop.permute.xlu0 %2823
  %2825 = vrot.lane.b32.xlu0 %v2713, 126
  %v2826 = vpop.permute.xlu0 %2825
  %2827 = vrot.lane.b32.xlu0 %v2718, 126
  %v2828 = vpop.permute.xlu0 %2827
  %2829 = vrot.lane.b32.xlu0 %v2723, 126
  %v2830 = vpop.permute.xlu0 %2829
  %2831 = vrot.lane.b32.xlu0 %v2728, 126
  %v2832 = vpop.permute.xlu0 %2831
  %2833 = vrot.lane.b32.xlu0 %v2733, 126
  %v2834 = vpop.permute.xlu0 %2833
  %2835 = vrot.lane.b32.xlu0 %v2738, 126
  %v2836 = vpop.permute.xlu0 %2835
  %2837 = vrot.lane.b32.xlu0 %v2743, 126
  %v2838 = vpop.permute.xlu0 %2837
  %2839 = vrot.lane.b32.xlu0 %v2748, 126
  %v2840 = vpop.permute.xlu0 %2839
  %2841 = vrot.lane.b32.xlu0 %v2753, 126
  %v2842 = vpop.permute.xlu0 %2841
  %2843 = vrot.lane.b32.xlu0 %v2758, 126
  %v2844 = vpop.permute.xlu0 %2843
  %2845 = vrot.lane.b32.xlu0 %v2763, 126
  %v2846 = vpop.permute.xlu0 %2845
  %2847 = vrot.lane.b32.xlu0 %v2768, 126
  %v2848 = vpop.permute.xlu0 %2847
  %2849 = vrot.lane.b32.xlu0 %v2773, 126
  %v2850 = vpop.permute.xlu0 %2849
  %2851 = vrot.lane.b32.xlu0 %v2778, 126
  %v2852 = vpop.permute.xlu0 %2851
  %2853 = vrot.lane.b32.xlu0 %v2783, 126
  %v2854 = vpop.permute.xlu0 %2853
  %2878 = vrot.lane.b32.xlu0 %v2673, 124
  %v2879 = vpop.permute.xlu0 %2878
  %2880 = vrot.lane.b32.xlu0 %v2678, 124
  %v2881 = vpop.permute.xlu0 %2880
  %2882 = vrot.lane.b32.xlu0 %v2683, 124
  %v2883 = vpop.permute.xlu0 %2882
  %2884 = vrot.lane.b32.xlu0 %v2688, 124
  %v2885 = vpop.permute.xlu0 %2884
  %2886 = vrot.lane.b32.xlu0 %v2693, 124
  %v2887 = vpop.permute.xlu0 %2886
  %2888 = vrot.lane.b32.xlu0 %v2698, 124
  %v2889 = vpop.permute.xlu0 %2888
  %2890 = vrot.lane.b32.xlu0 %v2703, 124
  %v2891 = vpop.permute.xlu0 %2890
  %2892 = vrot.lane.b32.xlu0 %v2708, 124
  %v2893 = vpop.permute.xlu0 %2892
  %2894 = vrot.lane.b32.xlu0 %v2713, 124
  %v2895 = vpop.permute.xlu0 %2894
  %2896 = vrot.lane.b32.xlu0 %v2718, 124
  %v2897 = vpop.permute.xlu0 %2896
  %2898 = vrot.lane.b32.xlu0 %v2723, 124
  %v2899 = vpop.permute.xlu0 %2898
  %2900 = vrot.lane.b32.xlu0 %v2728, 124
  %v2901 = vpop.permute.xlu0 %2900
  %2902 = vrot.lane.b32.xlu0 %v2733, 124
  %v2903 = vpop.permute.xlu0 %2902
  %2904 = vrot.lane.b32.xlu0 %v2738, 124
  %v2905 = vpop.permute.xlu0 %2904
  %2906 = vrot.lane.b32.xlu0 %v2743, 124
  %v2907 = vpop.permute.xlu0 %2906
  %2908 = vrot.lane.b32.xlu0 %v2748, 124
  %v2909 = vpop.permute.xlu0 %2908
  %2910 = vrot.lane.b32.xlu0 %v2753, 124
  %v2911 = vpop.permute.xlu0 %2910
  %2912 = vrot.lane.b32.xlu0 %v2758, 124
  %v2913 = vpop.permute.xlu0 %2912
  %2914 = vrot.lane.b32.xlu0 %v2763, 124
  %v2915 = vpop.permute.xlu0 %2914
  %2916 = vrot.lane.b32.xlu0 %v2768, 124
  %v2917 = vpop.permute.xlu0 %2916
  %2918 = vrot.lane.b32.xlu0 %v2773, 124
  %v2919 = vpop.permute.xlu0 %2918
  %2920 = vrot.lane.b32.xlu0 %v2778, 124
  %v2921 = vpop.permute.xlu0 %2920
  %2922 = vrot.lane.b32.xlu0 %v2783, 124
  %v2923 = vpop.permute.xlu0 %2922
  %2947 = vrot.lane.b32.xlu0 %v2673, 122
  %v2948 = vpop.permute.xlu0 %2947
  %2949 = vrot.lane.b32.xlu0 %v2678, 122
  %v2950 = vpop.permute.xlu0 %2949
  %2951 = vrot.lane.b32.xlu0 %v2683, 122
  %v2952 = vpop.permute.xlu0 %2951
  %2953 = vrot.lane.b32.xlu0 %v2688, 122
  %v2954 = vpop.permute.xlu0 %2953
  %2955 = vrot.lane.b32.xlu0 %v2693, 122
  %v2956 = vpop.permute.xlu0 %2955
  %2957 = vrot.lane.b32.xlu0 %v2698, 122
  %v2958 = vpop.permute.xlu0 %2957
  %2959 = vrot.lane.b32.xlu0 %v2703, 122
  %v2960 = vpop.permute.xlu0 %2959
  %2961 = vrot.lane.b32.xlu0 %v2708, 122
  %v2962 = vpop.permute.xlu0 %2961
  %2963 = vrot.lane.b32.xlu0 %v2713, 122
  %v2964 = vpop.permute.xlu0 %2963
  %2965 = vrot.lane.b32.xlu0 %v2718, 122
  %v2966 = vpop.permute.xlu0 %2965
  %2967 = vrot.lane.b32.xlu0 %v2723, 122
  %v2968 = vpop.permute.xlu0 %2967
  %2969 = vrot.lane.b32.xlu0 %v2728, 122
  %v2970 = vpop.permute.xlu0 %2969
  %2971 = vrot.lane.b32.xlu0 %v2733, 122
  %v2972 = vpop.permute.xlu0 %2971
  %2973 = vrot.lane.b32.xlu0 %v2738, 122
  %v2974 = vpop.permute.xlu0 %2973
  %2975 = vrot.lane.b32.xlu0 %v2743, 122
  %v2976 = vpop.permute.xlu0 %2975
  %2977 = vrot.lane.b32.xlu0 %v2748, 122
  %v2978 = vpop.permute.xlu0 %2977
  %2979 = vrot.lane.b32.xlu0 %v2753, 122
  %v2980 = vpop.permute.xlu0 %2979
  %2981 = vrot.lane.b32.xlu0 %v2758, 122
  %v2982 = vpop.permute.xlu0 %2981
  %2983 = vrot.lane.b32.xlu0 %v2763, 122
  %v2984 = vpop.permute.xlu0 %2983
  %2985 = vrot.lane.b32.xlu0 %v2768, 122
  %v2986 = vpop.permute.xlu0 %2985
  %2987 = vrot.lane.b32.xlu0 %v2773, 122
  %v2988 = vpop.permute.xlu0 %2987
  %2989 = vrot.lane.b32.xlu0 %v2778, 122
  %v2990 = vpop.permute.xlu0 %2989
  %2991 = vrot.lane.b32.xlu0 %v2783, 122
  %v2992 = vpop.permute.xlu0 %2991
  %vm3016 = vcmask 228352
  %v3017 = vsel %vm3016, %v2673, %v2810
  %v3018 = vsel %vm3016, %v2678, %v2812
  %v3019 = vsel %vm3016, %v2683, %v2814
  %v3020 = vsel %vm3016, %v2688, %v2816
  %v3021 = vsel %vm3016, %v2693, %v2818
  %v3022 = vsel %vm3016, %v2698, %v2820
  %v3023 = vsel %vm3016, %v2703, %v2822
  %v3024 = vsel %vm3016, %v2708, %v2824
  %v3025 = vsel %vm3016, %v2713, %v2826
  %v3026 = vsel %vm3016, %v2718, %v2828
  %v3027 = vsel %vm3016, %v2723, %v2830
  %v3028 = vsel %vm3016, %v2728, %v2832
  %v3029 = vsel %vm3016, %v2733, %v2834
  %v3030 = vsel %vm3016, %v2738, %v2836
  %v3031 = vsel %vm3016, %v2743, %v2838
  %v3032 = vsel %vm3016, %v2748, %v2840
  %v3033 = vsel %vm3016, %v2753, %v2842
  %v3034 = vsel %vm3016, %v2758, %v2844
  %v3035 = vsel %vm3016, %v2763, %v2846
  %v3036 = vsel %vm3016, %v2768, %v2848
  %v3037 = vsel %vm3016, %v2773, %v2850
  %v3038 = vsel %vm3016, %v2778, %v2852
  %v3039 = vsel %vm3016, %v2783, %v2854
  %vm3040 = vcmask 457728
  %v3041 = vsel %vm3040, %v3017, %v2879
  %v3042 = vsel %vm3040, %v3018, %v2881
  %v3043 = vsel %vm3040, %v3019, %v2883
  %v3044 = vsel %vm3040, %v3020, %v2885
  %v3045 = vsel %vm3040, %v3021, %v2887
  %v3046 = vsel %vm3040, %v3022, %v2889
  %v3047 = vsel %vm3040, %v3023, %v2891
  %v3048 = vsel %vm3040, %v3024, %v2893
  %v3049 = vsel %vm3040, %v3025, %v2895
  %v3050 = vsel %vm3040, %v3026, %v2897
  %v3051 = vsel %vm3040, %v3027, %v2899
  %v3052 = vsel %vm3040, %v3028, %v2901
  %v3053 = vsel %vm3040, %v3029, %v2903
  %v3054 = vsel %vm3040, %v3030, %v2905
  %v3055 = vsel %vm3040, %v3031, %v2907
  %v3056 = vsel %vm3040, %v3032, %v2909
  %v3057 = vsel %vm3040, %v3033, %v2911
  %v3058 = vsel %vm3040, %v3034, %v2913
  %v3059 = vsel %vm3040, %v3035, %v2915
  %v3060 = vsel %vm3040, %v3036, %v2917
  %v3061 = vsel %vm3040, %v3037, %v2919
  %v3062 = vsel %vm3040, %v3038, %v2921
  %v3063 = vsel %vm3040, %v3039, %v2923
  %vm3064 = vcmask 687104
  %v3065 = vsel %vm3064, %v3041, %v2948
  %v3066 = vsel %vm3064, %v3042, %v2950
  %v3067 = vsel %vm3064, %v3043, %v2952
  %v3068 = vsel %vm3064, %v3044, %v2954
  %v3069 = vsel %vm3064, %v3045, %v2956
  %v3070 = vsel %vm3064, %v3046, %v2958
  %v3071 = vsel %vm3064, %v3047, %v2960
  %v3072 = vsel %vm3064, %v3048, %v2962
  %v3073 = vsel %vm3064, %v3049, %v2964
  %v3074 = vsel %vm3064, %v3050, %v2966
  %v3075 = vsel %vm3064, %v3051, %v2968
  %v3076 = vsel %vm3064, %v3052, %v2970
  %v3077 = vsel %vm3064, %v3053, %v2972
  %v3078 = vsel %vm3064, %v3054, %v2974
  %v3079 = vsel %vm3064, %v3055, %v2976
  %v3080 = vsel %vm3064, %v3056, %v2978
  %v3081 = vsel %vm3064, %v3057, %v2980
  %v3082 = vsel %vm3064, %v3058, %v2982
  %v3083 = vsel %vm3064, %v3059, %v2984
  %v3084 = vsel %vm3064, %v3060, %v2986
  %v3085 = vsel %vm3064, %v3061, %v2988
  %v3086 = vsel %vm3064, %v3062, %v2990
  %v3087 = vsel %vm3064, %v3063, %v2992
  %3088 = vrot.lane.b32.xlu0 %v2673, 127
  %v3089 = vpop.permute.xlu0 %3088
  %3090 = vrot.lane.b32.xlu0 %v2678, 127
  %v3091 = vpop.permute.xlu0 %3090
  %3092 = vrot.lane.b32.xlu0 %v2683, 127
  %v3093 = vpop.permute.xlu0 %3092
  %3094 = vrot.lane.b32.xlu0 %v2688, 127
  %v3095 = vpop.permute.xlu0 %3094
  %3096 = vrot.lane.b32.xlu0 %v2693, 127
  %v3097 = vpop.permute.xlu0 %3096
  %3098 = vrot.lane.b32.xlu0 %v2698, 127
  %v3099 = vpop.permute.xlu0 %3098
  %3100 = vrot.lane.b32.xlu0 %v2703, 127
  %v3101 = vpop.permute.xlu0 %3100
  %3102 = vrot.lane.b32.xlu0 %v2708, 127
  %v3103 = vpop.permute.xlu0 %3102
  %3104 = vrot.lane.b32.xlu0 %v2713, 127
  %v3105 = vpop.permute.xlu0 %3104
  %3106 = vrot.lane.b32.xlu0 %v2718, 127
  %v3107 = vpop.permute.xlu0 %3106
  %3108 = vrot.lane.b32.xlu0 %v2723, 127
  %v3109 = vpop.permute.xlu0 %3108
  %3110 = vrot.lane.b32.xlu0 %v2728, 127
  %v3111 = vpop.permute.xlu0 %3110
  %3112 = vrot.lane.b32.xlu0 %v2733, 127
  %v3113 = vpop.permute.xlu0 %3112
  %3114 = vrot.lane.b32.xlu0 %v2738, 127
  %v3115 = vpop.permute.xlu0 %3114
  %3116 = vrot.lane.b32.xlu0 %v2743, 127
  %v3117 = vpop.permute.xlu0 %3116
  %3118 = vrot.lane.b32.xlu0 %v2748, 127
  %v3119 = vpop.permute.xlu0 %3118
  %3120 = vrot.lane.b32.xlu0 %v2753, 127
  %v3121 = vpop.permute.xlu0 %3120
  %3122 = vrot.lane.b32.xlu0 %v2758, 127
  %v3123 = vpop.permute.xlu0 %3122
  %3124 = vrot.lane.b32.xlu0 %v2763, 127
  %v3125 = vpop.permute.xlu0 %3124
  %3126 = vrot.lane.b32.xlu0 %v2768, 127
  %v3127 = vpop.permute.xlu0 %3126
  %3128 = vrot.lane.b32.xlu0 %v2773, 127
  %v3129 = vpop.permute.xlu0 %3128
  %3130 = vrot.lane.b32.xlu0 %v2778, 127
  %v3131 = vpop.permute.xlu0 %3130
  %3132 = vrot.lane.b32.xlu0 %v2783, 127
  %v3133 = vpop.permute.xlu0 %3132
  %3157 = vrot.lane.b32.xlu0 %v2673, 125
  %v3158 = vpop.permute.xlu0 %3157
  %3159 = vrot.lane.b32.xlu0 %v2678, 125
  %v3160 = vpop.permute.xlu0 %3159
  %3161 = vrot.lane.b32.xlu0 %v2683, 125
  %v3162 = vpop.permute.xlu0 %3161
  %3163 = vrot.lane.b32.xlu0 %v2688, 125
  %v3164 = vpop.permute.xlu0 %3163
  %3165 = vrot.lane.b32.xlu0 %v2693, 125
  %v3166 = vpop.permute.xlu0 %3165
  %3167 = vrot.lane.b32.xlu0 %v2698, 125
  %v3168 = vpop.permute.xlu0 %3167
  %3169 = vrot.lane.b32.xlu0 %v2703, 125
  %v3170 = vpop.permute.xlu0 %3169
  %3171 = vrot.lane.b32.xlu0 %v2708, 125
  %v3172 = vpop.permute.xlu0 %3171
  %3173 = vrot.lane.b32.xlu0 %v2713, 125
  %v3174 = vpop.permute.xlu0 %3173
  %3175 = vrot.lane.b32.xlu0 %v2718, 125
  %v3176 = vpop.permute.xlu0 %3175
  %3177 = vrot.lane.b32.xlu0 %v2723, 125
  %v3178 = vpop.permute.xlu0 %3177
  %3179 = vrot.lane.b32.xlu0 %v2728, 125
  %v3180 = vpop.permute.xlu0 %3179
  %3181 = vrot.lane.b32.xlu0 %v2733, 125
  %v3182 = vpop.permute.xlu0 %3181
  %3183 = vrot.lane.b32.xlu0 %v2738, 125
  %v3184 = vpop.permute.xlu0 %3183
  %3185 = vrot.lane.b32.xlu0 %v2743, 125
  %v3186 = vpop.permute.xlu0 %3185
  %3187 = vrot.lane.b32.xlu0 %v2748, 125
  %v3188 = vpop.permute.xlu0 %3187
  %3189 = vrot.lane.b32.xlu0 %v2753, 125
  %v3190 = vpop.permute.xlu0 %3189
  %3191 = vrot.lane.b32.xlu0 %v2758, 125
  %v3192 = vpop.permute.xlu0 %3191
  %3193 = vrot.lane.b32.xlu0 %v2763, 125
  %v3194 = vpop.permute.xlu0 %3193
  %3195 = vrot.lane.b32.xlu0 %v2768, 125
  %v3196 = vpop.permute.xlu0 %3195
  %3197 = vrot.lane.b32.xlu0 %v2773, 125
  %v3198 = vpop.permute.xlu0 %3197
  %3199 = vrot.lane.b32.xlu0 %v2778, 125
  %v3200 = vpop.permute.xlu0 %3199
  %3201 = vrot.lane.b32.xlu0 %v2783, 125
  %v3202 = vpop.permute.xlu0 %3201
  %3226 = vrot.lane.b32.xlu0 %v2673, 123
  %v3227 = vpop.permute.xlu0 %3226
  %3228 = vrot.lane.b32.xlu0 %v2678, 123
  %v3229 = vpop.permute.xlu0 %3228
  %3230 = vrot.lane.b32.xlu0 %v2683, 123
  %v3231 = vpop.permute.xlu0 %3230
  %3232 = vrot.lane.b32.xlu0 %v2688, 123
  %v3233 = vpop.permute.xlu0 %3232
  %3234 = vrot.lane.b32.xlu0 %v2693, 123
  %v3235 = vpop.permute.xlu0 %3234
  %3236 = vrot.lane.b32.xlu0 %v2698, 123
  %v3237 = vpop.permute.xlu0 %3236
  %3238 = vrot.lane.b32.xlu0 %v2703, 123
  %v3239 = vpop.permute.xlu0 %3238
  %3240 = vrot.lane.b32.xlu0 %v2708, 123
  %v3241 = vpop.permute.xlu0 %3240
  %3242 = vrot.lane.b32.xlu0 %v2713, 123
  %v3243 = vpop.permute.xlu0 %3242
  %3244 = vrot.lane.b32.xlu0 %v2718, 123
  %v3245 = vpop.permute.xlu0 %3244
  %3246 = vrot.lane.b32.xlu0 %v2723, 123
  %v3247 = vpop.permute.xlu0 %3246
  %3248 = vrot.lane.b32.xlu0 %v2728, 123
  %v3249 = vpop.permute.xlu0 %3248
  %3250 = vrot.lane.b32.xlu0 %v2733, 123
  %v3251 = vpop.permute.xlu0 %3250
  %3252 = vrot.lane.b32.xlu0 %v2738, 123
  %v3253 = vpop.permute.xlu0 %3252
  %3254 = vrot.lane.b32.xlu0 %v2743, 123
  %v3255 = vpop.permute.xlu0 %3254
  %3256 = vrot.lane.b32.xlu0 %v2748, 123
  %v3257 = vpop.permute.xlu0 %3256
  %3258 = vrot.lane.b32.xlu0 %v2753, 123
  %v3259 = vpop.permute.xlu0 %3258
  %3260 = vrot.lane.b32.xlu0 %v2758, 123
  %v3261 = vpop.permute.xlu0 %3260
  %3262 = vrot.lane.b32.xlu0 %v2763, 123
  %v3263 = vpop.permute.xlu0 %3262
  %3264 = vrot.lane.b32.xlu0 %v2768, 123
  %v3265 = vpop.permute.xlu0 %3264
  %3266 = vrot.lane.b32.xlu0 %v2773, 123
  %v3267 = vpop.permute.xlu0 %3266
  %3268 = vrot.lane.b32.xlu0 %v2778, 123
  %v3269 = vpop.permute.xlu0 %3268
  %3270 = vrot.lane.b32.xlu0 %v2783, 123
  %v3271 = vpop.permute.xlu0 %3270
  %3295 = vrot.lane.b32.xlu0 %v2673, 121
  %v3296 = vpop.permute.xlu0 %3295
  %3297 = vrot.lane.b32.xlu0 %v2678, 121
  %v3298 = vpop.permute.xlu0 %3297
  %3299 = vrot.lane.b32.xlu0 %v2683, 121
  %v3300 = vpop.permute.xlu0 %3299
  %3301 = vrot.lane.b32.xlu0 %v2688, 121
  %v3302 = vpop.permute.xlu0 %3301
  %3303 = vrot.lane.b32.xlu0 %v2693, 121
  %v3304 = vpop.permute.xlu0 %3303
  %3305 = vrot.lane.b32.xlu0 %v2698, 121
  %v3306 = vpop.permute.xlu0 %3305
  %3307 = vrot.lane.b32.xlu0 %v2703, 121
  %v3308 = vpop.permute.xlu0 %3307
  %3309 = vrot.lane.b32.xlu0 %v2708, 121
  %v3310 = vpop.permute.xlu0 %3309
  %3311 = vrot.lane.b32.xlu0 %v2713, 121
  %v3312 = vpop.permute.xlu0 %3311
  %3313 = vrot.lane.b32.xlu0 %v2718, 121
  %v3314 = vpop.permute.xlu0 %3313
  %3315 = vrot.lane.b32.xlu0 %v2723, 121
  %v3316 = vpop.permute.xlu0 %3315
  %3317 = vrot.lane.b32.xlu0 %v2728, 121
  %v3318 = vpop.permute.xlu0 %3317
  %3319 = vrot.lane.b32.xlu0 %v2733, 121
  %v3320 = vpop.permute.xlu0 %3319
  %3321 = vrot.lane.b32.xlu0 %v2738, 121
  %v3322 = vpop.permute.xlu0 %3321
  %3323 = vrot.lane.b32.xlu0 %v2743, 121
  %v3324 = vpop.permute.xlu0 %3323
  %3325 = vrot.lane.b32.xlu0 %v2748, 121
  %v3326 = vpop.permute.xlu0 %3325
  %3327 = vrot.lane.b32.xlu0 %v2753, 121
  %v3328 = vpop.permute.xlu0 %3327
  %3329 = vrot.lane.b32.xlu0 %v2758, 121
  %v3330 = vpop.permute.xlu0 %3329
  %3331 = vrot.lane.b32.xlu0 %v2763, 121
  %v3332 = vpop.permute.xlu0 %3331
  %3333 = vrot.lane.b32.xlu0 %v2768, 121
  %v3334 = vpop.permute.xlu0 %3333
  %3335 = vrot.lane.b32.xlu0 %v2773, 121
  %v3336 = vpop.permute.xlu0 %3335
  %3337 = vrot.lane.b32.xlu0 %v2778, 121
  %v3338 = vpop.permute.xlu0 %3337
  %3339 = vrot.lane.b32.xlu0 %v2783, 121
  %v3340 = vpop.permute.xlu0 %3339
  %v3364 = vsel %vm3016, %v3089, %v3158
  %v3365 = vsel %vm3016, %v3091, %v3160
  %v3366 = vsel %vm3016, %v3093, %v3162
  %v3367 = vsel %vm3016, %v3095, %v3164
  %v3368 = vsel %vm3016, %v3097, %v3166
  %v3369 = vsel %vm3016, %v3099, %v3168
  %v3370 = vsel %vm3016, %v3101, %v3170
  %v3371 = vsel %vm3016, %v3103, %v3172
  %v3372 = vsel %vm3016, %v3105, %v3174
  %v3373 = vsel %vm3016, %v3107, %v3176
  %v3374 = vsel %vm3016, %v3109, %v3178
  %v3375 = vsel %vm3016, %v3111, %v3180
  %v3376 = vsel %vm3016, %v3113, %v3182
  %v3377 = vsel %vm3016, %v3115, %v3184
  %v3378 = vsel %vm3016, %v3117, %v3186
  %v3379 = vsel %vm3016, %v3119, %v3188
  %v3380 = vsel %vm3016, %v3121, %v3190
  %v3381 = vsel %vm3016, %v3123, %v3192
  %v3382 = vsel %vm3016, %v3125, %v3194
  %v3383 = vsel %vm3016, %v3127, %v3196
  %v3384 = vsel %vm3016, %v3129, %v3198
  %v3385 = vsel %vm3016, %v3131, %v3200
  %v3386 = vsel %vm3016, %v3133, %v3202
  %v3387 = vsel %vm3040, %v3364, %v3227
  %v3388 = vsel %vm3040, %v3365, %v3229
  %v3389 = vsel %vm3040, %v3366, %v3231
  %v3390 = vsel %vm3040, %v3367, %v3233
  %v3391 = vsel %vm3040, %v3368, %v3235
  %v3392 = vsel %vm3040, %v3369, %v3237
  %v3393 = vsel %vm3040, %v3370, %v3239
  %v3394 = vsel %vm3040, %v3371, %v3241
  %v3395 = vsel %vm3040, %v3372, %v3243
  %v3396 = vsel %vm3040, %v3373, %v3245
  %v3397 = vsel %vm3040, %v3374, %v3247
  %v3398 = vsel %vm3040, %v3375, %v3249
  %v3399 = vsel %vm3040, %v3376, %v3251
  %v3400 = vsel %vm3040, %v3377, %v3253
  %v3401 = vsel %vm3040, %v3378, %v3255
  %v3402 = vsel %vm3040, %v3379, %v3257
  %v3403 = vsel %vm3040, %v3380, %v3259
  %v3404 = vsel %vm3040, %v3381, %v3261
  %v3405 = vsel %vm3040, %v3382, %v3263
  %v3406 = vsel %vm3040, %v3383, %v3265
  %v3407 = vsel %vm3040, %v3384, %v3267
  %v3408 = vsel %vm3040, %v3385, %v3269
  %v3409 = vsel %vm3040, %v3386, %v3271
  %v3410 = vsel %vm3064, %v3387, %v3296
  %v3411 = vsel %vm3064, %v3388, %v3298
  %v3412 = vsel %vm3064, %v3389, %v3300
  %v3413 = vsel %vm3064, %v3390, %v3302
  %v3414 = vsel %vm3064, %v3391, %v3304
  %v3415 = vsel %vm3064, %v3392, %v3306
  %v3416 = vsel %vm3064, %v3393, %v3308
  %v3417 = vsel %vm3064, %v3394, %v3310
  %v3418 = vsel %vm3064, %v3395, %v3312
  %v3419 = vsel %vm3064, %v3396, %v3314
  %v3420 = vsel %vm3064, %v3397, %v3316
  %v3421 = vsel %vm3064, %v3398, %v3318
  %v3422 = vsel %vm3064, %v3399, %v3320
  %v3423 = vsel %vm3064, %v3400, %v3322
  %v3424 = vsel %vm3064, %v3401, %v3324
  %v3425 = vsel %vm3064, %v3402, %v3326
  %v3426 = vsel %vm3064, %v3403, %v3328
  %v3427 = vsel %vm3064, %v3404, %v3330
  %v3428 = vsel %vm3064, %v3405, %v3332
  %v3429 = vsel %vm3064, %v3406, %v3334
  %v3430 = vsel %vm3064, %v3407, %v3336
  %v3431 = vsel %vm3064, %v3408, %v3338
  %v3432 = vsel %vm3064, %v3409, %v3340
  %3433 = vrot.lane.b32.xlu0 %v2673, 120
  %v3434 = vpop.permute.xlu0 %3433
  %3435 = vrot.lane.b32.xlu0 %v2678, 120
  %v3436 = vpop.permute.xlu0 %3435
  %3437 = vrot.lane.b32.xlu0 %v2683, 120
  %v3438 = vpop.permute.xlu0 %3437
  %3439 = vrot.lane.b32.xlu0 %v2688, 120
  %v3440 = vpop.permute.xlu0 %3439
  %3441 = vrot.lane.b32.xlu0 %v2693, 120
  %v3442 = vpop.permute.xlu0 %3441
  %3443 = vrot.lane.b32.xlu0 %v2698, 120
  %v3444 = vpop.permute.xlu0 %3443
  %3445 = vrot.lane.b32.xlu0 %v2703, 120
  %v3446 = vpop.permute.xlu0 %3445
  %3447 = vrot.lane.b32.xlu0 %v2708, 120
  %v3448 = vpop.permute.xlu0 %3447
  %3449 = vrot.lane.b32.xlu0 %v2713, 120
  %v3450 = vpop.permute.xlu0 %3449
  %3451 = vrot.lane.b32.xlu0 %v2718, 120
  %v3452 = vpop.permute.xlu0 %3451
  %3453 = vrot.lane.b32.xlu0 %v2723, 120
  %v3454 = vpop.permute.xlu0 %3453
  %3455 = vrot.lane.b32.xlu0 %v2728, 120
  %v3456 = vpop.permute.xlu0 %3455
  %3457 = vrot.lane.b32.xlu0 %v2733, 120
  %v3458 = vpop.permute.xlu0 %3457
  %3459 = vrot.lane.b32.xlu0 %v2738, 120
  %v3460 = vpop.permute.xlu0 %3459
  %3461 = vrot.lane.b32.xlu0 %v2743, 120
  %v3462 = vpop.permute.xlu0 %3461
  %3463 = vrot.lane.b32.xlu0 %v2748, 120
  %v3464 = vpop.permute.xlu0 %3463
  %3465 = vrot.lane.b32.xlu0 %v2753, 120
  %v3466 = vpop.permute.xlu0 %3465
  %3467 = vrot.lane.b32.xlu0 %v2758, 120
  %v3468 = vpop.permute.xlu0 %3467
  %3469 = vrot.lane.b32.xlu0 %v2763, 120
  %v3470 = vpop.permute.xlu0 %3469
  %3471 = vrot.lane.b32.xlu0 %v2768, 120
  %v3472 = vpop.permute.xlu0 %3471
  %3473 = vrot.lane.b32.xlu0 %v2773, 120
  %v3474 = vpop.permute.xlu0 %3473
  %3475 = vrot.lane.b32.xlu0 %v2778, 120
  %v3476 = vpop.permute.xlu0 %3475
  %3477 = vrot.lane.b32.xlu0 %v2783, 120
  %v3478 = vpop.permute.xlu0 %3477
  %v3502 = vsel %vm3016, %v2810, %v2879
  %v3503 = vsel %vm3016, %v2812, %v2881
  %v3504 = vsel %vm3016, %v2814, %v2883
  %v3505 = vsel %vm3016, %v2816, %v2885
  %v3506 = vsel %vm3016, %v2818, %v2887
  %v3507 = vsel %vm3016, %v2820, %v2889
  %v3508 = vsel %vm3016, %v2822, %v2891
  %v3509 = vsel %vm3016, %v2824, %v2893
  %v3510 = vsel %vm3016, %v2826, %v2895
  %v3511 = vsel %vm3016, %v2828, %v2897
  %v3512 = vsel %vm3016, %v2830, %v2899
  %v3513 = vsel %vm3016, %v2832, %v2901
  %v3514 = vsel %vm3016, %v2834, %v2903
  %v3515 = vsel %vm3016, %v2836, %v2905
  %v3516 = vsel %vm3016, %v2838, %v2907
  %v3517 = vsel %vm3016, %v2840, %v2909
  %v3518 = vsel %vm3016, %v2842, %v2911
  %v3519 = vsel %vm3016, %v2844, %v2913
  %v3520 = vsel %vm3016, %v2846, %v2915
  %v3521 = vsel %vm3016, %v2848, %v2917
  %v3522 = vsel %vm3016, %v2850, %v2919
  %v3523 = vsel %vm3016, %v2852, %v2921
  %v3524 = vsel %vm3016, %v2854, %v2923
  %v3525 = vsel %vm3040, %v3502, %v2948
  %v3526 = vsel %vm3040, %v3503, %v2950
  %v3527 = vsel %vm3040, %v3504, %v2952
  %v3528 = vsel %vm3040, %v3505, %v2954
  %v3529 = vsel %vm3040, %v3506, %v2956
  %v3530 = vsel %vm3040, %v3507, %v2958
  %v3531 = vsel %vm3040, %v3508, %v2960
  %v3532 = vsel %vm3040, %v3509, %v2962
  %v3533 = vsel %vm3040, %v3510, %v2964
  %v3534 = vsel %vm3040, %v3511, %v2966
  %v3535 = vsel %vm3040, %v3512, %v2968
  %v3536 = vsel %vm3040, %v3513, %v2970
  %v3537 = vsel %vm3040, %v3514, %v2972
  %v3538 = vsel %vm3040, %v3515, %v2974
  %v3539 = vsel %vm3040, %v3516, %v2976
  %v3540 = vsel %vm3040, %v3517, %v2978
  %v3541 = vsel %vm3040, %v3518, %v2980
  %v3542 = vsel %vm3040, %v3519, %v2982
  %v3543 = vsel %vm3040, %v3520, %v2984
  %v3544 = vsel %vm3040, %v3521, %v2986
  %v3545 = vsel %vm3040, %v3522, %v2988
  %v3546 = vsel %vm3040, %v3523, %v2990
  %v3547 = vsel %vm3040, %v3524, %v2992
  %v3548 = vsel %vm3064, %v3525, %v3434
  %v3549 = vsel %vm3064, %v3526, %v3436
  %v3550 = vsel %vm3064, %v3527, %v3438
  %v3551 = vsel %vm3064, %v3528, %v3440
  %v3552 = vsel %vm3064, %v3529, %v3442
  %v3553 = vsel %vm3064, %v3530, %v3444
  %v3554 = vsel %vm3064, %v3531, %v3446
  %v3555 = vsel %vm3064, %v3532, %v3448
  %v3556 = vsel %vm3064, %v3533, %v3450
  %v3557 = vsel %vm3064, %v3534, %v3452
  %v3558 = vsel %vm3064, %v3535, %v3454
  %v3559 = vsel %vm3064, %v3536, %v3456
  %v3560 = vsel %vm3064, %v3537, %v3458
  %v3561 = vsel %vm3064, %v3538, %v3460
  %v3562 = vsel %vm3064, %v3539, %v3462
  %v3563 = vsel %vm3064, %v3540, %v3464
  %v3564 = vsel %vm3064, %v3541, %v3466
  %v3565 = vsel %vm3064, %v3542, %v3468
  %v3566 = vsel %vm3064, %v3543, %v3470
  %v3567 = vsel %vm3064, %v3544, %v3472
  %v3568 = vsel %vm3064, %v3545, %v3474
  %v3569 = vsel %vm3064, %v3546, %v3476
  %v3570 = vsel %vm3064, %v3547, %v3478
  %v3571 = vld [vmem:[%s4] sm:$0xff]
  %v3572 = vld [vmem:[%s4 + $0x8] sm:$0xff]
  %v3573 = vld [vmem:[%s4 + $0x10] sm:$0xff]
  %v3574 = vld [vmem:[%s4 + $0x18] sm:$0xff]
  %v3575 = vld [vmem:[%s4 + $0x20] sm:$0xff]
  %v3576 = vld [vmem:[%s4 + $0x28] sm:$0xff]
  %v3577 = vld [vmem:[%s4 + $0x30] sm:$0xff]
  %v3578 = vld [vmem:[%s4 + $0x38] sm:$0xff]
  %v3579 = vld [vmem:[%s4 + $0x40] sm:$0xff]
  %v3580 = vld [vmem:[%s4 + $0x48] sm:$0xff]
  %v3581 = vld [vmem:[%s4 + $0x50] sm:$0xff]
  %v3582 = vld [vmem:[%s4 + $0x58] sm:$0xff]
  %v3583 = vld [vmem:[%s4 + $0x60] sm:$0xff]
  %v3584 = vld [vmem:[%s4 + $0x68] sm:$0xff]
  %v3585 = vld [vmem:[%s4 + $0x70] sm:$0xff]
  %v3586 = vld [vmem:[%s4 + $0x78] sm:$0xff]
  %v3587 = vld [vmem:[%s4 + $0x80] sm:$0xff]
  %v3588 = vld [vmem:[%s4 + $0x88] sm:$0xff]
  %v3589 = vld [vmem:[%s4 + $0x90] sm:$0xff]
  %v3590 = vld [vmem:[%s4 + $0x98] sm:$0xff]
  %v3591 = vld [vmem:[%s4 + $0xa0] sm:$0xff]
  %v3592 = vld [vmem:[%s4 + $0xa8] sm:$0xff]
  %v3593 = vld [vmem:[%s4 + $0xb0] sm:$0xff]
  %v3594 = vld [vmem:[%s4 + $0xb8] sm:$0xff]
  %v3595 = vld [vmem:[%s4 + $0xc0] sm:$0xff]
  %v3596 = vld [vmem:[%s4 + $0xc8] sm:$0xff]
  %v3597 = vld [vmem:[%s4 + $0xd0] sm:$0xff]
  %v3598 = vld [vmem:[%s4 + $0xd8] sm:$0xff]
  %v3599 = vld [vmem:[%s4 + $0xe0] sm:$0xff]
  %v3600 = vld [vmem:[%s4 + $0xe8] sm:$0xff]
  %v3601 = vld [vmem:[%s4 + $0xf0] sm:$0xff]
  %v3602 = vld [vmem:[%s4 + $0xf8] sm:$0xff]
  %v3603 = vld [vmem:[%s4 + $0x100] sm:$0xff]
  %v3604 = vld [vmem:[%s4 + $0x108] sm:$0xff]
  %v3605 = vld [vmem:[%s4 + $0x110] sm:$0xff]
  %v3606 = vld [vmem:[%s4 + $0x118] sm:$0xff]
  %v3607 = vld [vmem:[%s4 + $0x120] sm:$0xff]
  %v3608 = vld [vmem:[%s4 + $0x128] sm:$0xff]
  %v3609 = vld [vmem:[%s4 + $0x130] sm:$0xff]
  %v3610 = vld [vmem:[%s4 + $0x138] sm:$0xff]
  %v3611 = vld [vmem:[%s4 + $0x140] sm:$0xff]
  %v3612 = vld [vmem:[%s4 + $0x148] sm:$0xff]
  %v3613 = vld [vmem:[%s4 + $0x150] sm:$0xff]
  %v3614 = vld [vmem:[%s4 + $0x158] sm:$0xff]
  %v3615 = vld [vmem:[%s4 + $0x160] sm:$0xff]
  %v3616 = vld [vmem:[%s4 + $0x168] sm:$0xff]
  %v3617 = vld [vmem:[%s4 + $0x170] sm:$0xff]
  %v3618 = vld [vmem:[%s4 + $0x178] sm:$0xff]
  %v3619 = vld [vmem:[%s4 + $0x180] sm:$0xff]
  %v3620 = vld [vmem:[%s4 + $0x188] sm:$0xff]
  %v3621 = vld [vmem:[%s4 + $0x190] sm:$0xff]
  %v3622 = vld [vmem:[%s4 + $0x198] sm:$0xff]
  %v3623 = vld [vmem:[%s4 + $0x1a0] sm:$0xff]
  %v3624 = vld [vmem:[%s4 + $0x1a8] sm:$0xff]
  %v3625 = vld [vmem:[%s4 + $0x1b0] sm:$0xff]
  %v3626 = vld [vmem:[%s4 + $0x1b8] sm:$0xff]
  %v3627 = vld [vmem:[%s4 + $0x1c0] sm:$0xff]
  %v3628 = vld [vmem:[%s4 + $0x1c8] sm:$0xff]
  %v3629 = vld [vmem:[%s4 + $0x1d0] sm:$0xff]
  %v3630 = vld [vmem:[%s4 + $0x1d8] sm:$0xff]
  %v3631 = vld [vmem:[%s4 + $0x1e0] sm:$0xff]
  %v3632 = vld [vmem:[%s4 + $0x1e8] sm:$0xff]
  %v3633 = vld [vmem:[%s4 + $0x1f0] sm:$0xff]
  %v3634 = vld [vmem:[%s4 + $0x1f8] sm:$0xff]
  %v3635 = vld [vmem:[%s4 + $0x200] sm:$0xff]
  %v3636 = vld [vmem:[%s4 + $0x208] sm:$0xff]
  %v3637 = vld [vmem:[%s4 + $0x210] sm:$0xff]
  %v3638 = vld [vmem:[%s4 + $0x218] sm:$0xff]
  %v3639 = vld [vmem:[%s4 + $0x220] sm:$0xff]
  %v3640 = vld [vmem:[%s4 + $0x228] sm:$0xff]
  %v3641 = vld [vmem:[%s4 + $0x230] sm:$0xff]
  %v3642 = vld [vmem:[%s4 + $0x238] sm:$0xff]
  %v3643 = vld [vmem:[%s4 + $0x240] sm:$0xff]
  %v3644 = vld [vmem:[%s4 + $0x248] sm:$0xff]
  %v3645 = vld [vmem:[%s4 + $0x250] sm:$0xff]
  %v3646 = vld [vmem:[%s4 + $0x258] sm:$0xff]
  %v3647 = vld [vmem:[%s4 + $0x260] sm:$0xff]
  %v3648 = vld [vmem:[%s4 + $0x268] sm:$0xff]
  %v3649 = vld [vmem:[%s4 + $0x270] sm:$0xff]
  %v3650 = vld [vmem:[%s4 + $0x278] sm:$0xff]
  %v3651 = vld [vmem:[%s4 + $0x280] sm:$0xff]
  %v3652 = vld [vmem:[%s4 + $0x288] sm:$0xff]
  %v3653 = vld [vmem:[%s4 + $0x290] sm:$0xff]
  %v3654 = vld [vmem:[%s4 + $0x298] sm:$0xff]
  %v3655 = vld [vmem:[%s4 + $0x2a0] sm:$0xff]
  %v3656 = vld [vmem:[%s4 + $0x2a8] sm:$0xff]
  %v3657 = vld [vmem:[%s4 + $0x2b0] sm:$0xff]
  %v3658 = vld [vmem:[%s4 + $0x2b8] sm:$0xff]
  %v3659 = vld [vmem:[%s4 + $0x2c0] sm:$0xff]
  %v3660 = vld [vmem:[%s4 + $0x2c8] sm:$0xff]
  %v3661 = vld [vmem:[%s4 + $0x2d0] sm:$0xff]
  %v3662 = vld [vmem:[%s4 + $0x2d8] sm:$0xff]
  %v3663 = vld [vmem:[%s4 + $0x2e0] sm:$0xff]
  %v3664 = vld [vmem:[%s4 + $0x2e8] sm:$0xff]
  %v3665 = vld [vmem:[%s4 + $0x2f0] sm:$0xff]
  %v3666 = vld [vmem:[%s4 + $0x2f8] sm:$0xff]
  %v3667 = vld [vmem:[%s4 + $0x300] sm:$0xff]
  %v3668 = vld [vmem:[%s4 + $0x308] sm:$0xff]
  %v3669 = vld [vmem:[%s4 + $0x310] sm:$0xff]
  %v3670 = vld [vmem:[%s4 + $0x318] sm:$0xff]
  %v3671 = vld [vmem:[%s4 + $0x320] sm:$0xff]
  %v3672 = vld [vmem:[%s4 + $0x328] sm:$0xff]
  %v3673 = vld [vmem:[%s4 + $0x330] sm:$0xff]
  %v3674 = vld [vmem:[%s4 + $0x338] sm:$0xff]
  %v3675 = vld [vmem:[%s4 + $0x340] sm:$0xff]
  %v3676 = vld [vmem:[%s4 + $0x348] sm:$0xff]
  %v3677 = vld [vmem:[%s4 + $0x350] sm:$0xff]
  %v3678 = vld [vmem:[%s4 + $0x358] sm:$0xff]
  %v3679 = vld [vmem:[%s4 + $0x360] sm:$0xff]
  %v3680 = vld [vmem:[%s4 + $0x368] sm:$0xff]
  %v3681 = vld [vmem:[%s4 + $0x370] sm:$0xff]
  %v3682 = vld [vmem:[%s4 + $0x378] sm:$0xff]
  %s3683 = scalar_lea.vmem %s4, 1792
  %v3684 = vld [vmem:[%s3683] sm:$0xff]
  %v3685 = vld [vmem:[%s3683 + $0x8] sm:$0xff]
  %v3686 = vld [vmem:[%s3683 + $0x10] sm:$0xff]
  %v3687 = vld [vmem:[%s3683 + $0x18] sm:$0xff]
  %v3688 = vld [vmem:[%s3683 + $0x20] sm:$0xff]
  %v3689 = vld [vmem:[%s3683 + $0x28] sm:$0xff]
  %v3690 = vld [vmem:[%s3683 + $0x30] sm:$0xff]
  %v3691 = vld [vmem:[%s3683 + $0x38] sm:$0xff]
  %v3692 = vld [vmem:[%s3683 + $0x40] sm:$0xff]
  %v3693 = vld [vmem:[%s3683 + $0x48] sm:$0xff]
  %v3694 = vld [vmem:[%s3683 + $0x50] sm:$0xff]
  %v3695 = vld [vmem:[%s3683 + $0x58] sm:$0xff]
  %v3696 = vld [vmem:[%s3683 + $0x60] sm:$0xff]
  %v3697 = vld [vmem:[%s3683 + $0x68] sm:$0xff]
  %v3698 = vld [vmem:[%s3683 + $0x70] sm:$0xff]
  %v3699 = vld [vmem:[%s3683 + $0x78] sm:$0xff]
  %v3700 = vld [vmem:[%s3683 + $0x80] sm:$0xff]
  %v3701 = vld [vmem:[%s3683 + $0x88] sm:$0xff]
  %v3702 = vld [vmem:[%s3683 + $0x90] sm:$0xff]
  %v3703 = vld [vmem:[%s3683 + $0x98] sm:$0xff]
  %v3704 = vld [vmem:[%s3683 + $0xa0] sm:$0xff]
  %v3705 = vld [vmem:[%s3683 + $0xa8] sm:$0xff]
  %v3706 = vld [vmem:[%s3683 + $0xb0] sm:$0xff]
  %v3707 = vld [vmem:[%s3683 + $0xb8] sm:$0xff]
  %v3708 = vld [vmem:[%s3683 + $0xc0] sm:$0xff]
  %v3709 = vld [vmem:[%s3683 + $0xc8] sm:$0xff]
  %v3710 = vld [vmem:[%s3683 + $0xd0] sm:$0xff]
  %v3711 = vld [vmem:[%s3683 + $0xd8] sm:$0xff]
  %v3712 = vld [vmem:[%s3683 + $0xe0] sm:$0xff]
  %v3713 = vld [vmem:[%s3683 + $0xe8] sm:$0xff]
  %v3714 = vld [vmem:[%s3683 + $0xf0] sm:$0xff]
  %v3715 = vld [vmem:[%s3683 + $0xf8] sm:$0xff]
  %v3716 = vld [vmem:[%s3683 + $0x100] sm:$0xff]
  %v3717 = vld [vmem:[%s3683 + $0x108] sm:$0xff]
  %v3718 = vld [vmem:[%s3683 + $0x110] sm:$0xff]
  %v3719 = vld [vmem:[%s3683 + $0x118] sm:$0xff]
  %v3720 = vld [vmem:[%s3683 + $0x120] sm:$0xff]
  %v3721 = vld [vmem:[%s3683 + $0x128] sm:$0xff]
  %v3722 = vld [vmem:[%s3683 + $0x130] sm:$0xff]
  %v3723 = vld [vmem:[%s3683 + $0x138] sm:$0xff]
  %v3724 = vld [vmem:[%s3683 + $0x140] sm:$0xff]
  %v3725 = vld [vmem:[%s3683 + $0x148] sm:$0xff]
  %v3726 = vld [vmem:[%s3683 + $0x150] sm:$0xff]
  %v3727 = vld [vmem:[%s3683 + $0x158] sm:$0xff]
  %v3728 = vld [vmem:[%s3683 + $0x160] sm:$0xff]
  %v3729 = vld [vmem:[%s3683 + $0x168] sm:$0xff]
  %v3730 = vld [vmem:[%s3683 + $0x170] sm:$0xff]
  %v3731 = vld [vmem:[%s3683 + $0x178] sm:$0xff]
  %v3732 = vld [vmem:[%s3683 + $0x180] sm:$0xff]
  %v3733 = vld [vmem:[%s3683 + $0x188] sm:$0xff]
  %v3734 = vld [vmem:[%s3683 + $0x190] sm:$0xff]
  %v3735 = vld [vmem:[%s3683 + $0x198] sm:$0xff]
  %v3736 = vld [vmem:[%s3683 + $0x1a0] sm:$0xff]
  %v3737 = vld [vmem:[%s3683 + $0x1a8] sm:$0xff]
  %v3738 = vld [vmem:[%s3683 + $0x1b0] sm:$0xff]
  %v3739 = vld [vmem:[%s3683 + $0x1b8] sm:$0xff]
  %v3740 = vld [vmem:[%s3683 + $0x1c0] sm:$0xff]
  %v3741 = vld [vmem:[%s3683 + $0x1c8] sm:$0xff]
  %v3742 = vld [vmem:[%s3683 + $0x1d0] sm:$0xff]
  %v3743 = vld [vmem:[%s3683 + $0x1d8] sm:$0xff]
  %v3744 = vld [vmem:[%s3683 + $0x1e0] sm:$0xff]
  %v3745 = vld [vmem:[%s3683 + $0x1e8] sm:$0xff]
  %v3746 = vld [vmem:[%s3683 + $0x1f0] sm:$0xff]
  %v3747 = vld [vmem:[%s3683 + $0x1f8] sm:$0xff]
  %v3748 = vld [vmem:[%s3683 + $0x200] sm:$0xff]
  %v3749 = vld [vmem:[%s3683 + $0x208] sm:$0xff]
  %v3750 = vld [vmem:[%s3683 + $0x210] sm:$0xff]
  %v3751 = vld [vmem:[%s3683 + $0x218] sm:$0xff]
  %v3752 = vld [vmem:[%s3683 + $0x220] sm:$0xff]
  %v3753 = vld [vmem:[%s3683 + $0x228] sm:$0xff]
  %v3754 = vld [vmem:[%s3683 + $0x230] sm:$0xff]
  %v3755 = vld [vmem:[%s3683 + $0x238] sm:$0xff]
  %v3756 = vld [vmem:[%s3683 + $0x240] sm:$0xff]
  %v3757 = vld [vmem:[%s3683 + $0x248] sm:$0xff]
  %v3758 = vld [vmem:[%s3683 + $0x250] sm:$0xff]
  %v3759 = vld [vmem:[%s3683 + $0x258] sm:$0xff]
  %v3760 = vld [vmem:[%s3683 + $0x260] sm:$0xff]
  %v3761 = vld [vmem:[%s3683 + $0x268] sm:$0xff]
  %v3762 = vld [vmem:[%s3683 + $0x270] sm:$0xff]
  %v3763 = vld [vmem:[%s3683 + $0x278] sm:$0xff]
  %v3764 = vld [vmem:[%s3683 + $0x280] sm:$0xff]
  %v3765 = vld [vmem:[%s3683 + $0x288] sm:$0xff]
  %v3766 = vld [vmem:[%s3683 + $0x290] sm:$0xff]
  %v3767 = vld [vmem:[%s3683 + $0x298] sm:$0xff]
  %v3768 = vld [vmem:[%s3683 + $0x2a0] sm:$0xff]
  %v3769 = vld [vmem:[%s3683 + $0x2a8] sm:$0xff]
  %v3770 = vld [vmem:[%s3683 + $0x2b0] sm:$0xff]
  %v3771 = vld [vmem:[%s3683 + $0x2b8] sm:$0xff]
  %v3772 = vld [vmem:[%s3683 + $0x2c0] sm:$0xff]
  %v3773 = vld [vmem:[%s3683 + $0x2c8] sm:$0xff]
  %v3774 = vld [vmem:[%s3683 + $0x2d0] sm:$0xff]
  %v3775 = vld [vmem:[%s3683 + $0x2d8] sm:$0xff]
  %v3776 = vld [vmem:[%s3683 + $0x2e0] sm:$0xff]
  %v3777 = vld [vmem:[%s3683 + $0x2e8] sm:$0xff]
  %v3778 = vld [vmem:[%s3683 + $0x2f0] sm:$0xff]
  %v3779 = vld [vmem:[%s3683 + $0x2f8] sm:$0xff]
  %v3780 = vld [vmem:[%s3683 + $0x300] sm:$0xff]
  %v3781 = vld [vmem:[%s3683 + $0x308] sm:$0xff]
  %v3782 = vld [vmem:[%s3683 + $0x310] sm:$0xff]
  %v3783 = vld [vmem:[%s3683 + $0x318] sm:$0xff]
  %v3784 = vld [vmem:[%s3683 + $0x320] sm:$0xff]
  %v3785 = vld [vmem:[%s3683 + $0x328] sm:$0xff]
  %v3786 = vld [vmem:[%s3683 + $0x330] sm:$0xff]
  %v3787 = vld [vmem:[%s3683 + $0x338] sm:$0xff]
  %v3788 = vld [vmem:[%s3683 + $0x340] sm:$0xff]
  %v3789 = vld [vmem:[%s3683 + $0x348] sm:$0xff]
  %v3790 = vld [vmem:[%s3683 + $0x350] sm:$0xff]
  %v3791 = vld [vmem:[%s3683 + $0x358] sm:$0xff]
  %v3792 = vld [vmem:[%s3683 + $0x360] sm:$0xff]
  %v3793 = vld [vmem:[%s3683 + $0x368] sm:$0xff]
  %v3794 = vld [vmem:[%s3683 + $0x370] sm:$0xff]
  %v3795 = vld [vmem:[%s3683 + $0x378] sm:$0xff]
  %vm3796 = vcmask 424960
  %v3798 = vsel %vm3796, %v3685, 0
  %v3801 = vsel %vm3796, %v3687, 0
  %v3804 = vsel %vm3796, %v3689, 0
  %v3807 = vsel %vm3796, %v3691, 0
  %v3810 = vsel %vm3796, %v3693, 0
  %v3813 = vsel %vm3796, %v3695, 0
  %v3816 = vsel %vm3796, %v3697, 0
  %v3819 = vsel %vm3796, %v3699, 0
  %v3822 = vsel %vm3796, %v3701, 0
  %v3825 = vsel %vm3796, %v3703, 0
  %v3828 = vsel %vm3796, %v3705, 0
  %v3831 = vsel %vm3796, %v3707, 0
  %v3834 = vsel %vm3796, %v3709, 0
  %v3837 = vsel %vm3796, %v3711, 0
  %v3840 = vsel %vm3796, %v3713, 0
  %v3843 = vsel %vm3796, %v3715, 0
  %v3846 = vsel %vm3796, %v3717, 0
  %v3849 = vsel %vm3796, %v3719, 0
  %v3852 = vsel %vm3796, %v3721, 0
  %v3855 = vsel %vm3796, %v3723, 0
  %v3858 = vsel %vm3796, %v3725, 0
  %v3861 = vsel %vm3796, %v3727, 0
  %v3864 = vsel %vm3796, %v3729, 0
  %v3867 = vsel %vm3796, %v3731, 0
  %v3870 = vsel %vm3796, %v3733, 0
  %v3873 = vsel %vm3796, %v3735, 0
  %v3876 = vsel %vm3796, %v3737, 0
  %v3879 = vsel %vm3796, %v3739, 0
  %v3882 = vsel %vm3796, %v3741, 0
  %v3885 = vsel %vm3796, %v3743, 0
  %v3888 = vsel %vm3796, %v3745, 0
  %v3891 = vsel %vm3796, %v3747, 0
  %v3894 = vsel %vm3796, %v3749, 0
  %v3897 = vsel %vm3796, %v3751, 0
  %v3900 = vsel %vm3796, %v3753, 0
  %v3903 = vsel %vm3796, %v3755, 0
  %v3906 = vsel %vm3796, %v3757, 0
  %v3909 = vsel %vm3796, %v3759, 0
  %v3912 = vsel %vm3796, %v3761, 0
  %v3915 = vsel %vm3796, %v3763, 0
  %v3918 = vsel %vm3796, %v3765, 0
  %v3921 = vsel %vm3796, %v3767, 0
  %v3924 = vsel %vm3796, %v3769, 0
  %v3927 = vsel %vm3796, %v3771, 0
  %v3930 = vsel %vm3796, %v3773, 0
  %v3933 = vsel %vm3796, %v3775, 0
  %v3936 = vsel %vm3796, %v3777, 0
  %v3939 = vsel %vm3796, %v3779, 0
  %v3942 = vsel %vm3796, %v3781, 0
  %v3945 = vsel %vm3796, %v3783, 0
  %v3948 = vsel %vm3796, %v3785, 0
  %v3951 = vsel %vm3796, %v3787, 0
  %v3954 = vsel %vm3796, %v3789, 0
  %v3957 = vsel %vm3796, %v3791, 0
  %v3960 = vsel %vm3796, %v3793, 0
  %v3963 = vsel %vm3796, %v3795, 0
  %vm3965 = vcmask 1043456
  %v3967 = vsel %vm3965, %v3432, 0
  %3969 = vmatprep.subr.mxu0 0.0
  %3970 = vmatpush1.msra.mxu0 %v3410
  %3971 = vmatprep.subr.mxu0 0.0
  %3972 = vmatpush1.msra.mxu0 %v3411
  %3973 = vmatprep.subr.mxu0 0.0
  %3974 = vmatpush1.msra.mxu0 %v3412
  %3975 = vmatprep.subr.mxu0 0.0
  %3976 = vmatpush1.msra.mxu0 %v3413
  %3977 = vmatprep.subr.mxu0 0.0
  %3978 = vmatpush1.msra.mxu0 %v3414
  %3979 = vmatprep.subr.mxu0 0.0
  %3980 = vmatpush1.msra.mxu0 %v3415
  %3981 = vmatprep.subr.mxu0 0.0
  %3982 = vmatpush1.msra.mxu0 %v3416
  %3983 = vmatprep.subr.mxu0 0.0
  %3984 = vmatpush1.msra.mxu0 %v3417
  %3985 = vmatprep.subr.mxu0 0.0
  %3986 = vmatpush1.msra.mxu0 %v3418
  %3987 = vmatprep.subr.mxu0 0.0
  %3988 = vmatpush1.msra.mxu0 %v3419
  %3989 = vmatprep.subr.mxu0 0.0
  %3990 = vmatpush1.msra.mxu0 %v3420
  %3991 = vmatprep.subr.mxu0 0.0
  %3992 = vmatpush1.msra.mxu0 %v3421
  %3993 = vmatprep.subr.mxu0 0.0
  %3994 = vmatpush1.msra.mxu0 %v3422
  %3995 = vmatprep.subr.mxu0 0.0
  %3996 = vmatpush1.msra.mxu0 %v3423
  %3997 = vmatprep.subr.mxu0 0.0
  %3998 = vmatpush1.msra.mxu0 %v3424
  %3999 = vmatprep.subr.mxu0 0.0
  %4000 = vmatpush1.msra.mxu0 %v3425
  %4001 = vmatprep.subr.mxu0 0.0
  %4002 = vmatpush1.msra.mxu0 %v3426
  %4003 = vmatprep.subr.mxu0 0.0
  %4004 = vmatpush1.msra.mxu0 %v3427
  %4005 = vmatprep.subr.mxu0 0.0
  %4006 = vmatpush1.msra.mxu0 %v3428
  %4007 = vmatprep.subr.mxu0 0.0
  %4008 = vmatpush1.msra.mxu0 %v3429
  %4009 = vmatprep.subr.mxu0 0.0
  %4010 = vmatpush1.msra.mxu0 %v3430
  %4011 = vmatprep.subr.mxu0 0.0
  %4012 = vmatpush1.msra.mxu0 %v3431
  %4013 = vmatprep.subr.mxu0 0.0
  %4014 = vmatpush1.msra.mxu0 %v3967
  %4015 = vmatprep.subr.mxu0 0.0
  %4016 = vmatpush1.msra.mxu0 0.0
  %4017 = vmatprep.subr.mxu0 0.0
  %4018 = vmatpush1.msra.mxu0 0.0
  %4019 = vmatprep.subr.mxu0 0.0
  %4020 = vmatpush1.msra.mxu0 0.0
  %4021 = vmatprep.subr.mxu0 0.0
  %4022 = vmatpush1.msra.mxu0 0.0
  %4023 = vmatprep.subr.mxu0 0.0
  %4024 = vmatpush1.msra.mxu0 0.0
  %4025 = vmatprep.subr.mxu0 0.0
  %4026 = vmatpush1.msra.mxu0 0.0
  %4027 = vmatprep.subr.mxu0 0.0
  %4028 = vmatpush1.msra.mxu0 0.0
  %4029 = vmatprep.subr.mxu0 0.0
  %4030 = vmatpush1.msra.mxu0 0.0
  %4031 = vmatprep.subr.mxu0 0.0
  %4032 = vmatpush1.msra.mxu0 0.0
  %4033 = vmatprep.mubr.f32.mxu0 %v3798
  %4034 = vmatmul.mubr.f32.gmra.mrb[0].mxu0 %v3684
  %v4035 = vpop.f32.mrb[0].mxu0
  %v4036 = vadd.f32 0.0, %v4035
  %v4037 = vpop.f32.mrb[0].mxu0
  %4038 = vmatprep.mubr.f32.mxu0 %v3801
  %4039 = vmatmul.mubr.f32.gmra.mrb[0].mxu0 %v3686
  %v4040 = vpop.f32.mrb[0].mxu0
  %v4041 = vadd.f32 0.0, %v4040
  %v4042 = vpop.f32.mrb[0].mxu0
  %4043 = vmatprep.mubr.f32.mxu0 %v3804
  %4044 = vmatmul.mubr.f32.gmra.mrb[0].mxu0 %v3688
  %v4045 = vpop.f32.mrb[0].mxu0
  %v4046 = vadd.f32 0.0, %v4045
  %v4047 = vpop.f32.mrb[0].mxu0
  %4048 = vmatprep.mubr.f32.mxu0 %v3807
  %4049 = vmatmul.mubr.f32.gmra.mrb[0].mxu0 %v3690
  %v4050 = vpop.f32.mrb[0].mxu0
  %v4051 = vadd.f32 0.0, %v4050
  %v4052 = vpop.f32.mrb[0].mxu0
  %4053 = vmatprep.mubr.f32.mxu0 %v3810
  %4054 = vmatmul.mubr.f32.gmra.mrb[0].mxu0 %v3692
  %v4055 = vpop.f32.mrb[0].mxu0
  %v4056 = vadd.f32 0.0, %v4055
  %v4057 = vpop.f32.mrb[0].mxu0
  %4058 = vmatprep.mubr.f32.mxu0 %v3813
  %4059 = vmatmul.mubr.f32.gmra.mrb[0].mxu0 %v3694
  %v4060 = vpop.f32.mrb[0].mxu0
  %v4061 = vadd.f32 0.0, %v4060
  %v4062 = vpop.f32.mrb[0].mxu0
  %4063 = vmatprep.mubr.f32.mxu0 %v3816
  %4064 = vmatmul.mubr.f32.gmra.mrb[0].mxu0 %v3696
  %v4065 = vpop.f32.mrb[0].mxu0
  %v4066 = vadd.f32 0.0, %v4065
  %v4067 = vpop.f32.mrb[0].mxu0
  %4068 = vmatprep.mubr.f32.mxu0 %v3819
  %4069 = vmatmul.mubr.f32.gmra.mrb[0].mxu0 %v3698
  %v4070 = vpop.f32.mrb[0].mxu0
  %v4071 = vadd.f32 0.0, %v4070
  %v4072 = vpop.f32.mrb[0].mxu0
  %4073 = vmatprep.mubr.f32.mxu0 %v3822
  %4074 = vmatmul.mubr.f32.gmra.mrb[0].mxu0 %v3700
  %v4075 = vpop.f32.mrb[0].mxu0
  %v4076 = vadd.f32 0.0, %v4075
  %v4077 = vpop.f32.mrb[0].mxu0
  %4078 = vmatprep.mubr.f32.mxu0 %v3825
  %4079 = vmatmul.mubr.f32.gmra.mrb[0].mxu0 %v3702
  %v4080 = vpop.f32.mrb[0].mxu0
  %v4081 = vadd.f32 0.0, %v4080
  %v4082 = vpop.f32.mrb[0].mxu0
  %4083 = vmatprep.mubr.f32.mxu0 %v3828
  %4084 = vmatmul.mubr.f32.gmra.mrb[0].mxu0 %v3704
  %v4085 = vpop.f32.mrb[0].mxu0
  %v4086 = vadd.f32 0.0, %v4085
  %v4087 = vpop.f32.mrb[0].mxu0
  %4088 = vmatprep.mubr.f32.mxu0 %v3831
  %4089 = vmatmul.mubr.f32.gmra.mrb[0].mxu0 %v3706
  %v4090 = vpop.f32.mrb[0].mxu0
  %v4091 = vadd.f32 0.0, %v4090
  %v4092 = vpop.f32.mrb[0].mxu0
  %4093 = vmatprep.mubr.f32.mxu0 %v3834
  %4094 = vmatmul.mubr.f32.gmra.mrb[0].mxu0 %v3708
  %v4095 = vpop.f32.mrb[0].mxu0
  %v4096 = vadd.f32 0.0, %v4095
  %v4097 = vpop.f32.mrb[0].mxu0
  %4098 = vmatprep.mubr.f32.mxu0 %v3837
  %4099 = vmatmul.mubr.f32.gmra.mrb[0].mxu0 %v3710
  %v4100 = vpop.f32.mrb[0].mxu0
  %v4101 = vadd.f32 0.0, %v4100
  %v4102 = vpop.f32.mrb[0].mxu0
  %4103 = vmatprep.mubr.f32.mxu0 %v3840
  %4104 = vmatmul.mubr.f32.gmra.mrb[0].mxu0 %v3712
  %v4105 = vpop.f32.mrb[0].mxu0
  %v4106 = vadd.f32 0.0, %v4105
  %v4107 = vpop.f32.mrb[0].mxu0
  %4108 = vmatprep.mubr.f32.mxu0 %v3843
  %4109 = vmatmul.mubr.f32.gmra.mrb[0].mxu0 %v3714
  %v4110 = vpop.f32.mrb[0].mxu0
  %v4111 = vadd.f32 0.0, %v4110
  %v4112 = vpop.f32.mrb[0].mxu0
  %4113 = vmatprep.mubr.f32.mxu0 %v3846
  %4114 = vmatmul.mubr.f32.gmra.mrb[0].mxu0 %v3716
  %v4115 = vpop.f32.mrb[0].mxu0
  %v4116 = vadd.f32 0.0, %v4115
  %v4117 = vpop.f32.mrb[0].mxu0
  %4118 = vmatprep.mubr.f32.mxu0 %v3849
  %4119 = vmatmul.mubr.f32.gmra.mrb[0].mxu0 %v3718
  %v4120 = vpop.f32.mrb[0].mxu0
  %v4121 = vadd.f32 0.0, %v4120
  %v4122 = vpop.f32.mrb[0].mxu0
  %4123 = vmatprep.mubr.f32.mxu0 %v3852
  %4124 = vmatmul.mubr.f32.gmra.mrb[0].mxu0 %v3720
  %v4125 = vpop.f32.mrb[0].mxu0
  %v4126 = vadd.f32 0.0, %v4125
  %v4127 = vpop.f32.mrb[0].mxu0
  %4128 = vmatprep.mubr.f32.mxu0 %v3855
  %4129 = vmatmul.mubr.f32.gmra.mrb[0].mxu0 %v3722
  %v4130 = vpop.f32.mrb[0].mxu0
  %v4131 = vadd.f32 0.0, %v4130
  %v4132 = vpop.f32.mrb[0].mxu0
  %4133 = vmatprep.mubr.f32.mxu0 %v3858
  %4134 = vmatmul.mubr.f32.gmra.mrb[0].mxu0 %v3724
  %v4135 = vpop.f32.mrb[0].mxu0
  %v4136 = vadd.f32 0.0, %v4135
  %v4137 = vpop.f32.mrb[0].mxu0
  %4138 = vmatprep.mubr.f32.mxu0 %v3861
  %4139 = vmatmul.mubr.f32.gmra.mrb[0].mxu0 %v3726
  %v4140 = vpop.f32.mrb[0].mxu0
  %v4141 = vadd.f32 0.0, %v4140
  %v4142 = vpop.f32.mrb[0].mxu0
  %4143 = vmatprep.mubr.f32.mxu0 %v3864
  %4144 = vmatmul.mubr.f32.gmra.mrb[0].mxu0 %v3728
  %v4145 = vpop.f32.mrb[0].mxu0
  %v4146 = vadd.f32 0.0, %v4145
  %v4147 = vpop.f32.mrb[0].mxu0
  %4148 = vmatprep.mubr.f32.mxu0 %v3867
  %4149 = vmatmul.mubr.f32.gmra.mrb[0].mxu0 %v3730
  %v4150 = vpop.f32.mrb[0].mxu0
  %v4151 = vadd.f32 0.0, %v4150
  %v4152 = vpop.f32.mrb[0].mxu0
  %4153 = vmatprep.mubr.f32.mxu0 %v3870
  %4154 = vmatmul.mubr.f32.gmra.mrb[0].mxu0 %v3732
  %v4155 = vpop.f32.mrb[0].mxu0
  %v4156 = vadd.f32 0.0, %v4155
  %v4157 = vpop.f32.mrb[0].mxu0
  %4158 = vmatprep.mubr.f32.mxu0 %v3873
  %4159 = vmatmul.mubr.f32.gmra.mrb[0].mxu0 %v3734
  %v4160 = vpop.f32.mrb[0].mxu0
  %v4161 = vadd.f32 0.0, %v4160
  %v4162 = vpop.f32.mrb[0].mxu0
  %4163 = vmatprep.mubr.f32.mxu0 %v3876
  %4164 = vmatmul.mubr.f32.gmra.mrb[0].mxu0 %v3736
  %v4165 = vpop.f32.mrb[0].mxu0
  %v4166 = vadd.f32 0.0, %v4165
  %v4167 = vpop.f32.mrb[0].mxu0
  %4168 = vmatprep.mubr.f32.mxu0 %v3879
  %4169 = vmatmul.mubr.f32.gmra.mrb[0].mxu0 %v3738
  %v4170 = vpop.f32.mrb[0].mxu0
  %v4171 = vadd.f32 0.0, %v4170
  %v4172 = vpop.f32.mrb[0].mxu0
  %4173 = vmatprep.mubr.f32.mxu0 %v3882
  %4174 = vmatmul.mubr.f32.gmra.mrb[0].mxu0 %v3740
  %v4175 = vpop.f32.mrb[0].mxu0
  %v4176 = vadd.f32 0.0, %v4175
  %v4177 = vpop.f32.mrb[0].mxu0
  %4178 = vmatprep.mubr.f32.mxu0 %v3885
  %4179 = vmatmul.mubr.f32.gmra.mrb[0].mxu0 %v3742
  %v4180 = vpop.f32.mrb[0].mxu0
  %v4181 = vadd.f32 0.0, %v4180
  %v4182 = vpop.f32.mrb[0].mxu0
  %4183 = vmatprep.mubr.f32.mxu0 %v3888
  %4184 = vmatmul.mubr.f32.gmra.mrb[0].mxu0 %v3744
  %v4185 = vpop.f32.mrb[0].mxu0
  %v4186 = vadd.f32 0.0, %v4185
  %v4187 = vpop.f32.mrb[0].mxu0
  %4188 = vmatprep.mubr.f32.mxu0 %v3891
  %4189 = vmatmul.mubr.f32.gmra.mrb[0].mxu0 %v3746
  %v4190 = vpop.f32.mrb[0].mxu0
  %v4191 = vadd.f32 0.0, %v4190
  %v4192 = vpop.f32.mrb[0].mxu0
  %4193 = vmatprep.mubr.f32.mxu0 %v3894
  %4194 = vmatmul.mubr.f32.gmra.mrb[0].mxu0 %v3748
  %v4195 = vpop.f32.mrb[0].mxu0
  %v4196 = vadd.f32 0.0, %v4195
  %v4197 = vpop.f32.mrb[0].mxu0
  %4198 = vmatprep.mubr.f32.mxu0 %v3897
  %4199 = vmatmul.mubr.f32.gmra.mrb[0].mxu0 %v3750
  %v4200 = vpop.f32.mrb[0].mxu0
  %v4201 = vadd.f32 0.0, %v4200
  %v4202 = vpop.f32.mrb[0].mxu0
  %4203 = vmatprep.mubr.f32.mxu0 %v3900
  %4204 = vmatmul.mubr.f32.gmra.mrb[0].mxu0 %v3752
  %v4205 = vpop.f32.mrb[0].mxu0
  %v4206 = vadd.f32 0.0, %v4205
  %v4207 = vpop.f32.mrb[0].mxu0
  %4208 = vmatprep.mubr.f32.mxu0 %v3903
  %4209 = vmatmul.mubr.f32.gmra.mrb[0].mxu0 %v3754
  %v4210 = vpop.f32.mrb[0].mxu0
  %v4211 = vadd.f32 0.0, %v4210
  %v4212 = vpop.f32.mrb[0].mxu0
  %4213 = vmatprep.mubr.f32.mxu0 %v3906
  %4214 = vmatmul.mubr.f32.gmra.mrb[0].mxu0 %v3756
  %v4215 = vpop.f32.mrb[0].mxu0
  %v4216 = vadd.f32 0.0, %v4215
  %v4217 = vpop.f32.mrb[0].mxu0
  %4218 = vmatprep.mubr.f32.mxu0 %v3909
  %4219 = vmatmul.mubr.f32.gmra.mrb[0].mxu0 %v3758
  %v4220 = vpop.f32.mrb[0].mxu0
  %v4221 = vadd.f32 0.0, %v4220
  %v4222 = vpop.f32.mrb[0].mxu0
  %4223 = vmatprep.mubr.f32.mxu0 %v3912
  %4224 = vmatmul.mubr.f32.gmra.mrb[0].mxu0 %v3760
  %v4225 = vpop.f32.mrb[0].mxu0
  %v4226 = vadd.f32 0.0, %v4225
  %v4227 = vpop.f32.mrb[0].mxu0
  %4228 = vmatprep.mubr.f32.mxu0 %v3915
  %4229 = vmatmul.mubr.f32.gmra.mrb[0].mxu0 %v3762
  %v4230 = vpop.f32.mrb[0].mxu0
  %v4231 = vadd.f32 0.0, %v4230
  %v4232 = vpop.f32.mrb[0].mxu0
  %4233 = vmatprep.mubr.f32.mxu0 %v3918
  %4234 = vmatmul.mubr.f32.gmra.mrb[0].mxu0 %v3764
  %v4235 = vpop.f32.mrb[0].mxu0
  %v4236 = vadd.f32 0.0, %v4235
  %v4237 = vpop.f32.mrb[0].mxu0
  %4238 = vmatprep.mubr.f32.mxu0 %v3921
  %4239 = vmatmul.mubr.f32.gmra.mrb[0].mxu0 %v3766
  %v4240 = vpop.f32.mrb[0].mxu0
  %v4241 = vadd.f32 0.0, %v4240
  %v4242 = vpop.f32.mrb[0].mxu0
  %4243 = vmatprep.mubr.f32.mxu0 %v3924
  %4244 = vmatmul.mubr.f32.gmra.mrb[0].mxu0 %v3768
  %v4245 = vpop.f32.mrb[0].mxu0
  %v4246 = vadd.f32 0.0, %v4245
  %v4247 = vpop.f32.mrb[0].mxu0
  %4248 = vmatprep.mubr.f32.mxu0 %v3927
  %4249 = vmatmul.mubr.f32.gmra.mrb[0].mxu0 %v3770
  %v4250 = vpop.f32.mrb[0].mxu0
  %v4251 = vadd.f32 0.0, %v4250
  %v4252 = vpop.f32.mrb[0].mxu0
  %4253 = vmatprep.mubr.f32.mxu0 %v3930
  %4254 = vmatmul.mubr.f32.gmra.mrb[0].mxu0 %v3772
  %v4255 = vpop.f32.mrb[0].mxu0
  %v4256 = vadd.f32 0.0, %v4255
  %v4257 = vpop.f32.mrb[0].mxu0
  %4258 = vmatprep.mubr.f32.mxu0 %v3933
  %4259 = vmatmul.mubr.f32.gmra.mrb[0].mxu0 %v3774
  %v4260 = vpop.f32.mrb[0].mxu0
  %v4261 = vadd.f32 0.0, %v4260
  %v4262 = vpop.f32.mrb[0].mxu0
  %4263 = vmatprep.mubr.f32.mxu0 %v3936
  %4264 = vmatmul.mubr.f32.gmra.mrb[0].mxu0 %v3776
  %v4265 = vpop.f32.mrb[0].mxu0
  %v4266 = vadd.f32 0.0, %v4265
  %v4267 = vpop.f32.mrb[0].mxu0
  %4268 = vmatprep.mubr.f32.mxu0 %v3939
  %4269 = vmatmul.mubr.f32.gmra.mrb[0].mxu0 %v3778
  %v4270 = vpop.f32.mrb[0].mxu0
  %v4271 = vadd.f32 0.0, %v4270
  %v4272 = vpop.f32.mrb[0].mxu0
  %4273 = vmatprep.mubr.f32.mxu0 %v3942
  %4274 = vmatmul.mubr.f32.gmra.mrb[0].mxu0 %v3780
  %v4275 = vpop.f32.mrb[0].mxu0
  %v4276 = vadd.f32 0.0, %v4275
  %v4277 = vpop.f32.mrb[0].mxu0
  %4278 = vmatprep.mubr.f32.mxu0 %v3945
  %4279 = vmatmul.mubr.f32.gmra.mrb[0].mxu0 %v3782
  %v4280 = vpop.f32.mrb[0].mxu0
  %v4281 = vadd.f32 0.0, %v4280
  %v4282 = vpop.f32.mrb[0].mxu0
  %4283 = vmatprep.mubr.f32.mxu0 %v3948
  %4284 = vmatmul.mubr.f32.gmra.mrb[0].mxu0 %v3784
  %v4285 = vpop.f32.mrb[0].mxu0
  %v4286 = vadd.f32 0.0, %v4285
  %v4287 = vpop.f32.mrb[0].mxu0
  %4288 = vmatprep.mubr.f32.mxu0 %v3951
  %4289 = vmatmul.mubr.f32.gmra.mrb[0].mxu0 %v3786
  %v4290 = vpop.f32.mrb[0].mxu0
  %v4291 = vadd.f32 0.0, %v4290
  %v4292 = vpop.f32.mrb[0].mxu0
  %4293 = vmatprep.mubr.f32.mxu0 %v3954
  %4294 = vmatmul.mubr.f32.gmra.mrb[0].mxu0 %v3788
  %v4295 = vpop.f32.mrb[0].mxu0
  %v4296 = vadd.f32 0.0, %v4295
  %v4297 = vpop.f32.mrb[0].mxu0
  %4298 = vmatprep.mubr.f32.mxu0 %v3957
  %4299 = vmatmul.mubr.f32.gmra.mrb[0].mxu0 %v3790
  %v4300 = vpop.f32.mrb[0].mxu0
  %v4301 = vadd.f32 0.0, %v4300
  %v4302 = vpop.f32.mrb[0].mxu0
  %4303 = vmatprep.mubr.f32.mxu0 %v3960
  %4304 = vmatmul.mubr.f32.gmra.mrb[0].mxu0 %v3792
  %v4305 = vpop.f32.mrb[0].mxu0
  %v4306 = vadd.f32 0.0, %v4305
  %v4307 = vpop.f32.mrb[0].mxu0
  %4308 = vmatprep.mubr.f32.mxu0 %v3963
  %4309 = vmatmul.mubr.f32.gmra.mrb[0].mxu0 %v3794
  %v4310 = vpop.f32.mrb[0].mxu0
  %v4311 = vadd.f32 0.0, %v4310
  %v4312 = vpop.f32.mrb[0].mxu0
  %4313 = vdwg.mxu0
  %v4315 = vsel %vm3796, %v3572, 0
  %v4318 = vsel %vm3796, %v3574, 0
  %v4321 = vsel %vm3796, %v3576, 0
  %v4324 = vsel %vm3796, %v3578, 0
  %v4327 = vsel %vm3796, %v3580, 0
  %v4330 = vsel %vm3796, %v3582, 0
  %v4333 = vsel %vm3796, %v3584, 0
  %v4336 = vsel %vm3796, %v3586, 0
  %v4339 = vsel %vm3796, %v3588, 0
  %v4342 = vsel %vm3796, %v3590, 0
  %v4345 = vsel %vm3796, %v3592, 0
  %v4348 = vsel %vm3796, %v3594, 0
  %v4351 = vsel %vm3796, %v3596, 0
  %v4354 = vsel %vm3796, %v3598, 0
  %v4357 = vsel %vm3796, %v3600, 0
  %v4360 = vsel %vm3796, %v3602, 0
  %v4363 = vsel %vm3796, %v3604, 0
  %v4366 = vsel %vm3796, %v3606, 0
  %v4369 = vsel %vm3796, %v3608, 0
  %v4372 = vsel %vm3796, %v3610, 0
  %v4375 = vsel %vm3796, %v3612, 0
  %v4378 = vsel %vm3796, %v3614, 0
  %v4381 = vsel %vm3796, %v3616, 0
  %v4384 = vsel %vm3796, %v3618, 0
  %v4387 = vsel %vm3796, %v3620, 0
  %v4390 = vsel %vm3796, %v3622, 0
  %v4393 = vsel %vm3796, %v3624, 0
  %v4396 = vsel %vm3796, %v3626, 0
  %v4399 = vsel %vm3796, %v3628, 0
  %v4402 = vsel %vm3796, %v3630, 0
  %v4405 = vsel %vm3796, %v3632, 0
  %v4408 = vsel %vm3796, %v3634, 0
  %v4411 = vsel %vm3796, %v3636, 0
  %v4414 = vsel %vm3796, %v3638, 0
  %v4417 = vsel %vm3796, %v3640, 0
  %v4420 = vsel %vm3796, %v3642, 0
  %v4423 = vsel %vm3796, %v3644, 0
  %v4426 = vsel %vm3796, %v3646, 0
  %v4429 = vsel %vm3796, %v3648, 0
  %v4432 = vsel %vm3796, %v3650, 0
  %v4435 = vsel %vm3796, %v3652, 0
  %v4438 = vsel %vm3796, %v3654, 0
  %v4441 = vsel %vm3796, %v3656, 0
  %v4444 = vsel %vm3796, %v3658, 0
  %v4447 = vsel %vm3796, %v3660, 0
  %v4450 = vsel %vm3796, %v3662, 0
  %v4453 = vsel %vm3796, %v3664, 0
  %v4456 = vsel %vm3796, %v3666, 0
  %v4459 = vsel %vm3796, %v3668, 0
  %v4462 = vsel %vm3796, %v3670, 0
  %v4465 = vsel %vm3796, %v3672, 0
  %v4468 = vsel %vm3796, %v3674, 0
  %v4471 = vsel %vm3796, %v3676, 0
  %v4474 = vsel %vm3796, %v3678, 0
  %v4477 = vsel %vm3796, %v3680, 0
  %v4480 = vsel %vm3796, %v3682, 0
  %v4483 = vsel %vm3965, %v3087, 0
  %4485 = vmatprep.subr.mxu0 0.0
  %4486 = vmatpush1.msra.mxu0 %v3065
  %4487 = vmatprep.subr.mxu0 0.0
  %4488 = vmatpush1.msra.mxu0 %v3066
  %4489 = vmatprep.subr.mxu0 0.0
  %4490 = vmatpush1.msra.mxu0 %v3067
  %4491 = vmatprep.subr.mxu0 0.0
  %4492 = vmatpush1.msra.mxu0 %v3068
  %4493 = vmatprep.subr.mxu0 0.0
  %4494 = vmatpush1.msra.mxu0 %v3069
  %4495 = vmatprep.subr.mxu0 0.0
  %4496 = vmatpush1.msra.mxu0 %v3070
  %4497 = vmatprep.subr.mxu0 0.0
  %4498 = vmatpush1.msra.mxu0 %v3071
  %4499 = vmatprep.subr.mxu0 0.0
  %4500 = vmatpush1.msra.mxu0 %v3072
  %4501 = vmatprep.subr.mxu0 0.0
  %4502 = vmatpush1.msra.mxu0 %v3073
  %4503 = vmatprep.subr.mxu0 0.0
  %4504 = vmatpush1.msra.mxu0 %v3074
  %4505 = vmatprep.subr.mxu0 0.0
  %4506 = vmatpush1.msra.mxu0 %v3075
  %4507 = vmatprep.subr.mxu0 0.0
  %4508 = vmatpush1.msra.mxu0 %v3076
  %4509 = vmatprep.subr.mxu0 0.0
  %4510 = vmatpush1.msra.mxu0 %v3077
  %4511 = vmatprep.subr.mxu0 0.0
  %4512 = vmatpush1.msra.mxu0 %v3078
  %4513 = vmatprep.subr.mxu0 0.0
  %4514 = vmatpush1.msra.mxu0 %v3079
  %4515 = vmatprep.subr.mxu0 0.0
  %4516 = vmatpush1.msra.mxu0 %v3080
  %4517 = vmatprep.subr.mxu0 0.0
  %4518 = vmatpush1.msra.mxu0 %v3081
  %4519 = vmatprep.subr.mxu0 0.0
  %4520 = vmatpush1.msra.mxu0 %v3082
  %4521 = vmatprep.subr.mxu0 0.0
  %4522 = vmatpush1.msra.mxu0 %v3083
  %4523 = vmatprep.subr.mxu0 0.0
  %4524 = vmatpush1.msra.mxu0 %v3084
  %4525 = vmatprep.subr.mxu0 0.0
  %4526 = vmatpush1.msra.mxu0 %v3085
  %4527 = vmatprep.subr.mxu0 0.0
  %4528 = vmatpush1.msra.mxu0 %v3086
  %4529 = vmatprep.subr.mxu0 0.0
  %4530 = vmatpush1.msra.mxu0 %v4483
  %4531 = vmatprep.subr.mxu0 0.0
  %4532 = vmatpush1.msra.mxu0 0.0
  %4533 = vmatprep.subr.mxu0 0.0
  %4534 = vmatpush1.msra.mxu0 0.0
  %4535 = vmatprep.subr.mxu0 0.0
  %4536 = vmatpush1.msra.mxu0 0.0
  %4537 = vmatprep.subr.mxu0 0.0
  %4538 = vmatpush1.msra.mxu0 0.0
  %4539 = vmatprep.subr.mxu0 0.0
  %4540 = vmatpush1.msra.mxu0 0.0
  %4541 = vmatprep.subr.mxu0 0.0
  %4542 = vmatpush1.msra.mxu0 0.0
  %4543 = vmatprep.subr.mxu0 0.0
  %4544 = vmatpush1.msra.mxu0 0.0
  %4545 = vmatprep.subr.mxu0 0.0
  %4546 = vmatpush1.msra.mxu0 0.0
  %4547 = vmatprep.subr.mxu0 0.0
  %4548 = vmatpush1.msra.mxu0 0.0
  %4549 = vmatprep.mubr.f32.mxu0 %v4315
  %4550 = vmatmul.mubr.f32.gmra.mrb[0].mxu0 %v3571
  %v4551 = vpop.f32.mrb[0].mxu0
  %v4552 = vadd.f32 %v4036, %v4551
  %v4553 = vpop.f32.mrb[0].mxu0
  %4554 = vmatprep.mubr.f32.mxu0 %v4318
  %4555 = vmatmul.mubr.f32.gmra.mrb[0].mxu0 %v3573
  %v4556 = vpop.f32.mrb[0].mxu0
  %v4557 = vadd.f32 %v4041, %v4556
  %v4558 = vpop.f32.mrb[0].mxu0
  %4559 = vmatprep.mubr.f32.mxu0 %v4321
  %4560 = vmatmul.mubr.f32.gmra.mrb[0].mxu0 %v3575
  %v4561 = vpop.f32.mrb[0].mxu0
  %v4562 = vadd.f32 %v4046, %v4561
  %v4563 = vpop.f32.mrb[0].mxu0
  %4564 = vmatprep.mubr.f32.mxu0 %v4324
  %4565 = vmatmul.mubr.f32.gmra.mrb[0].mxu0 %v3577
  %v4566 = vpop.f32.mrb[0].mxu0
  %v4567 = vadd.f32 %v4051, %v4566
  %v4568 = vpop.f32.mrb[0].mxu0
  %4569 = vmatprep.mubr.f32.mxu0 %v4327
  %4570 = vmatmul.mubr.f32.gmra.mrb[0].mxu0 %v3579
  %v4571 = vpop.f32.mrb[0].mxu0
  %v4572 = vadd.f32 %v4056, %v4571
  %v4573 = vpop.f32.mrb[0].mxu0
  %4574 = vmatprep.mubr.f32.mxu0 %v4330
  %4575 = vmatmul.mubr.f32.gmra.mrb[0].mxu0 %v3581
  %v4576 = vpop.f32.mrb[0].mxu0
  %v4577 = vadd.f32 %v4061, %v4576
  %v4578 = vpop.f32.mrb[0].mxu0
  %4579 = vmatprep.mubr.f32.mxu0 %v4333
  %4580 = vmatmul.mubr.f32.gmra.mrb[0].mxu0 %v3583
  %v4581 = vpop.f32.mrb[0].mxu0
  %v4582 = vadd.f32 %v4066, %v4581
  %v4583 = vpop.f32.mrb[0].mxu0
  %4584 = vmatprep.mubr.f32.mxu0 %v4336
  %4585 = vmatmul.mubr.f32.gmra.mrb[0].mxu0 %v3585
  %v4586 = vpop.f32.mrb[0].mxu0
  %v4587 = vadd.f32 %v4071, %v4586
  %v4588 = vpop.f32.mrb[0].mxu0
  %4589 = vmatprep.mubr.f32.mxu0 %v4339
  %4590 = vmatmul.mubr.f32.gmra.mrb[0].mxu0 %v3587
  %v4591 = vpop.f32.mrb[0].mxu0
  %v4592 = vadd.f32 %v4076, %v4591
  %v4593 = vpop.f32.mrb[0].mxu0
  %4594 = vmatprep.mubr.f32.mxu0 %v4342
  %4595 = vmatmul.mubr.f32.gmra.mrb[0].mxu0 %v3589
  %v4596 = vpop.f32.mrb[0].mxu0
  %v4597 = vadd.f32 %v4081, %v4596
  %v4598 = vpop.f32.mrb[0].mxu0
  %4599 = vmatprep.mubr.f32.mxu0 %v4345
  %4600 = vmatmul.mubr.f32.gmra.mrb[0].mxu0 %v3591
  %v4601 = vpop.f32.mrb[0].mxu0
  %v4602 = vadd.f32 %v4086, %v4601
  %v4603 = vpop.f32.mrb[0].mxu0
  %4604 = vmatprep.mubr.f32.mxu0 %v4348
  %4605 = vmatmul.mubr.f32.gmra.mrb[0].mxu0 %v3593
  %v4606 = vpop.f32.mrb[0].mxu0
  %v4607 = vadd.f32 %v4091, %v4606
  %v4608 = vpop.f32.mrb[0].mxu0
  %4609 = vmatprep.mubr.f32.mxu0 %v4351
  %4610 = vmatmul.mubr.f32.gmra.mrb[0].mxu0 %v3595
  %v4611 = vpop.f32.mrb[0].mxu0
  %v4612 = vadd.f32 %v4096, %v4611
  %v4613 = vpop.f32.mrb[0].mxu0
  %4614 = vmatprep.mubr.f32.mxu0 %v4354
  %4615 = vmatmul.mubr.f32.gmra.mrb[0].mxu0 %v3597
  %v4616 = vpop.f32.mrb[0].mxu0
  %v4617 = vadd.f32 %v4101, %v4616
  %v4618 = vpop.f32.mrb[0].mxu0
  %4619 = vmatprep.mubr.f32.mxu0 %v4357
  %4620 = vmatmul.mubr.f32.gmra.mrb[0].mxu0 %v3599
  %v4621 = vpop.f32.mrb[0].mxu0
  %v4622 = vadd.f32 %v4106, %v4621
  %v4623 = vpop.f32.mrb[0].mxu0
  %4624 = vmatprep.mubr.f32.mxu0 %v4360
  %4625 = vmatmul.mubr.f32.gmra.mrb[0].mxu0 %v3601
  %v4626 = vpop.f32.mrb[0].mxu0
  %v4627 = vadd.f32 %v4111, %v4626
  %v4628 = vpop.f32.mrb[0].mxu0
  %4629 = vmatprep.mubr.f32.mxu0 %v4363
  %4630 = vmatmul.mubr.f32.gmra.mrb[0].mxu0 %v3603
  %v4631 = vpop.f32.mrb[0].mxu0
  %v4632 = vadd.f32 %v4116, %v4631
  %v4633 = vpop.f32.mrb[0].mxu0
  %4634 = vmatprep.mubr.f32.mxu0 %v4366
  %4635 = vmatmul.mubr.f32.gmra.mrb[0].mxu0 %v3605
  %v4636 = vpop.f32.mrb[0].mxu0
  %v4637 = vadd.f32 %v4121, %v4636
  %v4638 = vpop.f32.mrb[0].mxu0
  %4639 = vmatprep.mubr.f32.mxu0 %v4369
  %4640 = vmatmul.mubr.f32.gmra.mrb[0].mxu0 %v3607
  %v4641 = vpop.f32.mrb[0].mxu0
  %v4642 = vadd.f32 %v4126, %v4641
  %v4643 = vpop.f32.mrb[0].mxu0
  %4644 = vmatprep.mubr.f32.mxu0 %v4372
  %4645 = vmatmul.mubr.f32.gmra.mrb[0].mxu0 %v3609
  %v4646 = vpop.f32.mrb[0].mxu0
  %v4647 = vadd.f32 %v4131, %v4646
  %v4648 = vpop.f32.mrb[0].mxu0
  %4649 = vmatprep.mubr.f32.mxu0 %v4375
  %4650 = vmatmul.mubr.f32.gmra.mrb[0].mxu0 %v3611
  %v4651 = vpop.f32.mrb[0].mxu0
  %v4652 = vadd.f32 %v4136, %v4651
  %v4653 = vpop.f32.mrb[0].mxu0
  %4654 = vmatprep.mubr.f32.mxu0 %v4378
  %4655 = vmatmul.mubr.f32.gmra.mrb[0].mxu0 %v3613
  %v4656 = vpop.f32.mrb[0].mxu0
  %v4657 = vadd.f32 %v4141, %v4656
  %v4658 = vpop.f32.mrb[0].mxu0
  %4659 = vmatprep.mubr.f32.mxu0 %v4381
  %4660 = vmatmul.mubr.f32.gmra.mrb[0].mxu0 %v3615
  %v4661 = vpop.f32.mrb[0].mxu0
  %v4662 = vadd.f32 %v4146, %v4661
  %v4663 = vpop.f32.mrb[0].mxu0
  %4664 = vmatprep.mubr.f32.mxu0 %v4384
  %4665 = vmatmul.mubr.f32.gmra.mrb[0].mxu0 %v3617
  %v4666 = vpop.f32.mrb[0].mxu0
  %v4667 = vadd.f32 %v4151, %v4666
  %v4668 = vpop.f32.mrb[0].mxu0
  %4669 = vmatprep.mubr.f32.mxu0 %v4387
  %4670 = vmatmul.mubr.f32.gmra.mrb[0].mxu0 %v3619
  %v4671 = vpop.f32.mrb[0].mxu0
  %v4672 = vadd.f32 %v4156, %v4671
  %v4673 = vpop.f32.mrb[0].mxu0
  %4674 = vmatprep.mubr.f32.mxu0 %v4390
  %4675 = vmatmul.mubr.f32.gmra.mrb[0].mxu0 %v3621
  %v4676 = vpop.f32.mrb[0].mxu0
  %v4677 = vadd.f32 %v4161, %v4676
  %v4678 = vpop.f32.mrb[0].mxu0
  %4679 = vmatprep.mubr.f32.mxu0 %v4393
  %4680 = vmatmul.mubr.f32.gmra.mrb[0].mxu0 %v3623
  %v4681 = vpop.f32.mrb[0].mxu0
  %v4682 = vadd.f32 %v4166, %v4681
  %v4683 = vpop.f32.mrb[0].mxu0
  %4684 = vmatprep.mubr.f32.mxu0 %v4396
  %4685 = vmatmul.mubr.f32.gmra.mrb[0].mxu0 %v3625
  %v4686 = vpop.f32.mrb[0].mxu0
  %v4687 = vadd.f32 %v4171, %v4686
  %v4688 = vpop.f32.mrb[0].mxu0
  %4689 = vmatprep.mubr.f32.mxu0 %v4399
  %4690 = vmatmul.mubr.f32.gmra.mrb[0].mxu0 %v3627
  %v4691 = vpop.f32.mrb[0].mxu0
  %v4692 = vadd.f32 %v4176, %v4691
  %v4693 = vpop.f32.mrb[0].mxu0
  %4694 = vmatprep.mubr.f32.mxu0 %v4402
  %4695 = vmatmul.mubr.f32.gmra.mrb[0].mxu0 %v3629
  %v4696 = vpop.f32.mrb[0].mxu0
  %v4697 = vadd.f32 %v4181, %v4696
  %v4698 = vpop.f32.mrb[0].mxu0
  %4699 = vmatprep.mubr.f32.mxu0 %v4405
  %4700 = vmatmul.mubr.f32.gmra.mrb[0].mxu0 %v3631
  %v4701 = vpop.f32.mrb[0].mxu0
  %v4702 = vadd.f32 %v4186, %v4701
  %v4703 = vpop.f32.mrb[0].mxu0
  %4704 = vmatprep.mubr.f32.mxu0 %v4408
  %4705 = vmatmul.mubr.f32.gmra.mrb[0].mxu0 %v3633
  %v4706 = vpop.f32.mrb[0].mxu0
  %v4707 = vadd.f32 %v4191, %v4706
  %v4708 = vpop.f32.mrb[0].mxu0
  %4709 = vmatprep.mubr.f32.mxu0 %v4411
  %4710 = vmatmul.mubr.f32.gmra.mrb[0].mxu0 %v3635
  %v4711 = vpop.f32.mrb[0].mxu0
  %v4712 = vadd.f32 %v4196, %v4711
  %v4713 = vpop.f32.mrb[0].mxu0
  %4714 = vmatprep.mubr.f32.mxu0 %v4414
  %4715 = vmatmul.mubr.f32.gmra.mrb[0].mxu0 %v3637
  %v4716 = vpop.f32.mrb[0].mxu0
  %v4717 = vadd.f32 %v4201, %v4716
  %v4718 = vpop.f32.mrb[0].mxu0
  %4719 = vmatprep.mubr.f32.mxu0 %v4417
  %4720 = vmatmul.mubr.f32.gmra.mrb[0].mxu0 %v3639
  %v4721 = vpop.f32.mrb[0].mxu0
  %v4722 = vadd.f32 %v4206, %v4721
  %v4723 = vpop.f32.mrb[0].mxu0
  %4724 = vmatprep.mubr.f32.mxu0 %v4420
  %4725 = vmatmul.mubr.f32.gmra.mrb[0].mxu0 %v3641
  %v4726 = vpop.f32.mrb[0].mxu0
  %v4727 = vadd.f32 %v4211, %v4726
  %v4728 = vpop.f32.mrb[0].mxu0
  %4729 = vmatprep.mubr.f32.mxu0 %v4423
  %4730 = vmatmul.mubr.f32.gmra.mrb[0].mxu0 %v3643
  %v4731 = vpop.f32.mrb[0].mxu0
  %v4732 = vadd.f32 %v4216, %v4731
  %v4733 = vpop.f32.mrb[0].mxu0
  %4734 = vmatprep.mubr.f32.mxu0 %v4426
  %4735 = vmatmul.mubr.f32.gmra.mrb[0].mxu0 %v3645
  %v4736 = vpop.f32.mrb[0].mxu0
  %v4737 = vadd.f32 %v4221, %v4736
  %v4738 = vpop.f32.mrb[0].mxu0
  %4739 = vmatprep.mubr.f32.mxu0 %v4429
  %4740 = vmatmul.mubr.f32.gmra.mrb[0].mxu0 %v3647
  %v4741 = vpop.f32.mrb[0].mxu0
  %v4742 = vadd.f32 %v4226, %v4741
  %v4743 = vpop.f32.mrb[0].mxu0
  %4744 = vmatprep.mubr.f32.mxu0 %v4432
  %4745 = vmatmul.mubr.f32.gmra.mrb[0].mxu0 %v3649
  %v4746 = vpop.f32.mrb[0].mxu0
  %v4747 = vadd.f32 %v4231, %v4746
  %v4748 = vpop.f32.mrb[0].mxu0
  %4749 = vmatprep.mubr.f32.mxu0 %v4435
  %4750 = vmatmul.mubr.f32.gmra.mrb[0].mxu0 %v3651
  %v4751 = vpop.f32.mrb[0].mxu0
  %v4752 = vadd.f32 %v4236, %v4751
  %v4753 = vpop.f32.mrb[0].mxu0
  %4754 = vmatprep.mubr.f32.mxu0 %v4438
  %4755 = vmatmul.mubr.f32.gmra.mrb[0].mxu0 %v3653
  %v4756 = vpop.f32.mrb[0].mxu0
  %v4757 = vadd.f32 %v4241, %v4756
  %v4758 = vpop.f32.mrb[0].mxu0
  %4759 = vmatprep.mubr.f32.mxu0 %v4441
  %4760 = vmatmul.mubr.f32.gmra.mrb[0].mxu0 %v3655
  %v4761 = vpop.f32.mrb[0].mxu0
  %v4762 = vadd.f32 %v4246, %v4761
  %v4763 = vpop.f32.mrb[0].mxu0
  %4764 = vmatprep.mubr.f32.mxu0 %v4444
  %4765 = vmatmul.mubr.f32.gmra.mrb[0].mxu0 %v3657
  %v4766 = vpop.f32.mrb[0].mxu0
  %v4767 = vadd.f32 %v4251, %v4766
  %v4768 = vpop.f32.mrb[0].mxu0
  %4769 = vmatprep.mubr.f32.mxu0 %v4447
  %4770 = vmatmul.mubr.f32.gmra.mrb[0].mxu0 %v3659
  %v4771 = vpop.f32.mrb[0].mxu0
  %v4772 = vadd.f32 %v4256, %v4771
  %v4773 = vpop.f32.mrb[0].mxu0
  %4774 = vmatprep.mubr.f32.mxu0 %v4450
  %4775 = vmatmul.mubr.f32.gmra.mrb[0].mxu0 %v3661
  %v4776 = vpop.f32.mrb[0].mxu0
  %v4777 = vadd.f32 %v4261, %v4776
  %v4778 = vpop.f32.mrb[0].mxu0
  %4779 = vmatprep.mubr.f32.mxu0 %v4453
  %4780 = vmatmul.mubr.f32.gmra.mrb[0].mxu0 %v3663
  %v4781 = vpop.f32.mrb[0].mxu0
  %v4782 = vadd.f32 %v4266, %v4781
  %v4783 = vpop.f32.mrb[0].mxu0
  %4784 = vmatprep.mubr.f32.mxu0 %v4456
  %4785 = vmatmul.mubr.f32.gmra.mrb[0].mxu0 %v3665
  %v4786 = vpop.f32.mrb[0].mxu0
  %v4787 = vadd.f32 %v4271, %v4786
  %v4788 = vpop.f32.mrb[0].mxu0
  %4789 = vmatprep.mubr.f32.mxu0 %v4459
  %4790 = vmatmul.mubr.f32.gmra.mrb[0].mxu0 %v3667
  %v4791 = vpop.f32.mrb[0].mxu0
  %v4792 = vadd.f32 %v4276, %v4791
  %v4793 = vpop.f32.mrb[0].mxu0
  %4794 = vmatprep.mubr.f32.mxu0 %v4462
  %4795 = vmatmul.mubr.f32.gmra.mrb[0].mxu0 %v3669
  %v4796 = vpop.f32.mrb[0].mxu0
  %v4797 = vadd.f32 %v4281, %v4796
  %v4798 = vpop.f32.mrb[0].mxu0
  %4799 = vmatprep.mubr.f32.mxu0 %v4465
  %4800 = vmatmul.mubr.f32.gmra.mrb[0].mxu0 %v3671
  %v4801 = vpop.f32.mrb[0].mxu0
  %v4802 = vadd.f32 %v4286, %v4801
  %v4803 = vpop.f32.mrb[0].mxu0
  %4804 = vmatprep.mubr.f32.mxu0 %v4468
  %4805 = vmatmul.mubr.f32.gmra.mrb[0].mxu0 %v3673
  %v4806 = vpop.f32.mrb[0].mxu0
  %v4807 = vadd.f32 %v4291, %v4806
  %v4808 = vpop.f32.mrb[0].mxu0
  %4809 = vmatprep.mubr.f32.mxu0 %v4471
  %4810 = vmatmul.mubr.f32.gmra.mrb[0].mxu0 %v3675
  %v4811 = vpop.f32.mrb[0].mxu0
  %v4812 = vadd.f32 %v4296, %v4811
  %v4813 = vpop.f32.mrb[0].mxu0
  %4814 = vmatprep.mubr.f32.mxu0 %v4474
  %4815 = vmatmul.mubr.f32.gmra.mrb[0].mxu0 %v3677
  %v4816 = vpop.f32.mrb[0].mxu0
  %v4817 = vadd.f32 %v4301, %v4816
  %v4818 = vpop.f32.mrb[0].mxu0
  %4819 = vmatprep.mubr.f32.mxu0 %v4477
  %4820 = vmatmul.mubr.f32.gmra.mrb[0].mxu0 %v3679
  %v4821 = vpop.f32.mrb[0].mxu0
  %v4822 = vadd.f32 %v4306, %v4821
  %v4823 = vpop.f32.mrb[0].mxu0
  %4824 = vmatprep.mubr.f32.mxu0 %v4480
  %4825 = vmatmul.mubr.f32.gmra.mrb[0].mxu0 %v3681
  %v4826 = vpop.f32.mrb[0].mxu0
  %v4827 = vadd.f32 %v4311, %v4826
  %v4828 = vpop.f32.mrb[0].mxu0
  %4829 = vdwg.mxu0
  %s4830 = scalar_lea.vmem %s4, 3584
  %v4831 = vld [vmem:[%s4830] sm:$0xff]
  %v4832 = vld [vmem:[%s4830 + $0x8] sm:$0xff]
  %v4833 = vld [vmem:[%s4830 + $0x10] sm:$0xff]
  %v4834 = vld [vmem:[%s4830 + $0x18] sm:$0xff]
  %v4835 = vld [vmem:[%s4830 + $0x20] sm:$0xff]
  %v4836 = vld [vmem:[%s4830 + $0x28] sm:$0xff]
  %v4837 = vld [vmem:[%s4830 + $0x30] sm:$0xff]
  %v4838 = vld [vmem:[%s4830 + $0x38] sm:$0xff]
  %v4839 = vld [vmem:[%s4830 + $0x40] sm:$0xff]
  %v4840 = vld [vmem:[%s4830 + $0x48] sm:$0xff]
  %v4841 = vld [vmem:[%s4830 + $0x50] sm:$0xff]
  %v4842 = vld [vmem:[%s4830 + $0x58] sm:$0xff]
  %v4843 = vld [vmem:[%s4830 + $0x60] sm:$0xff]
  %v4844 = vld [vmem:[%s4830 + $0x68] sm:$0xff]
  %v4845 = vld [vmem:[%s4830 + $0x70] sm:$0xff]
  %v4846 = vld [vmem:[%s4830 + $0x78] sm:$0xff]
  %v4847 = vld [vmem:[%s4830 + $0x80] sm:$0xff]
  %v4848 = vld [vmem:[%s4830 + $0x88] sm:$0xff]
  %v4849 = vld [vmem:[%s4830 + $0x90] sm:$0xff]
  %v4850 = vld [vmem:[%s4830 + $0x98] sm:$0xff]
  %v4851 = vld [vmem:[%s4830 + $0xa0] sm:$0xff]
  %v4852 = vld [vmem:[%s4830 + $0xa8] sm:$0xff]
  %v4853 = vld [vmem:[%s4830 + $0xb0] sm:$0xff]
  %v4854 = vld [vmem:[%s4830 + $0xb8] sm:$0xff]
  %v4855 = vld [vmem:[%s4830 + $0xc0] sm:$0xff]
  %v4856 = vld [vmem:[%s4830 + $0xc8] sm:$0xff]
  %v4857 = vld [vmem:[%s4830 + $0xd0] sm:$0xff]
  %v4858 = vld [vmem:[%s4830 + $0xd8] sm:$0xff]
  %v4859 = vld [vmem:[%s4830 + $0xe0] sm:$0xff]
  %v4860 = vld [vmem:[%s4830 + $0xe8] sm:$0xff]
  %v4861 = vld [vmem:[%s4830 + $0xf0] sm:$0xff]
  %v4862 = vld [vmem:[%s4830 + $0xf8] sm:$0xff]
  %v4863 = vld [vmem:[%s4830 + $0x100] sm:$0xff]
  %v4864 = vld [vmem:[%s4830 + $0x108] sm:$0xff]
  %v4865 = vld [vmem:[%s4830 + $0x110] sm:$0xff]
  %v4866 = vld [vmem:[%s4830 + $0x118] sm:$0xff]
  %v4867 = vld [vmem:[%s4830 + $0x120] sm:$0xff]
  %v4868 = vld [vmem:[%s4830 + $0x128] sm:$0xff]
  %v4869 = vld [vmem:[%s4830 + $0x130] sm:$0xff]
  %v4870 = vld [vmem:[%s4830 + $0x138] sm:$0xff]
  %v4871 = vld [vmem:[%s4830 + $0x140] sm:$0xff]
  %v4872 = vld [vmem:[%s4830 + $0x148] sm:$0xff]
  %v4873 = vld [vmem:[%s4830 + $0x150] sm:$0xff]
  %v4874 = vld [vmem:[%s4830 + $0x158] sm:$0xff]
  %v4875 = vld [vmem:[%s4830 + $0x160] sm:$0xff]
  %v4876 = vld [vmem:[%s4830 + $0x168] sm:$0xff]
  %v4877 = vld [vmem:[%s4830 + $0x170] sm:$0xff]
  %v4878 = vld [vmem:[%s4830 + $0x178] sm:$0xff]
  %v4879 = vld [vmem:[%s4830 + $0x180] sm:$0xff]
  %v4880 = vld [vmem:[%s4830 + $0x188] sm:$0xff]
  %v4881 = vld [vmem:[%s4830 + $0x190] sm:$0xff]
  %v4882 = vld [vmem:[%s4830 + $0x198] sm:$0xff]
  %v4883 = vld [vmem:[%s4830 + $0x1a0] sm:$0xff]
  %v4884 = vld [vmem:[%s4830 + $0x1a8] sm:$0xff]
  %v4885 = vld [vmem:[%s4830 + $0x1b0] sm:$0xff]
  %v4886 = vld [vmem:[%s4830 + $0x1b8] sm:$0xff]
  %v4887 = vld [vmem:[%s4830 + $0x1c0] sm:$0xff]
  %v4888 = vld [vmem:[%s4830 + $0x1c8] sm:$0xff]
  %v4889 = vld [vmem:[%s4830 + $0x1d0] sm:$0xff]
  %v4890 = vld [vmem:[%s4830 + $0x1d8] sm:$0xff]
  %v4891 = vld [vmem:[%s4830 + $0x1e0] sm:$0xff]
  %v4892 = vld [vmem:[%s4830 + $0x1e8] sm:$0xff]
  %v4893 = vld [vmem:[%s4830 + $0x1f0] sm:$0xff]
  %v4894 = vld [vmem:[%s4830 + $0x1f8] sm:$0xff]
  %v4895 = vld [vmem:[%s4830 + $0x200] sm:$0xff]
  %v4896 = vld [vmem:[%s4830 + $0x208] sm:$0xff]
  %v4897 = vld [vmem:[%s4830 + $0x210] sm:$0xff]
  %v4898 = vld [vmem:[%s4830 + $0x218] sm:$0xff]
  %v4899 = vld [vmem:[%s4830 + $0x220] sm:$0xff]
  %v4900 = vld [vmem:[%s4830 + $0x228] sm:$0xff]
  %v4901 = vld [vmem:[%s4830 + $0x230] sm:$0xff]
  %v4902 = vld [vmem:[%s4830 + $0x238] sm:$0xff]
  %v4903 = vld [vmem:[%s4830 + $0x240] sm:$0xff]
  %v4904 = vld [vmem:[%s4830 + $0x248] sm:$0xff]
  %v4905 = vld [vmem:[%s4830 + $0x250] sm:$0xff]
  %v4906 = vld [vmem:[%s4830 + $0x258] sm:$0xff]
  %v4907 = vld [vmem:[%s4830 + $0x260] sm:$0xff]
  %v4908 = vld [vmem:[%s4830 + $0x268] sm:$0xff]
  %v4909 = vld [vmem:[%s4830 + $0x270] sm:$0xff]
  %v4910 = vld [vmem:[%s4830 + $0x278] sm:$0xff]
  %v4911 = vld [vmem:[%s4830 + $0x280] sm:$0xff]
  %v4912 = vld [vmem:[%s4830 + $0x288] sm:$0xff]
  %v4913 = vld [vmem:[%s4830 + $0x290] sm:$0xff]
  %v4914 = vld [vmem:[%s4830 + $0x298] sm:$0xff]
  %v4915 = vld [vmem:[%s4830 + $0x2a0] sm:$0xff]
  %v4916 = vld [vmem:[%s4830 + $0x2a8] sm:$0xff]
  %v4917 = vld [vmem:[%s4830 + $0x2b0] sm:$0xff]
  %v4918 = vld [vmem:[%s4830 + $0x2b8] sm:$0xff]
  %v4919 = vld [vmem:[%s4830 + $0x2c0] sm:$0xff]
  %v4920 = vld [vmem:[%s4830 + $0x2c8] sm:$0xff]
  %v4921 = vld [vmem:[%s4830 + $0x2d0] sm:$0xff]
  %v4922 = vld [vmem:[%s4830 + $0x2d8] sm:$0xff]
  %v4923 = vld [vmem:[%s4830 + $0x2e0] sm:$0xff]
  %v4924 = vld [vmem:[%s4830 + $0x2e8] sm:$0xff]
  %v4925 = vld [vmem:[%s4830 + $0x2f0] sm:$0xff]
  %v4926 = vld [vmem:[%s4830 + $0x2f8] sm:$0xff]
  %v4927 = vld [vmem:[%s4830 + $0x300] sm:$0xff]
  %v4928 = vld [vmem:[%s4830 + $0x308] sm:$0xff]
  %v4929 = vld [vmem:[%s4830 + $0x310] sm:$0xff]
  %v4930 = vld [vmem:[%s4830 + $0x318] sm:$0xff]
  %v4931 = vld [vmem:[%s4830 + $0x320] sm:$0xff]
  %v4932 = vld [vmem:[%s4830 + $0x328] sm:$0xff]
  %v4933 = vld [vmem:[%s4830 + $0x330] sm:$0xff]
  %v4934 = vld [vmem:[%s4830 + $0x338] sm:$0xff]
  %v4935 = vld [vmem:[%s4830 + $0x340] sm:$0xff]
  %v4936 = vld [vmem:[%s4830 + $0x348] sm:$0xff]
  %v4937 = vld [vmem:[%s4830 + $0x350] sm:$0xff]
  %v4938 = vld [vmem:[%s4830 + $0x358] sm:$0xff]
  %v4939 = vld [vmem:[%s4830 + $0x360] sm:$0xff]
  %v4940 = vld [vmem:[%s4830 + $0x368] sm:$0xff]
  %v4941 = vld [vmem:[%s4830 + $0x370] sm:$0xff]
  %v4942 = vld [vmem:[%s4830 + $0x378] sm:$0xff]
  %v4944 = vsel %vm3796, %v4832, 0
  %v4947 = vsel %vm3796, %v4834, 0
  %v4950 = vsel %vm3796, %v4836, 0
  %v4953 = vsel %vm3796, %v4838, 0
  %v4956 = vsel %vm3796, %v4840, 0
  %v4959 = vsel %vm3796, %v4842, 0
  %v4962 = vsel %vm3796, %v4844, 0
  %v4965 = vsel %vm3796, %v4846, 0
  %v4968 = vsel %vm3796, %v4848, 0
  %v4971 = vsel %vm3796, %v4850, 0
  %v4974 = vsel %vm3796, %v4852, 0
  %v4977 = vsel %vm3796, %v4854, 0
  %v4980 = vsel %vm3796, %v4856, 0
  %v4983 = vsel %vm3796, %v4858, 0
  %v4986 = vsel %vm3796, %v4860, 0
  %v4989 = vsel %vm3796, %v4862, 0
  %v4992 = vsel %vm3796, %v4864, 0
  %v4995 = vsel %vm3796, %v4866, 0
  %v4998 = vsel %vm3796, %v4868, 0
  %v5001 = vsel %vm3796, %v4870, 0
  %v5004 = vsel %vm3796, %v4872, 0
  %v5007 = vsel %vm3796, %v4874, 0
  %v5010 = vsel %vm3796, %v4876, 0
  %v5013 = vsel %vm3796, %v4878, 0
  %v5016 = vsel %vm3796, %v4880, 0
  %v5019 = vsel %vm3796, %v4882, 0
  %v5022 = vsel %vm3796, %v4884, 0
  %v5025 = vsel %vm3796, %v4886, 0
  %v5028 = vsel %vm3796, %v4888, 0
  %v5031 = vsel %vm3796, %v4890, 0
  %v5034 = vsel %vm3796, %v4892, 0
  %v5037 = vsel %vm3796, %v4894, 0
  %v5040 = vsel %vm3796, %v4896, 0
  %v5043 = vsel %vm3796, %v4898, 0
  %v5046 = vsel %vm3796, %v4900, 0
  %v5049 = vsel %vm3796, %v4902, 0
  %v5052 = vsel %vm3796, %v4904, 0
  %v5055 = vsel %vm3796, %v4906, 0
  %v5058 = vsel %vm3796, %v4908, 0
  %v5061 = vsel %vm3796, %v4910, 0
  %v5064 = vsel %vm3796, %v4912, 0
  %v5067 = vsel %vm3796, %v4914, 0
  %v5070 = vsel %vm3796, %v4916, 0
  %v5073 = vsel %vm3796, %v4918, 0
  %v5076 = vsel %vm3796, %v4920, 0
  %v5079 = vsel %vm3796, %v4922, 0
  %v5082 = vsel %vm3796, %v4924, 0
  %v5085 = vsel %vm3796, %v4926, 0
  %v5088 = vsel %vm3796, %v4928, 0
  %v5091 = vsel %vm3796, %v4930, 0
  %v5094 = vsel %vm3796, %v4932, 0
  %v5097 = vsel %vm3796, %v4934, 0
  %v5100 = vsel %vm3796, %v4936, 0
  %v5103 = vsel %vm3796, %v4938, 0
  %v5106 = vsel %vm3796, %v4940, 0
  %v5109 = vsel %vm3796, %v4942, 0
  %v5112 = vsel %vm3965, %v3570, 0
  %5114 = vmatprep.subr.mxu0 0.0
  %5115 = vmatpush1.msra.mxu0 %v3548
  %5116 = vmatprep.subr.mxu0 0.0
  %5117 = vmatpush1.msra.mxu0 %v3549
  %5118 = vmatprep.subr.mxu0 0.0
  %5119 = vmatpush1.msra.mxu0 %v3550
  %5120 = vmatprep.subr.mxu0 0.0
  %5121 = vmatpush1.msra.mxu0 %v3551
  %5122 = vmatprep.subr.mxu0 0.0
  %5123 = vmatpush1.msra.mxu0 %v3552
  %5124 = vmatprep.subr.mxu0 0.0
  %5125 = vmatpush1.msra.mxu0 %v3553
  %5126 = vmatprep.subr.mxu0 0.0
  %5127 = vmatpush1.msra.mxu0 %v3554
  %5128 = vmatprep.subr.mxu0 0.0
  %5129 = vmatpush1.msra.mxu0 %v3555
  %5130 = vmatprep.subr.mxu0 0.0
  %5131 = vmatpush1.msra.mxu0 %v3556
  %5132 = vmatprep.subr.mxu0 0.0
  %5133 = vmatpush1.msra.mxu0 %v3557
  %5134 = vmatprep.subr.mxu0 0.0
  %5135 = vmatpush1.msra.mxu0 %v3558
  %5136 = vmatprep.subr.mxu0 0.0
  %5137 = vmatpush1.msra.mxu0 %v3559
  %5138 = vmatprep.subr.mxu0 0.0
  %5139 = vmatpush1.msra.mxu0 %v3560
  %5140 = vmatprep.subr.mxu0 0.0
  %5141 = vmatpush1.msra.mxu0 %v3561
  %5142 = vmatprep.subr.mxu0 0.0
  %5143 = vmatpush1.msra.mxu0 %v3562
  %5144 = vmatprep.subr.mxu0 0.0
  %5145 = vmatpush1.msra.mxu0 %v3563
  %5146 = vmatprep.subr.mxu0 0.0
  %5147 = vmatpush1.msra.mxu0 %v3564
  %5148 = vmatprep.subr.mxu0 0.0
  %5149 = vmatpush1.msra.mxu0 %v3565
  %5150 = vmatprep.subr.mxu0 0.0
  %5151 = vmatpush1.msra.mxu0 %v3566
  %5152 = vmatprep.subr.mxu0 0.0
  %5153 = vmatpush1.msra.mxu0 %v3567
  %5154 = vmatprep.subr.mxu0 0.0
  %5155 = vmatpush1.msra.mxu0 %v3568
  %5156 = vmatprep.subr.mxu0 0.0
  %5157 = vmatpush1.msra.mxu0 %v3569
  %5158 = vmatprep.subr.mxu0 0.0
  %5159 = vmatpush1.msra.mxu0 %v5112
  %5160 = vmatprep.subr.mxu0 0.0
  %5161 = vmatpush1.msra.mxu0 0.0
  %5162 = vmatprep.subr.mxu0 0.0
  %5163 = vmatpush1.msra.mxu0 0.0
  %5164 = vmatprep.subr.mxu0 0.0
  %5165 = vmatpush1.msra.mxu0 0.0
  %5166 = vmatprep.subr.mxu0 0.0
  %5167 = vmatpush1.msra.mxu0 0.0
  %5168 = vmatprep.subr.mxu0 0.0
  %5169 = vmatpush1.msra.mxu0 0.0
  %5170 = vmatprep.subr.mxu0 0.0
  %5171 = vmatpush1.msra.mxu0 0.0
  %5172 = vmatprep.subr.mxu0 0.0
  %5173 = vmatpush1.msra.mxu0 0.0
  %5174 = vmatprep.subr.mxu0 0.0
  %5175 = vmatpush1.msra.mxu0 0.0
  %5176 = vmatprep.subr.mxu0 0.0
  %5177 = vmatpush1.msra.mxu0 0.0
  %5178 = vmatprep.mubr.f32.mxu0 %v4944
  %5179 = vmatmul.mubr.f32.gmra.mrb[0].mxu0 %v4831
  %v5180 = vpop.f32.mrb[0].mxu0
  %v5181 = vadd.f32 0.0, %v5180
  %v5182 = vpop.f32.mrb[0].mxu0
  %5183 = vmatprep.mubr.f32.mxu0 %v4947
  %5184 = vmatmul.mubr.f32.gmra.mrb[0].mxu0 %v4833
  %v5185 = vpop.f32.mrb[0].mxu0
  %v5186 = vadd.f32 0.0, %v5185
  %v5187 = vpop.f32.mrb[0].mxu0
  %5188 = vmatprep.mubr.f32.mxu0 %v4950
  %5189 = vmatmul.mubr.f32.gmra.mrb[0].mxu0 %v4835
  %v5190 = vpop.f32.mrb[0].mxu0
  %v5191 = vadd.f32 0.0, %v5190
  %v5192 = vpop.f32.mrb[0].mxu0
  %5193 = vmatprep.mubr.f32.mxu0 %v4953
  %5194 = vmatmul.mubr.f32.gmra.mrb[0].mxu0 %v4837
  %v5195 = vpop.f32.mrb[0].mxu0
  %v5196 = vadd.f32 0.0, %v5195
  %v5197 = vpop.f32.mrb[0].mxu0
  %5198 = vmatprep.mubr.f32.mxu0 %v4956
  %5199 = vmatmul.mubr.f32.gmra.mrb[0].mxu0 %v4839
  %v5200 = vpop.f32.mrb[0].mxu0
  %v5201 = vadd.f32 0.0, %v5200
  %v5202 = vpop.f32.mrb[0].mxu0
  %5203 = vmatprep.mubr.f32.mxu0 %v4959
  %5204 = vmatmul.mubr.f32.gmra.mrb[0].mxu0 %v4841
  %v5205 = vpop.f32.mrb[0].mxu0
  %v5206 = vadd.f32 0.0, %v5205
  %v5207 = vpop.f32.mrb[0].mxu0
  %5208 = vmatprep.mubr.f32.mxu0 %v4962
  %5209 = vmatmul.mubr.f32.gmra.mrb[0].mxu0 %v4843
  %v5210 = vpop.f32.mrb[0].mxu0
  %v5211 = vadd.f32 0.0, %v5210
  %v5212 = vpop.f32.mrb[0].mxu0
  %5213 = vmatprep.mubr.f32.mxu0 %v4965
  %5214 = vmatmul.mubr.f32.gmra.mrb[0].mxu0 %v4845
  %v5215 = vpop.f32.mrb[0].mxu0
  %v5216 = vadd.f32 0.0, %v5215
  %v5217 = vpop.f32.mrb[0].mxu0
  %5218 = vmatprep.mubr.f32.mxu0 %v4968
  %5219 = vmatmul.mubr.f32.gmra.mrb[0].mxu0 %v4847
  %v5220 = vpop.f32.mrb[0].mxu0
  %v5221 = vadd.f32 0.0, %v5220
  %v5222 = vpop.f32.mrb[0].mxu0
  %5223 = vmatprep.mubr.f32.mxu0 %v4971
  %5224 = vmatmul.mubr.f32.gmra.mrb[0].mxu0 %v4849
  %v5225 = vpop.f32.mrb[0].mxu0
  %v5226 = vadd.f32 0.0, %v5225
  %v5227 = vpop.f32.mrb[0].mxu0
  %5228 = vmatprep.mubr.f32.mxu0 %v4974
  %5229 = vmatmul.mubr.f32.gmra.mrb[0].mxu0 %v4851
  %v5230 = vpop.f32.mrb[0].mxu0
  %v5231 = vadd.f32 0.0, %v5230
  %v5232 = vpop.f32.mrb[0].mxu0
  %5233 = vmatprep.mubr.f32.mxu0 %v4977
  %5234 = vmatmul.mubr.f32.gmra.mrb[0].mxu0 %v4853
  %v5235 = vpop.f32.mrb[0].mxu0
  %v5236 = vadd.f32 0.0, %v5235
  %v5237 = vpop.f32.mrb[0].mxu0
  %5238 = vmatprep.mubr.f32.mxu0 %v4980
  %5239 = vmatmul.mubr.f32.gmra.mrb[0].mxu0 %v4855
  %v5240 = vpop.f32.mrb[0].mxu0
  %v5241 = vadd.f32 0.0, %v5240
  %v5242 = vpop.f32.mrb[0].mxu0
  %5243 = vmatprep.mubr.f32.mxu0 %v4983
  %5244 = vmatmul.mubr.f32.gmra.mrb[0].mxu0 %v4857
  %v5245 = vpop.f32.mrb[0].mxu0
  %v5246 = vadd.f32 0.0, %v5245
  %v5247 = vpop.f32.mrb[0].mxu0
  %5248 = vmatprep.mubr.f32.mxu0 %v4986
  %5249 = vmatmul.mubr.f32.gmra.mrb[0].mxu0 %v4859
  %v5250 = vpop.f32.mrb[0].mxu0
  %v5251 = vadd.f32 0.0, %v5250
  %v5252 = vpop.f32.mrb[0].mxu0
  %5253 = vmatprep.mubr.f32.mxu0 %v4989
  %5254 = vmatmul.mubr.f32.gmra.mrb[0].mxu0 %v4861
  %v5255 = vpop.f32.mrb[0].mxu0
  %v5256 = vadd.f32 0.0, %v5255
  %v5257 = vpop.f32.mrb[0].mxu0
  %5258 = vmatprep.mubr.f32.mxu0 %v4992
  %5259 = vmatmul.mubr.f32.gmra.mrb[0].mxu0 %v4863
  %v5260 = vpop.f32.mrb[0].mxu0
  %v5261 = vadd.f32 0.0, %v5260
  %v5262 = vpop.f32.mrb[0].mxu0
  %5263 = vmatprep.mubr.f32.mxu0 %v4995
  %5264 = vmatmul.mubr.f32.gmra.mrb[0].mxu0 %v4865
  %v5265 = vpop.f32.mrb[0].mxu0
  %v5266 = vadd.f32 0.0, %v5265
  %v5267 = vpop.f32.mrb[0].mxu0
  %5268 = vmatprep.mubr.f32.mxu0 %v4998
  %5269 = vmatmul.mubr.f32.gmra.mrb[0].mxu0 %v4867
  %v5270 = vpop.f32.mrb[0].mxu0
  %v5271 = vadd.f32 0.0, %v5270
  %v5272 = vpop.f32.mrb[0].mxu0
  %5273 = vmatprep.mubr.f32.mxu0 %v5001
  %5274 = vmatmul.mubr.f32.gmra.mrb[0].mxu0 %v4869
  %v5275 = vpop.f32.mrb[0].mxu0
  %v5276 = vadd.f32 0.0, %v5275
  %v5277 = vpop.f32.mrb[0].mxu0
  %5278 = vmatprep.mubr.f32.mxu0 %v5004
  %5279 = vmatmul.mubr.f32.gmra.mrb[0].mxu0 %v4871
  %v5280 = vpop.f32.mrb[0].mxu0
  %v5281 = vadd.f32 0.0, %v5280
  %v5282 = vpop.f32.mrb[0].mxu0
  %5283 = vmatprep.mubr.f32.mxu0 %v5007
  %5284 = vmatmul.mubr.f32.gmra.mrb[0].mxu0 %v4873
  %v5285 = vpop.f32.mrb[0].mxu0
  %v5286 = vadd.f32 0.0, %v5285
  %v5287 = vpop.f32.mrb[0].mxu0
  %5288 = vmatprep.mubr.f32.mxu0 %v5010
  %5289 = vmatmul.mubr.f32.gmra.mrb[0].mxu0 %v4875
  %v5290 = vpop.f32.mrb[0].mxu0
  %v5291 = vadd.f32 0.0, %v5290
  %v5292 = vpop.f32.mrb[0].mxu0
  %5293 = vmatprep.mubr.f32.mxu0 %v5013
  %5294 = vmatmul.mubr.f32.gmra.mrb[0].mxu0 %v4877
  %v5295 = vpop.f32.mrb[0].mxu0
  %v5296 = vadd.f32 0.0, %v5295
  %v5297 = vpop.f32.mrb[0].mxu0
  %5298 = vmatprep.mubr.f32.mxu0 %v5016
  %5299 = vmatmul.mubr.f32.gmra.mrb[0].mxu0 %v4879
  %v5300 = vpop.f32.mrb[0].mxu0
  %v5301 = vadd.f32 0.0, %v5300
  %v5302 = vpop.f32.mrb[0].mxu0
  %5303 = vmatprep.mubr.f32.mxu0 %v5019
  %5304 = vmatmul.mubr.f32.gmra.mrb[0].mxu0 %v4881
  %v5305 = vpop.f32.mrb[0].mxu0
  %v5306 = vadd.f32 0.0, %v5305
  %v5307 = vpop.f32.mrb[0].mxu0
  %5308 = vmatprep.mubr.f32.mxu0 %v5022
  %5309 = vmatmul.mubr.f32.gmra.mrb[0].mxu0 %v4883
  %v5310 = vpop.f32.mrb[0].mxu0
  %v5311 = vadd.f32 0.0, %v5310
  %v5312 = vpop.f32.mrb[0].mxu0
  %5313 = vmatprep.mubr.f32.mxu0 %v5025
  %5314 = vmatmul.mubr.f32.gmra.mrb[0].mxu0 %v4885
  %v5315 = vpop.f32.mrb[0].mxu0
  %v5316 = vadd.f32 0.0, %v5315
  %v5317 = vpop.f32.mrb[0].mxu0
  %5318 = vmatprep.mubr.f32.mxu0 %v5028
  %5319 = vmatmul.mubr.f32.gmra.mrb[0].mxu0 %v4887
  %v5320 = vpop.f32.mrb[0].mxu0
  %v5321 = vadd.f32 0.0, %v5320
  %v5322 = vpop.f32.mrb[0].mxu0
  %5323 = vmatprep.mubr.f32.mxu0 %v5031
  %5324 = vmatmul.mubr.f32.gmra.mrb[0].mxu0 %v4889
  %v5325 = vpop.f32.mrb[0].mxu0
  %v5326 = vadd.f32 0.0, %v5325
  %v5327 = vpop.f32.mrb[0].mxu0
  %5328 = vmatprep.mubr.f32.mxu0 %v5034
  %5329 = vmatmul.mubr.f32.gmra.mrb[0].mxu0 %v4891
  %v5330 = vpop.f32.mrb[0].mxu0
  %v5331 = vadd.f32 0.0, %v5330
  %v5332 = vpop.f32.mrb[0].mxu0
  %5333 = vmatprep.mubr.f32.mxu0 %v5037
  %5334 = vmatmul.mubr.f32.gmra.mrb[0].mxu0 %v4893
  %v5335 = vpop.f32.mrb[0].mxu0
  %v5336 = vadd.f32 0.0, %v5335
  %v5337 = vpop.f32.mrb[0].mxu0
  %5338 = vmatprep.mubr.f32.mxu0 %v5040
  %5339 = vmatmul.mubr.f32.gmra.mrb[0].mxu0 %v4895
  %v5340 = vpop.f32.mrb[0].mxu0
  %v5341 = vadd.f32 0.0, %v5340
  %v5342 = vpop.f32.mrb[0].mxu0
  %5343 = vmatprep.mubr.f32.mxu0 %v5043
  %5344 = vmatmul.mubr.f32.gmra.mrb[0].mxu0 %v4897
  %v5345 = vpop.f32.mrb[0].mxu0
  %v5346 = vadd.f32 0.0, %v5345
  %v5347 = vpop.f32.mrb[0].mxu0
  %5348 = vmatprep.mubr.f32.mxu0 %v5046
  %5349 = vmatmul.mubr.f32.gmra.mrb[0].mxu0 %v4899
  %v5350 = vpop.f32.mrb[0].mxu0
  %v5351 = vadd.f32 0.0, %v5350
  %v5352 = vpop.f32.mrb[0].mxu0
  %5353 = vmatprep.mubr.f32.mxu0 %v5049
  %5354 = vmatmul.mubr.f32.gmra.mrb[0].mxu0 %v4901
  %v5355 = vpop.f32.mrb[0].mxu0
  %v5356 = vadd.f32 0.0, %v5355
  %v5357 = vpop.f32.mrb[0].mxu0
  %5358 = vmatprep.mubr.f32.mxu0 %v5052
  %5359 = vmatmul.mubr.f32.gmra.mrb[0].mxu0 %v4903
  %v5360 = vpop.f32.mrb[0].mxu0
  %v5361 = vadd.f32 0.0, %v5360
  %v5362 = vpop.f32.mrb[0].mxu0
  %5363 = vmatprep.mubr.f32.mxu0 %v5055
  %5364 = vmatmul.mubr.f32.gmra.mrb[0].mxu0 %v4905
  %v5365 = vpop.f32.mrb[0].mxu0
  %v5366 = vadd.f32 0.0, %v5365
  %v5367 = vpop.f32.mrb[0].mxu0
  %5368 = vmatprep.mubr.f32.mxu0 %v5058
  %5369 = vmatmul.mubr.f32.gmra.mrb[0].mxu0 %v4907
  %v5370 = vpop.f32.mrb[0].mxu0
  %v5371 = vadd.f32 0.0, %v5370
  %v5372 = vpop.f32.mrb[0].mxu0
  %5373 = vmatprep.mubr.f32.mxu0 %v5061
  %5374 = vmatmul.mubr.f32.gmra.mrb[0].mxu0 %v4909
  %v5375 = vpop.f32.mrb[0].mxu0
  %v5376 = vadd.f32 0.0, %v5375
  %v5377 = vpop.f32.mrb[0].mxu0
  %5378 = vmatprep.mubr.f32.mxu0 %v5064
  %5379 = vmatmul.mubr.f32.gmra.mrb[0].mxu0 %v4911
  %v5380 = vpop.f32.mrb[0].mxu0
  %v5381 = vadd.f32 0.0, %v5380
  %v5382 = vpop.f32.mrb[0].mxu0
  %5383 = vmatprep.mubr.f32.mxu0 %v5067
  %5384 = vmatmul.mubr.f32.gmra.mrb[0].mxu0 %v4913
  %v5385 = vpop.f32.mrb[0].mxu0
  %v5386 = vadd.f32 0.0, %v5385
  %v5387 = vpop.f32.mrb[0].mxu0
  %5388 = vmatprep.mubr.f32.mxu0 %v5070
  %5389 = vmatmul.mubr.f32.gmra.mrb[0].mxu0 %v4915
  %v5390 = vpop.f32.mrb[0].mxu0
  %v5391 = vadd.f32 0.0, %v5390
  %v5392 = vpop.f32.mrb[0].mxu0
  %5393 = vmatprep.mubr.f32.mxu0 %v5073
  %5394 = vmatmul.mubr.f32.gmra.mrb[0].mxu0 %v4917
  %v5395 = vpop.f32.mrb[0].mxu0
  %v5396 = vadd.f32 0.0, %v5395
  %v5397 = vpop.f32.mrb[0].mxu0
  %5398 = vmatprep.mubr.f32.mxu0 %v5076
  %5399 = vmatmul.mubr.f32.gmra.mrb[0].mxu0 %v4919
  %v5400 = vpop.f32.mrb[0].mxu0
  %v5401 = vadd.f32 0.0, %v5400
  %v5402 = vpop.f32.mrb[0].mxu0
  %5403 = vmatprep.mubr.f32.mxu0 %v5079
  %5404 = vmatmul.mubr.f32.gmra.mrb[0].mxu0 %v4921
  %v5405 = vpop.f32.mrb[0].mxu0
  %v5406 = vadd.f32 0.0, %v5405
  %v5407 = vpop.f32.mrb[0].mxu0
  %5408 = vmatprep.mubr.f32.mxu0 %v5082
  %5409 = vmatmul.mubr.f32.gmra.mrb[0].mxu0 %v4923
  %v5410 = vpop.f32.mrb[0].mxu0
  %v5411 = vadd.f32 0.0, %v5410
  %v5412 = vpop.f32.mrb[0].mxu0
  %5413 = vmatprep.mubr.f32.mxu0 %v5085
  %5414 = vmatmul.mubr.f32.gmra.mrb[0].mxu0 %v4925
  %v5415 = vpop.f32.mrb[0].mxu0
  %v5416 = vadd.f32 0.0, %v5415
  %v5417 = vpop.f32.mrb[0].mxu0
  %5418 = vmatprep.mubr.f32.mxu0 %v5088
  %5419 = vmatmul.mubr.f32.gmra.mrb[0].mxu0 %v4927
  %v5420 = vpop.f32.mrb[0].mxu0
  %v5421 = vadd.f32 0.0, %v5420
  %v5422 = vpop.f32.mrb[0].mxu0
  %5423 = vmatprep.mubr.f32.mxu0 %v5091
  %5424 = vmatmul.mubr.f32.gmra.mrb[0].mxu0 %v4929
  %v5425 = vpop.f32.mrb[0].mxu0
  %v5426 = vadd.f32 0.0, %v5425
  %v5427 = vpop.f32.mrb[0].mxu0
  %5428 = vmatprep.mubr.f32.mxu0 %v5094
  %5429 = vmatmul.mubr.f32.gmra.mrb[0].mxu0 %v4931
  %v5430 = vpop.f32.mrb[0].mxu0
  %v5431 = vadd.f32 0.0, %v5430
  %v5432 = vpop.f32.mrb[0].mxu0
  %5433 = vmatprep.mubr.f32.mxu0 %v5097
  %5434 = vmatmul.mubr.f32.gmra.mrb[0].mxu0 %v4933
  %v5435 = vpop.f32.mrb[0].mxu0
  %v5436 = vadd.f32 0.0, %v5435
  %v5437 = vpop.f32.mrb[0].mxu0
  %5438 = vmatprep.mubr.f32.mxu0 %v5100
  %5439 = vmatmul.mubr.f32.gmra.mrb[0].mxu0 %v4935
  %v5440 = vpop.f32.mrb[0].mxu0
  %v5441 = vadd.f32 0.0, %v5440
  %v5442 = vpop.f32.mrb[0].mxu0
  %5443 = vmatprep.mubr.f32.mxu0 %v5103
  %5444 = vmatmul.mubr.f32.gmra.mrb[0].mxu0 %v4937
  %v5445 = vpop.f32.mrb[0].mxu0
  %v5446 = vadd.f32 0.0, %v5445
  %v5447 = vpop.f32.mrb[0].mxu0
  %5448 = vmatprep.mubr.f32.mxu0 %v5106
  %5449 = vmatmul.mubr.f32.gmra.mrb[0].mxu0 %v4939
  %v5450 = vpop.f32.mrb[0].mxu0
  %v5451 = vadd.f32 0.0, %v5450
  %v5452 = vpop.f32.mrb[0].mxu0
  %5453 = vmatprep.mubr.f32.mxu0 %v5109
  %5454 = vmatmul.mubr.f32.gmra.mrb[0].mxu0 %v4941
  %v5455 = vpop.f32.mrb[0].mxu0
  %v5456 = vadd.f32 0.0, %v5455
  %v5457 = vpop.f32.mrb[0].mxu0
  %5458 = vdwg.mxu0
  %v5459 = vadd.f32 %v4552, %v5181
  %v5460 = vadd.f32 %v4557, %v5186
  %v5461 = vadd.f32 %v4562, %v5191
  %v5462 = vadd.f32 %v4567, %v5196
  %v5463 = vadd.f32 %v4572, %v5201
  %v5464 = vadd.f32 %v4577, %v5206
  %v5465 = vadd.f32 %v4582, %v5211
  %v5466 = vadd.f32 %v4587, %v5216
  %v5467 = vadd.f32 %v4592, %v5221
  %v5468 = vadd.f32 %v4597, %v5226
  %v5469 = vadd.f32 %v4602, %v5231
  %v5470 = vadd.f32 %v4607, %v5236
  %v5471 = vadd.f32 %v4612, %v5241
  %v5472 = vadd.f32 %v4617, %v5246
  %v5473 = vadd.f32 %v4622, %v5251
  %v5474 = vadd.f32 %v4627, %v5256
  %v5475 = vadd.f32 %v4632, %v5261
  %v5476 = vadd.f32 %v4637, %v5266
  %v5477 = vadd.f32 %v4642, %v5271
  %v5478 = vadd.f32 %v4647, %v5276
  %v5479 = vadd.f32 %v4652, %v5281
  %v5480 = vadd.f32 %v4657, %v5286
  %v5481 = vadd.f32 %v4662, %v5291
  %v5482 = vadd.f32 %v4667, %v5296
  %v5483 = vadd.f32 %v4672, %v5301
  %v5484 = vadd.f32 %v4677, %v5306
  %v5485 = vadd.f32 %v4682, %v5311
  %v5486 = vadd.f32 %v4687, %v5316
  %v5487 = vadd.f32 %v4692, %v5321
  %v5488 = vadd.f32 %v4697, %v5326
  %v5489 = vadd.f32 %v4702, %v5331
  %v5490 = vadd.f32 %v4707, %v5336
  %v5491 = vadd.f32 %v4712, %v5341
  %v5492 = vadd.f32 %v4717, %v5346
  %v5493 = vadd.f32 %v4722, %v5351
  %v5494 = vadd.f32 %v4727, %v5356
  %v5495 = vadd.f32 %v4732, %v5361
  %v5496 = vadd.f32 %v4737, %v5366
  %v5497 = vadd.f32 %v4742, %v5371
  %v5498 = vadd.f32 %v4747, %v5376
  %v5499 = vadd.f32 %v4752, %v5381
  %v5500 = vadd.f32 %v4757, %v5386
  %v5501 = vadd.f32 %v4762, %v5391
  %v5502 = vadd.f32 %v4767, %v5396
  %v5503 = vadd.f32 %v4772, %v5401
  %v5504 = vadd.f32 %v4777, %v5406
  %v5505 = vadd.f32 %v4782, %v5411
  %v5506 = vadd.f32 %v4787, %v5416
  %v5507 = vadd.f32 %v4792, %v5421
  %v5508 = vadd.f32 %v4797, %v5426
  %v5509 = vadd.f32 %v4802, %v5431
  %v5510 = vadd.f32 %v4807, %v5436
  %v5511 = vadd.f32 %v4812, %v5441
  %v5512 = vadd.f32 %v4817, %v5446
  %v5513 = vadd.f32 %v4822, %v5451
  %v5514 = vadd.f32 %v4827, %v5456
  %s5515 = scalar_lea.vmem %s4, 896
  %v5516 = vld [vmem:[%s5515] sm:$0xff]
  %v5517 = vld [vmem:[%s5515 + $0x8] sm:$0xff]
  %v5518 = vld [vmem:[%s5515 + $0x10] sm:$0xff]
  %v5519 = vld [vmem:[%s5515 + $0x18] sm:$0xff]
  %v5520 = vld [vmem:[%s5515 + $0x20] sm:$0xff]
  %v5521 = vld [vmem:[%s5515 + $0x28] sm:$0xff]
  %v5522 = vld [vmem:[%s5515 + $0x30] sm:$0xff]
  %v5523 = vld [vmem:[%s5515 + $0x38] sm:$0xff]
  %v5524 = vld [vmem:[%s5515 + $0x40] sm:$0xff]
  %v5525 = vld [vmem:[%s5515 + $0x48] sm:$0xff]
  %v5526 = vld [vmem:[%s5515 + $0x50] sm:$0xff]
  %v5527 = vld [vmem:[%s5515 + $0x58] sm:$0xff]
  %v5528 = vld [vmem:[%s5515 + $0x60] sm:$0xff]
  %v5529 = vld [vmem:[%s5515 + $0x68] sm:$0xff]
  %v5530 = vld [vmem:[%s5515 + $0x70] sm:$0xff]
  %v5531 = vld [vmem:[%s5515 + $0x78] sm:$0xff]
  %v5532 = vld [vmem:[%s5515 + $0x80] sm:$0xff]
  %v5533 = vld [vmem:[%s5515 + $0x88] sm:$0xff]
  %v5534 = vld [vmem:[%s5515 + $0x90] sm:$0xff]
  %v5535 = vld [vmem:[%s5515 + $0x98] sm:$0xff]
  %v5536 = vld [vmem:[%s5515 + $0xa0] sm:$0xff]
  %v5537 = vld [vmem:[%s5515 + $0xa8] sm:$0xff]
  %v5538 = vld [vmem:[%s5515 + $0xb0] sm:$0xff]
  %v5539 = vld [vmem:[%s5515 + $0xb8] sm:$0xff]
  %v5540 = vld [vmem:[%s5515 + $0xc0] sm:$0xff]
  %v5541 = vld [vmem:[%s5515 + $0xc8] sm:$0xff]
  %v5542 = vld [vmem:[%s5515 + $0xd0] sm:$0xff]
  %v5543 = vld [vmem:[%s5515 + $0xd8] sm:$0xff]
  %v5544 = vld [vmem:[%s5515 + $0xe0] sm:$0xff]
  %v5545 = vld [vmem:[%s5515 + $0xe8] sm:$0xff]
  %v5546 = vld [vmem:[%s5515 + $0xf0] sm:$0xff]
  %v5547 = vld [vmem:[%s5515 + $0xf8] sm:$0xff]
  %v5548 = vld [vmem:[%s5515 + $0x100] sm:$0xff]
  %v5549 = vld [vmem:[%s5515 + $0x108] sm:$0xff]
  %v5550 = vld [vmem:[%s5515 + $0x110] sm:$0xff]
  %v5551 = vld [vmem:[%s5515 + $0x118] sm:$0xff]
  %v5552 = vld [vmem:[%s5515 + $0x120] sm:$0xff]
  %v5553 = vld [vmem:[%s5515 + $0x128] sm:$0xff]
  %v5554 = vld [vmem:[%s5515 + $0x130] sm:$0xff]
  %v5555 = vld [vmem:[%s5515 + $0x138] sm:$0xff]
  %v5556 = vld [vmem:[%s5515 + $0x140] sm:$0xff]
  %v5557 = vld [vmem:[%s5515 + $0x148] sm:$0xff]
  %v5558 = vld [vmem:[%s5515 + $0x150] sm:$0xff]
  %v5559 = vld [vmem:[%s5515 + $0x158] sm:$0xff]
  %v5560 = vld [vmem:[%s5515 + $0x160] sm:$0xff]
  %v5561 = vld [vmem:[%s5515 + $0x168] sm:$0xff]
  %v5562 = vld [vmem:[%s5515 + $0x170] sm:$0xff]
  %v5563 = vld [vmem:[%s5515 + $0x178] sm:$0xff]
  %v5564 = vld [vmem:[%s5515 + $0x180] sm:$0xff]
  %v5565 = vld [vmem:[%s5515 + $0x188] sm:$0xff]
  %v5566 = vld [vmem:[%s5515 + $0x190] sm:$0xff]
  %v5567 = vld [vmem:[%s5515 + $0x198] sm:$0xff]
  %v5568 = vld [vmem:[%s5515 + $0x1a0] sm:$0xff]
  %v5569 = vld [vmem:[%s5515 + $0x1a8] sm:$0xff]
  %v5570 = vld [vmem:[%s5515 + $0x1b0] sm:$0xff]
  %v5571 = vld [vmem:[%s5515 + $0x1b8] sm:$0xff]
  %v5572 = vld [vmem:[%s5515 + $0x1c0] sm:$0xff]
  %v5573 = vld [vmem:[%s5515 + $0x1c8] sm:$0xff]
  %v5574 = vld [vmem:[%s5515 + $0x1d0] sm:$0xff]
  %v5575 = vld [vmem:[%s5515 + $0x1d8] sm:$0xff]
  %v5576 = vld [vmem:[%s5515 + $0x1e0] sm:$0xff]
  %v5577 = vld [vmem:[%s5515 + $0x1e8] sm:$0xff]
  %v5578 = vld [vmem:[%s5515 + $0x1f0] sm:$0xff]
  %v5579 = vld [vmem:[%s5515 + $0x1f8] sm:$0xff]
  %v5580 = vld [vmem:[%s5515 + $0x200] sm:$0xff]
  %v5581 = vld [vmem:[%s5515 + $0x208] sm:$0xff]
  %v5582 = vld [vmem:[%s5515 + $0x210] sm:$0xff]
  %v5583 = vld [vmem:[%s5515 + $0x218] sm:$0xff]
  %v5584 = vld [vmem:[%s5515 + $0x220] sm:$0xff]
  %v5585 = vld [vmem:[%s5515 + $0x228] sm:$0xff]
  %v5586 = vld [vmem:[%s5515 + $0x230] sm:$0xff]
  %v5587 = vld [vmem:[%s5515 + $0x238] sm:$0xff]
  %v5588 = vld [vmem:[%s5515 + $0x240] sm:$0xff]
  %v5589 = vld [vmem:[%s5515 + $0x248] sm:$0xff]
  %v5590 = vld [vmem:[%s5515 + $0x250] sm:$0xff]
  %v5591 = vld [vmem:[%s5515 + $0x258] sm:$0xff]
  %v5592 = vld [vmem:[%s5515 + $0x260] sm:$0xff]
  %v5593 = vld [vmem:[%s5515 + $0x268] sm:$0xff]
  %v5594 = vld [vmem:[%s5515 + $0x270] sm:$0xff]
  %v5595 = vld [vmem:[%s5515 + $0x278] sm:$0xff]
  %v5596 = vld [vmem:[%s5515 + $0x280] sm:$0xff]
  %v5597 = vld [vmem:[%s5515 + $0x288] sm:$0xff]
  %v5598 = vld [vmem:[%s5515 + $0x290] sm:$0xff]
  %v5599 = vld [vmem:[%s5515 + $0x298] sm:$0xff]
  %v5600 = vld [vmem:[%s5515 + $0x2a0] sm:$0xff]
  %v5601 = vld [vmem:[%s5515 + $0x2a8] sm:$0xff]
  %v5602 = vld [vmem:[%s5515 + $0x2b0] sm:$0xff]
  %v5603 = vld [vmem:[%s5515 + $0x2b8] sm:$0xff]
  %v5604 = vld [vmem:[%s5515 + $0x2c0] sm:$0xff]
  %v5605 = vld [vmem:[%s5515 + $0x2c8] sm:$0xff]
  %v5606 = vld [vmem:[%s5515 + $0x2d0] sm:$0xff]
  %v5607 = vld [vmem:[%s5515 + $0x2d8] sm:$0xff]
  %v5608 = vld [vmem:[%s5515 + $0x2e0] sm:$0xff]
  %v5609 = vld [vmem:[%s5515 + $0x2e8] sm:$0xff]
  %v5610 = vld [vmem:[%s5515 + $0x2f0] sm:$0xff]
  %v5611 = vld [vmem:[%s5515 + $0x2f8] sm:$0xff]
  %v5612 = vld [vmem:[%s5515 + $0x300] sm:$0xff]
  %v5613 = vld [vmem:[%s5515 + $0x308] sm:$0xff]
  %v5614 = vld [vmem:[%s5515 + $0x310] sm:$0xff]
  %v5615 = vld [vmem:[%s5515 + $0x318] sm:$0xff]
  %v5616 = vld [vmem:[%s5515 + $0x320] sm:$0xff]
  %v5617 = vld [vmem:[%s5515 + $0x328] sm:$0xff]
  %v5618 = vld [vmem:[%s5515 + $0x330] sm:$0xff]
  %v5619 = vld [vmem:[%s5515 + $0x338] sm:$0xff]
  %v5620 = vld [vmem:[%s5515 + $0x340] sm:$0xff]
  %v5621 = vld [vmem:[%s5515 + $0x348] sm:$0xff]
  %v5622 = vld [vmem:[%s5515 + $0x350] sm:$0xff]
  %v5623 = vld [vmem:[%s5515 + $0x358] sm:$0xff]
  %v5624 = vld [vmem:[%s5515 + $0x360] sm:$0xff]
  %v5625 = vld [vmem:[%s5515 + $0x368] sm:$0xff]
  %v5626 = vld [vmem:[%s5515 + $0x370] sm:$0xff]
  %v5627 = vld [vmem:[%s5515 + $0x378] sm:$0xff]
  %s5628 = scalar_lea.vmem %s4, 2688
  %v5629 = vld [vmem:[%s5628] sm:$0xff]
  %v5630 = vld [vmem:[%s5628 + $0x8] sm:$0xff]
  %v5631 = vld [vmem:[%s5628 + $0x10] sm:$0xff]
  %v5632 = vld [vmem:[%s5628 + $0x18] sm:$0xff]
  %v5633 = vld [vmem:[%s5628 + $0x20] sm:$0xff]
  %v5634 = vld [vmem:[%s5628 + $0x28] sm:$0xff]
  %v5635 = vld [vmem:[%s5628 + $0x30] sm:$0xff]
  %v5636 = vld [vmem:[%s5628 + $0x38] sm:$0xff]
  %v5637 = vld [vmem:[%s5628 + $0x40] sm:$0xff]
  %v5638 = vld [vmem:[%s5628 + $0x48] sm:$0xff]
  %v5639 = vld [vmem:[%s5628 + $0x50] sm:$0xff]
  %v5640 = vld [vmem:[%s5628 + $0x58] sm:$0xff]
  %v5641 = vld [vmem:[%s5628 + $0x60] sm:$0xff]
  %v5642 = vld [vmem:[%s5628 + $0x68] sm:$0xff]
  %v5643 = vld [vmem:[%s5628 + $0x70] sm:$0xff]
  %v5644 = vld [vmem:[%s5628 + $0x78] sm:$0xff]
  %v5645 = vld [vmem:[%s5628 + $0x80] sm:$0xff]
  %v5646 = vld [vmem:[%s5628 + $0x88] sm:$0xff]
  %v5647 = vld [vmem:[%s5628 + $0x90] sm:$0xff]
  %v5648 = vld [vmem:[%s5628 + $0x98] sm:$0xff]
  %v5649 = vld [vmem:[%s5628 + $0xa0] sm:$0xff]
  %v5650 = vld [vmem:[%s5628 + $0xa8] sm:$0xff]
  %v5651 = vld [vmem:[%s5628 + $0xb0] sm:$0xff]
  %v5652 = vld [vmem:[%s5628 + $0xb8] sm:$0xff]
  %v5653 = vld [vmem:[%s5628 + $0xc0] sm:$0xff]
  %v5654 = vld [vmem:[%s5628 + $0xc8] sm:$0xff]
  %v5655 = vld [vmem:[%s5628 + $0xd0] sm:$0xff]
  %v5656 = vld [vmem:[%s5628 + $0xd8] sm:$0xff]
  %v5657 = vld [vmem:[%s5628 + $0xe0] sm:$0xff]
  %v5658 = vld [vmem:[%s5628 + $0xe8] sm:$0xff]
  %v5659 = vld [vmem:[%s5628 + $0xf0] sm:$0xff]
  %v5660 = vld [vmem:[%s5628 + $0xf8] sm:$0xff]
  %v5661 = vld [vmem:[%s5628 + $0x100] sm:$0xff]
  %v5662 = vld [vmem:[%s5628 + $0x108] sm:$0xff]
  %v5663 = vld [vmem:[%s5628 + $0x110] sm:$0xff]
  %v5664 = vld [vmem:[%s5628 + $0x118] sm:$0xff]
  %v5665 = vld [vmem:[%s5628 + $0x120] sm:$0xff]
  %v5666 = vld [vmem:[%s5628 + $0x128] sm:$0xff]
  %v5667 = vld [vmem:[%s5628 + $0x130] sm:$0xff]
  %v5668 = vld [vmem:[%s5628 + $0x138] sm:$0xff]
  %v5669 = vld [vmem:[%s5628 + $0x140] sm:$0xff]
  %v5670 = vld [vmem:[%s5628 + $0x148] sm:$0xff]
  %v5671 = vld [vmem:[%s5628 + $0x150] sm:$0xff]
  %v5672 = vld [vmem:[%s5628 + $0x158] sm:$0xff]
  %v5673 = vld [vmem:[%s5628 + $0x160] sm:$0xff]
  %v5674 = vld [vmem:[%s5628 + $0x168] sm:$0xff]
  %v5675 = vld [vmem:[%s5628 + $0x170] sm:$0xff]
  %v5676 = vld [vmem:[%s5628 + $0x178] sm:$0xff]
  %v5677 = vld [vmem:[%s5628 + $0x180] sm:$0xff]
  %v5678 = vld [vmem:[%s5628 + $0x188] sm:$0xff]
  %v5679 = vld [vmem:[%s5628 + $0x190] sm:$0xff]
  %v5680 = vld [vmem:[%s5628 + $0x198] sm:$0xff]
  %v5681 = vld [vmem:[%s5628 + $0x1a0] sm:$0xff]
  %v5682 = vld [vmem:[%s5628 + $0x1a8] sm:$0xff]
  %v5683 = vld [vmem:[%s5628 + $0x1b0] sm:$0xff]
  %v5684 = vld [vmem:[%s5628 + $0x1b8] sm:$0xff]
  %v5685 = vld [vmem:[%s5628 + $0x1c0] sm:$0xff]
  %v5686 = vld [vmem:[%s5628 + $0x1c8] sm:$0xff]
  %v5687 = vld [vmem:[%s5628 + $0x1d0] sm:$0xff]
  %v5688 = vld [vmem:[%s5628 + $0x1d8] sm:$0xff]
  %v5689 = vld [vmem:[%s5628 + $0x1e0] sm:$0xff]
  %v5690 = vld [vmem:[%s5628 + $0x1e8] sm:$0xff]
  %v5691 = vld [vmem:[%s5628 + $0x1f0] sm:$0xff]
  %v5692 = vld [vmem:[%s5628 + $0x1f8] sm:$0xff]
  %v5693 = vld [vmem:[%s5628 + $0x200] sm:$0xff]
  %v5694 = vld [vmem:[%s5628 + $0x208] sm:$0xff]
  %v5695 = vld [vmem:[%s5628 + $0x210] sm:$0xff]
  %v5696 = vld [vmem:[%s5628 + $0x218] sm:$0xff]
  %v5697 = vld [vmem:[%s5628 + $0x220] sm:$0xff]
  %v5698 = vld [vmem:[%s5628 + $0x228] sm:$0xff]
  %v5699 = vld [vmem:[%s5628 + $0x230] sm:$0xff]
  %v5700 = vld [vmem:[%s5628 + $0x238] sm:$0xff]
  %v5701 = vld [vmem:[%s5628 + $0x240] sm:$0xff]
  %v5702 = vld [vmem:[%s5628 + $0x248] sm:$0xff]
  %v5703 = vld [vmem:[%s5628 + $0x250] sm:$0xff]
  %v5704 = vld [vmem:[%s5628 + $0x258] sm:$0xff]
  %v5705 = vld [vmem:[%s5628 + $0x260] sm:$0xff]
  %v5706 = vld [vmem:[%s5628 + $0x268] sm:$0xff]
  %v5707 = vld [vmem:[%s5628 + $0x270] sm:$0xff]
  %v5708 = vld [vmem:[%s5628 + $0x278] sm:$0xff]
  %v5709 = vld [vmem:[%s5628 + $0x280] sm:$0xff]
  %v5710 = vld [vmem:[%s5628 + $0x288] sm:$0xff]
  %v5711 = vld [vmem:[%s5628 + $0x290] sm:$0xff]
  %v5712 = vld [vmem:[%s5628 + $0x298] sm:$0xff]
  %v5713 = vld [vmem:[%s5628 + $0x2a0] sm:$0xff]
  %v5714 = vld [vmem:[%s5628 + $0x2a8] sm:$0xff]
  %v5715 = vld [vmem:[%s5628 + $0x2b0] sm:$0xff]
  %v5716 = vld [vmem:[%s5628 + $0x2b8] sm:$0xff]
  %v5717 = vld [vmem:[%s5628 + $0x2c0] sm:$0xff]
  %v5718 = vld [vmem:[%s5628 + $0x2c8] sm:$0xff]
  %v5719 = vld [vmem:[%s5628 + $0x2d0] sm:$0xff]
  %v5720 = vld [vmem:[%s5628 + $0x2d8] sm:$0xff]
  %v5721 = vld [vmem:[%s5628 + $0x2e0] sm:$0xff]
  %v5722 = vld [vmem:[%s5628 + $0x2e8] sm:$0xff]
  %v5723 = vld [vmem:[%s5628 + $0x2f0] sm:$0xff]
  %v5724 = vld [vmem:[%s5628 + $0x2f8] sm:$0xff]
  %v5725 = vld [vmem:[%s5628 + $0x300] sm:$0xff]
  %v5726 = vld [vmem:[%s5628 + $0x308] sm:$0xff]
  %v5727 = vld [vmem:[%s5628 + $0x310] sm:$0xff]
  %v5728 = vld [vmem:[%s5628 + $0x318] sm:$0xff]
  %v5729 = vld [vmem:[%s5628 + $0x320] sm:$0xff]
  %v5730 = vld [vmem:[%s5628 + $0x328] sm:$0xff]
  %v5731 = vld [vmem:[%s5628 + $0x330] sm:$0xff]
  %v5732 = vld [vmem:[%s5628 + $0x338] sm:$0xff]
  %v5733 = vld [vmem:[%s5628 + $0x340] sm:$0xff]
  %v5734 = vld [vmem:[%s5628 + $0x348] sm:$0xff]
  %v5735 = vld [vmem:[%s5628 + $0x350] sm:$0xff]
  %v5736 = vld [vmem:[%s5628 + $0x358] sm:$0xff]
  %v5737 = vld [vmem:[%s5628 + $0x360] sm:$0xff]
  %v5738 = vld [vmem:[%s5628 + $0x368] sm:$0xff]
  %v5739 = vld [vmem:[%s5628 + $0x370] sm:$0xff]
  %v5740 = vld [vmem:[%s5628 + $0x378] sm:$0xff]
  %v5742 = vsel %vm3796, %v5630, 0
  %v5745 = vsel %vm3796, %v5632, 0
  %v5748 = vsel %vm3796, %v5634, 0
  %v5751 = vsel %vm3796, %v5636, 0
  %v5754 = vsel %vm3796, %v5638, 0
  %v5757 = vsel %vm3796, %v5640, 0
  %v5760 = vsel %vm3796, %v5642, 0
  %v5763 = vsel %vm3796, %v5644, 0
  %v5766 = vsel %vm3796, %v5646, 0
  %v5769 = vsel %vm3796, %v5648, 0
  %v5772 = vsel %vm3796, %v5650, 0
  %v5775 = vsel %vm3796, %v5652, 0
  %v5778 = vsel %vm3796, %v5654, 0
  %v5781 = vsel %vm3796, %v5656, 0
  %v5784 = vsel %vm3796, %v5658, 0
  %v5787 = vsel %vm3796, %v5660, 0
  %v5790 = vsel %vm3796, %v5662, 0
  %v5793 = vsel %vm3796, %v5664, 0
  %v5796 = vsel %vm3796, %v5666, 0
  %v5799 = vsel %vm3796, %v5668, 0
  %v5802 = vsel %vm3796, %v5670, 0
  %v5805 = vsel %vm3796, %v5672, 0
  %v5808 = vsel %vm3796, %v5674, 0
  %v5811 = vsel %vm3796, %v5676, 0
  %v5814 = vsel %vm3796, %v5678, 0
  %v5817 = vsel %vm3796, %v5680, 0
  %v5820 = vsel %vm3796, %v5682, 0
  %v5823 = vsel %vm3796, %v5684, 0
  %v5826 = vsel %vm3796, %v5686, 0
  %v5829 = vsel %vm3796, %v5688, 0
  %v5832 = vsel %vm3796, %v5690, 0
  %v5835 = vsel %vm3796, %v5692, 0
  %v5838 = vsel %vm3796, %v5694, 0
  %v5841 = vsel %vm3796, %v5696, 0
  %v5844 = vsel %vm3796, %v5698, 0
  %v5847 = vsel %vm3796, %v5700, 0
  %v5850 = vsel %vm3796, %v5702, 0
  %v5853 = vsel %vm3796, %v5704, 0
  %v5856 = vsel %vm3796, %v5706, 0
  %v5859 = vsel %vm3796, %v5708, 0
  %v5862 = vsel %vm3796, %v5710, 0
  %v5865 = vsel %vm3796, %v5712, 0
  %v5868 = vsel %vm3796, %v5714, 0
  %v5871 = vsel %vm3796, %v5716, 0
  %v5874 = vsel %vm3796, %v5718, 0
  %v5877 = vsel %vm3796, %v5720, 0
  %v5880 = vsel %vm3796, %v5722, 0
  %v5883 = vsel %vm3796, %v5724, 0
  %v5886 = vsel %vm3796, %v5726, 0
  %v5889 = vsel %vm3796, %v5728, 0
  %v5892 = vsel %vm3796, %v5730, 0
  %v5895 = vsel %vm3796, %v5732, 0
  %v5898 = vsel %vm3796, %v5734, 0
  %v5901 = vsel %vm3796, %v5736, 0
  %v5904 = vsel %vm3796, %v5738, 0
  %v5907 = vsel %vm3796, %v5740, 0
  %5909 = vmatprep.subr.mxu0 0.0
  %5910 = vmatpush1.msra.mxu0 %v3410
  %5911 = vmatprep.subr.mxu0 0.0
  %5912 = vmatpush1.msra.mxu0 %v3411
  %5913 = vmatprep.subr.mxu0 0.0
  %5914 = vmatpush1.msra.mxu0 %v3412
  %5915 = vmatprep.subr.mxu0 0.0
  %5916 = vmatpush1.msra.mxu0 %v3413
  %5917 = vmatprep.subr.mxu0 0.0
  %5918 = vmatpush1.msra.mxu0 %v3414
  %5919 = vmatprep.subr.mxu0 0.0
  %5920 = vmatpush1.msra.mxu0 %v3415
  %5921 = vmatprep.subr.mxu0 0.0
  %5922 = vmatpush1.msra.mxu0 %v3416
  %5923 = vmatprep.subr.mxu0 0.0
  %5924 = vmatpush1.msra.mxu0 %v3417
  %5925 = vmatprep.subr.mxu0 0.0
  %5926 = vmatpush1.msra.mxu0 %v3418
  %5927 = vmatprep.subr.mxu0 0.0
  %5928 = vmatpush1.msra.mxu0 %v3419
  %5929 = vmatprep.subr.mxu0 0.0
  %5930 = vmatpush1.msra.mxu0 %v3420
  %5931 = vmatprep.subr.mxu0 0.0
  %5932 = vmatpush1.msra.mxu0 %v3421
  %5933 = vmatprep.subr.mxu0 0.0
  %5934 = vmatpush1.msra.mxu0 %v3422
  %5935 = vmatprep.subr.mxu0 0.0
  %5936 = vmatpush1.msra.mxu0 %v3423
  %5937 = vmatprep.subr.mxu0 0.0
  %5938 = vmatpush1.msra.mxu0 %v3424
  %5939 = vmatprep.subr.mxu0 0.0
  %5940 = vmatpush1.msra.mxu0 %v3425
  %5941 = vmatprep.subr.mxu0 0.0
  %5942 = vmatpush1.msra.mxu0 %v3426
  %5943 = vmatprep.subr.mxu0 0.0
  %5944 = vmatpush1.msra.mxu0 %v3427
  %5945 = vmatprep.subr.mxu0 0.0
  %5946 = vmatpush1.msra.mxu0 %v3428
  %5947 = vmatprep.subr.mxu0 0.0
  %5948 = vmatpush1.msra.mxu0 %v3429
  %5949 = vmatprep.subr.mxu0 0.0
  %5950 = vmatpush1.msra.mxu0 %v3430
  %5951 = vmatprep.subr.mxu0 0.0
  %5952 = vmatpush1.msra.mxu0 %v3431
  %5953 = vmatprep.subr.mxu0 0.0
  %5954 = vmatpush1.msra.mxu0 %v3967
  %5955 = vmatprep.subr.mxu0 0.0
  %5956 = vmatpush1.msra.mxu0 0.0
  %5957 = vmatprep.subr.mxu0 0.0
  %5958 = vmatpush1.msra.mxu0 0.0
  %5959 = vmatprep.subr.mxu0 0.0
  %5960 = vmatpush1.msra.mxu0 0.0
  %5961 = vmatprep.subr.mxu0 0.0
  %5962 = vmatpush1.msra.mxu0 0.0
  %5963 = vmatprep.subr.mxu0 0.0
  %5964 = vmatpush1.msra.mxu0 0.0
  %5965 = vmatprep.subr.mxu0 0.0
  %5966 = vmatpush1.msra.mxu0 0.0
  %5967 = vmatprep.subr.mxu0 0.0
  %5968 = vmatpush1.msra.mxu0 0.0
  %5969 = vmatprep.subr.mxu0 0.0
  %5970 = vmatpush1.msra.mxu0 0.0
  %5971 = vmatprep.subr.mxu0 0.0
  %5972 = vmatpush1.msra.mxu0 0.0
  %5973 = vmatprep.mubr.f32.mxu0 %v5742
  %5974 = vmatmul.mubr.f32.gmra.mrb[0].mxu0 %v5629
  %v5975 = vpop.f32.mrb[0].mxu0
  %v5976 = vadd.f32 0.0, %v5975
  %v5977 = vpop.f32.mrb[0].mxu0
  %5978 = vmatprep.mubr.f32.mxu0 %v5745
  %5979 = vmatmul.mubr.f32.gmra.mrb[0].mxu0 %v5631
  %v5980 = vpop.f32.mrb[0].mxu0
  %v5981 = vadd.f32 0.0, %v5980
  %v5982 = vpop.f32.mrb[0].mxu0
  %5983 = vmatprep.mubr.f32.mxu0 %v5748
  %5984 = vmatmul.mubr.f32.gmra.mrb[0].mxu0 %v5633
  %v5985 = vpop.f32.mrb[0].mxu0
  %v5986 = vadd.f32 0.0, %v5985
  %v5987 = vpop.f32.mrb[0].mxu0
  %5988 = vmatprep.mubr.f32.mxu0 %v5751
  %5989 = vmatmul.mubr.f32.gmra.mrb[0].mxu0 %v5635
  %v5990 = vpop.f32.mrb[0].mxu0
  %v5991 = vadd.f32 0.0, %v5990
  %v5992 = vpop.f32.mrb[0].mxu0
  %5993 = vmatprep.mubr.f32.mxu0 %v5754
  %5994 = vmatmul.mubr.f32.gmra.mrb[0].mxu0 %v5637
  %v5995 = vpop.f32.mrb[0].mxu0
  %v5996 = vadd.f32 0.0, %v5995
  %v5997 = vpop.f32.mrb[0].mxu0
  %5998 = vmatprep.mubr.f32.mxu0 %v5757
  %5999 = vmatmul.mubr.f32.gmra.mrb[0].mxu0 %v5639
  %v6000 = vpop.f32.mrb[0].mxu0
  %v6001 = vadd.f32 0.0, %v6000
  %v6002 = vpop.f32.mrb[0].mxu0
  %6003 = vmatprep.mubr.f32.mxu0 %v5760
  %6004 = vmatmul.mubr.f32.gmra.mrb[0].mxu0 %v5641
  %v6005 = vpop.f32.mrb[0].mxu0
  %v6006 = vadd.f32 0.0, %v6005
  %v6007 = vpop.f32.mrb[0].mxu0
  %6008 = vmatprep.mubr.f32.mxu0 %v5763
  %6009 = vmatmul.mubr.f32.gmra.mrb[0].mxu0 %v5643
  %v6010 = vpop.f32.mrb[0].mxu0
  %v6011 = vadd.f32 0.0, %v6010
  %v6012 = vpop.f32.mrb[0].mxu0
  %6013 = vmatprep.mubr.f32.mxu0 %v5766
  %6014 = vmatmul.mubr.f32.gmra.mrb[0].mxu0 %v5645
  %v6015 = vpop.f32.mrb[0].mxu0
  %v6016 = vadd.f32 0.0, %v6015
  %v6017 = vpop.f32.mrb[0].mxu0
  %6018 = vmatprep.mubr.f32.mxu0 %v5769
  %6019 = vmatmul.mubr.f32.gmra.mrb[0].mxu0 %v5647
  %v6020 = vpop.f32.mrb[0].mxu0
  %v6021 = vadd.f32 0.0, %v6020
  %v6022 = vpop.f32.mrb[0].mxu0
  %6023 = vmatprep.mubr.f32.mxu0 %v5772
  %6024 = vmatmul.mubr.f32.gmra.mrb[0].mxu0 %v5649
  %v6025 = vpop.f32.mrb[0].mxu0
  %v6026 = vadd.f32 0.0, %v6025
  %v6027 = vpop.f32.mrb[0].mxu0
  %6028 = vmatprep.mubr.f32.mxu0 %v5775
  %6029 = vmatmul.mubr.f32.gmra.mrb[0].mxu0 %v5651
  %v6030 = vpop.f32.mrb[0].mxu0
  %v6031 = vadd.f32 0.0, %v6030
  %v6032 = vpop.f32.mrb[0].mxu0
  %6033 = vmatprep.mubr.f32.mxu0 %v5778
  %6034 = vmatmul.mubr.f32.gmra.mrb[0].mxu0 %v5653
  %v6035 = vpop.f32.mrb[0].mxu0
  %v6036 = vadd.f32 0.0, %v6035
  %v6037 = vpop.f32.mrb[0].mxu0
  %6038 = vmatprep.mubr.f32.mxu0 %v5781
  %6039 = vmatmul.mubr.f32.gmra.mrb[0].mxu0 %v5655
  %v6040 = vpop.f32.mrb[0].mxu0
  %v6041 = vadd.f32 0.0, %v6040
  %v6042 = vpop.f32.mrb[0].mxu0
  %6043 = vmatprep.mubr.f32.mxu0 %v5784
  %6044 = vmatmul.mubr.f32.gmra.mrb[0].mxu0 %v5657
  %v6045 = vpop.f32.mrb[0].mxu0
  %v6046 = vadd.f32 0.0, %v6045
  %v6047 = vpop.f32.mrb[0].mxu0
  %6048 = vmatprep.mubr.f32.mxu0 %v5787
  %6049 = vmatmul.mubr.f32.gmra.mrb[0].mxu0 %v5659
  %v6050 = vpop.f32.mrb[0].mxu0
  %v6051 = vadd.f32 0.0, %v6050
  %v6052 = vpop.f32.mrb[0].mxu0
  %6053 = vmatprep.mubr.f32.mxu0 %v5790
  %6054 = vmatmul.mubr.f32.gmra.mrb[0].mxu0 %v5661
  %v6055 = vpop.f32.mrb[0].mxu0
  %v6056 = vadd.f32 0.0, %v6055
  %v6057 = vpop.f32.mrb[0].mxu0
  %6058 = vmatprep.mubr.f32.mxu0 %v5793
  %6059 = vmatmul.mubr.f32.gmra.mrb[0].mxu0 %v5663
  %v6060 = vpop.f32.mrb[0].mxu0
  %v6061 = vadd.f32 0.0, %v6060
  %v6062 = vpop.f32.mrb[0].mxu0
  %6063 = vmatprep.mubr.f32.mxu0 %v5796
  %6064 = vmatmul.mubr.f32.gmra.mrb[0].mxu0 %v5665
  %v6065 = vpop.f32.mrb[0].mxu0
  %v6066 = vadd.f32 0.0, %v6065
  %v6067 = vpop.f32.mrb[0].mxu0
  %6068 = vmatprep.mubr.f32.mxu0 %v5799
  %6069 = vmatmul.mubr.f32.gmra.mrb[0].mxu0 %v5667
  %v6070 = vpop.f32.mrb[0].mxu0
  %v6071 = vadd.f32 0.0, %v6070
  %v6072 = vpop.f32.mrb[0].mxu0
  %6073 = vmatprep.mubr.f32.mxu0 %v5802
  %6074 = vmatmul.mubr.f32.gmra.mrb[0].mxu0 %v5669
  %v6075 = vpop.f32.mrb[0].mxu0
  %v6076 = vadd.f32 0.0, %v6075
  %v6077 = vpop.f32.mrb[0].mxu0
  %6078 = vmatprep.mubr.f32.mxu0 %v5805
  %6079 = vmatmul.mubr.f32.gmra.mrb[0].mxu0 %v5671
  %v6080 = vpop.f32.mrb[0].mxu0
  %v6081 = vadd.f32 0.0, %v6080
  %v6082 = vpop.f32.mrb[0].mxu0
  %6083 = vmatprep.mubr.f32.mxu0 %v5808
  %6084 = vmatmul.mubr.f32.gmra.mrb[0].mxu0 %v5673
  %v6085 = vpop.f32.mrb[0].mxu0
  %v6086 = vadd.f32 0.0, %v6085
  %v6087 = vpop.f32.mrb[0].mxu0
  %6088 = vmatprep.mubr.f32.mxu0 %v5811
  %6089 = vmatmul.mubr.f32.gmra.mrb[0].mxu0 %v5675
  %v6090 = vpop.f32.mrb[0].mxu0
  %v6091 = vadd.f32 0.0, %v6090
  %v6092 = vpop.f32.mrb[0].mxu0
  %6093 = vmatprep.mubr.f32.mxu0 %v5814
  %6094 = vmatmul.mubr.f32.gmra.mrb[0].mxu0 %v5677
  %v6095 = vpop.f32.mrb[0].mxu0
  %v6096 = vadd.f32 0.0, %v6095
  %v6097 = vpop.f32.mrb[0].mxu0
  %6098 = vmatprep.mubr.f32.mxu0 %v5817
  %6099 = vmatmul.mubr.f32.gmra.mrb[0].mxu0 %v5679
  %v6100 = vpop.f32.mrb[0].mxu0
  %v6101 = vadd.f32 0.0, %v6100
  %v6102 = vpop.f32.mrb[0].mxu0
  %6103 = vmatprep.mubr.f32.mxu0 %v5820
  %6104 = vmatmul.mubr.f32.gmra.mrb[0].mxu0 %v5681
  %v6105 = vpop.f32.mrb[0].mxu0
  %v6106 = vadd.f32 0.0, %v6105
  %v6107 = vpop.f32.mrb[0].mxu0
  %6108 = vmatprep.mubr.f32.mxu0 %v5823
  %6109 = vmatmul.mubr.f32.gmra.mrb[0].mxu0 %v5683
  %v6110 = vpop.f32.mrb[0].mxu0
  %v6111 = vadd.f32 0.0, %v6110
  %v6112 = vpop.f32.mrb[0].mxu0
  %6113 = vmatprep.mubr.f32.mxu0 %v5826
  %6114 = vmatmul.mubr.f32.gmra.mrb[0].mxu0 %v5685
  %v6115 = vpop.f32.mrb[0].mxu0
  %v6116 = vadd.f32 0.0, %v6115
  %v6117 = vpop.f32.mrb[0].mxu0
  %6118 = vmatprep.mubr.f32.mxu0 %v5829
  %6119 = vmatmul.mubr.f32.gmra.mrb[0].mxu0 %v5687
  %v6120 = vpop.f32.mrb[0].mxu0
  %v6121 = vadd.f32 0.0, %v6120
  %v6122 = vpop.f32.mrb[0].mxu0
  %6123 = vmatprep.mubr.f32.mxu0 %v5832
  %6124 = vmatmul.mubr.f32.gmra.mrb[0].mxu0 %v5689
  %v6125 = vpop.f32.mrb[0].mxu0
  %v6126 = vadd.f32 0.0, %v6125
  %v6127 = vpop.f32.mrb[0].mxu0
  %6128 = vmatprep.mubr.f32.mxu0 %v5835
  %6129 = vmatmul.mubr.f32.gmra.mrb[0].mxu0 %v5691
  %v6130 = vpop.f32.mrb[0].mxu0
  %v6131 = vadd.f32 0.0, %v6130
  %v6132 = vpop.f32.mrb[0].mxu0
  %6133 = vmatprep.mubr.f32.mxu0 %v5838
  %6134 = vmatmul.mubr.f32.gmra.mrb[0].mxu0 %v5693
  %v6135 = vpop.f32.mrb[0].mxu0
  %v6136 = vadd.f32 0.0, %v6135
  %v6137 = vpop.f32.mrb[0].mxu0
  %6138 = vmatprep.mubr.f32.mxu0 %v5841
  %6139 = vmatmul.mubr.f32.gmra.mrb[0].mxu0 %v5695
  %v6140 = vpop.f32.mrb[0].mxu0
  %v6141 = vadd.f32 0.0, %v6140
  %v6142 = vpop.f32.mrb[0].mxu0
  %6143 = vmatprep.mubr.f32.mxu0 %v5844
  %6144 = vmatmul.mubr.f32.gmra.mrb[0].mxu0 %v5697
  %v6145 = vpop.f32.mrb[0].mxu0
  %v6146 = vadd.f32 0.0, %v6145
  %v6147 = vpop.f32.mrb[0].mxu0
  %6148 = vmatprep.mubr.f32.mxu0 %v5847
  %6149 = vmatmul.mubr.f32.gmra.mrb[0].mxu0 %v5699
  %v6150 = vpop.f32.mrb[0].mxu0
  %v6151 = vadd.f32 0.0, %v6150
  %v6152 = vpop.f32.mrb[0].mxu0
  %6153 = vmatprep.mubr.f32.mxu0 %v5850
  %6154 = vmatmul.mubr.f32.gmra.mrb[0].mxu0 %v5701
  %v6155 = vpop.f32.mrb[0].mxu0
  %v6156 = vadd.f32 0.0, %v6155
  %v6157 = vpop.f32.mrb[0].mxu0
  %6158 = vmatprep.mubr.f32.mxu0 %v5853
  %6159 = vmatmul.mubr.f32.gmra.mrb[0].mxu0 %v5703
  %v6160 = vpop.f32.mrb[0].mxu0
  %v6161 = vadd.f32 0.0, %v6160
  %v6162 = vpop.f32.mrb[0].mxu0
  %6163 = vmatprep.mubr.f32.mxu0 %v5856
  %6164 = vmatmul.mubr.f32.gmra.mrb[0].mxu0 %v5705
  %v6165 = vpop.f32.mrb[0].mxu0
  %v6166 = vadd.f32 0.0, %v6165
  %v6167 = vpop.f32.mrb[0].mxu0
  %6168 = vmatprep.mubr.f32.mxu0 %v5859
  %6169 = vmatmul.mubr.f32.gmra.mrb[0].mxu0 %v5707
  %v6170 = vpop.f32.mrb[0].mxu0
  %v6171 = vadd.f32 0.0, %v6170
  %v6172 = vpop.f32.mrb[0].mxu0
  %6173 = vmatprep.mubr.f32.mxu0 %v5862
  %6174 = vmatmul.mubr.f32.gmra.mrb[0].mxu0 %v5709
  %v6175 = vpop.f32.mrb[0].mxu0
  %v6176 = vadd.f32 0.0, %v6175
  %v6177 = vpop.f32.mrb[0].mxu0
  %6178 = vmatprep.mubr.f32.mxu0 %v5865
  %6179 = vmatmul.mubr.f32.gmra.mrb[0].mxu0 %v5711
  %v6180 = vpop.f32.mrb[0].mxu0
  %v6181 = vadd.f32 0.0, %v6180
  %v6182 = vpop.f32.mrb[0].mxu0
  %6183 = vmatprep.mubr.f32.mxu0 %v5868
  %6184 = vmatmul.mubr.f32.gmra.mrb[0].mxu0 %v5713
  %v6185 = vpop.f32.mrb[0].mxu0
  %v6186 = vadd.f32 0.0, %v6185
  %v6187 = vpop.f32.mrb[0].mxu0
  %6188 = vmatprep.mubr.f32.mxu0 %v5871
  %6189 = vmatmul.mubr.f32.gmra.mrb[0].mxu0 %v5715
  %v6190 = vpop.f32.mrb[0].mxu0
  %v6191 = vadd.f32 0.0, %v6190
  %v6192 = vpop.f32.mrb[0].mxu0
  %6193 = vmatprep.mubr.f32.mxu0 %v5874
  %6194 = vmatmul.mubr.f32.gmra.mrb[0].mxu0 %v5717
  %v6195 = vpop.f32.mrb[0].mxu0
  %v6196 = vadd.f32 0.0, %v6195
  %v6197 = vpop.f32.mrb[0].mxu0
  %6198 = vmatprep.mubr.f32.mxu0 %v5877
  %6199 = vmatmul.mubr.f32.gmra.mrb[0].mxu0 %v5719
  %v6200 = vpop.f32.mrb[0].mxu0
  %v6201 = vadd.f32 0.0, %v6200
  %v6202 = vpop.f32.mrb[0].mxu0
  %6203 = vmatprep.mubr.f32.mxu0 %v5880
  %6204 = vmatmul.mubr.f32.gmra.mrb[0].mxu0 %v5721
  %v6205 = vpop.f32.mrb[0].mxu0
  %v6206 = vadd.f32 0.0, %v6205
  %v6207 = vpop.f32.mrb[0].mxu0
  %6208 = vmatprep.mubr.f32.mxu0 %v5883
  %6209 = vmatmul.mubr.f32.gmra.mrb[0].mxu0 %v5723
  %v6210 = vpop.f32.mrb[0].mxu0
  %v6211 = vadd.f32 0.0, %v6210
  %v6212 = vpop.f32.mrb[0].mxu0
  %6213 = vmatprep.mubr.f32.mxu0 %v5886
  %6214 = vmatmul.mubr.f32.gmra.mrb[0].mxu0 %v5725
  %v6215 = vpop.f32.mrb[0].mxu0
  %v6216 = vadd.f32 0.0, %v6215
  %v6217 = vpop.f32.mrb[0].mxu0
  %6218 = vmatprep.mubr.f32.mxu0 %v5889
  %6219 = vmatmul.mubr.f32.gmra.mrb[0].mxu0 %v5727
  %v6220 = vpop.f32.mrb[0].mxu0
  %v6221 = vadd.f32 0.0, %v6220
  %v6222 = vpop.f32.mrb[0].mxu0
  %6223 = vmatprep.mubr.f32.mxu0 %v5892
  %6224 = vmatmul.mubr.f32.gmra.mrb[0].mxu0 %v5729
  %v6225 = vpop.f32.mrb[0].mxu0
  %v6226 = vadd.f32 0.0, %v6225
  %v6227 = vpop.f32.mrb[0].mxu0
  %6228 = vmatprep.mubr.f32.mxu0 %v5895
  %6229 = vmatmul.mubr.f32.gmra.mrb[0].mxu0 %v5731
  %v6230 = vpop.f32.mrb[0].mxu0
  %v6231 = vadd.f32 0.0, %v6230
  %v6232 = vpop.f32.mrb[0].mxu0
  %6233 = vmatprep.mubr.f32.mxu0 %v5898
  %6234 = vmatmul.mubr.f32.gmra.mrb[0].mxu0 %v5733
  %v6235 = vpop.f32.mrb[0].mxu0
  %v6236 = vadd.f32 0.0, %v6235
  %v6237 = vpop.f32.mrb[0].mxu0
  %6238 = vmatprep.mubr.f32.mxu0 %v5901
  %6239 = vmatmul.mubr.f32.gmra.mrb[0].mxu0 %v5735
  %v6240 = vpop.f32.mrb[0].mxu0
  %v6241 = vadd.f32 0.0, %v6240
  %v6242 = vpop.f32.mrb[0].mxu0
  %6243 = vmatprep.mubr.f32.mxu0 %v5904
  %6244 = vmatmul.mubr.f32.gmra.mrb[0].mxu0 %v5737
  %v6245 = vpop.f32.mrb[0].mxu0
  %v6246 = vadd.f32 0.0, %v6245
  %v6247 = vpop.f32.mrb[0].mxu0
  %6248 = vmatprep.mubr.f32.mxu0 %v5907
  %6249 = vmatmul.mubr.f32.gmra.mrb[0].mxu0 %v5739
  %v6250 = vpop.f32.mrb[0].mxu0
  %v6251 = vadd.f32 0.0, %v6250
  %v6252 = vpop.f32.mrb[0].mxu0
  %6253 = vdwg.mxu0
  %v6255 = vsel %vm3796, %v5517, 0
  %v6258 = vsel %vm3796, %v5519, 0
  %v6261 = vsel %vm3796, %v5521, 0
  %v6264 = vsel %vm3796, %v5523, 0
  %v6267 = vsel %vm3796, %v5525, 0
  %v6270 = vsel %vm3796, %v5527, 0
  %v6273 = vsel %vm3796, %v5529, 0
  %v6276 = vsel %vm3796, %v5531, 0
  %v6279 = vsel %vm3796, %v5533, 0
  %v6282 = vsel %vm3796, %v5535, 0
  %v6285 = vsel %vm3796, %v5537, 0
  %v6288 = vsel %vm3796, %v5539, 0
  %v6291 = vsel %vm3796, %v5541, 0
  %v6294 = vsel %vm3796, %v5543, 0
  %v6297 = vsel %vm3796, %v5545, 0
  %v6300 = vsel %vm3796, %v5547, 0
  %v6303 = vsel %vm3796, %v5549, 0
  %v6306 = vsel %vm3796, %v5551, 0
  %v6309 = vsel %vm3796, %v5553, 0
  %v6312 = vsel %vm3796, %v5555, 0
  %v6315 = vsel %vm3796, %v5557, 0
  %v6318 = vsel %vm3796, %v5559, 0
  %v6321 = vsel %vm3796, %v5561, 0
  %v6324 = vsel %vm3796, %v5563, 0
  %v6327 = vsel %vm3796, %v5565, 0
  %v6330 = vsel %vm3796, %v5567, 0
  %v6333 = vsel %vm3796, %v5569, 0
  %v6336 = vsel %vm3796, %v5571, 0
  %v6339 = vsel %vm3796, %v5573, 0
  %v6342 = vsel %vm3796, %v5575, 0
  %v6345 = vsel %vm3796, %v5577, 0
  %v6348 = vsel %vm3796, %v5579, 0
  %v6351 = vsel %vm3796, %v5581, 0
  %v6354 = vsel %vm3796, %v5583, 0
  %v6357 = vsel %vm3796, %v5585, 0
  %v6360 = vsel %vm3796, %v5587, 0
  %v6363 = vsel %vm3796, %v5589, 0
  %v6366 = vsel %vm3796, %v5591, 0
  %v6369 = vsel %vm3796, %v5593, 0
  %v6372 = vsel %vm3796, %v5595, 0
  %v6375 = vsel %vm3796, %v5597, 0
  %v6378 = vsel %vm3796, %v5599, 0
  %v6381 = vsel %vm3796, %v5601, 0
  %v6384 = vsel %vm3796, %v5603, 0
  %v6387 = vsel %vm3796, %v5605, 0
  %v6390 = vsel %vm3796, %v5607, 0
  %v6393 = vsel %vm3796, %v5609, 0
  %v6396 = vsel %vm3796, %v5611, 0
  %v6399 = vsel %vm3796, %v5613, 0
  %v6402 = vsel %vm3796, %v5615, 0
  %v6405 = vsel %vm3796, %v5617, 0
  %v6408 = vsel %vm3796, %v5619, 0
  %v6411 = vsel %vm3796, %v5621, 0
  %v6414 = vsel %vm3796, %v5623, 0
  %v6417 = vsel %vm3796, %v5625, 0
  %v6420 = vsel %vm3796, %v5627, 0
  %6422 = vmatprep.subr.mxu0 0.0
  %6423 = vmatpush1.msra.mxu0 %v3065
  %6424 = vmatprep.subr.mxu0 0.0
  %6425 = vmatpush1.msra.mxu0 %v3066
  %6426 = vmatprep.subr.mxu0 0.0
  %6427 = vmatpush1.msra.mxu0 %v3067
  %6428 = vmatprep.subr.mxu0 0.0
  %6429 = vmatpush1.msra.mxu0 %v3068
  %6430 = vmatprep.subr.mxu0 0.0
  %6431 = vmatpush1.msra.mxu0 %v3069
  %6432 = vmatprep.subr.mxu0 0.0
  %6433 = vmatpush1.msra.mxu0 %v3070
  %6434 = vmatprep.subr.mxu0 0.0
  %6435 = vmatpush1.msra.mxu0 %v3071
  %6436 = vmatprep.subr.mxu0 0.0
  %6437 = vmatpush1.msra.mxu0 %v3072
  %6438 = vmatprep.subr.mxu0 0.0
  %6439 = vmatpush1.msra.mxu0 %v3073
  %6440 = vmatprep.subr.mxu0 0.0
  %6441 = vmatpush1.msra.mxu0 %v3074
  %6442 = vmatprep.subr.mxu0 0.0
  %6443 = vmatpush1.msra.mxu0 %v3075
  %6444 = vmatprep.subr.mxu0 0.0
  %6445 = vmatpush1.msra.mxu0 %v3076
  %6446 = vmatprep.subr.mxu0 0.0
  %6447 = vmatpush1.msra.mxu0 %v3077
  %6448 = vmatprep.subr.mxu0 0.0
  %6449 = vmatpush1.msra.mxu0 %v3078
  %6450 = vmatprep.subr.mxu0 0.0
  %6451 = vmatpush1.msra.mxu0 %v3079
  %6452 = vmatprep.subr.mxu0 0.0
  %6453 = vmatpush1.msra.mxu0 %v3080
  %6454 = vmatprep.subr.mxu0 0.0
  %6455 = vmatpush1.msra.mxu0 %v3081
  %6456 = vmatprep.subr.mxu0 0.0
  %6457 = vmatpush1.msra.mxu0 %v3082
  %6458 = vmatprep.subr.mxu0 0.0
  %6459 = vmatpush1.msra.mxu0 %v3083
  %6460 = vmatprep.subr.mxu0 0.0
  %6461 = vmatpush1.msra.mxu0 %v3084
  %6462 = vmatprep.subr.mxu0 0.0
  %6463 = vmatpush1.msra.mxu0 %v3085
  %6464 = vmatprep.subr.mxu0 0.0
  %6465 = vmatpush1.msra.mxu0 %v3086
  %6466 = vmatprep.subr.mxu0 0.0
  %6467 = vmatpush1.msra.mxu0 %v4483
  %6468 = vmatprep.subr.mxu0 0.0
  %6469 = vmatpush1.msra.mxu0 0.0
  %6470 = vmatprep.subr.mxu0 0.0
  %6471 = vmatpush1.msra.mxu0 0.0
  %6472 = vmatprep.subr.mxu0 0.0
  %6473 = vmatpush1.msra.mxu0 0.0
  %6474 = vmatprep.subr.mxu0 0.0
  %6475 = vmatpush1.msra.mxu0 0.0
  %6476 = vmatprep.subr.mxu0 0.0
  %6477 = vmatpush1.msra.mxu0 0.0
  %6478 = vmatprep.subr.mxu0 0.0
  %6479 = vmatpush1.msra.mxu0 0.0
  %6480 = vmatprep.subr.mxu0 0.0
  %6481 = vmatpush1.msra.mxu0 0.0
  %6482 = vmatprep.subr.mxu0 0.0
  %6483 = vmatpush1.msra.mxu0 0.0
  %6484 = vmatprep.subr.mxu0 0.0
  %6485 = vmatpush1.msra.mxu0 0.0
  %6486 = vmatprep.mubr.f32.mxu0 %v6255
  %6487 = vmatmul.mubr.f32.gmra.mrb[0].mxu0 %v5516
  %v6488 = vpop.f32.mrb[0].mxu0
  %v6489 = vadd.f32 %v5976, %v6488
  %v6490 = vpop.f32.mrb[0].mxu0
  %6491 = vmatprep.mubr.f32.mxu0 %v6258
  %6492 = vmatmul.mubr.f32.gmra.mrb[0].mxu0 %v5518
  %v6493 = vpop.f32.mrb[0].mxu0
  %v6494 = vadd.f32 %v5981, %v6493
  %v6495 = vpop.f32.mrb[0].mxu0
  %6496 = vmatprep.mubr.f32.mxu0 %v6261
  %6497 = vmatmul.mubr.f32.gmra.mrb[0].mxu0 %v5520
  %v6498 = vpop.f32.mrb[0].mxu0
  %v6499 = vadd.f32 %v5986, %v6498
  %v6500 = vpop.f32.mrb[0].mxu0
  %6501 = vmatprep.mubr.f32.mxu0 %v6264
  %6502 = vmatmul.mubr.f32.gmra.mrb[0].mxu0 %v5522
  %v6503 = vpop.f32.mrb[0].mxu0
  %v6504 = vadd.f32 %v5991, %v6503
  %v6505 = vpop.f32.mrb[0].mxu0
  %6506 = vmatprep.mubr.f32.mxu0 %v6267
  %6507 = vmatmul.mubr.f32.gmra.mrb[0].mxu0 %v5524
  %v6508 = vpop.f32.mrb[0].mxu0
  %v6509 = vadd.f32 %v5996, %v6508
  %v6510 = vpop.f32.mrb[0].mxu0
  %6511 = vmatprep.mubr.f32.mxu0 %v6270
  %6512 = vmatmul.mubr.f32.gmra.mrb[0].mxu0 %v5526
  %v6513 = vpop.f32.mrb[0].mxu0
  %v6514 = vadd.f32 %v6001, %v6513
  %v6515 = vpop.f32.mrb[0].mxu0
  %6516 = vmatprep.mubr.f32.mxu0 %v6273
  %6517 = vmatmul.mubr.f32.gmra.mrb[0].mxu0 %v5528
  %v6518 = vpop.f32.mrb[0].mxu0
  %v6519 = vadd.f32 %v6006, %v6518
  %v6520 = vpop.f32.mrb[0].mxu0
  %6521 = vmatprep.mubr.f32.mxu0 %v6276
  %6522 = vmatmul.mubr.f32.gmra.mrb[0].mxu0 %v5530
  %v6523 = vpop.f32.mrb[0].mxu0
  %v6524 = vadd.f32 %v6011, %v6523
  %v6525 = vpop.f32.mrb[0].mxu0
  %6526 = vmatprep.mubr.f32.mxu0 %v6279
  %6527 = vmatmul.mubr.f32.gmra.mrb[0].mxu0 %v5532
  %v6528 = vpop.f32.mrb[0].mxu0
  %v6529 = vadd.f32 %v6016, %v6528
  %v6530 = vpop.f32.mrb[0].mxu0
  %6531 = vmatprep.mubr.f32.mxu0 %v6282
  %6532 = vmatmul.mubr.f32.gmra.mrb[0].mxu0 %v5534
  %v6533 = vpop.f32.mrb[0].mxu0
  %v6534 = vadd.f32 %v6021, %v6533
  %v6535 = vpop.f32.mrb[0].mxu0
  %6536 = vmatprep.mubr.f32.mxu0 %v6285
  %6537 = vmatmul.mubr.f32.gmra.mrb[0].mxu0 %v5536
  %v6538 = vpop.f32.mrb[0].mxu0
  %v6539 = vadd.f32 %v6026, %v6538
  %v6540 = vpop.f32.mrb[0].mxu0
  %6541 = vmatprep.mubr.f32.mxu0 %v6288
  %6542 = vmatmul.mubr.f32.gmra.mrb[0].mxu0 %v5538
  %v6543 = vpop.f32.mrb[0].mxu0
  %v6544 = vadd.f32 %v6031, %v6543
  %v6545 = vpop.f32.mrb[0].mxu0
  %6546 = vmatprep.mubr.f32.mxu0 %v6291
  %6547 = vmatmul.mubr.f32.gmra.mrb[0].mxu0 %v5540
  %v6548 = vpop.f32.mrb[0].mxu0
  %v6549 = vadd.f32 %v6036, %v6548
  %v6550 = vpop.f32.mrb[0].mxu0
  %6551 = vmatprep.mubr.f32.mxu0 %v6294
  %6552 = vmatmul.mubr.f32.gmra.mrb[0].mxu0 %v5542
  %v6553 = vpop.f32.mrb[0].mxu0
  %v6554 = vadd.f32 %v6041, %v6553
  %v6555 = vpop.f32.mrb[0].mxu0
  %6556 = vmatprep.mubr.f32.mxu0 %v6297
  %6557 = vmatmul.mubr.f32.gmra.mrb[0].mxu0 %v5544
  %v6558 = vpop.f32.mrb[0].mxu0
  %v6559 = vadd.f32 %v6046, %v6558
  %v6560 = vpop.f32.mrb[0].mxu0
  %6561 = vmatprep.mubr.f32.mxu0 %v6300
  %6562 = vmatmul.mubr.f32.gmra.mrb[0].mxu0 %v5546
  %v6563 = vpop.f32.mrb[0].mxu0
  %v6564 = vadd.f32 %v6051, %v6563
  %v6565 = vpop.f32.mrb[0].mxu0
  %6566 = vmatprep.mubr.f32.mxu0 %v6303
  %6567 = vmatmul.mubr.f32.gmra.mrb[0].mxu0 %v5548
  %v6568 = vpop.f32.mrb[0].mxu0
  %v6569 = vadd.f32 %v6056, %v6568
  %v6570 = vpop.f32.mrb[0].mxu0
  %6571 = vmatprep.mubr.f32.mxu0 %v6306
  %6572 = vmatmul.mubr.f32.gmra.mrb[0].mxu0 %v5550
  %v6573 = vpop.f32.mrb[0].mxu0
  %v6574 = vadd.f32 %v6061, %v6573
  %v6575 = vpop.f32.mrb[0].mxu0
  %6576 = vmatprep.mubr.f32.mxu0 %v6309
  %6577 = vmatmul.mubr.f32.gmra.mrb[0].mxu0 %v5552
  %v6578 = vpop.f32.mrb[0].mxu0
  %v6579 = vadd.f32 %v6066, %v6578
  %v6580 = vpop.f32.mrb[0].mxu0
  %6581 = vmatprep.mubr.f32.mxu0 %v6312
  %6582 = vmatmul.mubr.f32.gmra.mrb[0].mxu0 %v5554
  %v6583 = vpop.f32.mrb[0].mxu0
  %v6584 = vadd.f32 %v6071, %v6583
  %v6585 = vpop.f32.mrb[0].mxu0
  %6586 = vmatprep.mubr.f32.mxu0 %v6315
  %6587 = vmatmul.mubr.f32.gmra.mrb[0].mxu0 %v5556
  %v6588 = vpop.f32.mrb[0].mxu0
  %v6589 = vadd.f32 %v6076, %v6588
  %v6590 = vpop.f32.mrb[0].mxu0
  %6591 = vmatprep.mubr.f32.mxu0 %v6318
  %6592 = vmatmul.mubr.f32.gmra.mrb[0].mxu0 %v5558
  %v6593 = vpop.f32.mrb[0].mxu0
  %v6594 = vadd.f32 %v6081, %v6593
  %v6595 = vpop.f32.mrb[0].mxu0
  %6596 = vmatprep.mubr.f32.mxu0 %v6321
  %6597 = vmatmul.mubr.f32.gmra.mrb[0].mxu0 %v5560
  %v6598 = vpop.f32.mrb[0].mxu0
  %v6599 = vadd.f32 %v6086, %v6598
  %v6600 = vpop.f32.mrb[0].mxu0
  %6601 = vmatprep.mubr.f32.mxu0 %v6324
  %6602 = vmatmul.mubr.f32.gmra.mrb[0].mxu0 %v5562
  %v6603 = vpop.f32.mrb[0].mxu0
  %v6604 = vadd.f32 %v6091, %v6603
  %v6605 = vpop.f32.mrb[0].mxu0
  %6606 = vmatprep.mubr.f32.mxu0 %v6327
  %6607 = vmatmul.mubr.f32.gmra.mrb[0].mxu0 %v5564
  %v6608 = vpop.f32.mrb[0].mxu0
  %v6609 = vadd.f32 %v6096, %v6608
  %v6610 = vpop.f32.mrb[0].mxu0
  %6611 = vmatprep.mubr.f32.mxu0 %v6330
  %6612 = vmatmul.mubr.f32.gmra.mrb[0].mxu0 %v5566
  %v6613 = vpop.f32.mrb[0].mxu0
  %v6614 = vadd.f32 %v6101, %v6613
  %v6615 = vpop.f32.mrb[0].mxu0
  %6616 = vmatprep.mubr.f32.mxu0 %v6333
  %6617 = vmatmul.mubr.f32.gmra.mrb[0].mxu0 %v5568
  %v6618 = vpop.f32.mrb[0].mxu0
  %v6619 = vadd.f32 %v6106, %v6618
  %v6620 = vpop.f32.mrb[0].mxu0
  %6621 = vmatprep.mubr.f32.mxu0 %v6336
  %6622 = vmatmul.mubr.f32.gmra.mrb[0].mxu0 %v5570
  %v6623 = vpop.f32.mrb[0].mxu0
  %v6624 = vadd.f32 %v6111, %v6623
  %v6625 = vpop.f32.mrb[0].mxu0
  %6626 = vmatprep.mubr.f32.mxu0 %v6339
  %6627 = vmatmul.mubr.f32.gmra.mrb[0].mxu0 %v5572
  %v6628 = vpop.f32.mrb[0].mxu0
  %v6629 = vadd.f32 %v6116, %v6628
  %v6630 = vpop.f32.mrb[0].mxu0
  %6631 = vmatprep.mubr.f32.mxu0 %v6342
  %6632 = vmatmul.mubr.f32.gmra.mrb[0].mxu0 %v5574
  %v6633 = vpop.f32.mrb[0].mxu0
  %v6634 = vadd.f32 %v6121, %v6633
  %v6635 = vpop.f32.mrb[0].mxu0
  %6636 = vmatprep.mubr.f32.mxu0 %v6345
  %6637 = vmatmul.mubr.f32.gmra.mrb[0].mxu0 %v5576
  %v6638 = vpop.f32.mrb[0].mxu0
  %v6639 = vadd.f32 %v6126, %v6638
  %v6640 = vpop.f32.mrb[0].mxu0
  %6641 = vmatprep.mubr.f32.mxu0 %v6348
  %6642 = vmatmul.mubr.f32.gmra.mrb[0].mxu0 %v5578
  %v6643 = vpop.f32.mrb[0].mxu0
  %v6644 = vadd.f32 %v6131, %v6643
  %v6645 = vpop.f32.mrb[0].mxu0
  %6646 = vmatprep.mubr.f32.mxu0 %v6351
  %6647 = vmatmul.mubr.f32.gmra.mrb[0].mxu0 %v5580
  %v6648 = vpop.f32.mrb[0].mxu0
  %v6649 = vadd.f32 %v6136, %v6648
  %v6650 = vpop.f32.mrb[0].mxu0
  %6651 = vmatprep.mubr.f32.mxu0 %v6354
  %6652 = vmatmul.mubr.f32.gmra.mrb[0].mxu0 %v5582
  %v6653 = vpop.f32.mrb[0].mxu0
  %v6654 = vadd.f32 %v6141, %v6653
  %v6655 = vpop.f32.mrb[0].mxu0
  %6656 = vmatprep.mubr.f32.mxu0 %v6357
  %6657 = vmatmul.mubr.f32.gmra.mrb[0].mxu0 %v5584
  %v6658 = vpop.f32.mrb[0].mxu0
  %v6659 = vadd.f32 %v6146, %v6658
  %v6660 = vpop.f32.mrb[0].mxu0
  %6661 = vmatprep.mubr.f32.mxu0 %v6360
  %6662 = vmatmul.mubr.f32.gmra.mrb[0].mxu0 %v5586
  %v6663 = vpop.f32.mrb[0].mxu0
  %v6664 = vadd.f32 %v6151, %v6663
  %v6665 = vpop.f32.mrb[0].mxu0
  %6666 = vmatprep.mubr.f32.mxu0 %v6363
  %6667 = vmatmul.mubr.f32.gmra.mrb[0].mxu0 %v5588
  %v6668 = vpop.f32.mrb[0].mxu0
  %v6669 = vadd.f32 %v6156, %v6668
  %v6670 = vpop.f32.mrb[0].mxu0
  %6671 = vmatprep.mubr.f32.mxu0 %v6366
  %6672 = vmatmul.mubr.f32.gmra.mrb[0].mxu0 %v5590
  %v6673 = vpop.f32.mrb[0].mxu0
  %v6674 = vadd.f32 %v6161, %v6673
  %v6675 = vpop.f32.mrb[0].mxu0
  %6676 = vmatprep.mubr.f32.mxu0 %v6369
  %6677 = vmatmul.mubr.f32.gmra.mrb[0].mxu0 %v5592
  %v6678 = vpop.f32.mrb[0].mxu0
  %v6679 = vadd.f32 %v6166, %v6678
  %v6680 = vpop.f32.mrb[0].mxu0
  %6681 = vmatprep.mubr.f32.mxu0 %v6372
  %6682 = vmatmul.mubr.f32.gmra.mrb[0].mxu0 %v5594
  %v6683 = vpop.f32.mrb[0].mxu0
  %v6684 = vadd.f32 %v6171, %v6683
  %v6685 = vpop.f32.mrb[0].mxu0
  %6686 = vmatprep.mubr.f32.mxu0 %v6375
  %6687 = vmatmul.mubr.f32.gmra.mrb[0].mxu0 %v5596
  %v6688 = vpop.f32.mrb[0].mxu0
  %v6689 = vadd.f32 %v6176, %v6688
  %v6690 = vpop.f32.mrb[0].mxu0
  %6691 = vmatprep.mubr.f32.mxu0 %v6378
  %6692 = vmatmul.mubr.f32.gmra.mrb[0].mxu0 %v5598
  %v6693 = vpop.f32.mrb[0].mxu0
  %v6694 = vadd.f32 %v6181, %v6693
  %v6695 = vpop.f32.mrb[0].mxu0
  %6696 = vmatprep.mubr.f32.mxu0 %v6381
  %6697 = vmatmul.mubr.f32.gmra.mrb[0].mxu0 %v5600
  %v6698 = vpop.f32.mrb[0].mxu0
  %v6699 = vadd.f32 %v6186, %v6698
  %v6700 = vpop.f32.mrb[0].mxu0
  %6701 = vmatprep.mubr.f32.mxu0 %v6384
  %6702 = vmatmul.mubr.f32.gmra.mrb[0].mxu0 %v5602
  %v6703 = vpop.f32.mrb[0].mxu0
  %v6704 = vadd.f32 %v6191, %v6703
  %v6705 = vpop.f32.mrb[0].mxu0
  %6706 = vmatprep.mubr.f32.mxu0 %v6387
  %6707 = vmatmul.mubr.f32.gmra.mrb[0].mxu0 %v5604
  %v6708 = vpop.f32.mrb[0].mxu0
  %v6709 = vadd.f32 %v6196, %v6708
  %v6710 = vpop.f32.mrb[0].mxu0
  %6711 = vmatprep.mubr.f32.mxu0 %v6390
  %6712 = vmatmul.mubr.f32.gmra.mrb[0].mxu0 %v5606
  %v6713 = vpop.f32.mrb[0].mxu0
  %v6714 = vadd.f32 %v6201, %v6713
  %v6715 = vpop.f32.mrb[0].mxu0
  %6716 = vmatprep.mubr.f32.mxu0 %v6393
  %6717 = vmatmul.mubr.f32.gmra.mrb[0].mxu0 %v5608
  %v6718 = vpop.f32.mrb[0].mxu0
  %v6719 = vadd.f32 %v6206, %v6718
  %v6720 = vpop.f32.mrb[0].mxu0
  %6721 = vmatprep.mubr.f32.mxu0 %v6396
  %6722 = vmatmul.mubr.f32.gmra.mrb[0].mxu0 %v5610
  %v6723 = vpop.f32.mrb[0].mxu0
  %v6724 = vadd.f32 %v6211, %v6723
  %v6725 = vpop.f32.mrb[0].mxu0
  %6726 = vmatprep.mubr.f32.mxu0 %v6399
  %6727 = vmatmul.mubr.f32.gmra.mrb[0].mxu0 %v5612
  %v6728 = vpop.f32.mrb[0].mxu0
  %v6729 = vadd.f32 %v6216, %v6728
  %v6730 = vpop.f32.mrb[0].mxu0
  %6731 = vmatprep.mubr.f32.mxu0 %v6402
  %6732 = vmatmul.mubr.f32.gmra.mrb[0].mxu0 %v5614
  %v6733 = vpop.f32.mrb[0].mxu0
  %v6734 = vadd.f32 %v6221, %v6733
  %v6735 = vpop.f32.mrb[0].mxu0
  %6736 = vmatprep.mubr.f32.mxu0 %v6405
  %6737 = vmatmul.mubr.f32.gmra.mrb[0].mxu0 %v5616
  %v6738 = vpop.f32.mrb[0].mxu0
  %v6739 = vadd.f32 %v6226, %v6738
  %v6740 = vpop.f32.mrb[0].mxu0
  %6741 = vmatprep.mubr.f32.mxu0 %v6408
  %6742 = vmatmul.mubr.f32.gmra.mrb[0].mxu0 %v5618
  %v6743 = vpop.f32.mrb[0].mxu0
  %v6744 = vadd.f32 %v6231, %v6743
  %v6745 = vpop.f32.mrb[0].mxu0
  %6746 = vmatprep.mubr.f32.mxu0 %v6411
  %6747 = vmatmul.mubr.f32.gmra.mrb[0].mxu0 %v5620
  %v6748 = vpop.f32.mrb[0].mxu0
  %v6749 = vadd.f32 %v6236, %v6748
  %v6750 = vpop.f32.mrb[0].mxu0
  %6751 = vmatprep.mubr.f32.mxu0 %v6414
  %6752 = vmatmul.mubr.f32.gmra.mrb[0].mxu0 %v5622
  %v6753 = vpop.f32.mrb[0].mxu0
  %v6754 = vadd.f32 %v6241, %v6753
  %v6755 = vpop.f32.mrb[0].mxu0
  %6756 = vmatprep.mubr.f32.mxu0 %v6417
  %6757 = vmatmul.mubr.f32.gmra.mrb[0].mxu0 %v5624
  %v6758 = vpop.f32.mrb[0].mxu0
  %v6759 = vadd.f32 %v6246, %v6758
  %v6760 = vpop.f32.mrb[0].mxu0
  %6761 = vmatprep.mubr.f32.mxu0 %v6420
  %6762 = vmatmul.mubr.f32.gmra.mrb[0].mxu0 %v5626
  %v6763 = vpop.f32.mrb[0].mxu0
  %v6764 = vadd.f32 %v6251, %v6763
  %v6765 = vpop.f32.mrb[0].mxu0
  %6766 = vdwg.mxu0
  %s6767 = scalar_lea.vmem %s4, 4480
  %v6768 = vld [vmem:[%s6767] sm:$0xff]
  %v6769 = vld [vmem:[%s6767 + $0x8] sm:$0xff]
  %v6770 = vld [vmem:[%s6767 + $0x10] sm:$0xff]
  %v6771 = vld [vmem:[%s6767 + $0x18] sm:$0xff]
  %v6772 = vld [vmem:[%s6767 + $0x20] sm:$0xff]
  %v6773 = vld [vmem:[%s6767 + $0x28] sm:$0xff]
  %v6774 = vld [vmem:[%s6767 + $0x30] sm:$0xff]
  %v6775 = vld [vmem:[%s6767 + $0x38] sm:$0xff]
  %v6776 = vld [vmem:[%s6767 + $0x40] sm:$0xff]
  %v6777 = vld [vmem:[%s6767 + $0x48] sm:$0xff]
  %v6778 = vld [vmem:[%s6767 + $0x50] sm:$0xff]
  %v6779 = vld [vmem:[%s6767 + $0x58] sm:$0xff]
  %v6780 = vld [vmem:[%s6767 + $0x60] sm:$0xff]
  %v6781 = vld [vmem:[%s6767 + $0x68] sm:$0xff]
  %v6782 = vld [vmem:[%s6767 + $0x70] sm:$0xff]
  %v6783 = vld [vmem:[%s6767 + $0x78] sm:$0xff]
  %v6784 = vld [vmem:[%s6767 + $0x80] sm:$0xff]
  %v6785 = vld [vmem:[%s6767 + $0x88] sm:$0xff]
  %v6786 = vld [vmem:[%s6767 + $0x90] sm:$0xff]
  %v6787 = vld [vmem:[%s6767 + $0x98] sm:$0xff]
  %v6788 = vld [vmem:[%s6767 + $0xa0] sm:$0xff]
  %v6789 = vld [vmem:[%s6767 + $0xa8] sm:$0xff]
  %v6790 = vld [vmem:[%s6767 + $0xb0] sm:$0xff]
  %v6791 = vld [vmem:[%s6767 + $0xb8] sm:$0xff]
  %v6792 = vld [vmem:[%s6767 + $0xc0] sm:$0xff]
  %v6793 = vld [vmem:[%s6767 + $0xc8] sm:$0xff]
  %v6794 = vld [vmem:[%s6767 + $0xd0] sm:$0xff]
  %v6795 = vld [vmem:[%s6767 + $0xd8] sm:$0xff]
  %v6796 = vld [vmem:[%s6767 + $0xe0] sm:$0xff]
  %v6797 = vld [vmem:[%s6767 + $0xe8] sm:$0xff]
  %v6798 = vld [vmem:[%s6767 + $0xf0] sm:$0xff]
  %v6799 = vld [vmem:[%s6767 + $0xf8] sm:$0xff]
  %v6800 = vld [vmem:[%s6767 + $0x100] sm:$0xff]
  %v6801 = vld [vmem:[%s6767 + $0x108] sm:$0xff]
  %v6802 = vld [vmem:[%s6767 + $0x110] sm:$0xff]
  %v6803 = vld [vmem:[%s6767 + $0x118] sm:$0xff]
  %v6804 = vld [vmem:[%s6767 + $0x120] sm:$0xff]
  %v6805 = vld [vmem:[%s6767 + $0x128] sm:$0xff]
  %v6806 = vld [vmem:[%s6767 + $0x130] sm:$0xff]
  %v6807 = vld [vmem:[%s6767 + $0x138] sm:$0xff]
  %v6808 = vld [vmem:[%s6767 + $0x140] sm:$0xff]
  %v6809 = vld [vmem:[%s6767 + $0x148] sm:$0xff]
  %v6810 = vld [vmem:[%s6767 + $0x150] sm:$0xff]
  %v6811 = vld [vmem:[%s6767 + $0x158] sm:$0xff]
  %v6812 = vld [vmem:[%s6767 + $0x160] sm:$0xff]
  %v6813 = vld [vmem:[%s6767 + $0x168] sm:$0xff]
  %v6814 = vld [vmem:[%s6767 + $0x170] sm:$0xff]
  %v6815 = vld [vmem:[%s6767 + $0x178] sm:$0xff]
  %v6816 = vld [vmem:[%s6767 + $0x180] sm:$0xff]
  %v6817 = vld [vmem:[%s6767 + $0x188] sm:$0xff]
  %v6818 = vld [vmem:[%s6767 + $0x190] sm:$0xff]
  %v6819 = vld [vmem:[%s6767 + $0x198] sm:$0xff]
  %v6820 = vld [vmem:[%s6767 + $0x1a0] sm:$0xff]
  %v6821 = vld [vmem:[%s6767 + $0x1a8] sm:$0xff]
  %v6822 = vld [vmem:[%s6767 + $0x1b0] sm:$0xff]
  %v6823 = vld [vmem:[%s6767 + $0x1b8] sm:$0xff]
  %v6824 = vld [vmem:[%s6767 + $0x1c0] sm:$0xff]
  %v6825 = vld [vmem:[%s6767 + $0x1c8] sm:$0xff]
  %v6826 = vld [vmem:[%s6767 + $0x1d0] sm:$0xff]
  %v6827 = vld [vmem:[%s6767 + $0x1d8] sm:$0xff]
  %v6828 = vld [vmem:[%s6767 + $0x1e0] sm:$0xff]
  %v6829 = vld [vmem:[%s6767 + $0x1e8] sm:$0xff]
  %v6830 = vld [vmem:[%s6767 + $0x1f0] sm:$0xff]
  %v6831 = vld [vmem:[%s6767 + $0x1f8] sm:$0xff]
  %v6832 = vld [vmem:[%s6767 + $0x200] sm:$0xff]
  %v6833 = vld [vmem:[%s6767 + $0x208] sm:$0xff]
  %v6834 = vld [vmem:[%s6767 + $0x210] sm:$0xff]
  %v6835 = vld [vmem:[%s6767 + $0x218] sm:$0xff]
  %v6836 = vld [vmem:[%s6767 + $0x220] sm:$0xff]
  %v6837 = vld [vmem:[%s6767 + $0x228] sm:$0xff]
  %v6838 = vld [vmem:[%s6767 + $0x230] sm:$0xff]
  %v6839 = vld [vmem:[%s6767 + $0x238] sm:$0xff]
  %v6840 = vld [vmem:[%s6767 + $0x240] sm:$0xff]
  %v6841 = vld [vmem:[%s6767 + $0x248] sm:$0xff]
  %v6842 = vld [vmem:[%s6767 + $0x250] sm:$0xff]
  %v6843 = vld [vmem:[%s6767 + $0x258] sm:$0xff]
  %v6844 = vld [vmem:[%s6767 + $0x260] sm:$0xff]
  %v6845 = vld [vmem:[%s6767 + $0x268] sm:$0xff]
  %v6846 = vld [vmem:[%s6767 + $0x270] sm:$0xff]
  %v6847 = vld [vmem:[%s6767 + $0x278] sm:$0xff]
  %v6848 = vld [vmem:[%s6767 + $0x280] sm:$0xff]
  %v6849 = vld [vmem:[%s6767 + $0x288] sm:$0xff]
  %v6850 = vld [vmem:[%s6767 + $0x290] sm:$0xff]
  %v6851 = vld [vmem:[%s6767 + $0x298] sm:$0xff]
  %v6852 = vld [vmem:[%s6767 + $0x2a0] sm:$0xff]
  %v6853 = vld [vmem:[%s6767 + $0x2a8] sm:$0xff]
  %v6854 = vld [vmem:[%s6767 + $0x2b0] sm:$0xff]
  %v6855 = vld [vmem:[%s6767 + $0x2b8] sm:$0xff]
  %v6856 = vld [vmem:[%s6767 + $0x2c0] sm:$0xff]
  %v6857 = vld [vmem:[%s6767 + $0x2c8] sm:$0xff]
  %v6858 = vld [vmem:[%s6767 + $0x2d0] sm:$0xff]
  %v6859 = vld [vmem:[%s6767 + $0x2d8] sm:$0xff]
  %v6860 = vld [vmem:[%s6767 + $0x2e0] sm:$0xff]
  %v6861 = vld [vmem:[%s6767 + $0x2e8] sm:$0xff]
  %v6862 = vld [vmem:[%s6767 + $0x2f0] sm:$0xff]
  %v6863 = vld [vmem:[%s6767 + $0x2f8] sm:$0xff]
  %v6864 = vld [vmem:[%s6767 + $0x300] sm:$0xff]
  %v6865 = vld [vmem:[%s6767 + $0x308] sm:$0xff]
  %v6866 = vld [vmem:[%s6767 + $0x310] sm:$0xff]
  %v6867 = vld [vmem:[%s6767 + $0x318] sm:$0xff]
  %v6868 = vld [vmem:[%s6767 + $0x320] sm:$0xff]
  %v6869 = vld [vmem:[%s6767 + $0x328] sm:$0xff]
  %v6870 = vld [vmem:[%s6767 + $0x330] sm:$0xff]
  %v6871 = vld [vmem:[%s6767 + $0x338] sm:$0xff]
  %v6872 = vld [vmem:[%s6767 + $0x340] sm:$0xff]
  %v6873 = vld [vmem:[%s6767 + $0x348] sm:$0xff]
  %v6874 = vld [vmem:[%s6767 + $0x350] sm:$0xff]
  %v6875 = vld [vmem:[%s6767 + $0x358] sm:$0xff]
  %v6876 = vld [vmem:[%s6767 + $0x360] sm:$0xff]
  %v6877 = vld [vmem:[%s6767 + $0x368] sm:$0xff]
  %v6878 = vld [vmem:[%s6767 + $0x370] sm:$0xff]
  %v6879 = vld [vmem:[%s6767 + $0x378] sm:$0xff]
  %v6881 = vsel %vm3796, %v6769, 0
  %v6884 = vsel %vm3796, %v6771, 0
  %v6887 = vsel %vm3796, %v6773, 0
  %v6890 = vsel %vm3796, %v6775, 0
  %v6893 = vsel %vm3796, %v6777, 0
  %v6896 = vsel %vm3796, %v6779, 0
  %v6899 = vsel %vm3796, %v6781, 0
  %v6902 = vsel %vm3796, %v6783, 0
  %v6905 = vsel %vm3796, %v6785, 0
  %v6908 = vsel %vm3796, %v6787, 0
  %v6911 = vsel %vm3796, %v6789, 0
  %v6914 = vsel %vm3796, %v6791, 0
  %v6917 = vsel %vm3796, %v6793, 0
  %v6920 = vsel %vm3796, %v6795, 0
  %v6923 = vsel %vm3796, %v6797, 0
  %v6926 = vsel %vm3796, %v6799, 0
  %v6929 = vsel %vm3796, %v6801, 0
  %v6932 = vsel %vm3796, %v6803, 0
  %v6935 = vsel %vm3796, %v6805, 0
  %v6938 = vsel %vm3796, %v6807, 0
  %v6941 = vsel %vm3796, %v6809, 0
  %v6944 = vsel %vm3796, %v6811, 0
  %v6947 = vsel %vm3796, %v6813, 0
  %v6950 = vsel %vm3796, %v6815, 0
  %v6953 = vsel %vm3796, %v6817, 0
  %v6956 = vsel %vm3796, %v6819, 0
  %v6959 = vsel %vm3796, %v6821, 0
  %v6962 = vsel %vm3796, %v6823, 0
  %v6965 = vsel %vm3796, %v6825, 0
  %v6968 = vsel %vm3796, %v6827, 0
  %v6971 = vsel %vm3796, %v6829, 0
  %v6974 = vsel %vm3796, %v6831, 0
  %v6977 = vsel %vm3796, %v6833, 0
  %v6980 = vsel %vm3796, %v6835, 0
  %v6983 = vsel %vm3796, %v6837, 0
  %v6986 = vsel %vm3796, %v6839, 0
  %v6989 = vsel %vm3796, %v6841, 0
  %v6992 = vsel %vm3796, %v6843, 0
  %v6995 = vsel %vm3796, %v6845, 0
  %v6998 = vsel %vm3796, %v6847, 0
  %v7001 = vsel %vm3796, %v6849, 0
  %v7004 = vsel %vm3796, %v6851, 0
  %v7007 = vsel %vm3796, %v6853, 0
  %v7010 = vsel %vm3796, %v6855, 0
  %v7013 = vsel %vm3796, %v6857, 0
  %v7016 = vsel %vm3796, %v6859, 0
  %v7019 = vsel %vm3796, %v6861, 0
  %v7022 = vsel %vm3796, %v6863, 0
  %v7025 = vsel %vm3796, %v6865, 0
  %v7028 = vsel %vm3796, %v6867, 0
  %v7031 = vsel %vm3796, %v6869, 0
  %v7034 = vsel %vm3796, %v6871, 0
  %v7037 = vsel %vm3796, %v6873, 0
  %v7040 = vsel %vm3796, %v6875, 0
  %v7043 = vsel %vm3796, %v6877, 0
  %v7046 = vsel %vm3796, %v6879, 0
  %7048 = vmatprep.subr.mxu0 0.0
  %7049 = vmatpush1.msra.mxu0 %v3548
  %7050 = vmatprep.subr.mxu0 0.0
  %7051 = vmatpush1.msra.mxu0 %v3549
  %7052 = vmatprep.subr.mxu0 0.0
  %7053 = vmatpush1.msra.mxu0 %v3550
  %7054 = vmatprep.subr.mxu0 0.0
  %7055 = vmatpush1.msra.mxu0 %v3551
  %7056 = vmatprep.subr.mxu0 0.0
  %7057 = vmatpush1.msra.mxu0 %v3552
  %7058 = vmatprep.subr.mxu0 0.0
  %7059 = vmatpush1.msra.mxu0 %v3553
  %7060 = vmatprep.subr.mxu0 0.0
  %7061 = vmatpush1.msra.mxu0 %v3554
  %7062 = vmatprep.subr.mxu0 0.0
  %7063 = vmatpush1.msra.mxu0 %v3555
  %7064 = vmatprep.subr.mxu0 0.0
  %7065 = vmatpush1.msra.mxu0 %v3556
  %7066 = vmatprep.subr.mxu0 0.0
  %7067 = vmatpush1.msra.mxu0 %v3557
  %7068 = vmatprep.subr.mxu0 0.0
  %7069 = vmatpush1.msra.mxu0 %v3558
  %7070 = vmatprep.subr.mxu0 0.0
  %7071 = vmatpush1.msra.mxu0 %v3559
  %7072 = vmatprep.subr.mxu0 0.0
  %7073 = vmatpush1.msra.mxu0 %v3560
  %7074 = vmatprep.subr.mxu0 0.0
  %7075 = vmatpush1.msra.mxu0 %v3561
  %7076 = vmatprep.subr.mxu0 0.0
  %7077 = vmatpush1.msra.mxu0 %v3562
  %7078 = vmatprep.subr.mxu0 0.0
  %7079 = vmatpush1.msra.mxu0 %v3563
  %7080 = vmatprep.subr.mxu0 0.0
  %7081 = vmatpush1.msra.mxu0 %v3564
  %7082 = vmatprep.subr.mxu0 0.0
  %7083 = vmatpush1.msra.mxu0 %v3565
  %7084 = vmatprep.subr.mxu0 0.0
  %7085 = vmatpush1.msra.mxu0 %v3566
  %7086 = vmatprep.subr.mxu0 0.0
  %7087 = vmatpush1.msra.mxu0 %v3567
  %7088 = vmatprep.subr.mxu0 0.0
  %7089 = vmatpush1.msra.mxu0 %v3568
  %7090 = vmatprep.subr.mxu0 0.0
  %7091 = vmatpush1.msra.mxu0 %v3569
  %7092 = vmatprep.subr.mxu0 0.0
  %7093 = vmatpush1.msra.mxu0 %v5112
  %7094 = vmatprep.subr.mxu0 0.0
  %7095 = vmatpush1.msra.mxu0 0.0
  %7096 = vmatprep.subr.mxu0 0.0
  %7097 = vmatpush1.msra.mxu0 0.0
  %7098 = vmatprep.subr.mxu0 0.0
  %7099 = vmatpush1.msra.mxu0 0.0
  %7100 = vmatprep.subr.mxu0 0.0
  %7101 = vmatpush1.msra.mxu0 0.0
  %7102 = vmatprep.subr.mxu0 0.0
  %7103 = vmatpush1.msra.mxu0 0.0
  %7104 = vmatprep.subr.mxu0 0.0
  %7105 = vmatpush1.msra.mxu0 0.0
  %7106 = vmatprep.subr.mxu0 0.0
  %7107 = vmatpush1.msra.mxu0 0.0
  %7108 = vmatprep.subr.mxu0 0.0
  %7109 = vmatpush1.msra.mxu0 0.0
  %7110 = vmatprep.subr.mxu0 0.0
  %7111 = vmatpush1.msra.mxu0 0.0
  %7112 = vmatprep.mubr.f32.mxu0 %v6881
  %7113 = vmatmul.mubr.f32.gmra.mrb[0].mxu0 %v6768
  %v7114 = vpop.f32.mrb[0].mxu0
  %v7115 = vadd.f32 0.0, %v7114
  %v7116 = vpop.f32.mrb[0].mxu0
  %7117 = vmatprep.mubr.f32.mxu0 %v6884
  %7118 = vmatmul.mubr.f32.gmra.mrb[0].mxu0 %v6770
  %v7119 = vpop.f32.mrb[0].mxu0
  %v7120 = vadd.f32 0.0, %v7119
  %v7121 = vpop.f32.mrb[0].mxu0
  %7122 = vmatprep.mubr.f32.mxu0 %v6887
  %7123 = vmatmul.mubr.f32.gmra.mrb[0].mxu0 %v6772
  %v7124 = vpop.f32.mrb[0].mxu0
  %v7125 = vadd.f32 0.0, %v7124
  %v7126 = vpop.f32.mrb[0].mxu0
  %7127 = vmatprep.mubr.f32.mxu0 %v6890
  %7128 = vmatmul.mubr.f32.gmra.mrb[0].mxu0 %v6774
  %v7129 = vpop.f32.mrb[0].mxu0
  %v7130 = vadd.f32 0.0, %v7129
  %v7131 = vpop.f32.mrb[0].mxu0
  %7132 = vmatprep.mubr.f32.mxu0 %v6893
  %7133 = vmatmul.mubr.f32.gmra.mrb[0].mxu0 %v6776
  %v7134 = vpop.f32.mrb[0].mxu0
  %v7135 = vadd.f32 0.0, %v7134
  %v7136 = vpop.f32.mrb[0].mxu0
  %7137 = vmatprep.mubr.f32.mxu0 %v6896
  %7138 = vmatmul.mubr.f32.gmra.mrb[0].mxu0 %v6778
  %v7139 = vpop.f32.mrb[0].mxu0
  %v7140 = vadd.f32 0.0, %v7139
  %v7141 = vpop.f32.mrb[0].mxu0
  %7142 = vmatprep.mubr.f32.mxu0 %v6899
  %7143 = vmatmul.mubr.f32.gmra.mrb[0].mxu0 %v6780
  %v7144 = vpop.f32.mrb[0].mxu0
  %v7145 = vadd.f32 0.0, %v7144
  %v7146 = vpop.f32.mrb[0].mxu0
  %7147 = vmatprep.mubr.f32.mxu0 %v6902
  %7148 = vmatmul.mubr.f32.gmra.mrb[0].mxu0 %v6782
  %v7149 = vpop.f32.mrb[0].mxu0
  %v7150 = vadd.f32 0.0, %v7149
  %v7151 = vpop.f32.mrb[0].mxu0
  %7152 = vmatprep.mubr.f32.mxu0 %v6905
  %7153 = vmatmul.mubr.f32.gmra.mrb[0].mxu0 %v6784
  %v7154 = vpop.f32.mrb[0].mxu0
  %v7155 = vadd.f32 0.0, %v7154
  %v7156 = vpop.f32.mrb[0].mxu0
  %7157 = vmatprep.mubr.f32.mxu0 %v6908
  %7158 = vmatmul.mubr.f32.gmra.mrb[0].mxu0 %v6786
  %v7159 = vpop.f32.mrb[0].mxu0
  %v7160 = vadd.f32 0.0, %v7159
  %v7161 = vpop.f32.mrb[0].mxu0
  %7162 = vmatprep.mubr.f32.mxu0 %v6911
  %7163 = vmatmul.mubr.f32.gmra.mrb[0].mxu0 %v6788
  %v7164 = vpop.f32.mrb[0].mxu0
  %v7165 = vadd.f32 0.0, %v7164
  %v7166 = vpop.f32.mrb[0].mxu0
  %7167 = vmatprep.mubr.f32.mxu0 %v6914
  %7168 = vmatmul.mubr.f32.gmra.mrb[0].mxu0 %v6790
  %v7169 = vpop.f32.mrb[0].mxu0
  %v7170 = vadd.f32 0.0, %v7169
  %v7171 = vpop.f32.mrb[0].mxu0
  %7172 = vmatprep.mubr.f32.mxu0 %v6917
  %7173 = vmatmul.mubr.f32.gmra.mrb[0].mxu0 %v6792
  %v7174 = vpop.f32.mrb[0].mxu0
  %v7175 = vadd.f32 0.0, %v7174
  %v7176 = vpop.f32.mrb[0].mxu0
  %7177 = vmatprep.mubr.f32.mxu0 %v6920
  %7178 = vmatmul.mubr.f32.gmra.mrb[0].mxu0 %v6794
  %v7179 = vpop.f32.mrb[0].mxu0
  %v7180 = vadd.f32 0.0, %v7179
  %v7181 = vpop.f32.mrb[0].mxu0
  %7182 = vmatprep.mubr.f32.mxu0 %v6923
  %7183 = vmatmul.mubr.f32.gmra.mrb[0].mxu0 %v6796
  %v7184 = vpop.f32.mrb[0].mxu0
  %v7185 = vadd.f32 0.0, %v7184
  %v7186 = vpop.f32.mrb[0].mxu0
  %7187 = vmatprep.mubr.f32.mxu0 %v6926
  %7188 = vmatmul.mubr.f32.gmra.mrb[0].mxu0 %v6798
  %v7189 = vpop.f32.mrb[0].mxu0
  %v7190 = vadd.f32 0.0, %v7189
  %v7191 = vpop.f32.mrb[0].mxu0
  %7192 = vmatprep.mubr.f32.mxu0 %v6929
  %7193 = vmatmul.mubr.f32.gmra.mrb[0].mxu0 %v6800
  %v7194 = vpop.f32.mrb[0].mxu0
  %v7195 = vadd.f32 0.0, %v7194
  %v7196 = vpop.f32.mrb[0].mxu0
  %7197 = vmatprep.mubr.f32.mxu0 %v6932
  %7198 = vmatmul.mubr.f32.gmra.mrb[0].mxu0 %v6802
  %v7199 = vpop.f32.mrb[0].mxu0
  %v7200 = vadd.f32 0.0, %v7199
  %v7201 = vpop.f32.mrb[0].mxu0
  %7202 = vmatprep.mubr.f32.mxu0 %v6935
  %7203 = vmatmul.mubr.f32.gmra.mrb[0].mxu0 %v6804
  %v7204 = vpop.f32.mrb[0].mxu0
  %v7205 = vadd.f32 0.0, %v7204
  %v7206 = vpop.f32.mrb[0].mxu0
  %7207 = vmatprep.mubr.f32.mxu0 %v6938
  %7208 = vmatmul.mubr.f32.gmra.mrb[0].mxu0 %v6806
  %v7209 = vpop.f32.mrb[0].mxu0
  %v7210 = vadd.f32 0.0, %v7209
  %v7211 = vpop.f32.mrb[0].mxu0
  %7212 = vmatprep.mubr.f32.mxu0 %v6941
  %7213 = vmatmul.mubr.f32.gmra.mrb[0].mxu0 %v6808
  %v7214 = vpop.f32.mrb[0].mxu0
  %v7215 = vadd.f32 0.0, %v7214
  %v7216 = vpop.f32.mrb[0].mxu0
  %7217 = vmatprep.mubr.f32.mxu0 %v6944
  %7218 = vmatmul.mubr.f32.gmra.mrb[0].mxu0 %v6810
  %v7219 = vpop.f32.mrb[0].mxu0
  %v7220 = vadd.f32 0.0, %v7219
  %v7221 = vpop.f32.mrb[0].mxu0
  %7222 = vmatprep.mubr.f32.mxu0 %v6947
  %7223 = vmatmul.mubr.f32.gmra.mrb[0].mxu0 %v6812
  %v7224 = vpop.f32.mrb[0].mxu0
  %v7225 = vadd.f32 0.0, %v7224
  %v7226 = vpop.f32.mrb[0].mxu0
  %7227 = vmatprep.mubr.f32.mxu0 %v6950
  %7228 = vmatmul.mubr.f32.gmra.mrb[0].mxu0 %v6814
  %v7229 = vpop.f32.mrb[0].mxu0
  %v7230 = vadd.f32 0.0, %v7229
  %v7231 = vpop.f32.mrb[0].mxu0
  %7232 = vmatprep.mubr.f32.mxu0 %v6953
  %7233 = vmatmul.mubr.f32.gmra.mrb[0].mxu0 %v6816
  %v7234 = vpop.f32.mrb[0].mxu0
  %v7235 = vadd.f32 0.0, %v7234
  %v7236 = vpop.f32.mrb[0].mxu0
  %7237 = vmatprep.mubr.f32.mxu0 %v6956
  %7238 = vmatmul.mubr.f32.gmra.mrb[0].mxu0 %v6818
  %v7239 = vpop.f32.mrb[0].mxu0
  %v7240 = vadd.f32 0.0, %v7239
  %v7241 = vpop.f32.mrb[0].mxu0
  %7242 = vmatprep.mubr.f32.mxu0 %v6959
  %7243 = vmatmul.mubr.f32.gmra.mrb[0].mxu0 %v6820
  %v7244 = vpop.f32.mrb[0].mxu0
  %v7245 = vadd.f32 0.0, %v7244
  %v7246 = vpop.f32.mrb[0].mxu0
  %7247 = vmatprep.mubr.f32.mxu0 %v6962
  %7248 = vmatmul.mubr.f32.gmra.mrb[0].mxu0 %v6822
  %v7249 = vpop.f32.mrb[0].mxu0
  %v7250 = vadd.f32 0.0, %v7249
  %v7251 = vpop.f32.mrb[0].mxu0
  %7252 = vmatprep.mubr.f32.mxu0 %v6965
  %7253 = vmatmul.mubr.f32.gmra.mrb[0].mxu0 %v6824
  %v7254 = vpop.f32.mrb[0].mxu0
  %v7255 = vadd.f32 0.0, %v7254
  %v7256 = vpop.f32.mrb[0].mxu0
  %7257 = vmatprep.mubr.f32.mxu0 %v6968
  %7258 = vmatmul.mubr.f32.gmra.mrb[0].mxu0 %v6826
  %v7259 = vpop.f32.mrb[0].mxu0
  %v7260 = vadd.f32 0.0, %v7259
  %v7261 = vpop.f32.mrb[0].mxu0
  %7262 = vmatprep.mubr.f32.mxu0 %v6971
  %7263 = vmatmul.mubr.f32.gmra.mrb[0].mxu0 %v6828
  %v7264 = vpop.f32.mrb[0].mxu0
  %v7265 = vadd.f32 0.0, %v7264
  %v7266 = vpop.f32.mrb[0].mxu0
  %7267 = vmatprep.mubr.f32.mxu0 %v6974
  %7268 = vmatmul.mubr.f32.gmra.mrb[0].mxu0 %v6830
  %v7269 = vpop.f32.mrb[0].mxu0
  %v7270 = vadd.f32 0.0, %v7269
  %v7271 = vpop.f32.mrb[0].mxu0
  %7272 = vmatprep.mubr.f32.mxu0 %v6977
  %7273 = vmatmul.mubr.f32.gmra.mrb[0].mxu0 %v6832
  %v7274 = vpop.f32.mrb[0].mxu0
  %v7275 = vadd.f32 0.0, %v7274
  %v7276 = vpop.f32.mrb[0].mxu0
  %7277 = vmatprep.mubr.f32.mxu0 %v6980
  %7278 = vmatmul.mubr.f32.gmra.mrb[0].mxu0 %v6834
  %v7279 = vpop.f32.mrb[0].mxu0
  %v7280 = vadd.f32 0.0, %v7279
  %v7281 = vpop.f32.mrb[0].mxu0
  %7282 = vmatprep.mubr.f32.mxu0 %v6983
  %7283 = vmatmul.mubr.f32.gmra.mrb[0].mxu0 %v6836
  %v7284 = vpop.f32.mrb[0].mxu0
  %v7285 = vadd.f32 0.0, %v7284
  %v7286 = vpop.f32.mrb[0].mxu0
  %7287 = vmatprep.mubr.f32.mxu0 %v6986
  %7288 = vmatmul.mubr.f32.gmra.mrb[0].mxu0 %v6838
  %v7289 = vpop.f32.mrb[0].mxu0
  %v7290 = vadd.f32 0.0, %v7289
  %v7291 = vpop.f32.mrb[0].mxu0
  %7292 = vmatprep.mubr.f32.mxu0 %v6989
  %7293 = vmatmul.mubr.f32.gmra.mrb[0].mxu0 %v6840
  %v7294 = vpop.f32.mrb[0].mxu0
  %v7295 = vadd.f32 0.0, %v7294
  %v7296 = vpop.f32.mrb[0].mxu0
  %7297 = vmatprep.mubr.f32.mxu0 %v6992
  %7298 = vmatmul.mubr.f32.gmra.mrb[0].mxu0 %v6842
  %v7299 = vpop.f32.mrb[0].mxu0
  %v7300 = vadd.f32 0.0, %v7299
  %v7301 = vpop.f32.mrb[0].mxu0
  %7302 = vmatprep.mubr.f32.mxu0 %v6995
  %7303 = vmatmul.mubr.f32.gmra.mrb[0].mxu0 %v6844
  %v7304 = vpop.f32.mrb[0].mxu0
  %v7305 = vadd.f32 0.0, %v7304
  %v7306 = vpop.f32.mrb[0].mxu0
  %7307 = vmatprep.mubr.f32.mxu0 %v6998
  %7308 = vmatmul.mubr.f32.gmra.mrb[0].mxu0 %v6846
  %v7309 = vpop.f32.mrb[0].mxu0
  %v7310 = vadd.f32 0.0, %v7309
  %v7311 = vpop.f32.mrb[0].mxu0
  %7312 = vmatprep.mubr.f32.mxu0 %v7001
  %7313 = vmatmul.mubr.f32.gmra.mrb[0].mxu0 %v6848
  %v7314 = vpop.f32.mrb[0].mxu0
  %v7315 = vadd.f32 0.0, %v7314
  %v7316 = vpop.f32.mrb[0].mxu0
  %7317 = vmatprep.mubr.f32.mxu0 %v7004
  %7318 = vmatmul.mubr.f32.gmra.mrb[0].mxu0 %v6850
  %v7319 = vpop.f32.mrb[0].mxu0
  %v7320 = vadd.f32 0.0, %v7319
  %v7321 = vpop.f32.mrb[0].mxu0
  %7322 = vmatprep.mubr.f32.mxu0 %v7007
  %7323 = vmatmul.mubr.f32.gmra.mrb[0].mxu0 %v6852
  %v7324 = vpop.f32.mrb[0].mxu0
  %v7325 = vadd.f32 0.0, %v7324
  %v7326 = vpop.f32.mrb[0].mxu0
  %7327 = vmatprep.mubr.f32.mxu0 %v7010
  %7328 = vmatmul.mubr.f32.gmra.mrb[0].mxu0 %v6854
  %v7329 = vpop.f32.mrb[0].mxu0
  %v7330 = vadd.f32 0.0, %v7329
  %v7331 = vpop.f32.mrb[0].mxu0
  %7332 = vmatprep.mubr.f32.mxu0 %v7013
  %7333 = vmatmul.mubr.f32.gmra.mrb[0].mxu0 %v6856
  %v7334 = vpop.f32.mrb[0].mxu0
  %v7335 = vadd.f32 0.0, %v7334
  %v7336 = vpop.f32.mrb[0].mxu0
  %7337 = vmatprep.mubr.f32.mxu0 %v7016
  %7338 = vmatmul.mubr.f32.gmra.mrb[0].mxu0 %v6858
  %v7339 = vpop.f32.mrb[0].mxu0
  %v7340 = vadd.f32 0.0, %v7339
  %v7341 = vpop.f32.mrb[0].mxu0
  %7342 = vmatprep.mubr.f32.mxu0 %v7019
  %7343 = vmatmul.mubr.f32.gmra.mrb[0].mxu0 %v6860
  %v7344 = vpop.f32.mrb[0].mxu0
  %v7345 = vadd.f32 0.0, %v7344
  %v7346 = vpop.f32.mrb[0].mxu0
  %7347 = vmatprep.mubr.f32.mxu0 %v7022
  %7348 = vmatmul.mubr.f32.gmra.mrb[0].mxu0 %v6862
  %v7349 = vpop.f32.mrb[0].mxu0
  %v7350 = vadd.f32 0.0, %v7349
  %v7351 = vpop.f32.mrb[0].mxu0
  %7352 = vmatprep.mubr.f32.mxu0 %v7025
  %7353 = vmatmul.mubr.f32.gmra.mrb[0].mxu0 %v6864
  %v7354 = vpop.f32.mrb[0].mxu0
  %v7355 = vadd.f32 0.0, %v7354
  %v7356 = vpop.f32.mrb[0].mxu0
  %7357 = vmatprep.mubr.f32.mxu0 %v7028
  %7358 = vmatmul.mubr.f32.gmra.mrb[0].mxu0 %v6866
  %v7359 = vpop.f32.mrb[0].mxu0
  %v7360 = vadd.f32 0.0, %v7359
  %v7361 = vpop.f32.mrb[0].mxu0
  %7362 = vmatprep.mubr.f32.mxu0 %v7031
  %7363 = vmatmul.mubr.f32.gmra.mrb[0].mxu0 %v6868
  %v7364 = vpop.f32.mrb[0].mxu0
  %v7365 = vadd.f32 0.0, %v7364
  %v7366 = vpop.f32.mrb[0].mxu0
  %7367 = vmatprep.mubr.f32.mxu0 %v7034
  %7368 = vmatmul.mubr.f32.gmra.mrb[0].mxu0 %v6870
  %v7369 = vpop.f32.mrb[0].mxu0
  %v7370 = vadd.f32 0.0, %v7369
  %v7371 = vpop.f32.mrb[0].mxu0
  %7372 = vmatprep.mubr.f32.mxu0 %v7037
  %7373 = vmatmul.mubr.f32.gmra.mrb[0].mxu0 %v6872
  %v7374 = vpop.f32.mrb[0].mxu0
  %v7375 = vadd.f32 0.0, %v7374
  %v7376 = vpop.f32.mrb[0].mxu0
  %7377 = vmatprep.mubr.f32.mxu0 %v7040
  %7378 = vmatmul.mubr.f32.gmra.mrb[0].mxu0 %v6874
  %v7379 = vpop.f32.mrb[0].mxu0
  %v7380 = vadd.f32 0.0, %v7379
  %v7381 = vpop.f32.mrb[0].mxu0
  %7382 = vmatprep.mubr.f32.mxu0 %v7043
  %7383 = vmatmul.mubr.f32.gmra.mrb[0].mxu0 %v6876
  %v7384 = vpop.f32.mrb[0].mxu0
  %v7385 = vadd.f32 0.0, %v7384
  %v7386 = vpop.f32.mrb[0].mxu0
  %7387 = vmatprep.mubr.f32.mxu0 %v7046
  %7388 = vmatmul.mubr.f32.gmra.mrb[0].mxu0 %v6878
  %v7389 = vpop.f32.mrb[0].mxu0
  %v7390 = vadd.f32 0.0, %v7389
  %v7391 = vpop.f32.mrb[0].mxu0
  %7392 = vdwg.mxu0
  %v7393 = vadd.f32 %v6489, %v7115
  %v7394 = vadd.f32 %v6494, %v7120
  %v7395 = vadd.f32 %v6499, %v7125
  %v7396 = vadd.f32 %v6504, %v7130
  %v7397 = vadd.f32 %v6509, %v7135
  %v7398 = vadd.f32 %v6514, %v7140
  %v7399 = vadd.f32 %v6519, %v7145
  %v7400 = vadd.f32 %v6524, %v7150
  %v7401 = vadd.f32 %v6529, %v7155
  %v7402 = vadd.f32 %v6534, %v7160
  %v7403 = vadd.f32 %v6539, %v7165
  %v7404 = vadd.f32 %v6544, %v7170
  %v7405 = vadd.f32 %v6549, %v7175
  %v7406 = vadd.f32 %v6554, %v7180
  %v7407 = vadd.f32 %v6559, %v7185
  %v7408 = vadd.f32 %v6564, %v7190
  %v7409 = vadd.f32 %v6569, %v7195
  %v7410 = vadd.f32 %v6574, %v7200
  %v7411 = vadd.f32 %v6579, %v7205
  %v7412 = vadd.f32 %v6584, %v7210
  %v7413 = vadd.f32 %v6589, %v7215
  %v7414 = vadd.f32 %v6594, %v7220
  %v7415 = vadd.f32 %v6599, %v7225
  %v7416 = vadd.f32 %v6604, %v7230
  %v7417 = vadd.f32 %v6609, %v7235
  %v7418 = vadd.f32 %v6614, %v7240
  %v7419 = vadd.f32 %v6619, %v7245
  %v7420 = vadd.f32 %v6624, %v7250
  %v7421 = vadd.f32 %v6629, %v7255
  %v7422 = vadd.f32 %v6634, %v7260
  %v7423 = vadd.f32 %v6639, %v7265
  %v7424 = vadd.f32 %v6644, %v7270
  %v7425 = vadd.f32 %v6649, %v7275
  %v7426 = vadd.f32 %v6654, %v7280
  %v7427 = vadd.f32 %v6659, %v7285
  %v7428 = vadd.f32 %v6664, %v7290
  %v7429 = vadd.f32 %v6669, %v7295
  %v7430 = vadd.f32 %v6674, %v7300
  %v7431 = vadd.f32 %v6679, %v7305
  %v7432 = vadd.f32 %v6684, %v7310
  %v7433 = vadd.f32 %v6689, %v7315
  %v7434 = vadd.f32 %v6694, %v7320
  %v7435 = vadd.f32 %v6699, %v7325
  %v7436 = vadd.f32 %v6704, %v7330
  %v7437 = vadd.f32 %v6709, %v7335
  %v7438 = vadd.f32 %v6714, %v7340
  %v7439 = vadd.f32 %v6719, %v7345
  %v7440 = vadd.f32 %v6724, %v7350
  %v7441 = vadd.f32 %v6729, %v7355
  %v7442 = vadd.f32 %v6734, %v7360
  %v7443 = vadd.f32 %v6739, %v7365
  %v7444 = vadd.f32 %v6744, %v7370
  %v7445 = vadd.f32 %v6749, %v7375
  %v7446 = vadd.f32 %v6754, %v7380
  %v7447 = vadd.f32 %v6759, %v7385
  %v7448 = vadd.f32 %v6764, %v7390
  %v7449 = vmax.f32 %v5459, %v7393
  %v7450 = vmax.f32 %v5460, %v7394
  %v7451 = vmax.f32 %v5461, %v7395
  %v7452 = vmax.f32 %v5462, %v7396
  %v7453 = vmax.f32 %v5463, %v7397
  %v7454 = vmax.f32 %v5464, %v7398
  %v7455 = vmax.f32 %v5465, %v7399
  %v7456 = vmax.f32 %v5466, %v7400
  %v7457 = vmax.f32 %v5467, %v7401
  %v7458 = vmax.f32 %v5468, %v7402
  %v7459 = vmax.f32 %v5469, %v7403
  %v7460 = vmax.f32 %v5470, %v7404
  %v7461 = vmax.f32 %v5471, %v7405
  %v7462 = vmax.f32 %v5472, %v7406
  %v7463 = vmax.f32 %v5473, %v7407
  %v7464 = vmax.f32 %v5474, %v7408
  %v7465 = vmax.f32 %v5475, %v7409
  %v7466 = vmax.f32 %v5476, %v7410
  %v7467 = vmax.f32 %v5477, %v7411
  %v7468 = vmax.f32 %v5478, %v7412
  %v7469 = vmax.f32 %v5479, %v7413
  %v7470 = vmax.f32 %v5480, %v7414
  %v7471 = vmax.f32 %v5481, %v7415
  %v7472 = vmax.f32 %v5482, %v7416
  %v7473 = vmax.f32 %v5483, %v7417
  %v7474 = vmax.f32 %v5484, %v7418
  %v7475 = vmax.f32 %v5485, %v7419
  %v7476 = vmax.f32 %v5486, %v7420
  %v7477 = vmax.f32 %v5487, %v7421
  %v7478 = vmax.f32 %v5488, %v7422
  %v7479 = vmax.f32 %v5489, %v7423
  %v7480 = vmax.f32 %v5490, %v7424
  %v7481 = vmax.f32 %v5491, %v7425
  %v7482 = vmax.f32 %v5492, %v7426
  %v7483 = vmax.f32 %v5493, %v7427
  %v7484 = vmax.f32 %v5494, %v7428
  %v7485 = vmax.f32 %v5495, %v7429
  %v7486 = vmax.f32 %v5496, %v7430
  %v7487 = vmax.f32 %v5497, %v7431
  %v7488 = vmax.f32 %v5498, %v7432
  %v7489 = vmax.f32 %v5499, %v7433
  %v7490 = vmax.f32 %v5500, %v7434
  %v7491 = vmax.f32 %v5501, %v7435
  %v7492 = vmax.f32 %v5502, %v7436
  %v7493 = vmax.f32 %v5503, %v7437
  %v7494 = vmax.f32 %v5504, %v7438
  %v7495 = vmax.f32 %v5505, %v7439
  %v7496 = vmax.f32 %v5506, %v7440
  %v7497 = vmax.f32 %v5507, %v7441
  %v7498 = vmax.f32 %v5508, %v7442
  %v7499 = vmax.f32 %v5509, %v7443
  %v7500 = vmax.f32 %v5510, %v7444
  %v7501 = vmax.f32 %v5511, %v7445
  %v7502 = vmax.f32 %v5512, %v7446
  %v7503 = vmax.f32 %v5513, %v7447
  %v7504 = vmax.f32 %v5514, %v7448
  %v7505 = vld [vmem:[%s5] sm:$0xff]
  %v7506 = vld [vmem:[%s5 + $0x8] sm:$0xff]
  %v7507 = vld [vmem:[%s5 + $0x10] sm:$0xff]
  %v7508 = vld [vmem:[%s5 + $0x18] sm:$0xff]
  %v7509 = vld [vmem:[%s5 + $0x20] sm:$0xff]
  %v7510 = vld [vmem:[%s5 + $0x28] sm:$0xff]
  %v7511 = vld [vmem:[%s5 + $0x30] sm:$0xff]
  %v7512 = vld [vmem:[%s5 + $0x38] sm:$0xff]
  %v7513 = vld [vmem:[%s5 + $0x40] sm:$0xff]
  %v7514 = vld [vmem:[%s5 + $0x48] sm:$0xff]
  %v7515 = vld [vmem:[%s5 + $0x50] sm:$0xff]
  %v7516 = vld [vmem:[%s5 + $0x58] sm:$0xff]
  %v7517 = vld [vmem:[%s5 + $0x60] sm:$0xff]
  %v7518 = vld [vmem:[%s5 + $0x68] sm:$0xff]
  %v7519 = vld [vmem:[%s5 + $0x70] sm:$0xff]
  %v7520 = vld [vmem:[%s5 + $0x78] sm:$0xff]
  %v7521 = vld [vmem:[%s5 + $0x80] sm:$0xff]
  %v7522 = vld [vmem:[%s5 + $0x88] sm:$0xff]
  %v7523 = vld [vmem:[%s5 + $0x90] sm:$0xff]
  %v7524 = vld [vmem:[%s5 + $0x98] sm:$0xff]
  %v7525 = vld [vmem:[%s5 + $0xa0] sm:$0xff]
  %v7526 = vld [vmem:[%s5 + $0xa8] sm:$0xff]
  %v7527 = vld [vmem:[%s5 + $0xb0] sm:$0xff]
  %v7528 = vld [vmem:[%s5 + $0xb8] sm:$0xff]
  %v7529 = vld [vmem:[%s5 + $0xc0] sm:$0xff]
  %v7530 = vld [vmem:[%s5 + $0xc8] sm:$0xff]
  %v7531 = vld [vmem:[%s5 + $0xd0] sm:$0xff]
  %v7532 = vld [vmem:[%s5 + $0xd8] sm:$0xff]
  %v7533 = vld [vmem:[%s5 + $0xe0] sm:$0xff]
  %v7534 = vld [vmem:[%s5 + $0xe8] sm:$0xff]
  %v7535 = vld [vmem:[%s5 + $0xf0] sm:$0xff]
  %v7536 = vld [vmem:[%s5 + $0xf8] sm:$0xff]
  %v7537 = vld [vmem:[%s5 + $0x100] sm:$0xff]
  %v7538 = vld [vmem:[%s5 + $0x108] sm:$0xff]
  %v7539 = vld [vmem:[%s5 + $0x110] sm:$0xff]
  %v7540 = vld [vmem:[%s5 + $0x118] sm:$0xff]
  %v7541 = vld [vmem:[%s5 + $0x120] sm:$0xff]
  %v7542 = vld [vmem:[%s5 + $0x128] sm:$0xff]
  %v7543 = vld [vmem:[%s5 + $0x130] sm:$0xff]
  %v7544 = vld [vmem:[%s5 + $0x138] sm:$0xff]
  %v7545 = vld [vmem:[%s5 + $0x140] sm:$0xff]
  %v7546 = vld [vmem:[%s5 + $0x148] sm:$0xff]
  %v7547 = vld [vmem:[%s5 + $0x150] sm:$0xff]
  %v7548 = vld [vmem:[%s5 + $0x158] sm:$0xff]
  %v7549 = vld [vmem:[%s5 + $0x160] sm:$0xff]
  %v7550 = vld [vmem:[%s5 + $0x168] sm:$0xff]
  %v7551 = vld [vmem:[%s5 + $0x170] sm:$0xff]
  %v7552 = vld [vmem:[%s5 + $0x178] sm:$0xff]
  %v7553 = vld [vmem:[%s5 + $0x180] sm:$0xff]
  %v7554 = vld [vmem:[%s5 + $0x188] sm:$0xff]
  %v7555 = vld [vmem:[%s5 + $0x190] sm:$0xff]
  %v7556 = vld [vmem:[%s5 + $0x198] sm:$0xff]
  %v7557 = vld [vmem:[%s5 + $0x1a0] sm:$0xff]
  %v7558 = vld [vmem:[%s5 + $0x1a8] sm:$0xff]
  %v7559 = vld [vmem:[%s5 + $0x1b0] sm:$0xff]
  %v7560 = vld [vmem:[%s5 + $0x1b8] sm:$0xff]
  %7562 = vset.pattern.permute.xlu0 0
  %7563 = vperm.xlu0 %7562, %v7505
  %v7564 = vpop.permute.xlu0 %7563
  %7567 = vset.pattern.permute.xlu0 0
  %7568 = vperm.xlu0 %7567, %v7506
  %v7569 = vpop.permute.xlu0 %7568
  %7572 = vset.pattern.permute.xlu0 0
  %7573 = vperm.xlu0 %7572, %v7507
  %v7574 = vpop.permute.xlu0 %7573
  %7577 = vset.pattern.permute.xlu0 0
  %7578 = vperm.xlu0 %7577, %v7508
  %v7579 = vpop.permute.xlu0 %7578
  %7582 = vset.pattern.permute.xlu0 0
  %7583 = vperm.xlu0 %7582, %v7509
  %v7584 = vpop.permute.xlu0 %7583
  %7587 = vset.pattern.permute.xlu0 0
  %7588 = vperm.xlu0 %7587, %v7510
  %v7589 = vpop.permute.xlu0 %7588
  %7592 = vset.pattern.permute.xlu0 0
  %7593 = vperm.xlu0 %7592, %v7511
  %v7594 = vpop.permute.xlu0 %7593
  %7597 = vset.pattern.permute.xlu0 0
  %7598 = vperm.xlu0 %7597, %v7512
  %v7599 = vpop.permute.xlu0 %7598
  %7602 = vset.pattern.permute.xlu0 0
  %7603 = vperm.xlu0 %7602, %v7513
  %v7604 = vpop.permute.xlu0 %7603
  %7607 = vset.pattern.permute.xlu0 0
  %7608 = vperm.xlu0 %7607, %v7514
  %v7609 = vpop.permute.xlu0 %7608
  %7612 = vset.pattern.permute.xlu0 0
  %7613 = vperm.xlu0 %7612, %v7515
  %v7614 = vpop.permute.xlu0 %7613
  %7617 = vset.pattern.permute.xlu0 0
  %7618 = vperm.xlu0 %7617, %v7516
  %v7619 = vpop.permute.xlu0 %7618
  %7622 = vset.pattern.permute.xlu0 0
  %7623 = vperm.xlu0 %7622, %v7517
  %v7624 = vpop.permute.xlu0 %7623
  %7627 = vset.pattern.permute.xlu0 0
  %7628 = vperm.xlu0 %7627, %v7518
  %v7629 = vpop.permute.xlu0 %7628
  %7632 = vset.pattern.permute.xlu0 0
  %7633 = vperm.xlu0 %7632, %v7519
  %v7634 = vpop.permute.xlu0 %7633
  %7637 = vset.pattern.permute.xlu0 0
  %7638 = vperm.xlu0 %7637, %v7520
  %v7639 = vpop.permute.xlu0 %7638
  %7642 = vset.pattern.permute.xlu0 0
  %7643 = vperm.xlu0 %7642, %v7521
  %v7644 = vpop.permute.xlu0 %7643
  %7647 = vset.pattern.permute.xlu0 0
  %7648 = vperm.xlu0 %7647, %v7522
  %v7649 = vpop.permute.xlu0 %7648
  %7652 = vset.pattern.permute.xlu0 0
  %7653 = vperm.xlu0 %7652, %v7523
  %v7654 = vpop.permute.xlu0 %7653
  %7657 = vset.pattern.permute.xlu0 0
  %7658 = vperm.xlu0 %7657, %v7524
  %v7659 = vpop.permute.xlu0 %7658
  %7662 = vset.pattern.permute.xlu0 0
  %7663 = vperm.xlu0 %7662, %v7525
  %v7664 = vpop.permute.xlu0 %7663
  %7667 = vset.pattern.permute.xlu0 0
  %7668 = vperm.xlu0 %7667, %v7526
  %v7669 = vpop.permute.xlu0 %7668
  %7672 = vset.pattern.permute.xlu0 0
  %7673 = vperm.xlu0 %7672, %v7527
  %v7674 = vpop.permute.xlu0 %7673
  %7677 = vset.pattern.permute.xlu0 0
  %7678 = vperm.xlu0 %7677, %v7528
  %v7679 = vpop.permute.xlu0 %7678
  %7682 = vset.pattern.permute.xlu0 0
  %7683 = vperm.xlu0 %7682, %v7529
  %v7684 = vpop.permute.xlu0 %7683
  %7687 = vset.pattern.permute.xlu0 0
  %7688 = vperm.xlu0 %7687, %v7530
  %v7689 = vpop.permute.xlu0 %7688
  %7692 = vset.pattern.permute.xlu0 0
  %7693 = vperm.xlu0 %7692, %v7531
  %v7694 = vpop.permute.xlu0 %7693
  %7697 = vset.pattern.permute.xlu0 0
  %7698 = vperm.xlu0 %7697, %v7532
  %v7699 = vpop.permute.xlu0 %7698
  %7702 = vset.pattern.permute.xlu0 0
  %7703 = vperm.xlu0 %7702, %v7533
  %v7704 = vpop.permute.xlu0 %7703
  %7707 = vset.pattern.permute.xlu0 0
  %7708 = vperm.xlu0 %7707, %v7534
  %v7709 = vpop.permute.xlu0 %7708
  %7712 = vset.pattern.permute.xlu0 0
  %7713 = vperm.xlu0 %7712, %v7535
  %v7714 = vpop.permute.xlu0 %7713
  %7717 = vset.pattern.permute.xlu0 0
  %7718 = vperm.xlu0 %7717, %v7536
  %v7719 = vpop.permute.xlu0 %7718
  %7722 = vset.pattern.permute.xlu0 0
  %7723 = vperm.xlu0 %7722, %v7537
  %v7724 = vpop.permute.xlu0 %7723
  %7727 = vset.pattern.permute.xlu0 0
  %7728 = vperm.xlu0 %7727, %v7538
  %v7729 = vpop.permute.xlu0 %7728
  %7732 = vset.pattern.permute.xlu0 0
  %7733 = vperm.xlu0 %7732, %v7539
  %v7734 = vpop.permute.xlu0 %7733
  %7737 = vset.pattern.permute.xlu0 0
  %7738 = vperm.xlu0 %7737, %v7540
  %v7739 = vpop.permute.xlu0 %7738
  %7742 = vset.pattern.permute.xlu0 0
  %7743 = vperm.xlu0 %7742, %v7541
  %v7744 = vpop.permute.xlu0 %7743
  %7747 = vset.pattern.permute.xlu0 0
  %7748 = vperm.xlu0 %7747, %v7542
  %v7749 = vpop.permute.xlu0 %7748
  %7752 = vset.pattern.permute.xlu0 0
  %7753 = vperm.xlu0 %7752, %v7543
  %v7754 = vpop.permute.xlu0 %7753
  %7757 = vset.pattern.permute.xlu0 0
  %7758 = vperm.xlu0 %7757, %v7544
  %v7759 = vpop.permute.xlu0 %7758
  %7762 = vset.pattern.permute.xlu0 0
  %7763 = vperm.xlu0 %7762, %v7545
  %v7764 = vpop.permute.xlu0 %7763
  %7767 = vset.pattern.permute.xlu0 0
  %7768 = vperm.xlu0 %7767, %v7546
  %v7769 = vpop.permute.xlu0 %7768
  %7772 = vset.pattern.permute.xlu0 0
  %7773 = vperm.xlu0 %7772, %v7547
  %v7774 = vpop.permute.xlu0 %7773
  %7777 = vset.pattern.permute.xlu0 0
  %7778 = vperm.xlu0 %7777, %v7548
  %v7779 = vpop.permute.xlu0 %7778
  %7782 = vset.pattern.permute.xlu0 0
  %7783 = vperm.xlu0 %7782, %v7549
  %v7784 = vpop.permute.xlu0 %7783
  %7787 = vset.pattern.permute.xlu0 0
  %7788 = vperm.xlu0 %7787, %v7550
  %v7789 = vpop.permute.xlu0 %7788
  %7792 = vset.pattern.permute.xlu0 0
  %7793 = vperm.xlu0 %7792, %v7551
  %v7794 = vpop.permute.xlu0 %7793
  %7797 = vset.pattern.permute.xlu0 0
  %7798 = vperm.xlu0 %7797, %v7552
  %v7799 = vpop.permute.xlu0 %7798
  %7802 = vset.pattern.permute.xlu0 0
  %7803 = vperm.xlu0 %7802, %v7553
  %v7804 = vpop.permute.xlu0 %7803
  %7807 = vset.pattern.permute.xlu0 0
  %7808 = vperm.xlu0 %7807, %v7554
  %v7809 = vpop.permute.xlu0 %7808
  %7812 = vset.pattern.permute.xlu0 0
  %7813 = vperm.xlu0 %7812, %v7555
  %v7814 = vpop.permute.xlu0 %7813
  %7817 = vset.pattern.permute.xlu0 0
  %7818 = vperm.xlu0 %7817, %v7556
  %v7819 = vpop.permute.xlu0 %7818
  %7822 = vset.pattern.permute.xlu0 0
  %7823 = vperm.xlu0 %7822, %v7557
  %v7824 = vpop.permute.xlu0 %7823
  %7827 = vset.pattern.permute.xlu0 0
  %7828 = vperm.xlu0 %7827, %v7558
  %v7829 = vpop.permute.xlu0 %7828
  %7832 = vset.pattern.permute.xlu0 0
  %7833 = vperm.xlu0 %7832, %v7559
  %v7834 = vpop.permute.xlu0 %7833
  %7837 = vset.pattern.permute.xlu0 0
  %7838 = vperm.xlu0 %7837, %v7560
  %v7839 = vpop.permute.xlu0 %7838
  %v7841 = vadd.f32 %v7449, %v7564
  %v7842 = vadd.f32 %v7450, %v7569
  %v7843 = vadd.f32 %v7451, %v7574
  %v7844 = vadd.f32 %v7452, %v7579
  %v7845 = vadd.f32 %v7453, %v7584
  %v7846 = vadd.f32 %v7454, %v7589
  %v7847 = vadd.f32 %v7455, %v7594
  %v7848 = vadd.f32 %v7456, %v7599
  %v7849 = vadd.f32 %v7457, %v7604
  %v7850 = vadd.f32 %v7458, %v7609
  %v7851 = vadd.f32 %v7459, %v7614
  %v7852 = vadd.f32 %v7460, %v7619
  %v7853 = vadd.f32 %v7461, %v7624
  %v7854 = vadd.f32 %v7462, %v7629
  %v7855 = vadd.f32 %v7463, %v7634
  %v7856 = vadd.f32 %v7464, %v7639
  %v7857 = vadd.f32 %v7465, %v7644
  %v7858 = vadd.f32 %v7466, %v7649
  %v7859 = vadd.f32 %v7467, %v7654
  %v7860 = vadd.f32 %v7468, %v7659
  %v7861 = vadd.f32 %v7469, %v7664
  %v7862 = vadd.f32 %v7470, %v7669
  %v7863 = vadd.f32 %v7471, %v7674
  %v7864 = vadd.f32 %v7472, %v7679
  %v7865 = vadd.f32 %v7473, %v7684
  %v7866 = vadd.f32 %v7474, %v7689
  %v7867 = vadd.f32 %v7475, %v7694
  %v7868 = vadd.f32 %v7476, %v7699
  %v7869 = vadd.f32 %v7477, %v7704
  %v7870 = vadd.f32 %v7478, %v7709
  %v7871 = vadd.f32 %v7479, %v7714
  %v7872 = vadd.f32 %v7480, %v7719
  %v7873 = vadd.f32 %v7481, %v7724
  %v7874 = vadd.f32 %v7482, %v7729
  %v7875 = vadd.f32 %v7483, %v7734
  %v7876 = vadd.f32 %v7484, %v7739
  %v7877 = vadd.f32 %v7485, %v7744
  %v7878 = vadd.f32 %v7486, %v7749
  %v7879 = vadd.f32 %v7487, %v7754
  %v7880 = vadd.f32 %v7488, %v7759
  %v7881 = vadd.f32 %v7489, %v7764
  %v7882 = vadd.f32 %v7490, %v7769
  %v7883 = vadd.f32 %v7491, %v7774
  %v7884 = vadd.f32 %v7492, %v7779
  %v7885 = vadd.f32 %v7493, %v7784
  %v7886 = vadd.f32 %v7494, %v7789
  %v7887 = vadd.f32 %v7495, %v7794
  %v7888 = vadd.f32 %v7496, %v7799
  %v7889 = vadd.f32 %v7497, %v7804
  %v7890 = vadd.f32 %v7498, %v7809
  %v7891 = vadd.f32 %v7499, %v7814
  %v7892 = vadd.f32 %v7500, %v7819
  %v7893 = vadd.f32 %v7501, %v7824
  %v7894 = vadd.f32 %v7502, %v7829
  %v7895 = vadd.f32 %v7503, %v7834
  %v7896 = vadd.f32 %v7504, %v7839
  %v7897 = vmax.f32 %v7841, 0.0
  %v7898 = vmax.f32 %v7842, 0.0
  %v7899 = vmax.f32 %v7843, 0.0
  %v7900 = vmax.f32 %v7844, 0.0
  %v7901 = vmax.f32 %v7845, 0.0
  %v7902 = vmax.f32 %v7846, 0.0
  %v7903 = vmax.f32 %v7847, 0.0
  %v7904 = vmax.f32 %v7848, 0.0
  %v7905 = vmax.f32 %v7849, 0.0
  %v7906 = vmax.f32 %v7850, 0.0
  %v7907 = vmax.f32 %v7851, 0.0
  %v7908 = vmax.f32 %v7852, 0.0
  %v7909 = vmax.f32 %v7853, 0.0
  %v7910 = vmax.f32 %v7854, 0.0
  %v7911 = vmax.f32 %v7855, 0.0
  %v7912 = vmax.f32 %v7856, 0.0
  %v7913 = vmax.f32 %v7857, 0.0
  %v7914 = vmax.f32 %v7858, 0.0
  %v7915 = vmax.f32 %v7859, 0.0
  %v7916 = vmax.f32 %v7860, 0.0
  %v7917 = vmax.f32 %v7861, 0.0
  %v7918 = vmax.f32 %v7862, 0.0
  %v7919 = vmax.f32 %v7863, 0.0
  %v7920 = vmax.f32 %v7864, 0.0
  %v7921 = vmax.f32 %v7865, 0.0
  %v7922 = vmax.f32 %v7866, 0.0
  %v7923 = vmax.f32 %v7867, 0.0
  %v7924 = vmax.f32 %v7868, 0.0
  %v7925 = vmax.f32 %v7869, 0.0
  %v7926 = vmax.f32 %v7870, 0.0
  %v7927 = vmax.f32 %v7871, 0.0
  %v7928 = vmax.f32 %v7872, 0.0
  %v7929 = vmax.f32 %v7873, 0.0
  %v7930 = vmax.f32 %v7874, 0.0
  %v7931 = vmax.f32 %v7875, 0.0
  %v7932 = vmax.f32 %v7876, 0.0
  %v7933 = vmax.f32 %v7877, 0.0
  %v7934 = vmax.f32 %v7878, 0.0
  %v7935 = vmax.f32 %v7879, 0.0
  %v7936 = vmax.f32 %v7880, 0.0
  %v7937 = vmax.f32 %v7881, 0.0
  %v7938 = vmax.f32 %v7882, 0.0
  %v7939 = vmax.f32 %v7883, 0.0
  %v7940 = vmax.f32 %v7884, 0.0
  %v7941 = vmax.f32 %v7885, 0.0
  %v7942 = vmax.f32 %v7886, 0.0
  %v7943 = vmax.f32 %v7887, 0.0
  %v7944 = vmax.f32 %v7888, 0.0
  %v7945 = vmax.f32 %v7889, 0.0
  %v7946 = vmax.f32 %v7890, 0.0
  %v7947 = vmax.f32 %v7891, 0.0
  %v7948 = vmax.f32 %v7892, 0.0
  %v7949 = vmax.f32 %v7893, 0.0
  %v7950 = vmax.f32 %v7894, 0.0
  %v7951 = vmax.f32 %v7895, 0.0
  %v7952 = vmax.f32 %v7896, 0.0
  %8009 = vrot.lane.b32.xlu0 %v7897, 127
  %v8010 = vpop.permute.xlu0 %8009
  %8011 = vrot.lane.b32.xlu0 %v7898, 127
  %v8012 = vpop.permute.xlu0 %8011
  %8013 = vrot.lane.b32.xlu0 %v7899, 127
  %v8014 = vpop.permute.xlu0 %8013
  %8015 = vrot.lane.b32.xlu0 %v7900, 127
  %v8016 = vpop.permute.xlu0 %8015
  %8017 = vrot.lane.b32.xlu0 %v7901, 127
  %v8018 = vpop.permute.xlu0 %8017
  %8019 = vrot.lane.b32.xlu0 %v7902, 127
  %v8020 = vpop.permute.xlu0 %8019
  %8021 = vrot.lane.b32.xlu0 %v7903, 127
  %v8022 = vpop.permute.xlu0 %8021
  %8023 = vrot.lane.b32.xlu0 %v7904, 127
  %v8024 = vpop.permute.xlu0 %8023
  %8025 = vrot.lane.b32.xlu0 %v7905, 127
  %v8026 = vpop.permute.xlu0 %8025
  %8027 = vrot.lane.b32.xlu0 %v7906, 127
  %v8028 = vpop.permute.xlu0 %8027
  %8029 = vrot.lane.b32.xlu0 %v7907, 127
  %v8030 = vpop.permute.xlu0 %8029
  %8031 = vrot.lane.b32.xlu0 %v7908, 127
  %v8032 = vpop.permute.xlu0 %8031
  %8033 = vrot.lane.b32.xlu0 %v7909, 127
  %v8034 = vpop.permute.xlu0 %8033
  %8035 = vrot.lane.b32.xlu0 %v7910, 127
  %v8036 = vpop.permute.xlu0 %8035
  %8037 = vrot.lane.b32.xlu0 %v7911, 127
  %v8038 = vpop.permute.xlu0 %8037
  %8039 = vrot.lane.b32.xlu0 %v7912, 127
  %v8040 = vpop.permute.xlu0 %8039
  %8041 = vrot.lane.b32.xlu0 %v7913, 127
  %v8042 = vpop.permute.xlu0 %8041
  %8043 = vrot.lane.b32.xlu0 %v7914, 127
  %v8044 = vpop.permute.xlu0 %8043
  %8045 = vrot.lane.b32.xlu0 %v7915, 127
  %v8046 = vpop.permute.xlu0 %8045
  %8047 = vrot.lane.b32.xlu0 %v7916, 127
  %v8048 = vpop.permute.xlu0 %8047
  %8049 = vrot.lane.b32.xlu0 %v7917, 127
  %v8050 = vpop.permute.xlu0 %8049
  %8051 = vrot.lane.b32.xlu0 %v7918, 127
  %v8052 = vpop.permute.xlu0 %8051
  %8053 = vrot.lane.b32.xlu0 %v7919, 127
  %v8054 = vpop.permute.xlu0 %8053
  %8055 = vrot.lane.b32.xlu0 %v7920, 127
  %v8056 = vpop.permute.xlu0 %8055
  %8057 = vrot.lane.b32.xlu0 %v7921, 127
  %v8058 = vpop.permute.xlu0 %8057
  %8059 = vrot.lane.b32.xlu0 %v7922, 127
  %v8060 = vpop.permute.xlu0 %8059
  %8061 = vrot.lane.b32.xlu0 %v7923, 127
  %v8062 = vpop.permute.xlu0 %8061
  %8063 = vrot.lane.b32.xlu0 %v7924, 127
  %v8064 = vpop.permute.xlu0 %8063
  %8065 = vrot.lane.b32.xlu0 %v7925, 127
  %v8066 = vpop.permute.xlu0 %8065
  %8067 = vrot.lane.b32.xlu0 %v7926, 127
  %v8068 = vpop.permute.xlu0 %8067
  %8069 = vrot.lane.b32.xlu0 %v7927, 127
  %v8070 = vpop.permute.xlu0 %8069
  %8071 = vrot.lane.b32.xlu0 %v7928, 127
  %v8072 = vpop.permute.xlu0 %8071
  %8073 = vrot.lane.b32.xlu0 %v7929, 127
  %v8074 = vpop.permute.xlu0 %8073
  %8075 = vrot.lane.b32.xlu0 %v7930, 127
  %v8076 = vpop.permute.xlu0 %8075
  %8077 = vrot.lane.b32.xlu0 %v7931, 127
  %v8078 = vpop.permute.xlu0 %8077
  %8079 = vrot.lane.b32.xlu0 %v7932, 127
  %v8080 = vpop.permute.xlu0 %8079
  %8081 = vrot.lane.b32.xlu0 %v7933, 127
  %v8082 = vpop.permute.xlu0 %8081
  %8083 = vrot.lane.b32.xlu0 %v7934, 127
  %v8084 = vpop.permute.xlu0 %8083
  %8085 = vrot.lane.b32.xlu0 %v7935, 127
  %v8086 = vpop.permute.xlu0 %8085
  %8087 = vrot.lane.b32.xlu0 %v7936, 127
  %v8088 = vpop.permute.xlu0 %8087
  %8089 = vrot.lane.b32.xlu0 %v7937, 127
  %v8090 = vpop.permute.xlu0 %8089
  %8091 = vrot.lane.b32.xlu0 %v7938, 127
  %v8092 = vpop.permute.xlu0 %8091
  %8093 = vrot.lane.b32.xlu0 %v7939, 127
  %v8094 = vpop.permute.xlu0 %8093
  %8095 = vrot.lane.b32.xlu0 %v7940, 127
  %v8096 = vpop.permute.xlu0 %8095
  %8097 = vrot.lane.b32.xlu0 %v7941, 127
  %v8098 = vpop.permute.xlu0 %8097
  %8099 = vrot.lane.b32.xlu0 %v7942, 127
  %v8100 = vpop.permute.xlu0 %8099
  %8101 = vrot.lane.b32.xlu0 %v7943, 127
  %v8102 = vpop.permute.xlu0 %8101
  %8103 = vrot.lane.b32.xlu0 %v7944, 127
  %v8104 = vpop.permute.xlu0 %8103
  %8105 = vrot.lane.b32.xlu0 %v7945, 127
  %v8106 = vpop.permute.xlu0 %8105
  %8107 = vrot.lane.b32.xlu0 %v7946, 127
  %v8108 = vpop.permute.xlu0 %8107
  %8109 = vrot.lane.b32.xlu0 %v7947, 127
  %v8110 = vpop.permute.xlu0 %8109
  %8111 = vrot.lane.b32.xlu0 %v7948, 127
  %v8112 = vpop.permute.xlu0 %8111
  %8113 = vrot.lane.b32.xlu0 %v7949, 127
  %v8114 = vpop.permute.xlu0 %8113
  %8115 = vrot.lane.b32.xlu0 %v7950, 127
  %v8116 = vpop.permute.xlu0 %8115
  %8117 = vrot.lane.b32.xlu0 %v7951, 127
  %v8118 = vpop.permute.xlu0 %8117
  %8119 = vrot.lane.b32.xlu0 %v7952, 127
  %v8120 = vpop.permute.xlu0 %8119
  %v8177 = vmax.f32 %v7897, %v8010
  %v8178 = vmax.f32 %v7898, %v8012
  %v8179 = vmax.f32 %v7899, %v8014
  %v8180 = vmax.f32 %v7900, %v8016
  %v8181 = vmax.f32 %v7901, %v8018
  %v8182 = vmax.f32 %v7902, %v8020
  %v8183 = vmax.f32 %v7903, %v8022
  %v8184 = vmax.f32 %v7904, %v8024
  %v8185 = vmax.f32 %v7905, %v8026
  %v8186 = vmax.f32 %v7906, %v8028
  %v8187 = vmax.f32 %v7907, %v8030
  %v8188 = vmax.f32 %v7908, %v8032
  %v8189 = vmax.f32 %v7909, %v8034
  %v8190 = vmax.f32 %v7910, %v8036
  %v8191 = vmax.f32 %v7911, %v8038
  %v8192 = vmax.f32 %v7912, %v8040
  %v8193 = vmax.f32 %v7913, %v8042
  %v8194 = vmax.f32 %v7914, %v8044
  %v8195 = vmax.f32 %v7915, %v8046
  %v8196 = vmax.f32 %v7916, %v8048
  %v8197 = vmax.f32 %v7917, %v8050
  %v8198 = vmax.f32 %v7918, %v8052
  %v8199 = vmax.f32 %v7919, %v8054
  %v8200 = vmax.f32 %v7920, %v8056
  %v8201 = vmax.f32 %v7921, %v8058
  %v8202 = vmax.f32 %v7922, %v8060
  %v8203 = vmax.f32 %v7923, %v8062
  %v8204 = vmax.f32 %v7924, %v8064
  %v8205 = vmax.f32 %v7925, %v8066
  %v8206 = vmax.f32 %v7926, %v8068
  %v8207 = vmax.f32 %v7927, %v8070
  %v8208 = vmax.f32 %v7928, %v8072
  %v8209 = vmax.f32 %v7929, %v8074
  %v8210 = vmax.f32 %v7930, %v8076
  %v8211 = vmax.f32 %v7931, %v8078
  %v8212 = vmax.f32 %v7932, %v8080
  %v8213 = vmax.f32 %v7933, %v8082
  %v8214 = vmax.f32 %v7934, %v8084
  %v8215 = vmax.f32 %v7935, %v8086
  %v8216 = vmax.f32 %v7936, %v8088
  %v8217 = vmax.f32 %v7937, %v8090
  %v8218 = vmax.f32 %v7938, %v8092
  %v8219 = vmax.f32 %v7939, %v8094
  %v8220 = vmax.f32 %v7940, %v8096
  %v8221 = vmax.f32 %v7941, %v8098
  %v8222 = vmax.f32 %v7942, %v8100
  %v8223 = vmax.f32 %v7943, %v8102
  %v8224 = vmax.f32 %v7944, %v8104
  %v8225 = vmax.f32 %v7945, %v8106
  %v8226 = vmax.f32 %v7946, %v8108
  %v8227 = vmax.f32 %v7947, %v8110
  %v8228 = vmax.f32 %v7948, %v8112
  %v8229 = vmax.f32 %v7949, %v8114
  %v8230 = vmax.f32 %v7950, %v8116
  %v8231 = vmax.f32 %v7951, %v8118
  %v8232 = vmax.f32 %v7952, %v8120
  %v8233 = vld [vmem:[%s6] sm:$0xff]
  %v8234 = vld [vmem:[%s6 + $0x8] sm:$0xff]
  %v8235 = vld [vmem:[%s6 + $0x10] sm:$0xff]
  %v8236 = vld [vmem:[%s6 + $0x18] sm:$0xff]
  %v8237 = vld [vmem:[%s6 + $0x20] sm:$0xff]
  %v8238 = vld [vmem:[%s6 + $0x28] sm:$0xff]
  %v8239 = vld [vmem:[%s6 + $0x30] sm:$0xff]
  %v8240 = vld [vmem:[%s6 + $0x38] sm:$0xff]
  %v8241 = vld [vmem:[%s6 + $0x40] sm:$0xff]
  %v8242 = vld [vmem:[%s6 + $0x48] sm:$0xff]
  %v8243 = vld [vmem:[%s6 + $0x50] sm:$0xff]
  %v8244 = vld [vmem:[%s6 + $0x58] sm:$0xff]
  %v8245 = vld [vmem:[%s6 + $0x60] sm:$0xff]
  %v8246 = vld [vmem:[%s6 + $0x68] sm:$0x7f]
  %v8248 = vsel %vm2532, %v8177, 0
  %v8251 = vsel %vm2532, %v8178, 0
  %v8254 = vsel %vm2532, %v8179, 0
  %v8257 = vsel %vm2532, %v8180, 0
  %v8260 = vsel %vm2532, %v8181, 0
  %v8263 = vsel %vm2532, %v8182, 0
  %v8266 = vsel %vm2532, %v8183, 0
  %v8269 = vsel %vm2532, %v8184, 0
  %v8272 = vsel %vm2532, %v8185, 0
  %v8275 = vsel %vm2532, %v8186, 0
  %v8278 = vsel %vm2532, %v8187, 0
  %v8281 = vsel %vm2532, %v8188, 0
  %v8284 = vsel %vm2532, %v8189, 0
  %v8287 = vsel %vm2532, %v8190, 0
  %v8290 = vsel %vm2532, %v8191, 0
  %v8293 = vsel %vm2532, %v8192, 0
  %v8296 = vsel %vm2532, %v8193, 0
  %v8299 = vsel %vm2532, %v8194, 0
  %v8302 = vsel %vm2532, %v8195, 0
  %v8305 = vsel %vm2532, %v8196, 0
  %v8308 = vsel %vm2532, %v8197, 0
  %v8311 = vsel %vm2532, %v8198, 0
  %v8314 = vsel %vm2532, %v8199, 0
  %v8317 = vsel %vm2532, %v8200, 0
  %v8320 = vsel %vm2532, %v8201, 0
  %v8323 = vsel %vm2532, %v8202, 0
  %v8326 = vsel %vm2532, %v8203, 0
  %v8329 = vsel %vm2532, %v8204, 0
  %v8332 = vsel %vm2532, %v8205, 0
  %v8335 = vsel %vm2532, %v8206, 0
  %v8338 = vsel %vm2532, %v8207, 0
  %v8341 = vsel %vm2532, %v8208, 0
  %v8344 = vsel %vm2532, %v8209, 0
  %v8347 = vsel %vm2532, %v8210, 0
  %v8350 = vsel %vm2532, %v8211, 0
  %v8353 = vsel %vm2532, %v8212, 0
  %v8356 = vsel %vm2532, %v8213, 0
  %v8359 = vsel %vm2532, %v8214, 0
  %v8362 = vsel %vm2532, %v8215, 0
  %v8365 = vsel %vm2532, %v8216, 0
  %v8368 = vsel %vm2532, %v8217, 0
  %v8371 = vsel %vm2532, %v8218, 0
  %v8374 = vsel %vm2532, %v8219, 0
  %v8377 = vsel %vm2532, %v8220, 0
  %v8380 = vsel %vm2532, %v8221, 0
  %v8383 = vsel %vm2532, %v8222, 0
  %v8386 = vsel %vm2532, %v8223, 0
  %v8389 = vsel %vm2532, %v8224, 0
  %v8392 = vsel %vm2532, %v8225, 0
  %v8395 = vsel %vm2532, %v8226, 0
  %v8398 = vsel %vm2532, %v8227, 0
  %v8401 = vsel %vm2532, %v8228, 0
  %v8404 = vsel %vm2532, %v8229, 0
  %v8407 = vsel %vm2532, %v8230, 0
  %v8410 = vsel %vm2532, %v8231, 0
  %v8413 = vsel %vm2532, %v8232, 0
  %v8416 = vsel %vm2602, %v8246, 0
  %8418 = vmatprep.subr.mxu0 0.0
  %8419 = vmatpush1.msra.mxu0 %v8233
  %8420 = vmatprep.subr.mxu0 0.0
  %8421 = vmatpush1.msra.mxu0 %v8234
  %8422 = vmatprep.subr.mxu0 0.0
  %8423 = vmatpush1.msra.mxu0 %v8235
  %8424 = vmatprep.subr.mxu0 0.0
  %8425 = vmatpush1.msra.mxu0 %v8236
  %8426 = vmatprep.subr.mxu0 0.0
  %8427 = vmatpush1.msra.mxu0 %v8237
  %8428 = vmatprep.subr.mxu0 0.0
  %8429 = vmatpush1.msra.mxu0 %v8238
  %8430 = vmatprep.subr.mxu0 0.0
  %8431 = vmatpush1.msra.mxu0 %v8239
  %8432 = vmatprep.subr.mxu0 0.0
  %8433 = vmatpush1.msra.mxu0 %v8240
  %8434 = vmatprep.subr.mxu0 0.0
  %8435 = vmatpush1.msra.mxu0 %v8241
  %8436 = vmatprep.subr.mxu0 0.0
  %8437 = vmatpush1.msra.mxu0 %v8242
  %8438 = vmatprep.subr.mxu0 0.0
  %8439 = vmatpush1.msra.mxu0 %v8243
  %8440 = vmatprep.subr.mxu0 0.0
  %8441 = vmatpush1.msra.mxu0 %v8244
  %8442 = vmatprep.subr.mxu0 0.0
  %8443 = vmatpush1.msra.mxu0 %v8245
  %8444 = vmatprep.subr.mxu0 0.0
  %8445 = vmatpush1.msra.mxu0 %v8416
  %8446 = vmatprep.subr.mxu0 0.0
  %8447 = vmatpush1.msra.mxu0 0.0
  %8448 = vmatprep.subr.mxu0 0.0
  %8449 = vmatpush1.msra.mxu0 0.0
  %8450 = vmatprep.subr.mxu0 0.0
  %8451 = vmatpush1.msra.mxu0 0.0
  %8452 = vmatprep.subr.mxu0 0.0
  %8453 = vmatpush1.msra.mxu0 0.0
  %8454 = vmatprep.subr.mxu0 0.0
  %8455 = vmatpush1.msra.mxu0 0.0
  %8456 = vmatprep.subr.mxu0 0.0
  %8457 = vmatpush1.msra.mxu0 0.0
  %8458 = vmatprep.subr.mxu0 0.0
  %8459 = vmatpush1.msra.mxu0 0.0
  %8460 = vmatprep.subr.mxu0 0.0
  %8461 = vmatpush1.msra.mxu0 0.0
  %8462 = vmatprep.subr.mxu0 0.0
  %8463 = vmatpush1.msra.mxu0 0.0
  %8464 = vmatprep.subr.mxu0 0.0
  %8465 = vmatpush1.msra.mxu0 0.0
  %8466 = vmatprep.subr.mxu0 0.0
  %8467 = vmatpush1.msra.mxu0 0.0
  %8468 = vmatprep.subr.mxu0 0.0
  %8469 = vmatpush1.msra.mxu0 0.0
  %8470 = vmatprep.subr.mxu0 0.0
  %8471 = vmatpush1.msra.mxu0 0.0
  %8472 = vmatprep.subr.mxu0 0.0
  %8473 = vmatpush1.msra.mxu0 0.0
  %8474 = vmatprep.subr.mxu0 0.0
  %8475 = vmatpush1.msra.mxu0 0.0
  %8476 = vmatprep.subr.mxu0 0.0
  %8477 = vmatpush1.msra.mxu0 0.0
  %8478 = vmatprep.subr.mxu0 0.0
  %8479 = vmatpush1.msra.mxu0 0.0
  %8480 = vmatprep.subr.mxu0 0.0
  %8481 = vmatpush1.msra.mxu0 0.0
  %8482 = vmatprep.mubr.f32.mxu0 0.0
  %8483 = vmatmul.mubr.f32.gmra.mrb[0].mxu0 %v8248
  %v8484 = vpop.f32.mrb[0].mxu0
  %v8485 = vadd.f32 0.0, %v8484
  %v8486 = vpop.f32.mrb[0].mxu0
  %8487 = vmatprep.mubr.f32.mxu0 0.0
  %8488 = vmatmul.mubr.f32.gmra.mrb[0].mxu0 %v8251
  %v8489 = vpop.f32.mrb[0].mxu0
  %v8490 = vadd.f32 0.0, %v8489
  %v8491 = vpop.f32.mrb[0].mxu0
  %8492 = vmatprep.mubr.f32.mxu0 0.0
  %8493 = vmatmul.mubr.f32.gmra.mrb[0].mxu0 %v8254
  %v8494 = vpop.f32.mrb[0].mxu0
  %v8495 = vadd.f32 0.0, %v8494
  %v8496 = vpop.f32.mrb[0].mxu0
  %8497 = vmatprep.mubr.f32.mxu0 0.0
  %8498 = vmatmul.mubr.f32.gmra.mrb[0].mxu0 %v8257
  %v8499 = vpop.f32.mrb[0].mxu0
  %v8500 = vadd.f32 0.0, %v8499
  %v8501 = vpop.f32.mrb[0].mxu0
  %8502 = vmatprep.mubr.f32.mxu0 0.0
  %8503 = vmatmul.mubr.f32.gmra.mrb[0].mxu0 %v8260
  %v8504 = vpop.f32.mrb[0].mxu0
  %v8505 = vadd.f32 0.0, %v8504
  %v8506 = vpop.f32.mrb[0].mxu0
  %8507 = vmatprep.mubr.f32.mxu0 0.0
  %8508 = vmatmul.mubr.f32.gmra.mrb[0].mxu0 %v8263
  %v8509 = vpop.f32.mrb[0].mxu0
  %v8510 = vadd.f32 0.0, %v8509
  %v8511 = vpop.f32.mrb[0].mxu0
  %8512 = vmatprep.mubr.f32.mxu0 0.0
  %8513 = vmatmul.mubr.f32.gmra.mrb[0].mxu0 %v8266
  %v8514 = vpop.f32.mrb[0].mxu0
  %v8515 = vadd.f32 0.0, %v8514
  %v8516 = vpop.f32.mrb[0].mxu0
  %8517 = vmatprep.mubr.f32.mxu0 0.0
  %8518 = vmatmul.mubr.f32.gmra.mrb[0].mxu0 %v8269
  %v8519 = vpop.f32.mrb[0].mxu0
  %v8520 = vadd.f32 0.0, %v8519
  %v8521 = vpop.f32.mrb[0].mxu0
  %8522 = vmatprep.mubr.f32.mxu0 0.0
  %8523 = vmatmul.mubr.f32.gmra.mrb[0].mxu0 %v8272
  %v8524 = vpop.f32.mrb[0].mxu0
  %v8525 = vadd.f32 0.0, %v8524
  %v8526 = vpop.f32.mrb[0].mxu0
  %8527 = vmatprep.mubr.f32.mxu0 0.0
  %8528 = vmatmul.mubr.f32.gmra.mrb[0].mxu0 %v8275
  %v8529 = vpop.f32.mrb[0].mxu0
  %v8530 = vadd.f32 0.0, %v8529
  %v8531 = vpop.f32.mrb[0].mxu0
  %8532 = vmatprep.mubr.f32.mxu0 0.0
  %8533 = vmatmul.mubr.f32.gmra.mrb[0].mxu0 %v8278
  %v8534 = vpop.f32.mrb[0].mxu0
  %v8535 = vadd.f32 0.0, %v8534
  %v8536 = vpop.f32.mrb[0].mxu0
  %8537 = vmatprep.mubr.f32.mxu0 0.0
  %8538 = vmatmul.mubr.f32.gmra.mrb[0].mxu0 %v8281
  %v8539 = vpop.f32.mrb[0].mxu0
  %v8540 = vadd.f32 0.0, %v8539
  %v8541 = vpop.f32.mrb[0].mxu0
  %8542 = vmatprep.mubr.f32.mxu0 0.0
  %8543 = vmatmul.mubr.f32.gmra.mrb[0].mxu0 %v8284
  %v8544 = vpop.f32.mrb[0].mxu0
  %v8545 = vadd.f32 0.0, %v8544
  %v8546 = vpop.f32.mrb[0].mxu0
  %8547 = vmatprep.mubr.f32.mxu0 0.0
  %8548 = vmatmul.mubr.f32.gmra.mrb[0].mxu0 %v8287
  %v8549 = vpop.f32.mrb[0].mxu0
  %v8550 = vadd.f32 0.0, %v8549
  %v8551 = vpop.f32.mrb[0].mxu0
  %8552 = vmatprep.mubr.f32.mxu0 0.0
  %8553 = vmatmul.mubr.f32.gmra.mrb[0].mxu0 %v8290
  %v8554 = vpop.f32.mrb[0].mxu0
  %v8555 = vadd.f32 0.0, %v8554
  %v8556 = vpop.f32.mrb[0].mxu0
  %8557 = vmatprep.mubr.f32.mxu0 0.0
  %8558 = vmatmul.mubr.f32.gmra.mrb[0].mxu0 %v8293
  %v8559 = vpop.f32.mrb[0].mxu0
  %v8560 = vadd.f32 0.0, %v8559
  %v8561 = vpop.f32.mrb[0].mxu0
  %8562 = vmatprep.mubr.f32.mxu0 0.0
  %8563 = vmatmul.mubr.f32.gmra.mrb[0].mxu0 %v8296
  %v8564 = vpop.f32.mrb[0].mxu0
  %v8565 = vadd.f32 0.0, %v8564
  %v8566 = vpop.f32.mrb[0].mxu0
  %8567 = vmatprep.mubr.f32.mxu0 0.0
  %8568 = vmatmul.mubr.f32.gmra.mrb[0].mxu0 %v8299
  %v8569 = vpop.f32.mrb[0].mxu0
  %v8570 = vadd.f32 0.0, %v8569
  %v8571 = vpop.f32.mrb[0].mxu0
  %8572 = vmatprep.mubr.f32.mxu0 0.0
  %8573 = vmatmul.mubr.f32.gmra.mrb[0].mxu0 %v8302
  %v8574 = vpop.f32.mrb[0].mxu0
  %v8575 = vadd.f32 0.0, %v8574
  %v8576 = vpop.f32.mrb[0].mxu0
  %8577 = vmatprep.mubr.f32.mxu0 0.0
  %8578 = vmatmul.mubr.f32.gmra.mrb[0].mxu0 %v8305
  %v8579 = vpop.f32.mrb[0].mxu0
  %v8580 = vadd.f32 0.0, %v8579
  %v8581 = vpop.f32.mrb[0].mxu0
  %8582 = vmatprep.mubr.f32.mxu0 0.0
  %8583 = vmatmul.mubr.f32.gmra.mrb[0].mxu0 %v8308
  %v8584 = vpop.f32.mrb[0].mxu0
  %v8585 = vadd.f32 0.0, %v8584
  %v8586 = vpop.f32.mrb[0].mxu0
  %8587 = vmatprep.mubr.f32.mxu0 0.0
  %8588 = vmatmul.mubr.f32.gmra.mrb[0].mxu0 %v8311
  %v8589 = vpop.f32.mrb[0].mxu0
  %v8590 = vadd.f32 0.0, %v8589
  %v8591 = vpop.f32.mrb[0].mxu0
  %8592 = vmatprep.mubr.f32.mxu0 0.0
  %8593 = vmatmul.mubr.f32.gmra.mrb[0].mxu0 %v8314
  %v8594 = vpop.f32.mrb[0].mxu0
  %v8595 = vadd.f32 0.0, %v8594
  %v8596 = vpop.f32.mrb[0].mxu0
  %8597 = vmatprep.mubr.f32.mxu0 0.0
  %8598 = vmatmul.mubr.f32.gmra.mrb[0].mxu0 %v8317
  %v8599 = vpop.f32.mrb[0].mxu0
  %v8600 = vadd.f32 0.0, %v8599
  %v8601 = vpop.f32.mrb[0].mxu0
  %8602 = vmatprep.mubr.f32.mxu0 0.0
  %8603 = vmatmul.mubr.f32.gmra.mrb[0].mxu0 %v8320
  %v8604 = vpop.f32.mrb[0].mxu0
  %v8605 = vadd.f32 0.0, %v8604
  %v8606 = vpop.f32.mrb[0].mxu0
  %8607 = vmatprep.mubr.f32.mxu0 0.0
  %8608 = vmatmul.mubr.f32.gmra.mrb[0].mxu0 %v8323
  %v8609 = vpop.f32.mrb[0].mxu0
  %v8610 = vadd.f32 0.0, %v8609
  %v8611 = vpop.f32.mrb[0].mxu0
  %8612 = vmatprep.mubr.f32.mxu0 0.0
  %8613 = vmatmul.mubr.f32.gmra.mrb[0].mxu0 %v8326
  %v8614 = vpop.f32.mrb[0].mxu0
  %v8615 = vadd.f32 0.0, %v8614
  %v8616 = vpop.f32.mrb[0].mxu0
  %8617 = vmatprep.mubr.f32.mxu0 0.0
  %8618 = vmatmul.mubr.f32.gmra.mrb[0].mxu0 %v8329
  %v8619 = vpop.f32.mrb[0].mxu0
  %v8620 = vadd.f32 0.0, %v8619
  %v8621 = vpop.f32.mrb[0].mxu0
  %8622 = vmatprep.mubr.f32.mxu0 0.0
  %8623 = vmatmul.mubr.f32.gmra.mrb[0].mxu0 %v8332
  %v8624 = vpop.f32.mrb[0].mxu0
  %v8625 = vadd.f32 0.0, %v8624
  %v8626 = vpop.f32.mrb[0].mxu0
  %8627 = vmatprep.mubr.f32.mxu0 0.0
  %8628 = vmatmul.mubr.f32.gmra.mrb[0].mxu0 %v8335
  %v8629 = vpop.f32.mrb[0].mxu0
  %v8630 = vadd.f32 0.0, %v8629
  %v8631 = vpop.f32.mrb[0].mxu0
  %8632 = vmatprep.mubr.f32.mxu0 0.0
  %8633 = vmatmul.mubr.f32.gmra.mrb[0].mxu0 %v8338
  %v8634 = vpop.f32.mrb[0].mxu0
  %v8635 = vadd.f32 0.0, %v8634
  %v8636 = vpop.f32.mrb[0].mxu0
  %8637 = vmatprep.mubr.f32.mxu0 0.0
  %8638 = vmatmul.mubr.f32.gmra.mrb[0].mxu0 %v8341
  %v8639 = vpop.f32.mrb[0].mxu0
  %v8640 = vadd.f32 0.0, %v8639
  %v8641 = vpop.f32.mrb[0].mxu0
  %8642 = vmatprep.mubr.f32.mxu0 0.0
  %8643 = vmatmul.mubr.f32.gmra.mrb[0].mxu0 %v8344
  %v8644 = vpop.f32.mrb[0].mxu0
  %v8645 = vadd.f32 0.0, %v8644
  %v8646 = vpop.f32.mrb[0].mxu0
  %8647 = vmatprep.mubr.f32.mxu0 0.0
  %8648 = vmatmul.mubr.f32.gmra.mrb[0].mxu0 %v8347
  %v8649 = vpop.f32.mrb[0].mxu0
  %v8650 = vadd.f32 0.0, %v8649
  %v8651 = vpop.f32.mrb[0].mxu0
  %8652 = vmatprep.mubr.f32.mxu0 0.0
  %8653 = vmatmul.mubr.f32.gmra.mrb[0].mxu0 %v8350
  %v8654 = vpop.f32.mrb[0].mxu0
  %v8655 = vadd.f32 0.0, %v8654
  %v8656 = vpop.f32.mrb[0].mxu0
  %8657 = vmatprep.mubr.f32.mxu0 0.0
  %8658 = vmatmul.mubr.f32.gmra.mrb[0].mxu0 %v8353
  %v8659 = vpop.f32.mrb[0].mxu0
  %v8660 = vadd.f32 0.0, %v8659
  %v8661 = vpop.f32.mrb[0].mxu0
  %8662 = vmatprep.mubr.f32.mxu0 0.0
  %8663 = vmatmul.mubr.f32.gmra.mrb[0].mxu0 %v8356
  %v8664 = vpop.f32.mrb[0].mxu0
  %v8665 = vadd.f32 0.0, %v8664
  %v8666 = vpop.f32.mrb[0].mxu0
  %8667 = vmatprep.mubr.f32.mxu0 0.0
  %8668 = vmatmul.mubr.f32.gmra.mrb[0].mxu0 %v8359
  %v8669 = vpop.f32.mrb[0].mxu0
  %v8670 = vadd.f32 0.0, %v8669
  %v8671 = vpop.f32.mrb[0].mxu0
  %8672 = vmatprep.mubr.f32.mxu0 0.0
  %8673 = vmatmul.mubr.f32.gmra.mrb[0].mxu0 %v8362
  %v8674 = vpop.f32.mrb[0].mxu0
  %v8675 = vadd.f32 0.0, %v8674
  %v8676 = vpop.f32.mrb[0].mxu0
  %8677 = vmatprep.mubr.f32.mxu0 0.0
  %8678 = vmatmul.mubr.f32.gmra.mrb[0].mxu0 %v8365
  %v8679 = vpop.f32.mrb[0].mxu0
  %v8680 = vadd.f32 0.0, %v8679
  %v8681 = vpop.f32.mrb[0].mxu0
  %8682 = vmatprep.mubr.f32.mxu0 0.0
  %8683 = vmatmul.mubr.f32.gmra.mrb[0].mxu0 %v8368
  %v8684 = vpop.f32.mrb[0].mxu0
  %v8685 = vadd.f32 0.0, %v8684
  %v8686 = vpop.f32.mrb[0].mxu0
  %8687 = vmatprep.mubr.f32.mxu0 0.0
  %8688 = vmatmul.mubr.f32.gmra.mrb[0].mxu0 %v8371
  %v8689 = vpop.f32.mrb[0].mxu0
  %v8690 = vadd.f32 0.0, %v8689
  %v8691 = vpop.f32.mrb[0].mxu0
  %8692 = vmatprep.mubr.f32.mxu0 0.0
  %8693 = vmatmul.mubr.f32.gmra.mrb[0].mxu0 %v8374
  %v8694 = vpop.f32.mrb[0].mxu0
  %v8695 = vadd.f32 0.0, %v8694
  %v8696 = vpop.f32.mrb[0].mxu0
  %8697 = vmatprep.mubr.f32.mxu0 0.0
  %8698 = vmatmul.mubr.f32.gmra.mrb[0].mxu0 %v8377
  %v8699 = vpop.f32.mrb[0].mxu0
  %v8700 = vadd.f32 0.0, %v8699
  %v8701 = vpop.f32.mrb[0].mxu0
  %8702 = vmatprep.mubr.f32.mxu0 0.0
  %8703 = vmatmul.mubr.f32.gmra.mrb[0].mxu0 %v8380
  %v8704 = vpop.f32.mrb[0].mxu0
  %v8705 = vadd.f32 0.0, %v8704
  %v8706 = vpop.f32.mrb[0].mxu0
  %8707 = vmatprep.mubr.f32.mxu0 0.0
  %8708 = vmatmul.mubr.f32.gmra.mrb[0].mxu0 %v8383
  %v8709 = vpop.f32.mrb[0].mxu0
  %v8710 = vadd.f32 0.0, %v8709
  %v8711 = vpop.f32.mrb[0].mxu0
  %8712 = vmatprep.mubr.f32.mxu0 0.0
  %8713 = vmatmul.mubr.f32.gmra.mrb[0].mxu0 %v8386
  %v8714 = vpop.f32.mrb[0].mxu0
  %v8715 = vadd.f32 0.0, %v8714
  %v8716 = vpop.f32.mrb[0].mxu0
  %8717 = vmatprep.mubr.f32.mxu0 0.0
  %8718 = vmatmul.mubr.f32.gmra.mrb[0].mxu0 %v8389
  %v8719 = vpop.f32.mrb[0].mxu0
  %v8720 = vadd.f32 0.0, %v8719
  %v8721 = vpop.f32.mrb[0].mxu0
  %8722 = vmatprep.mubr.f32.mxu0 0.0
  %8723 = vmatmul.mubr.f32.gmra.mrb[0].mxu0 %v8392
  %v8724 = vpop.f32.mrb[0].mxu0
  %v8725 = vadd.f32 0.0, %v8724
  %v8726 = vpop.f32.mrb[0].mxu0
  %8727 = vmatprep.mubr.f32.mxu0 0.0
  %8728 = vmatmul.mubr.f32.gmra.mrb[0].mxu0 %v8395
  %v8729 = vpop.f32.mrb[0].mxu0
  %v8730 = vadd.f32 0.0, %v8729
  %v8731 = vpop.f32.mrb[0].mxu0
  %8732 = vmatprep.mubr.f32.mxu0 0.0
  %8733 = vmatmul.mubr.f32.gmra.mrb[0].mxu0 %v8398
  %v8734 = vpop.f32.mrb[0].mxu0
  %v8735 = vadd.f32 0.0, %v8734
  %v8736 = vpop.f32.mrb[0].mxu0
  %8737 = vmatprep.mubr.f32.mxu0 0.0
  %8738 = vmatmul.mubr.f32.gmra.mrb[0].mxu0 %v8401
  %v8739 = vpop.f32.mrb[0].mxu0
  %v8740 = vadd.f32 0.0, %v8739
  %v8741 = vpop.f32.mrb[0].mxu0
  %8742 = vmatprep.mubr.f32.mxu0 0.0
  %8743 = vmatmul.mubr.f32.gmra.mrb[0].mxu0 %v8404
  %v8744 = vpop.f32.mrb[0].mxu0
  %v8745 = vadd.f32 0.0, %v8744
  %v8746 = vpop.f32.mrb[0].mxu0
  %8747 = vmatprep.mubr.f32.mxu0 0.0
  %8748 = vmatmul.mubr.f32.gmra.mrb[0].mxu0 %v8407
  %v8749 = vpop.f32.mrb[0].mxu0
  %v8750 = vadd.f32 0.0, %v8749
  %v8751 = vpop.f32.mrb[0].mxu0
  %8752 = vmatprep.mubr.f32.mxu0 0.0
  %8753 = vmatmul.mubr.f32.gmra.mrb[0].mxu0 %v8410
  %v8754 = vpop.f32.mrb[0].mxu0
  %v8755 = vadd.f32 0.0, %v8754
  %v8756 = vpop.f32.mrb[0].mxu0
  %8757 = vmatprep.mubr.f32.mxu0 0.0
  %8758 = vmatmul.mubr.f32.gmra.mrb[0].mxu0 %v8413
  %v8759 = vpop.f32.mrb[0].mxu0
  %v8760 = vadd.f32 0.0, %v8759
  %v8761 = vpop.f32.mrb[0].mxu0
  %8762 = vdwg.mxu0
  %v8763 = vld [vmem:[%s7] sm:$0xff]
  %v8764 = vld [vmem:[%s7 + $0x8] sm:$0xff]
  %v8765 = vld [vmem:[%s7 + $0x10] sm:$0xff]
  %v8766 = vld [vmem:[%s7 + $0x18] sm:$0xff]
  %v8767 = vld [vmem:[%s7 + $0x20] sm:$0xff]
  %v8768 = vld [vmem:[%s7 + $0x28] sm:$0xff]
  %v8769 = vld [vmem:[%s7 + $0x30] sm:$0xff]
  %v8770 = vld [vmem:[%s7 + $0x38] sm:$0xff]
  %v8771 = vld [vmem:[%s7 + $0x40] sm:$0xff]
  %v8772 = vld [vmem:[%s7 + $0x48] sm:$0xff]
  %v8773 = vld [vmem:[%s7 + $0x50] sm:$0xff]
  %v8774 = vld [vmem:[%s7 + $0x58] sm:$0xff]
  %v8775 = vld [vmem:[%s7 + $0x60] sm:$0xff]
  %v8776 = vld [vmem:[%s7 + $0x68] sm:$0xff]
  %v8777 = vld [vmem:[%s7 + $0x70] sm:$0xff]
  %v8778 = vld [vmem:[%s7 + $0x78] sm:$0xff]
  %v8779 = vld [vmem:[%s7 + $0x80] sm:$0xff]
  %v8780 = vld [vmem:[%s7 + $0x88] sm:$0xff]
  %v8781 = vld [vmem:[%s7 + $0x90] sm:$0xff]
  %v8782 = vld [vmem:[%s7 + $0x98] sm:$0xff]
  %v8783 = vld [vmem:[%s7 + $0xa0] sm:$0xff]
  %v8784 = vld [vmem:[%s7 + $0xa8] sm:$0xff]
  %v8785 = vld [vmem:[%s7 + $0xb0] sm:$0xff]
  %v8786 = vld [vmem:[%s7 + $0xb8] sm:$0xff]
  %v8787 = vld [vmem:[%s7 + $0xc0] sm:$0xff]
  %v8788 = vld [vmem:[%s7 + $0xc8] sm:$0xff]
  %v8789 = vld [vmem:[%s7 + $0xd0] sm:$0xff]
  %v8790 = vld [vmem:[%s7 + $0xd8] sm:$0xff]
  %v8791 = vld [vmem:[%s7 + $0xe0] sm:$0xff]
  %v8792 = vld [vmem:[%s7 + $0xe8] sm:$0xff]
  %v8793 = vld [vmem:[%s7 + $0xf0] sm:$0xff]
  %v8794 = vld [vmem:[%s7 + $0xf8] sm:$0xff]
  %v8795 = vld [vmem:[%s7 + $0x100] sm:$0xff]
  %v8796 = vld [vmem:[%s7 + $0x108] sm:$0xff]
  %v8797 = vld [vmem:[%s7 + $0x110] sm:$0xff]
  %v8798 = vld [vmem:[%s7 + $0x118] sm:$0xff]
  %v8799 = vld [vmem:[%s7 + $0x120] sm:$0xff]
  %v8800 = vld [vmem:[%s7 + $0x128] sm:$0xff]
  %v8801 = vld [vmem:[%s7 + $0x130] sm:$0xff]
  %v8802 = vld [vmem:[%s7 + $0x138] sm:$0xff]
  %v8803 = vld [vmem:[%s7 + $0x140] sm:$0xff]
  %v8804 = vld [vmem:[%s7 + $0x148] sm:$0xff]
  %v8805 = vld [vmem:[%s7 + $0x150] sm:$0xff]
  %v8806 = vld [vmem:[%s7 + $0x158] sm:$0xff]
  %v8807 = vld [vmem:[%s7 + $0x160] sm:$0xff]
  %v8808 = vld [vmem:[%s7 + $0x168] sm:$0xff]
  %v8809 = vld [vmem:[%s7 + $0x170] sm:$0xff]
  %v8810 = vld [vmem:[%s7 + $0x178] sm:$0xff]
  %v8811 = vld [vmem:[%s7 + $0x180] sm:$0xff]
  %v8812 = vld [vmem:[%s7 + $0x188] sm:$0xff]
  %v8813 = vld [vmem:[%s7 + $0x190] sm:$0xff]
  %v8814 = vld [vmem:[%s7 + $0x198] sm:$0xff]
  %v8815 = vld [vmem:[%s7 + $0x1a0] sm:$0xff]
  %v8816 = vld [vmem:[%s7 + $0x1a8] sm:$0xff]
  %v8817 = vld [vmem:[%s7 + $0x1b0] sm:$0xff]
  %v8818 = vld [vmem:[%s7 + $0x1b8] sm:$0xff]
  %v8819 = vmul.f32 %v8485, %v8763
  %v8820 = vmul.f32 %v8490, %v8764
  %v8821 = vmul.f32 %v8495, %v8765
  %v8822 = vmul.f32 %v8500, %v8766
  %v8823 = vmul.f32 %v8505, %v8767
  %v8824 = vmul.f32 %v8510, %v8768
  %v8825 = vmul.f32 %v8515, %v8769
  %v8826 = vmul.f32 %v8520, %v8770
  %v8827 = vmul.f32 %v8525, %v8771
  %v8828 = vmul.f32 %v8530, %v8772
  %v8829 = vmul.f32 %v8535, %v8773
  %v8830 = vmul.f32 %v8540, %v8774
  %v8831 = vmul.f32 %v8545, %v8775
  %v8832 = vmul.f32 %v8550, %v8776
  %v8833 = vmul.f32 %v8555, %v8777
  %v8834 = vmul.f32 %v8560, %v8778
  %v8835 = vmul.f32 %v8565, %v8779
  %v8836 = vmul.f32 %v8570, %v8780
  %v8837 = vmul.f32 %v8575, %v8781
  %v8838 = vmul.f32 %v8580, %v8782
  %v8839 = vmul.f32 %v8585, %v8783
  %v8840 = vmul.f32 %v8590, %v8784
  %v8841 = vmul.f32 %v8595, %v8785
  %v8842 = vmul.f32 %v8600, %v8786
  %v8843 = vmul.f32 %v8605, %v8787
  %v8844 = vmul.f32 %v8610, %v8788
  %v8845 = vmul.f32 %v8615, %v8789
  %v8846 = vmul.f32 %v8620, %v8790
  %v8847 = vmul.f32 %v8625, %v8791
  %v8848 = vmul.f32 %v8630, %v8792
  %v8849 = vmul.f32 %v8635, %v8793
  %v8850 = vmul.f32 %v8640, %v8794
  %v8851 = vmul.f32 %v8645, %v8795
  %v8852 = vmul.f32 %v8650, %v8796
  %v8853 = vmul.f32 %v8655, %v8797
  %v8854 = vmul.f32 %v8660, %v8798
  %v8855 = vmul.f32 %v8665, %v8799
  %v8856 = vmul.f32 %v8670, %v8800
  %v8857 = vmul.f32 %v8675, %v8801
  %v8858 = vmul.f32 %v8680, %v8802
  %v8859 = vmul.f32 %v8685, %v8803
  %v8860 = vmul.f32 %v8690, %v8804
  %v8861 = vmul.f32 %v8695, %v8805
  %v8862 = vmul.f32 %v8700, %v8806
  %v8863 = vmul.f32 %v8705, %v8807
  %v8864 = vmul.f32 %v8710, %v8808
  %v8865 = vmul.f32 %v8715, %v8809
  %v8866 = vmul.f32 %v8720, %v8810
  %v8867 = vmul.f32 %v8725, %v8811
  %v8868 = vmul.f32 %v8730, %v8812
  %v8869 = vmul.f32 %v8735, %v8813
  %v8870 = vmul.f32 %v8740, %v8814
  %v8871 = vmul.f32 %v8745, %v8815
  %v8872 = vmul.f32 %v8750, %v8816
  %v8873 = vmul.f32 %v8755, %v8817
  %v8874 = vmul.f32 %v8760, %v8818
  %v8875 = vld [vmem:[%s8] sm:$0xff]
  %v8876 = vld [vmem:[%s8 + $0x8] sm:$0xff]
  %v8877 = vld [vmem:[%s8 + $0x10] sm:$0xff]
  %v8878 = vld [vmem:[%s8 + $0x18] sm:$0xff]
  %v8879 = vld [vmem:[%s8 + $0x20] sm:$0xff]
  %v8880 = vld [vmem:[%s8 + $0x28] sm:$0xff]
  %v8881 = vld [vmem:[%s8 + $0x30] sm:$0xff]
  %v8883 = vsel %vm3040, %v8819, 0
  %v8886 = vsel %vm3040, %v8820, 0
  %v8889 = vsel %vm3040, %v8821, 0
  %v8892 = vsel %vm3040, %v8822, 0
  %v8895 = vsel %vm3040, %v8823, 0
  %v8898 = vsel %vm3040, %v8824, 0
  %v8901 = vsel %vm3040, %v8825, 0
  %v8904 = vsel %vm3040, %v8826, 0
  %v8907 = vsel %vm3040, %v8827, 0
  %v8910 = vsel %vm3040, %v8828, 0
  %v8913 = vsel %vm3040, %v8829, 0
  %v8916 = vsel %vm3040, %v8830, 0
  %v8919 = vsel %vm3040, %v8831, 0
  %v8922 = vsel %vm3040, %v8832, 0
  %v8925 = vsel %vm3040, %v8833, 0
  %v8928 = vsel %vm3040, %v8834, 0
  %v8931 = vsel %vm3040, %v8835, 0
  %v8934 = vsel %vm3040, %v8836, 0
  %v8937 = vsel %vm3040, %v8837, 0
  %v8940 = vsel %vm3040, %v8838, 0
  %v8943 = vsel %vm3040, %v8839, 0
  %v8946 = vsel %vm3040, %v8840, 0
  %v8949 = vsel %vm3040, %v8841, 0
  %v8952 = vsel %vm3040, %v8842, 0
  %v8955 = vsel %vm3040, %v8843, 0
  %v8958 = vsel %vm3040, %v8844, 0
  %v8961 = vsel %vm3040, %v8845, 0
  %v8964 = vsel %vm3040, %v8846, 0
  %v8967 = vsel %vm3040, %v8847, 0
  %v8970 = vsel %vm3040, %v8848, 0
  %v8973 = vsel %vm3040, %v8849, 0
  %v8976 = vsel %vm3040, %v8850, 0
  %v8979 = vsel %vm3040, %v8851, 0
  %v8982 = vsel %vm3040, %v8852, 0
  %v8985 = vsel %vm3040, %v8853, 0
  %v8988 = vsel %vm3040, %v8854, 0
  %v8991 = vsel %vm3040, %v8855, 0
  %v8994 = vsel %vm3040, %v8856, 0
  %v8997 = vsel %vm3040, %v8857, 0
  %v9000 = vsel %vm3040, %v8858, 0
  %v9003 = vsel %vm3040, %v8859, 0
  %v9006 = vsel %vm3040, %v8860, 0
  %v9009 = vsel %vm3040, %v8861, 0
  %v9012 = vsel %vm3040, %v8862, 0
  %v9015 = vsel %vm3040, %v8863, 0
  %v9018 = vsel %vm3040, %v8864, 0
  %v9021 = vsel %vm3040, %v8865, 0
  %v9024 = vsel %vm3040, %v8866, 0
  %v9027 = vsel %vm3040, %v8867, 0
  %v9030 = vsel %vm3040, %v8868, 0
  %v9033 = vsel %vm3040, %v8869, 0
  %v9036 = vsel %vm3040, %v8870, 0
  %v9039 = vsel %vm3040, %v8871, 0
  %v9042 = vsel %vm3040, %v8872, 0
  %v9045 = vsel %vm3040, %v8873, 0
  %v9048 = vsel %vm3040, %v8874, 0
  %9050 = vmatprep.subr.mxu0 0.0
  %9051 = vmatpush1.msra.mxu0 %v8875
  %9052 = vmatprep.subr.mxu0 0.0
  %9053 = vmatpush1.msra.mxu0 %v8876
  %9054 = vmatprep.subr.mxu0 0.0
  %9055 = vmatpush1.msra.mxu0 %v8877
  %9056 = vmatprep.subr.mxu0 0.0
  %9057 = vmatpush1.msra.mxu0 %v8878
  %9058 = vmatprep.subr.mxu0 0.0
  %9059 = vmatpush1.msra.mxu0 %v8879
  %9060 = vmatprep.subr.mxu0 0.0
  %9061 = vmatpush1.msra.mxu0 %v8880
  %9062 = vmatprep.subr.mxu0 0.0
  %9063 = vmatpush1.msra.mxu0 %v8881
  %9064 = vmatprep.subr.mxu0 0.0
  %9065 = vmatpush1.msra.mxu0 0.0
  %9066 = vmatprep.subr.mxu0 0.0
  %9067 = vmatpush1.msra.mxu0 0.0
  %9068 = vmatprep.subr.mxu0 0.0
  %9069 = vmatpush1.msra.mxu0 0.0
  %9070 = vmatprep.subr.mxu0 0.0
  %9071 = vmatpush1.msra.mxu0 0.0
  %9072 = vmatprep.subr.mxu0 0.0
  %9073 = vmatpush1.msra.mxu0 0.0
  %9074 = vmatprep.subr.mxu0 0.0
  %9075 = vmatpush1.msra.mxu0 0.0
  %9076 = vmatprep.subr.mxu0 0.0
  %9077 = vmatpush1.msra.mxu0 0.0
  %9078 = vmatprep.subr.mxu0 0.0
  %9079 = vmatpush1.msra.mxu0 0.0
  %9080 = vmatprep.subr.mxu0 0.0
  %9081 = vmatpush1.msra.mxu0 0.0
  %9082 = vmatprep.subr.mxu0 0.0
  %9083 = vmatpush1.msra.mxu0 0.0
  %9084 = vmatprep.subr.mxu0 0.0
  %9085 = vmatpush1.msra.mxu0 0.0
  %9086 = vmatprep.subr.mxu0 0.0
  %9087 = vmatpush1.msra.mxu0 0.0
  %9088 = vmatprep.subr.mxu0 0.0
  %9089 = vmatpush1.msra.mxu0 0.0
  %9090 = vmatprep.subr.mxu0 0.0
  %9091 = vmatpush1.msra.mxu0 0.0
  %9092 = vmatprep.subr.mxu0 0.0
  %9093 = vmatpush1.msra.mxu0 0.0
  %9094 = vmatprep.subr.mxu0 0.0
  %9095 = vmatpush1.msra.mxu0 0.0
  %9096 = vmatprep.subr.mxu0 0.0
  %9097 = vmatpush1.msra.mxu0 0.0
  %9098 = vmatprep.subr.mxu0 0.0
  %9099 = vmatpush1.msra.mxu0 0.0
  %9100 = vmatprep.subr.mxu0 0.0
  %9101 = vmatpush1.msra.mxu0 0.0
  %9102 = vmatprep.subr.mxu0 0.0
  %9103 = vmatpush1.msra.mxu0 0.0
  %9104 = vmatprep.subr.mxu0 0.0
  %9105 = vmatpush1.msra.mxu0 0.0
  %9106 = vmatprep.subr.mxu0 0.0
  %9107 = vmatpush1.msra.mxu0 0.0
  %9108 = vmatprep.subr.mxu0 0.0
  %9109 = vmatpush1.msra.mxu0 0.0
  %9110 = vmatprep.subr.mxu0 0.0
  %9111 = vmatpush1.msra.mxu0 0.0
  %9112 = vmatprep.subr.mxu0 0.0
  %9113 = vmatpush1.msra.mxu0 0.0
  %9114 = vmatprep.mubr.f32.mxu0 0.0
  %9115 = vmatmul.mubr.f32.gmra.mrb[0].mxu0 %v8883
  %v9116 = vpop.f32.mrb[0].mxu0
  %v9117 = vadd.f32 0.0, %v9116
  %v9118 = vpop.f32.mrb[0].mxu0
  %9119 = vmatprep.mubr.f32.mxu0 0.0
  %9120 = vmatmul.mubr.f32.gmra.mrb[0].mxu0 %v8886
  %v9121 = vpop.f32.mrb[0].mxu0
  %v9122 = vadd.f32 0.0, %v9121
  %v9123 = vpop.f32.mrb[0].mxu0
  %9124 = vmatprep.mubr.f32.mxu0 0.0
  %9125 = vmatmul.mubr.f32.gmra.mrb[0].mxu0 %v8889
  %v9126 = vpop.f32.mrb[0].mxu0
  %v9127 = vadd.f32 0.0, %v9126
  %v9128 = vpop.f32.mrb[0].mxu0
  %9129 = vmatprep.mubr.f32.mxu0 0.0
  %9130 = vmatmul.mubr.f32.gmra.mrb[0].mxu0 %v8892
  %v9131 = vpop.f32.mrb[0].mxu0
  %v9132 = vadd.f32 0.0, %v9131
  %v9133 = vpop.f32.mrb[0].mxu0
  %9134 = vmatprep.mubr.f32.mxu0 0.0
  %9135 = vmatmul.mubr.f32.gmra.mrb[0].mxu0 %v8895
  %v9136 = vpop.f32.mrb[0].mxu0
  %v9137 = vadd.f32 0.0, %v9136
  %v9138 = vpop.f32.mrb[0].mxu0
  %9139 = vmatprep.mubr.f32.mxu0 0.0
  %9140 = vmatmul.mubr.f32.gmra.mrb[0].mxu0 %v8898
  %v9141 = vpop.f32.mrb[0].mxu0
  %v9142 = vadd.f32 0.0, %v9141
  %v9143 = vpop.f32.mrb[0].mxu0
  %9144 = vmatprep.mubr.f32.mxu0 0.0
  %9145 = vmatmul.mubr.f32.gmra.mrb[0].mxu0 %v8901
  %v9146 = vpop.f32.mrb[0].mxu0
  %v9147 = vadd.f32 0.0, %v9146
  %v9148 = vpop.f32.mrb[0].mxu0
  %9149 = vmatprep.mubr.f32.mxu0 0.0
  %9150 = vmatmul.mubr.f32.gmra.mrb[0].mxu0 %v8904
  %v9151 = vpop.f32.mrb[0].mxu0
  %v9152 = vadd.f32 0.0, %v9151
  %v9153 = vpop.f32.mrb[0].mxu0
  %9154 = vmatprep.mubr.f32.mxu0 0.0
  %9155 = vmatmul.mubr.f32.gmra.mrb[0].mxu0 %v8907
  %v9156 = vpop.f32.mrb[0].mxu0
  %v9157 = vadd.f32 0.0, %v9156
  %v9158 = vpop.f32.mrb[0].mxu0
  %9159 = vmatprep.mubr.f32.mxu0 0.0
  %9160 = vmatmul.mubr.f32.gmra.mrb[0].mxu0 %v8910
  %v9161 = vpop.f32.mrb[0].mxu0
  %v9162 = vadd.f32 0.0, %v9161
  %v9163 = vpop.f32.mrb[0].mxu0
  %9164 = vmatprep.mubr.f32.mxu0 0.0
  %9165 = vmatmul.mubr.f32.gmra.mrb[0].mxu0 %v8913
  %v9166 = vpop.f32.mrb[0].mxu0
  %v9167 = vadd.f32 0.0, %v9166
  %v9168 = vpop.f32.mrb[0].mxu0
  %9169 = vmatprep.mubr.f32.mxu0 0.0
  %9170 = vmatmul.mubr.f32.gmra.mrb[0].mxu0 %v8916
  %v9171 = vpop.f32.mrb[0].mxu0
  %v9172 = vadd.f32 0.0, %v9171
  %v9173 = vpop.f32.mrb[0].mxu0
  %9174 = vmatprep.mubr.f32.mxu0 0.0
  %9175 = vmatmul.mubr.f32.gmra.mrb[0].mxu0 %v8919
  %v9176 = vpop.f32.mrb[0].mxu0
  %v9177 = vadd.f32 0.0, %v9176
  %v9178 = vpop.f32.mrb[0].mxu0
  %9179 = vmatprep.mubr.f32.mxu0 0.0
  %9180 = vmatmul.mubr.f32.gmra.mrb[0].mxu0 %v8922
  %v9181 = vpop.f32.mrb[0].mxu0
  %v9182 = vadd.f32 0.0, %v9181
  %v9183 = vpop.f32.mrb[0].mxu0
  %9184 = vmatprep.mubr.f32.mxu0 0.0
  %9185 = vmatmul.mubr.f32.gmra.mrb[0].mxu0 %v8925
  %v9186 = vpop.f32.mrb[0].mxu0
  %v9187 = vadd.f32 0.0, %v9186
  %v9188 = vpop.f32.mrb[0].mxu0
  %9189 = vmatprep.mubr.f32.mxu0 0.0
  %9190 = vmatmul.mubr.f32.gmra.mrb[0].mxu0 %v8928
  %v9191 = vpop.f32.mrb[0].mxu0
  %v9192 = vadd.f32 0.0, %v9191
  %v9193 = vpop.f32.mrb[0].mxu0
  %9194 = vmatprep.mubr.f32.mxu0 0.0
  %9195 = vmatmul.mubr.f32.gmra.mrb[0].mxu0 %v8931
  %v9196 = vpop.f32.mrb[0].mxu0
  %v9197 = vadd.f32 0.0, %v9196
  %v9198 = vpop.f32.mrb[0].mxu0
  %9199 = vmatprep.mubr.f32.mxu0 0.0
  %9200 = vmatmul.mubr.f32.gmra.mrb[0].mxu0 %v8934
  %v9201 = vpop.f32.mrb[0].mxu0
  %v9202 = vadd.f32 0.0, %v9201
  %v9203 = vpop.f32.mrb[0].mxu0
  %9204 = vmatprep.mubr.f32.mxu0 0.0
  %9205 = vmatmul.mubr.f32.gmra.mrb[0].mxu0 %v8937
  %v9206 = vpop.f32.mrb[0].mxu0
  %v9207 = vadd.f32 0.0, %v9206
  %v9208 = vpop.f32.mrb[0].mxu0
  %9209 = vmatprep.mubr.f32.mxu0 0.0
  %9210 = vmatmul.mubr.f32.gmra.mrb[0].mxu0 %v8940
  %v9211 = vpop.f32.mrb[0].mxu0
  %v9212 = vadd.f32 0.0, %v9211
  %v9213 = vpop.f32.mrb[0].mxu0
  %9214 = vmatprep.mubr.f32.mxu0 0.0
  %9215 = vmatmul.mubr.f32.gmra.mrb[0].mxu0 %v8943
  %v9216 = vpop.f32.mrb[0].mxu0
  %v9217 = vadd.f32 0.0, %v9216
  %v9218 = vpop.f32.mrb[0].mxu0
  %9219 = vmatprep.mubr.f32.mxu0 0.0
  %9220 = vmatmul.mubr.f32.gmra.mrb[0].mxu0 %v8946
  %v9221 = vpop.f32.mrb[0].mxu0
  %v9222 = vadd.f32 0.0, %v9221
  %v9223 = vpop.f32.mrb[0].mxu0
  %9224 = vmatprep.mubr.f32.mxu0 0.0
  %9225 = vmatmul.mubr.f32.gmra.mrb[0].mxu0 %v8949
  %v9226 = vpop.f32.mrb[0].mxu0
  %v9227 = vadd.f32 0.0, %v9226
  %v9228 = vpop.f32.mrb[0].mxu0
  %9229 = vmatprep.mubr.f32.mxu0 0.0
  %9230 = vmatmul.mubr.f32.gmra.mrb[0].mxu0 %v8952
  %v9231 = vpop.f32.mrb[0].mxu0
  %v9232 = vadd.f32 0.0, %v9231
  %v9233 = vpop.f32.mrb[0].mxu0
  %9234 = vmatprep.mubr.f32.mxu0 0.0
  %9235 = vmatmul.mubr.f32.gmra.mrb[0].mxu0 %v8955
  %v9236 = vpop.f32.mrb[0].mxu0
  %v9237 = vadd.f32 0.0, %v9236
  %v9238 = vpop.f32.mrb[0].mxu0
  %9239 = vmatprep.mubr.f32.mxu0 0.0
  %9240 = vmatmul.mubr.f32.gmra.mrb[0].mxu0 %v8958
  %v9241 = vpop.f32.mrb[0].mxu0
  %v9242 = vadd.f32 0.0, %v9241
  %v9243 = vpop.f32.mrb[0].mxu0
  %9244 = vmatprep.mubr.f32.mxu0 0.0
  %9245 = vmatmul.mubr.f32.gmra.mrb[0].mxu0 %v8961
  %v9246 = vpop.f32.mrb[0].mxu0
  %v9247 = vadd.f32 0.0, %v9246
  %v9248 = vpop.f32.mrb[0].mxu0
  %9249 = vmatprep.mubr.f32.mxu0 0.0
  %9250 = vmatmul.mubr.f32.gmra.mrb[0].mxu0 %v8964
  %v9251 = vpop.f32.mrb[0].mxu0
  %v9252 = vadd.f32 0.0, %v9251
  %v9253 = vpop.f32.mrb[0].mxu0
  %9254 = vmatprep.mubr.f32.mxu0 0.0
  %9255 = vmatmul.mubr.f32.gmra.mrb[0].mxu0 %v8967
  %v9256 = vpop.f32.mrb[0].mxu0
  %v9257 = vadd.f32 0.0, %v9256
  %v9258 = vpop.f32.mrb[0].mxu0
  %9259 = vmatprep.mubr.f32.mxu0 0.0
  %9260 = vmatmul.mubr.f32.gmra.mrb[0].mxu0 %v8970
  %v9261 = vpop.f32.mrb[0].mxu0
  %v9262 = vadd.f32 0.0, %v9261
  %v9263 = vpop.f32.mrb[0].mxu0
  %9264 = vmatprep.mubr.f32.mxu0 0.0
  %9265 = vmatmul.mubr.f32.gmra.mrb[0].mxu0 %v8973
  %v9266 = vpop.f32.mrb[0].mxu0
  %v9267 = vadd.f32 0.0, %v9266
  %v9268 = vpop.f32.mrb[0].mxu0
  %9269 = vmatprep.mubr.f32.mxu0 0.0
  %9270 = vmatmul.mubr.f32.gmra.mrb[0].mxu0 %v8976
  %v9271 = vpop.f32.mrb[0].mxu0
  %v9272 = vadd.f32 0.0, %v9271
  %v9273 = vpop.f32.mrb[0].mxu0
  %9274 = vmatprep.mubr.f32.mxu0 0.0
  %9275 = vmatmul.mubr.f32.gmra.mrb[0].mxu0 %v8979
  %v9276 = vpop.f32.mrb[0].mxu0
  %v9277 = vadd.f32 0.0, %v9276
  %v9278 = vpop.f32.mrb[0].mxu0
  %9279 = vmatprep.mubr.f32.mxu0 0.0
  %9280 = vmatmul.mubr.f32.gmra.mrb[0].mxu0 %v8982
  %v9281 = vpop.f32.mrb[0].mxu0
  %v9282 = vadd.f32 0.0, %v9281
  %v9283 = vpop.f32.mrb[0].mxu0
  %9284 = vmatprep.mubr.f32.mxu0 0.0
  %9285 = vmatmul.mubr.f32.gmra.mrb[0].mxu0 %v8985
  %v9286 = vpop.f32.mrb[0].mxu0
  %v9287 = vadd.f32 0.0, %v9286
  %v9288 = vpop.f32.mrb[0].mxu0
  %9289 = vmatprep.mubr.f32.mxu0 0.0
  %9290 = vmatmul.mubr.f32.gmra.mrb[0].mxu0 %v8988
  %v9291 = vpop.f32.mrb[0].mxu0
  %v9292 = vadd.f32 0.0, %v9291
  %v9293 = vpop.f32.mrb[0].mxu0
  %9294 = vmatprep.mubr.f32.mxu0 0.0
  %9295 = vmatmul.mubr.f32.gmra.mrb[0].mxu0 %v8991
  %v9296 = vpop.f32.mrb[0].mxu0
  %v9297 = vadd.f32 0.0, %v9296
  %v9298 = vpop.f32.mrb[0].mxu0
  %9299 = vmatprep.mubr.f32.mxu0 0.0
  %9300 = vmatmul.mubr.f32.gmra.mrb[0].mxu0 %v8994
  %v9301 = vpop.f32.mrb[0].mxu0
  %v9302 = vadd.f32 0.0, %v9301
  %v9303 = vpop.f32.mrb[0].mxu0
  %9304 = vmatprep.mubr.f32.mxu0 0.0
  %9305 = vmatmul.mubr.f32.gmra.mrb[0].mxu0 %v8997
  %v9306 = vpop.f32.mrb[0].mxu0
  %v9307 = vadd.f32 0.0, %v9306
  %v9308 = vpop.f32.mrb[0].mxu0
  %9309 = vmatprep.mubr.f32.mxu0 0.0
  %9310 = vmatmul.mubr.f32.gmra.mrb[0].mxu0 %v9000
  %v9311 = vpop.f32.mrb[0].mxu0
  %v9312 = vadd.f32 0.0, %v9311
  %v9313 = vpop.f32.mrb[0].mxu0
  %9314 = vmatprep.mubr.f32.mxu0 0.0
  %9315 = vmatmul.mubr.f32.gmra.mrb[0].mxu0 %v9003
  %v9316 = vpop.f32.mrb[0].mxu0
  %v9317 = vadd.f32 0.0, %v9316
  %v9318 = vpop.f32.mrb[0].mxu0
  %9319 = vmatprep.mubr.f32.mxu0 0.0
  %9320 = vmatmul.mubr.f32.gmra.mrb[0].mxu0 %v9006
  %v9321 = vpop.f32.mrb[0].mxu0
  %v9322 = vadd.f32 0.0, %v9321
  %v9323 = vpop.f32.mrb[0].mxu0
  %9324 = vmatprep.mubr.f32.mxu0 0.0
  %9325 = vmatmul.mubr.f32.gmra.mrb[0].mxu0 %v9009
  %v9326 = vpop.f32.mrb[0].mxu0
  %v9327 = vadd.f32 0.0, %v9326
  %v9328 = vpop.f32.mrb[0].mxu0
  %9329 = vmatprep.mubr.f32.mxu0 0.0
  %9330 = vmatmul.mubr.f32.gmra.mrb[0].mxu0 %v9012
  %v9331 = vpop.f32.mrb[0].mxu0
  %v9332 = vadd.f32 0.0, %v9331
  %v9333 = vpop.f32.mrb[0].mxu0
  %9334 = vmatprep.mubr.f32.mxu0 0.0
  %9335 = vmatmul.mubr.f32.gmra.mrb[0].mxu0 %v9015
  %v9336 = vpop.f32.mrb[0].mxu0
  %v9337 = vadd.f32 0.0, %v9336
  %v9338 = vpop.f32.mrb[0].mxu0
  %9339 = vmatprep.mubr.f32.mxu0 0.0
  %9340 = vmatmul.mubr.f32.gmra.mrb[0].mxu0 %v9018
  %v9341 = vpop.f32.mrb[0].mxu0
  %v9342 = vadd.f32 0.0, %v9341
  %v9343 = vpop.f32.mrb[0].mxu0
  %9344 = vmatprep.mubr.f32.mxu0 0.0
  %9345 = vmatmul.mubr.f32.gmra.mrb[0].mxu0 %v9021
  %v9346 = vpop.f32.mrb[0].mxu0
  %v9347 = vadd.f32 0.0, %v9346
  %v9348 = vpop.f32.mrb[0].mxu0
  %9349 = vmatprep.mubr.f32.mxu0 0.0
  %9350 = vmatmul.mubr.f32.gmra.mrb[0].mxu0 %v9024
  %v9351 = vpop.f32.mrb[0].mxu0
  %v9352 = vadd.f32 0.0, %v9351
  %v9353 = vpop.f32.mrb[0].mxu0
  %9354 = vmatprep.mubr.f32.mxu0 0.0
  %9355 = vmatmul.mubr.f32.gmra.mrb[0].mxu0 %v9027
  %v9356 = vpop.f32.mrb[0].mxu0
  %v9357 = vadd.f32 0.0, %v9356
  %v9358 = vpop.f32.mrb[0].mxu0
  %9359 = vmatprep.mubr.f32.mxu0 0.0
  %9360 = vmatmul.mubr.f32.gmra.mrb[0].mxu0 %v9030
  %v9361 = vpop.f32.mrb[0].mxu0
  %v9362 = vadd.f32 0.0, %v9361
  %v9363 = vpop.f32.mrb[0].mxu0
  %9364 = vmatprep.mubr.f32.mxu0 0.0
  %9365 = vmatmul.mubr.f32.gmra.mrb[0].mxu0 %v9033
  %v9366 = vpop.f32.mrb[0].mxu0
  %v9367 = vadd.f32 0.0, %v9366
  %v9368 = vpop.f32.mrb[0].mxu0
  %9369 = vmatprep.mubr.f32.mxu0 0.0
  %9370 = vmatmul.mubr.f32.gmra.mrb[0].mxu0 %v9036
  %v9371 = vpop.f32.mrb[0].mxu0
  %v9372 = vadd.f32 0.0, %v9371
  %v9373 = vpop.f32.mrb[0].mxu0
  %9374 = vmatprep.mubr.f32.mxu0 0.0
  %9375 = vmatmul.mubr.f32.gmra.mrb[0].mxu0 %v9039
  %v9376 = vpop.f32.mrb[0].mxu0
  %v9377 = vadd.f32 0.0, %v9376
  %v9378 = vpop.f32.mrb[0].mxu0
  %9379 = vmatprep.mubr.f32.mxu0 0.0
  %9380 = vmatmul.mubr.f32.gmra.mrb[0].mxu0 %v9042
  %v9381 = vpop.f32.mrb[0].mxu0
  %v9382 = vadd.f32 0.0, %v9381
  %v9383 = vpop.f32.mrb[0].mxu0
  %9384 = vmatprep.mubr.f32.mxu0 0.0
  %9385 = vmatmul.mubr.f32.gmra.mrb[0].mxu0 %v9045
  %v9386 = vpop.f32.mrb[0].mxu0
  %v9387 = vadd.f32 0.0, %v9386
  %v9388 = vpop.f32.mrb[0].mxu0
  %9389 = vmatprep.mubr.f32.mxu0 0.0
  %9390 = vmatmul.mubr.f32.gmra.mrb[0].mxu0 %v9048
  %v9391 = vpop.f32.mrb[0].mxu0
  %v9392 = vadd.f32 0.0, %v9391
  %v9393 = vpop.f32.mrb[0].mxu0
  %9394 = vdwg.mxu0
  %vm9395 = vcmask 31744
  %v9396 = vsel %vm9395, %v9117, 0.0
  %v9397 = vsel %vm9395, %v9122, 0.0
  %v9398 = vadd.f32 %v9396, %v9397
  %v9399 = vsel %vm9395, %v9127, 0.0
  %v9400 = vadd.f32 %v9398, %v9399
  %v9401 = vsel %vm9395, %v9132, 0.0
  %v9402 = vadd.f32 %v9400, %v9401
  %v9403 = vsel %vm9395, %v9137, 0.0
  %v9404 = vadd.f32 %v9402, %v9403
  %v9405 = vsel %vm9395, %v9142, 0.0
  %v9406 = vadd.f32 %v9404, %v9405
  %v9407 = vsel %vm9395, %v9147, 0.0
  %v9408 = vadd.f32 %v9406, %v9407
  %v9409 = vsel %vm9395, %v9152, 0.0
  %v9410 = vadd.f32 %v9408, %v9409
  %v9411 = vsel %vm9395, %v9157, 0.0
  %v9412 = vadd.f32 %v9410, %v9411
  %v9413 = vsel %vm9395, %v9162, 0.0
  %v9414 = vadd.f32 %v9412, %v9413
  %v9415 = vsel %vm9395, %v9167, 0.0
  %v9416 = vadd.f32 %v9414, %v9415
  %v9417 = vsel %vm9395, %v9172, 0.0
  %v9418 = vadd.f32 %v9416, %v9417
  %v9419 = vsel %vm9395, %v9177, 0.0
  %v9420 = vadd.f32 %v9418, %v9419
  %v9421 = vsel %vm9395, %v9182, 0.0
  %v9422 = vadd.f32 %v9420, %v9421
  %v9423 = vsel %vm9395, %v9187, 0.0
  %v9424 = vadd.f32 %v9422, %v9423
  %v9425 = vsel %vm9395, %v9192, 0.0
  %v9426 = vadd.f32 %v9424, %v9425
  %v9427 = vsel %vm9395, %v9197, 0.0
  %v9428 = vadd.f32 %v9426, %v9427
  %v9429 = vsel %vm9395, %v9202, 0.0
  %v9430 = vadd.f32 %v9428, %v9429
  %v9431 = vsel %vm9395, %v9207, 0.0
  %v9432 = vadd.f32 %v9430, %v9431
  %v9433 = vsel %vm9395, %v9212, 0.0
  %v9434 = vadd.f32 %v9432, %v9433
  %v9435 = vsel %vm9395, %v9217, 0.0
  %v9436 = vadd.f32 %v9434, %v9435
  %v9437 = vsel %vm9395, %v9222, 0.0
  %v9438 = vadd.f32 %v9436, %v9437
  %v9439 = vsel %vm9395, %v9227, 0.0
  %v9440 = vadd.f32 %v9438, %v9439
  %v9441 = vsel %vm9395, %v9232, 0.0
  %v9442 = vadd.f32 %v9440, %v9441
  %v9443 = vsel %vm9395, %v9237, 0.0
  %v9444 = vadd.f32 %v9442, %v9443
  %v9445 = vsel %vm9395, %v9242, 0.0
  %v9446 = vadd.f32 %v9444, %v9445
  %v9447 = vsel %vm9395, %v9247, 0.0
  %v9448 = vadd.f32 %v9446, %v9447
  %v9449 = vsel %vm9395, %v9252, 0.0
  %v9450 = vadd.f32 %v9448, %v9449
  %v9451 = vsel %vm9395, %v9257, 0.0
  %v9452 = vadd.f32 %v9450, %v9451
  %v9453 = vsel %vm9395, %v9262, 0.0
  %v9454 = vadd.f32 %v9452, %v9453
  %v9455 = vsel %vm9395, %v9267, 0.0
  %v9456 = vadd.f32 %v9454, %v9455
  %v9457 = vsel %vm9395, %v9272, 0.0
  %v9458 = vadd.f32 %v9456, %v9457
  %v9459 = vsel %vm9395, %v9277, 0.0
  %v9460 = vadd.f32 %v9458, %v9459
  %v9461 = vsel %vm9395, %v9282, 0.0
  %v9462 = vadd.f32 %v9460, %v9461
  %v9463 = vsel %vm9395, %v9287, 0.0
  %v9464 = vadd.f32 %v9462, %v9463
  %v9465 = vsel %vm9395, %v9292, 0.0
  %v9466 = vadd.f32 %v9464, %v9465
  %v9467 = vsel %vm9395, %v9297, 0.0
  %v9468 = vadd.f32 %v9466, %v9467
  %v9469 = vsel %vm9395, %v9302, 0.0
  %v9470 = vadd.f32 %v9468, %v9469
  %v9471 = vsel %vm9395, %v9307, 0.0
  %v9472 = vadd.f32 %v9470, %v9471
  %v9473 = vsel %vm9395, %v9312, 0.0
  %v9474 = vadd.f32 %v9472, %v9473
  %v9475 = vsel %vm9395, %v9317, 0.0
  %v9476 = vadd.f32 %v9474, %v9475
  %v9477 = vsel %vm9395, %v9322, 0.0
  %v9478 = vadd.f32 %v9476, %v9477
  %v9479 = vsel %vm9395, %v9327, 0.0
  %v9480 = vadd.f32 %v9478, %v9479
  %v9481 = vsel %vm9395, %v9332, 0.0
  %v9482 = vadd.f32 %v9480, %v9481
  %v9483 = vsel %vm9395, %v9337, 0.0
  %v9484 = vadd.f32 %v9482, %v9483
  %v9485 = vsel %vm9395, %v9342, 0.0
  %v9486 = vadd.f32 %v9484, %v9485
  %v9487 = vsel %vm9395, %v9347, 0.0
  %v9488 = vadd.f32 %v9486, %v9487
  %v9489 = vsel %vm9395, %v9352, 0.0
  %v9490 = vadd.f32 %v9488, %v9489
  %v9491 = vsel %vm9395, %v9357, 0.0
  %v9492 = vadd.f32 %v9490, %v9491
  %v9493 = vsel %vm9395, %v9362, 0.0
  %v9494 = vadd.f32 %v9492, %v9493
  %v9495 = vsel %vm9395, %v9367, 0.0
  %v9496 = vadd.f32 %v9494, %v9495
  %v9497 = vsel %vm9395, %v9372, 0.0
  %v9498 = vadd.f32 %v9496, %v9497
  %v9499 = vsel %vm9395, %v9377, 0.0
  %v9500 = vadd.f32 %v9498, %v9499
  %v9501 = vsel %vm9395, %v9382, 0.0
  %v9502 = vadd.f32 %v9500, %v9501
  %v9503 = vsel %vm9395, %v9387, 0.0
  %v9504 = vadd.f32 %v9502, %v9503
  %v9505 = vsel %vm9395, %v9392, 0.0
  %v9506 = vadd.f32 %v9504, %v9505
  %v9507 = vrot.slane %v9506, 4
  %v9508 = vadd.f32 %v9506, %v9507
  %v9509 = vrot.slane %v9508, 2
  %v9510 = vadd.f32 %v9508, %v9509
  %v9511 = vrot.slane %v9510, 1
  %v9512 = vadd.f32 %v9510, %v9511
  %v9513 = vld [vmem:[#allocation2] sm:$0x1]
  %9515 = vset.pattern.permute.xlu0 0
  %9516 = vperm.xlu0 %9515, %v9513
  %v9517 = vpop.permute.xlu0 %9516
  %v9519 = vlaneseq
  %v9520 = vshrl.u32 %v9519, 7
  %v9521 = vsub.s32 0, %v9520
  %v9522 = vrot.slane %v9517, %v9521
  %v9523 = vadd.f32 %v9512, %v9522
  %v9524 = vsub.f32 0.0, %v9523
  %v9525 = vmul.f32 %v9524, 1.442695
  %v9526 = vpow.pop %v9525
  %v9527 = vadd.f32 %v9526, 1.0
  %v9528 = vrcp.pop %v9527
  %v9529 = vmul.f32 1.0, %v9528
  %vm9530 = vcmask 24576
  %9531 = vst.msk [vmem:[%s10] sm:$0x1] %vm9530, %v9529
  // Predicated region
  $region42: #{image_classification_forward.1} parent=0 // pred_check
    _
  $region43: #{image_classification_forward.1} parent=0 // pred_check_branch
    %9533 = sbr.rel (0) target = $region45
  $region44: #{image_classification_forward.1} parent=0 // pred_region
    _
  $region45: #{image_classification_forward.1} parent=0 // pred_fallthru
    _
  // Predicated region
  $region46: #{image_classification_forward.1} parent=0 // pred_check
    _
  $region47: #{image_classification_forward.1} parent=0 // pred_check_branch
    %9535 = sbr.rel (0) target = $region49
  $region48: #{image_classification_forward.1} parent=0 // pred_region
    _
  $region49: #{image_classification_forward.1} parent=0 // pred_fallthru
    _

</llo_original>
